<compile_context>
chip_gen: v7x
topology: tpu7x:2x2x1
jax: 0.10.0
libtpu: 0.0.40
codegen_flags: <defaults>
</compile_context>

<pallas_src>
import jax
import jax.numpy as jnp
from jax.experimental import pallas as pl
from jax.experimental.pallas import tpu as pltpu

NODES_PER_GRAPH = 207     # fc1 in_features 1656 = 207 * 8
N_PAD = 256               # nodes per graph padded to a 128-multiple
F_IN_PAD = 256            # input feature dim 207 padded to 256
F_HID = 128               # hidden width (conv3/conv4 outs zero-padded to 128)
F_OUT_CONV4 = 8           # real conv4 output width

_VMEM = pl.BlockSpec(memory_space=pltpu.MemorySpace.VMEM)


# ----------------------------------------------------------------------------
# Fused Pallas kernel: 6x (ChebConv + ReLU + BN [+ residual]) + fc1, per graph
# ----------------------------------------------------------------------------
def _chebnet_fused_kernel(lhat_ref, x_ref,
                          w1_ref, w20_ref, w21_ref, w22_ref, w3_ref, w4_ref,
                          b1_ref, b20_ref, b21_ref, b22_ref, b3_ref, b4_ref,
                          t1_ref, t2_ref, t3_ref,
                          wfc_ref, bfc_ref,
                          o_ref):
    lhat = lhat_ref[...]                      # [256, 256] f32 (per-graph L_hat)
    xb = x_ref[...]                           # [256, 256] bf16 (nodes x feats)

    t1 = t1_ref[...]

    # ---- layer 1 (re-associated):  z = x @ W0 + L @ (x @ W1) --------------
    u = jnp.dot(xb, w1_ref[F_IN_PAD:, :], preferred_element_type=jnp.float32)
    z = jnp.dot(xb, w1_ref[:F_IN_PAD, :], preferred_element_type=jnp.float32)
    z = z + jnp.dot(lhat, u, preferred_element_type=jnp.float32)
    # BN scale is folded into W/b (valid since scale > 0); only shift remains.
    h = jnp.maximum(z + b1_ref[...], 0.0) + t1          # [256, 128] f32

    def cheb(h, w_ref, b_ref, shift):
        lh = jnp.dot(lhat, h, preferred_element_type=jnp.float32)
        z = jnp.dot(h.astype(jnp.bfloat16), w_ref[:F_HID, :],
                    preferred_element_type=jnp.float32)
        z = z + jnp.dot(lh.astype(jnp.bfloat16), w_ref[F_HID:, :],
                        preferred_element_type=jnp.float32)
        return jnp.maximum(z + b_ref[...], 0.0) + shift

    # ---- conv2_0 / conv2_1 / conv2_2 (+ 0.7 * residual), shared bn1 -------
    h = cheb(h, w20_ref, b20_ref, t1) + 0.7 * h
    h = cheb(h, w21_ref, b21_ref, t1) + 0.7 * h
    h = cheb(h, w22_ref, b22_ref, t1) + 0.7 * h
    # ---- conv3 + bn2 (real out 64, zero-padded to 128) ---------------------
    h = cheb(h, w3_ref, b3_ref, t2_ref[...])
    # ---- conv4 + bn3 (real out 8, zero-padded to 128) ----------------------
    h = cheb(h, w4_ref, b4_ref, t3_ref[...])            # valid region [:207, :8]

    # ---- fc1 fused: out = flatten(h[:207, :8]) @ fc1_w + fc1_b -------------
    # wfc_ref[f] holds fc1_w[n*8 + f, :] padded over nodes (rows >=207 are 0),
    # so padded node rows / padded feature cols of h contribute exactly 0.
    ht = h.T                                             # [128, 256] f32 (XLU)
    acc = bfc_ref[...]                                   # [1, 128] f32
    for f in range(F_OUT_CONV4):
        acc = acc + jnp.dot(ht[f:f + 1, :], wfc_ref[f],
                            preferred_element_type=jnp.float32)
    o_ref[...] = acc                                     # lane-dense [1, 128]


def chebnet_conv_stack(lhat_blk, x_blk, prep):
    num_graphs = lhat_blk.shape[0]
    out = pl.pallas_call(
        _chebnet_fused_kernel,
        out_shape=jax.ShapeDtypeStruct((num_graphs, 1, F_HID), jnp.float32),
        grid=(num_graphs,),
        in_specs=[
            pl.BlockSpec((None, N_PAD, N_PAD), lambda g: (g, 0, 0)),     # L_hat
            pl.BlockSpec((None, N_PAD, F_IN_PAD), lambda g: (g, 0, 0)),  # x
        ] + [_VMEM] * 17,                                                # params
        out_specs=pl.BlockSpec((None, 1, F_HID), lambda g: (g, 0, 0)),
        compiler_params=pltpu.CompilerParams(
            dimension_semantics=("parallel",)),
    )(lhat_blk, x_blk,
      prep["w1"], prep["w20"], prep["w21"], prep["w22"], prep["w3"], prep["w4"],
      prep["b1"], prep["b20"], prep["b21"], prep["b22"], prep["b3"], prep["b4"],
      prep["t1"], prep["t2"], prep["t3"],
      prep["wfc"], prep["bfc"])
    return out[:, 0, :]                                  # [G, 128]


# ----------------------------------------------------------------------------
# Plain-JAX glue: per-graph dense scaled Laplacian from (edge_index, edge_attr)
# ----------------------------------------------------------------------------
def build_scaled_laplacian_blocks(edge_index, edge_attr, num_graphs,
                                  lambda_max=2.0):
    # Graphs are disjoint contiguous blocks of 207 nodes -> block-diagonal L.
    src = edge_index[0]
    dst = edge_index[1]
    w = jnp.where(src != dst, edge_attr.astype(jnp.float32), 0.0)  # drop self loops
    g = src // NODES_PER_GRAPH
    ls = src % NODES_PER_GRAPH
    ld = dst % NODES_PER_GRAPH
    npg = NODES_PER_GRAPH
    # A[g, target, source] so that (A @ x)[i] = sum_j w(j->i) x[j]
    adj = jnp.zeros((num_graphs, npg, npg), jnp.float32).at[g, ld, ls].add(w)
    deg = jnp.zeros((num_graphs, npg), jnp.float32).at[g, ls].add(w)
    dinv = jnp.where(deg > 0, jax.lax.rsqrt(deg), 0.0)
    eye = jnp.eye(npg, dtype=jnp.float32)[None]
    lap = eye - dinv[:, :, None] * adj * dinv[:, None, :]   # sym-normalized L
    return (2.0 / lambda_max) * lap - eye                   # 2L/lmax - I


# ----------------------------------------------------------------------------
# Parameter init + ONE-TIME host-side folding / padding / stacking
# ----------------------------------------------------------------------------
def glorot(key, fan_in, fan_out):
    limit = (6.0 / (fan_in + fan_out)) ** 0.5
    return jax.random.uniform(key, (fan_in, fan_out), jnp.float32, -limit, limit)


def init_params(key):
    ks = jax.random.split(key, 16)
    p = {}
    p["conv1"] = (glorot(ks[0], 207, 128), glorot(ks[1], 207, 128),
                  jnp.zeros((128,), jnp.float32))
    p["conv2_0"] = (glorot(ks[2], 128, 128), glorot(ks[3], 128, 128),
                    jnp.zeros((128,), jnp.float32))
    p["conv2_1"] = (glorot(ks[4], 128, 128), glorot(ks[5], 128, 128),
                    jnp.zeros((128,), jnp.float32))
    p["conv2_2"] = (glorot(ks[6], 128, 128), glorot(ks[7], 128, 128),
                    jnp.zeros((128,), jnp.float32))
    p["conv3"] = (glorot(ks[8], 128, 64), glorot(ks[9], 128, 64),
                  jnp.zeros((64,), jnp.float32))
    p["conv4"] = (glorot(ks[10], 64, 8), glorot(ks[11], 64, 8),
                  jnp.zeros((8,), jnp.float32))

    # BatchNorm1d eval defaults: gamma=1, beta=0, running_mean=0, running_var=1
    def bn(dim):
        eps = 1e-5
        gamma = jnp.ones((dim,), jnp.float32)
        beta = jnp.zeros((dim,), jnp.float32)
        mean = jnp.zeros((dim,), jnp.float32)
        var = jnp.ones((dim,), jnp.float32)
        scale = gamma / jnp.sqrt(var + eps)   # > 0 required for the ReLU fold
        shift = beta - mean * scale
        return scale, shift

    p["bn1"] = bn(128)
    p["bn2"] = bn(64)
    p["bn3"] = bn(8)

    # fc1: Linear(1656, 128), stored as [in, out]
    lim = (1.0 / 1656) ** 0.5
    p["fc1_w"] = jax.random.uniform(ks[12], (1656, 128), jnp.float32, -lim, lim)
    p["fc1_b"] = jax.random.uniform(ks[13], (128,), jnp.float32, -lim, lim)
    return p


def prepare_params(params):
    """Fold BN scale into conv weights/bias, zero-pad to aligned dims, stack
    [W0; W1], cast weights to bf16, and pre-shape fc1.  Runs ONCE at init
    (outside jit), so no per-call pad/cast ops sit in front of the kernel."""

    def fold_stack(w0, w1, b, bn_scale, f_in_pad):
        # relu(z) * s == relu(z * s) only because s > 0 (default BN init).
        w0s, w1s, bs = w0 * bn_scale[None, :], w1 * bn_scale[None, :], b * bn_scale

        def pad2(w):
            return jnp.pad(w, ((0, f_in_pad - w.shape[0]),
                               (0, F_HID - w.shape[1])))

        wstk = jnp.concatenate([pad2(w0s), pad2(w1s)], axis=0).astype(jnp.bfloat16)
        bias = jnp.pad(bs, (0, F_HID - bs.shape[0])).reshape(1, -1)
        return wstk, bias

    bn1_s, bn1_t = params["bn1"]
    bn2_s, bn2_t = params["bn2"]
    bn3_s, bn3_t = params["bn3"]

    prep = {}
    prep["w1"], prep["b1"] = fold_stack(*params["conv1"], bn1_s, F_IN_PAD)
    prep["w20"], prep["b20"] = fold_stack(*params["conv2_0"], bn1_s, F_HID)
    prep["w21"], prep["b21"] = fold_stack(*params["conv2_1"], bn1_s, F_HID)
    prep["w22"], prep["b22"] = fold_stack(*params["conv2_2"], bn1_s, F_HID)
    prep["w3"], prep["b3"] = fold_stack(*params["conv3"], bn2_s, F_HID)
    prep["w4"], prep["b4"] = fold_stack(*params["conv4"], bn3_s, F_HID)
    prep["t1"] = jnp.pad(bn1_t, (0, F_HID - bn1_t.shape[0])).reshape(1, -1)
    prep["t2"] = jnp.pad(bn2_t, (0, F_HID - bn2_t.shape[0])).reshape(1, -1)
    prep["t3"] = jnp.pad(bn3_t, (0, F_HID - bn3_t.shape[0])).reshape(1, -1)

    # fc1_w [1656,128] -> [207 nodes, 8 feats, 128] -> [8, 207, 128] -> pad nodes.
    wfc = params["fc1_w"].reshape(NODES_PER_GRAPH, F_OUT_CONV4, F_HID)
    wfc = wfc.transpose(1, 0, 2)
    prep["wfc"] = jnp.pad(wfc, ((0, 0), (0, N_PAD - NODES_PER_GRAPH), (0, 0)))
    prep["bfc"] = params["fc1_b"].reshape(1, -1)
    return prep


# ----------------------------------------------------------------------------
# ChebNet forward (eval mode: dropout = identity)
# ----------------------------------------------------------------------------
def chebnet_forward(prep, x, edge_index, edge_attr, batch):
    del batch  # graphs are contiguous 207-node blocks; num_graphs is static
    x = x.astype(jnp.float32)
    edge_index = edge_index.reshape(2, -1)
    n = x.shape[0]
    num_graphs = n // NODES_PER_GRAPH          # static (== batch[-1] + 1)

    # Per-graph dense scaled Laplacian blocks, padded to [G, 256, 256] (f32).
    lhat = build_scaled_laplacian_blocks(edge_index, edge_attr, num_graphs)
    pad_n = N_PAD - NODES_PER_GRAPH
    lhat_blk = jnp.pad(lhat, ((0, 0), (0, pad_n), (0, pad_n)))

    # Node features per graph, padded to [G, 256, 256] (bf16 matmul LHS).
    x_blk = x.reshape(num_graphs, NODES_PER_GRAPH, NODES_PER_GRAPH)
    x_blk = jnp.pad(x_blk, ((0, 0), (0, pad_n), (0, F_IN_PAD - NODES_PER_GRAPH)))
    x_blk = x_blk.astype(jnp.bfloat16)

    # One fused pallas_call: all 6 conv/relu/bn/residual layers + fc1.
    return chebnet_conv_stack(lhat_blk, x_blk, prep)     # [G, 128]
    # TODO(synk): dropout omitted (eval mode); training-mode dropout would need
    #             pltpu.prng_* inside the fused kernel.


chebnet_forward_jit = jax.jit(chebnet_forward)


# ----------------------------------------------------------------------------
# Main
# ----------------------------------------------------------------------------
if __name__ == "__main__":
    key = jax.random.PRNGKey(0)
    k_param, k_x, k_w = jax.random.split(key, 3)

    num_graphs = 2
    n = NODES_PER_GRAPH * num_graphs           # 414 nodes total

    # Node features [N, 207]
    x = jax.random.normal(k_x, (n, NODES_PER_GRAPH), jnp.float32)

    # Symmetric ring graph within each graph instance.
    src_list, dst_list = [], []
    for g in range(num_graphs):
        off = g * NODES_PER_GRAPH
        for i in range(NODES_PER_GRAPH):
            j = (i + 1) % NODES_PER_GRAPH
            src_list += [off + i, off + j]
            dst_list += [off + j, off + i]
    edge_index = jnp.array([src_list, dst_list], dtype=jnp.int32)   # [2, 828]
    e_half = edge_index.shape[1] // 2
    w_half = jax.random.uniform(k_w, (e_half,), jnp.float32, 0.1, 1.0)
    edge_attr = jnp.repeat(w_half, 2)                                # symmetric

    batch = jnp.repeat(jnp.arange(num_graphs, dtype=jnp.int32), NODES_PER_GRAPH)

    params = init_params(k_param)
    prep = prepare_params(params)              # one-time fold/pad/cast (hoisted)

    out = chebnet_forward_jit(prep, x, edge_index, edge_attr, batch)
    out = jax.block_until_ready(out)

    assert out.shape == (num_graphs, 128), out.shape
    assert jnp.all(jnp.isfinite(out))
    print("KERNEL_OK")
</pallas_src>

<mosaic_0001>
module attributes {stable_mosaic.version = 11 : i64} {
  func.func @_chebnet_fused_kernel(%arg0: i32, %arg1: memref<1x256x256xf32, #tpu.memory_space<vmem>>, %arg2: memref<1x256x256xbf16, #tpu.memory_space<vmem>>, %arg3: memref<512x128xbf16, #tpu.memory_space<vmem>>, %arg4: memref<256x128xbf16, #tpu.memory_space<vmem>>, %arg5: memref<256x128xbf16, #tpu.memory_space<vmem>>, %arg6: memref<256x128xbf16, #tpu.memory_space<vmem>>, %arg7: memref<256x128xbf16, #tpu.memory_space<vmem>>, %arg8: memref<256x128xbf16, #tpu.memory_space<vmem>>, %arg9: memref<1x128xf32, #tpu.memory_space<vmem>>, %arg10: memref<1x128xf32, #tpu.memory_space<vmem>>, %arg11: memref<1x128xf32, #tpu.memory_space<vmem>>, %arg12: memref<1x128xf32, #tpu.memory_space<vmem>>, %arg13: memref<1x128xf32, #tpu.memory_space<vmem>>, %arg14: memref<1x128xf32, #tpu.memory_space<vmem>>, %arg15: memref<1x128xf32, #tpu.memory_space<vmem>>, %arg16: memref<1x128xf32, #tpu.memory_space<vmem>>, %arg17: memref<1x128xf32, #tpu.memory_space<vmem>>, %arg18: memref<8x256x128xf32, #tpu.memory_space<vmem>>, %arg19: memref<1x128xf32, #tpu.memory_space<vmem>>, %arg20: memref<1x1x128xf32, #tpu.memory_space<vmem>>) attributes {dimension_semantics = [#tpu.dimension_semantics<parallel>], iteration_bounds = array<i64: 2>, scalar_prefetch = 0 : i64, scratch_operands = 0 : i64, tpu.core_type = #tpu.core_type<tc>, window_params = [{transform_indices = @transform_0, window_bounds = array<i64: 1, 256, 256>}, {transform_indices = @transform_1, window_bounds = array<i64: 1, 256, 256>}, {pipeline_mode = #tpu.pipeline_mode<synchronous>, transform_indices = @transform_2, window_bounds = array<i64: 512, 128>}, {pipeline_mode = #tpu.pipeline_mode<synchronous>, transform_indices = @transform_3, window_bounds = array<i64: 256, 128>}, {pipeline_mode = #tpu.pipeline_mode<synchronous>, transform_indices = @transform_4, window_bounds = array<i64: 256, 128>}, {pipeline_mode = #tpu.pipeline_mode<synchronous>, transform_indices = @transform_5, window_bounds = array<i64: 256, 128>}, {pipeline_mode = #tpu.pipeline_mode<synchronous>, transform_indices = @transform_6, window_bounds = array<i64: 256, 128>}, {pipeline_mode = #tpu.pipeline_mode<synchronous>, transform_indices = @transform_7, window_bounds = array<i64: 256, 128>}, {pipeline_mode = #tpu.pipeline_mode<synchronous>, transform_indices = @transform_8, window_bounds = array<i64: 1, 128>}, {pipeline_mode = #tpu.pipeline_mode<synchronous>, transform_indices = @transform_9, window_bounds = array<i64: 1, 128>}, {pipeline_mode = #tpu.pipeline_mode<synchronous>, transform_indices = @transform_10, window_bounds = array<i64: 1, 128>}, {pipeline_mode = #tpu.pipeline_mode<synchronous>, transform_indices = @transform_11, window_bounds = array<i64: 1, 128>}, {pipeline_mode = #tpu.pipeline_mode<synchronous>, transform_indices = @transform_12, window_bounds = array<i64: 1, 128>}, {pipeline_mode = #tpu.pipeline_mode<synchronous>, transform_indices = @transform_13, window_bounds = array<i64: 1, 128>}, {pipeline_mode = #tpu.pipeline_mode<synchronous>, transform_indices = @transform_14, window_bounds = array<i64: 1, 128>}, {pipeline_mode = #tpu.pipeline_mode<synchronous>, transform_indices = @transform_15, window_bounds = array<i64: 1, 128>}, {pipeline_mode = #tpu.pipeline_mode<synchronous>, transform_indices = @transform_16, window_bounds = array<i64: 1, 128>}, {pipeline_mode = #tpu.pipeline_mode<synchronous>, transform_indices = @transform_17, window_bounds = array<i64: 8, 256, 128>}, {pipeline_mode = #tpu.pipeline_mode<synchronous>, transform_indices = @transform_18, window_bounds = array<i64: 1, 128>}, {transform_indices = @transform_19, window_bounds = array<i64: 1, 1, 128>}]} {
    %c0 = arith.constant 0 : index
    %c0_0 = arith.constant 0 : index
    %c0_1 = arith.constant 0 : index
    %0 = vector.load %arg1[%c0, %c0_0, %c0_1] : memref<1x256x256xf32, #tpu.memory_space<vmem>>, vector<1x256x256xf32>
    %1 = vector.shape_cast %0 : vector<1x256x256xf32> to vector<256x256xf32>
    %c0_2 = arith.constant 0 : index
    %c0_3 = arith.constant 0 : index
    %c0_4 = arith.constant 0 : index
    %2 = vector.load %arg2[%c0_2, %c0_3, %c0_4] : memref<1x256x256xbf16, #tpu.memory_space<vmem>>, vector<1x256x256xbf16>
    %3 = vector.shape_cast %2 : vector<1x256x256xbf16> to vector<256x256xbf16>
    %c0_5 = arith.constant 0 : index
    %c0_6 = arith.constant 0 : index
    %4 = vector.load %arg15[%c0_5, %c0_6] : memref<1x128xf32, #tpu.memory_space<vmem>>, vector<1x128xf32>
    %c256 = arith.constant 256 : index
    %c0_7 = arith.constant 0 : index
    %5 = vector.load %arg3[%c256, %c0_7] : memref<512x128xbf16, #tpu.memory_space<vmem>>, vector<256x128xbf16>
    %cst = arith.constant dense<0.000000e+00> : vector<256x128xf32>
    %6 = tpu.matmul %3, %5, %cst {dimension_numbers = #tpu.dot_dimension_numbers<[1], [0], [0], [1], [0, 0, 1, 1], [], []>} : vector<256x256xbf16>, vector<256x128xbf16>, vector<256x128xf32> -> vector<256x128xf32>
    %c0_8 = arith.constant 0 : index
    %c0_9 = arith.constant 0 : index
    %7 = vector.load %arg3[%c0_8, %c0_9] : memref<512x128xbf16, #tpu.memory_space<vmem>>, vector<256x128xbf16>
    %cst_10 = arith.constant dense<0.000000e+00> : vector<256x128xf32>
    %8 = tpu.matmul %3, %7, %cst_10 {dimension_numbers = #tpu.dot_dimension_numbers<[1], [0], [0], [1], [0, 0, 1, 1], [], []>} : vector<256x256xbf16>, vector<256x128xbf16>, vector<256x128xf32> -> vector<256x128xf32>
    %cst_11 = arith.constant dense<0.000000e+00> : vector<256x128xf32>
    %9 = tpu.matmul %1, %6, %cst_11 {dimension_numbers = #tpu.dot_dimension_numbers<[1], [0], [0], [1], [0, 0, 1, 1], [], []>} : vector<256x256xf32>, vector<256x128xf32>, vector<256x128xf32> -> vector<256x128xf32>
    %10 = arith.addf %8, %9 : vector<256x128xf32>
    %c0_12 = arith.constant 0 : index
    %c0_13 = arith.constant 0 : index
    %11 = vector.load %arg9[%c0_12, %c0_13] : memref<1x128xf32, #tpu.memory_space<vmem>>, vector<1x128xf32>
    %12 = vector.broadcast %11 : vector<1x128xf32> to vector<256x128xf32>
    %13 = arith.addf %10, %12 : vector<256x128xf32>
    %cst_14 = arith.constant 0.000000e+00 : f32
    %14 = vector.broadcast %cst_14 : f32 to vector<256x128xf32>
    %15 = arith.maximumf %13, %14 : vector<256x128xf32>
    %16 = vector.broadcast %4 : vector<1x128xf32> to vector<256x128xf32>
    %17 = arith.addf %15, %16 : vector<256x128xf32>
    %cst_15 = arith.constant dense<0.000000e+00> : vector<256x128xf32>
    %18 = tpu.matmul %1, %17, %cst_15 {dimension_numbers = #tpu.dot_dimension_numbers<[1], [0], [0], [1], [0, 0, 1, 1], [], []>} : vector<256x256xf32>, vector<256x128xf32>, vector<256x128xf32> -> vector<256x128xf32>
    %19 = arith.truncf %17 : vector<256x128xf32> to vector<256x128xbf16>
    %c0_16 = arith.constant 0 : index
    %c0_17 = arith.constant 0 : index
    %20 = vector.load %arg4[%c0_16, %c0_17] : memref<256x128xbf16, #tpu.memory_space<vmem>>, vector<128x128xbf16>
    %cst_18 = arith.constant dense<0.000000e+00> : vector<256x128xf32>
    %21 = tpu.matmul %19, %20, %cst_18 {dimension_numbers = #tpu.dot_dimension_numbers<[1], [0], [0], [1], [0, 0, 1, 1], [], []>} : vector<256x128xbf16>, vector<128x128xbf16>, vector<256x128xf32> -> vector<256x128xf32>
    %22 = arith.truncf %18 : vector<256x128xf32> to vector<256x128xbf16>
    %c128 = arith.constant 128 : index
    %c0_19 = arith.constant 0 : index
    %23 = vector.load %arg4[%c128, %c0_19] : memref<256x128xbf16, #tpu.memory_space<vmem>>, vector<128x128xbf16>
    %cst_20 = arith.constant dense<0.000000e+00> : vector<256x128xf32>
    %24 = tpu.matmul %22, %23, %cst_20 {dimension_numbers = #tpu.dot_dimension_numbers<[1], [0], [0], [1], [0, 0, 1, 1], [], []>} : vector<256x128xbf16>, vector<128x128xbf16>, vector<256x128xf32> -> vector<256x128xf32>
    %25 = arith.addf %21, %24 : vector<256x128xf32>
    %c0_21 = arith.constant 0 : index
    %c0_22 = arith.constant 0 : index
    %26 = vector.load %arg10[%c0_21, %c0_22] : memref<1x128xf32, #tpu.memory_space<vmem>>, vector<1x128xf32>
    %27 = vector.broadcast %26 : vector<1x128xf32> to vector<256x128xf32>
    %28 = arith.addf %25, %27 : vector<256x128xf32>
    %cst_23 = arith.constant 0.000000e+00 : f32
    %29 = vector.broadcast %cst_23 : f32 to vector<256x128xf32>
    %30 = arith.maximumf %28, %29 : vector<256x128xf32>
    %31 = vector.broadcast %4 : vector<1x128xf32> to vector<256x128xf32>
    %32 = arith.addf %30, %31 : vector<256x128xf32>
    %cst_24 = arith.constant 0.699999988 : f32
    %33 = vector.broadcast %cst_24 : f32 to vector<256x128xf32>
    %34 = arith.mulf %33, %17 : vector<256x128xf32>
    %35 = arith.addf %32, %34 : vector<256x128xf32>
    %cst_25 = arith.constant dense<0.000000e+00> : vector<256x128xf32>
    %36 = tpu.matmul %1, %35, %cst_25 {dimension_numbers = #tpu.dot_dimension_numbers<[1], [0], [0], [1], [0, 0, 1, 1], [], []>} : vector<256x256xf32>, vector<256x128xf32>, vector<256x128xf32> -> vector<256x128xf32>
    %37 = arith.truncf %35 : vector<256x128xf32> to vector<256x128xbf16>
    %c0_26 = arith.constant 0 : index
    %c0_27 = arith.constant 0 : index
    %38 = vector.load %arg5[%c0_26, %c0_27] : memref<256x128xbf16, #tpu.memory_space<vmem>>, vector<128x128xbf16>
    %cst_28 = arith.constant dense<0.000000e+00> : vector<256x128xf32>
    %39 = tpu.matmul %37, %38, %cst_28 {dimension_numbers = #tpu.dot_dimension_numbers<[1], [0], [0], [1], [0, 0, 1, 1], [], []>} : vector<256x128xbf16>, vector<128x128xbf16>, vector<256x128xf32> -> vector<256x128xf32>
    %40 = arith.truncf %36 : vector<256x128xf32> to vector<256x128xbf16>
    %c128_29 = arith.constant 128 : index
    %c0_30 = arith.constant 0 : index
    %41 = vector.load %arg5[%c128_29, %c0_30] : memref<256x128xbf16, #tpu.memory_space<vmem>>, vector<128x128xbf16>
    %cst_31 = arith.constant dense<0.000000e+00> : vector<256x128xf32>
    %42 = tpu.matmul %40, %41, %cst_31 {dimension_numbers = #tpu.dot_dimension_numbers<[1], [0], [0], [1], [0, 0, 1, 1], [], []>} : vector<256x128xbf16>, vector<128x128xbf16>, vector<256x128xf32> -> vector<256x128xf32>
    %43 = arith.addf %39, %42 : vector<256x128xf32>
    %c0_32 = arith.constant 0 : index
    %c0_33 = arith.constant 0 : index
    %44 = vector.load %arg11[%c0_32, %c0_33] : memref<1x128xf32, #tpu.memory_space<vmem>>, vector<1x128xf32>
    %45 = vector.broadcast %44 : vector<1x128xf32> to vector<256x128xf32>
    %46 = arith.addf %43, %45 : vector<256x128xf32>
    %cst_34 = arith.constant 0.000000e+00 : f32
    %47 = vector.broadcast %cst_34 : f32 to vector<256x128xf32>
    %48 = arith.maximumf %46, %47 : vector<256x128xf32>
    %49 = vector.broadcast %4 : vector<1x128xf32> to vector<256x128xf32>
    %50 = arith.addf %48, %49 : vector<256x128xf32>
    %cst_35 = arith.constant 0.699999988 : f32
    %51 = vector.broadcast %cst_35 : f32 to vector<256x128xf32>
    %52 = arith.mulf %51, %35 : vector<256x128xf32>
    %53 = arith.addf %50, %52 : vector<256x128xf32>
    %cst_36 = arith.constant dense<0.000000e+00> : vector<256x128xf32>
    %54 = tpu.matmul %1, %53, %cst_36 {dimension_numbers = #tpu.dot_dimension_numbers<[1], [0], [0], [1], [0, 0, 1, 1], [], []>} : vector<256x256xf32>, vector<256x128xf32>, vector<256x128xf32> -> vector<256x128xf32>
    %55 = arith.truncf %53 : vector<256x128xf32> to vector<256x128xbf16>
    %c0_37 = arith.constant 0 : index
    %c0_38 = arith.constant 0 : index
    %56 = vector.load %arg6[%c0_37, %c0_38] : memref<256x128xbf16, #tpu.memory_space<vmem>>, vector<128x128xbf16>
    %cst_39 = arith.constant dense<0.000000e+00> : vector<256x128xf32>
    %57 = tpu.matmul %55, %56, %cst_39 {dimension_numbers = #tpu.dot_dimension_numbers<[1], [0], [0], [1], [0, 0, 1, 1], [], []>} : vector<256x128xbf16>, vector<128x128xbf16>, vector<256x128xf32> -> vector<256x128xf32>
    %58 = arith.truncf %54 : vector<256x128xf32> to vector<256x128xbf16>
    %c128_40 = arith.constant 128 : index
    %c0_41 = arith.constant 0 : index
    %59 = vector.load %arg6[%c128_40, %c0_41] : memref<256x128xbf16, #tpu.memory_space<vmem>>, vector<128x128xbf16>
    %cst_42 = arith.constant dense<0.000000e+00> : vector<256x128xf32>
    %60 = tpu.matmul %58, %59, %cst_42 {dimension_numbers = #tpu.dot_dimension_numbers<[1], [0], [0], [1], [0, 0, 1, 1], [], []>} : vector<256x128xbf16>, vector<128x128xbf16>, vector<256x128xf32> -> vector<256x128xf32>
    %61 = arith.addf %57, %60 : vector<256x128xf32>
    %c0_43 = arith.constant 0 : index
    %c0_44 = arith.constant 0 : index
    %62 = vector.load %arg12[%c0_43, %c0_44] : memref<1x128xf32, #tpu.memory_space<vmem>>, vector<1x128xf32>
    %63 = vector.broadcast %62 : vector<1x128xf32> to vector<256x128xf32>
    %64 = arith.addf %61, %63 : vector<256x128xf32>
    %cst_45 = arith.constant 0.000000e+00 : f32
    %65 = vector.broadcast %cst_45 : f32 to vector<256x128xf32>
    %66 = arith.maximumf %64, %65 : vector<256x128xf32>
    %67 = vector.broadcast %4 : vector<1x128xf32> to vector<256x128xf32>
    %68 = arith.addf %66, %67 : vector<256x128xf32>
    %cst_46 = arith.constant 0.699999988 : f32
    %69 = vector.broadcast %cst_46 : f32 to vector<256x128xf32>
    %70 = arith.mulf %69, %53 : vector<256x128xf32>
    %71 = arith.addf %68, %70 : vector<256x128xf32>
    %c0_47 = arith.constant 0 : index
    %c0_48 = arith.constant 0 : index
    %72 = vector.load %arg16[%c0_47, %c0_48] : memref<1x128xf32, #tpu.memory_space<vmem>>, vector<1x128xf32>
    %cst_49 = arith.constant dense<0.000000e+00> : vector<256x128xf32>
    %73 = tpu.matmul %1, %71, %cst_49 {dimension_numbers = #tpu.dot_dimension_numbers<[1], [0], [0], [1], [0, 0, 1, 1], [], []>} : vector<256x256xf32>, vector<256x128xf32>, vector<256x128xf32> -> vector<256x128xf32>
    %74 = arith.truncf %71 : vector<256x128xf32> to vector<256x128xbf16>
    %c0_50 = arith.constant 0 : index
    %c0_51 = arith.constant 0 : index
    %75 = vector.load %arg7[%c0_50, %c0_51] : memref<256x128xbf16, #tpu.memory_space<vmem>>, vector<128x128xbf16>
    %cst_52 = arith.constant dense<0.000000e+00> : vector<256x128xf32>
    %76 = tpu.matmul %74, %75, %cst_52 {dimension_numbers = #tpu.dot_dimension_numbers<[1], [0], [0], [1], [0, 0, 1, 1], [], []>} : vector<256x128xbf16>, vector<128x128xbf16>, vector<256x128xf32> -> vector<256x128xf32>
    %77 = arith.truncf %73 : vector<256x128xf32> to vector<256x128xbf16>
    %c128_53 = arith.constant 128 : index
    %c0_54 = arith.constant 0 : index
    %78 = vector.load %arg7[%c128_53, %c0_54] : memref<256x128xbf16, #tpu.memory_space<vmem>>, vector<128x128xbf16>
    %cst_55 = arith.constant dense<0.000000e+00> : vector<256x128xf32>
    %79 = tpu.matmul %77, %78, %cst_55 {dimension_numbers = #tpu.dot_dimension_numbers<[1], [0], [0], [1], [0, 0, 1, 1], [], []>} : vector<256x128xbf16>, vector<128x128xbf16>, vector<256x128xf32> -> vector<256x128xf32>
    %80 = arith.addf %76, %79 : vector<256x128xf32>
    %c0_56 = arith.constant 0 : index
    %c0_57 = arith.constant 0 : index
    %81 = vector.load %arg13[%c0_56, %c0_57] : memref<1x128xf32, #tpu.memory_space<vmem>>, vector<1x128xf32>
    %82 = vector.broadcast %81 : vector<1x128xf32> to vector<256x128xf32>
    %83 = arith.addf %80, %82 : vector<256x128xf32>
    %cst_58 = arith.constant 0.000000e+00 : f32
    %84 = vector.broadcast %cst_58 : f32 to vector<256x128xf32>
    %85 = arith.maximumf %83, %84 : vector<256x128xf32>
    %86 = vector.broadcast %72 : vector<1x128xf32> to vector<256x128xf32>
    %87 = arith.addf %85, %86 : vector<256x128xf32>
    %c0_59 = arith.constant 0 : index
    %c0_60 = arith.constant 0 : index
    %88 = vector.load %arg17[%c0_59, %c0_60] : memref<1x128xf32, #tpu.memory_space<vmem>>, vector<1x128xf32>
    %cst_61 = arith.constant dense<0.000000e+00> : vector<256x128xf32>
    %89 = tpu.matmul %1, %87, %cst_61 {dimension_numbers = #tpu.dot_dimension_numbers<[1], [0], [0], [1], [0, 0, 1, 1], [], []>} : vector<256x256xf32>, vector<256x128xf32>, vector<256x128xf32> -> vector<256x128xf32>
    %90 = arith.truncf %87 : vector<256x128xf32> to vector<256x128xbf16>
    %c0_62 = arith.constant 0 : index
    %c0_63 = arith.constant 0 : index
    %91 = vector.load %arg8[%c0_62, %c0_63] : memref<256x128xbf16, #tpu.memory_space<vmem>>, vector<128x128xbf16>
    %cst_64 = arith.constant dense<0.000000e+00> : vector<256x128xf32>
    %92 = tpu.matmul %90, %91, %cst_64 {dimension_numbers = #tpu.dot_dimension_numbers<[1], [0], [0], [1], [0, 0, 1, 1], [], []>} : vector<256x128xbf16>, vector<128x128xbf16>, vector<256x128xf32> -> vector<256x128xf32>
    %93 = arith.truncf %89 : vector<256x128xf32> to vector<256x128xbf16>
    %c128_65 = arith.constant 128 : index
    %c0_66 = arith.constant 0 : index
    %94 = vector.load %arg8[%c128_65, %c0_66] : memref<256x128xbf16, #tpu.memory_space<vmem>>, vector<128x128xbf16>
    %cst_67 = arith.constant dense<0.000000e+00> : vector<256x128xf32>
    %95 = tpu.matmul %93, %94, %cst_67 {dimension_numbers = #tpu.dot_dimension_numbers<[1], [0], [0], [1], [0, 0, 1, 1], [], []>} : vector<256x128xbf16>, vector<128x128xbf16>, vector<256x128xf32> -> vector<256x128xf32>
    %96 = arith.addf %92, %95 : vector<256x128xf32>
    %c0_68 = arith.constant 0 : index
    %c0_69 = arith.constant 0 : index
    %97 = vector.load %arg14[%c0_68, %c0_69] : memref<1x128xf32, #tpu.memory_space<vmem>>, vector<1x128xf32>
    %98 = vector.broadcast %97 : vector<1x128xf32> to vector<256x128xf32>
    %99 = arith.addf %96, %98 : vector<256x128xf32>
    %cst_70 = arith.constant 0.000000e+00 : f32
    %100 = vector.broadcast %cst_70 : f32 to vector<256x128xf32>
    %101 = arith.maximumf %99, %100 : vector<256x128xf32>
    %102 = vector.broadcast %88 : vector<1x128xf32> to vector<256x128xf32>
    %103 = arith.addf %101, %102 : vector<256x128xf32>
    %104 = tpu.transpose %103, [1, 0] : vector<256x128xf32> -> vector<128x256xf32>
    %c0_71 = arith.constant 0 : index
    %c0_72 = arith.constant 0 : index
    %105 = vector.load %arg19[%c0_71, %c0_72] : memref<1x128xf32, #tpu.memory_space<vmem>>, vector<1x128xf32>
    %106 = vector.extract_strided_slice %104 {offsets = [0, 0], sizes = [1, 256], strides = [1, 1]} : vector<128x256xf32> to vector<1x256xf32>
    %c0_73 = arith.constant 0 : index
    %c0_74 = arith.constant 0 : index
    %c0_75 = arith.constant 0 : index
    %107 = vector.load %arg18[%c0_73, %c0_74, %c0_75] : memref<8x256x128xf32, #tpu.memory_space<vmem>>, vector<1x256x128xf32>
    %108 = vector.shape_cast %107 : vector<1x256x128xf32> to vector<256x128xf32>
    %cst_76 = arith.constant dense<0.000000e+00> : vector<1x128xf32>
    %109 = tpu.matmul %106, %108, %cst_76 {dimension_numbers = #tpu.dot_dimension_numbers<[1], [0], [0], [1], [0, 0, 1, 1], [], []>} : vector<1x256xf32>, vector<256x128xf32>, vector<1x128xf32> -> vector<1x128xf32>
    %110 = arith.addf %105, %109 : vector<1x128xf32>
    %111 = vector.extract_strided_slice %104 {offsets = [1, 0], sizes = [1, 256], strides = [1, 1]} : vector<128x256xf32> to vector<1x256xf32>
    %c1 = arith.constant 1 : index
    %c0_77 = arith.constant 0 : index
    %c0_78 = arith.constant 0 : index
    %112 = vector.load %arg18[%c1, %c0_77, %c0_78] : memref<8x256x128xf32, #tpu.memory_space<vmem>>, vector<1x256x128xf32>
    %113 = vector.shape_cast %112 : vector<1x256x128xf32> to vector<256x128xf32>
    %cst_79 = arith.constant dense<0.000000e+00> : vector<1x128xf32>
    %114 = tpu.matmul %111, %113, %cst_79 {dimension_numbers = #tpu.dot_dimension_numbers<[1], [0], [0], [1], [0, 0, 1, 1], [], []>} : vector<1x256xf32>, vector<256x128xf32>, vector<1x128xf32> -> vector<1x128xf32>
    %115 = arith.addf %110, %114 : vector<1x128xf32>
    %116 = vector.extract_strided_slice %104 {offsets = [2, 0], sizes = [1, 256], strides = [1, 1]} : vector<128x256xf32> to vector<1x256xf32>
    %c2 = arith.constant 2 : index
    %c0_80 = arith.constant 0 : index
    %c0_81 = arith.constant 0 : index
    %117 = vector.load %arg18[%c2, %c0_80, %c0_81] : memref<8x256x128xf32, #tpu.memory_space<vmem>>, vector<1x256x128xf32>
    %118 = vector.shape_cast %117 : vector<1x256x128xf32> to vector<256x128xf32>
    %cst_82 = arith.constant dense<0.000000e+00> : vector<1x128xf32>
    %119 = tpu.matmul %116, %118, %cst_82 {dimension_numbers = #tpu.dot_dimension_numbers<[1], [0], [0], [1], [0, 0, 1, 1], [], []>} : vector<1x256xf32>, vector<256x128xf32>, vector<1x128xf32> -> vector<1x128xf32>
    %120 = arith.addf %115, %119 : vector<1x128xf32>
    %121 = vector.extract_strided_slice %104 {offsets = [3, 0], sizes = [1, 256], strides = [1, 1]} : vector<128x256xf32> to vector<1x256xf32>
    %c3 = arith.constant 3 : index
    %c0_83 = arith.constant 0 : index
    %c0_84 = arith.constant 0 : index
    %122 = vector.load %arg18[%c3, %c0_83, %c0_84] : memref<8x256x128xf32, #tpu.memory_space<vmem>>, vector<1x256x128xf32>
    %123 = vector.shape_cast %122 : vector<1x256x128xf32> to vector<256x128xf32>
    %cst_85 = arith.constant dense<0.000000e+00> : vector<1x128xf32>
    %124 = tpu.matmul %121, %123, %cst_85 {dimension_numbers = #tpu.dot_dimension_numbers<[1], [0], [0], [1], [0, 0, 1, 1], [], []>} : vector<1x256xf32>, vector<256x128xf32>, vector<1x128xf32> -> vector<1x128xf32>
    %125 = arith.addf %120, %124 : vector<1x128xf32>
    %126 = vector.extract_strided_slice %104 {offsets = [4, 0], sizes = [1, 256], strides = [1, 1]} : vector<128x256xf32> to vector<1x256xf32>
    %c4 = arith.constant 4 : index
    %c0_86 = arith.constant 0 : index
    %c0_87 = arith.constant 0 : index
    %127 = vector.load %arg18[%c4, %c0_86, %c0_87] : memref<8x256x128xf32, #tpu.memory_space<vmem>>, vector<1x256x128xf32>
    %128 = vector.shape_cast %127 : vector<1x256x128xf32> to vector<256x128xf32>
    %cst_88 = arith.constant dense<0.000000e+00> : vector<1x128xf32>
    %129 = tpu.matmul %126, %128, %cst_88 {dimension_numbers = #tpu.dot_dimension_numbers<[1], [0], [0], [1], [0, 0, 1, 1], [], []>} : vector<1x256xf32>, vector<256x128xf32>, vector<1x128xf32> -> vector<1x128xf32>
    %130 = arith.addf %125, %129 : vector<1x128xf32>
    %131 = vector.extract_strided_slice %104 {offsets = [5, 0], sizes = [1, 256], strides = [1, 1]} : vector<128x256xf32> to vector<1x256xf32>
    %c5 = arith.constant 5 : index
    %c0_89 = arith.constant 0 : index
    %c0_90 = arith.constant 0 : index
    %132 = vector.load %arg18[%c5, %c0_89, %c0_90] : memref<8x256x128xf32, #tpu.memory_space<vmem>>, vector<1x256x128xf32>
    %133 = vector.shape_cast %132 : vector<1x256x128xf32> to vector<256x128xf32>
    %cst_91 = arith.constant dense<0.000000e+00> : vector<1x128xf32>
    %134 = tpu.matmul %131, %133, %cst_91 {dimension_numbers = #tpu.dot_dimension_numbers<[1], [0], [0], [1], [0, 0, 1, 1], [], []>} : vector<1x256xf32>, vector<256x128xf32>, vector<1x128xf32> -> vector<1x128xf32>
    %135 = arith.addf %130, %134 : vector<1x128xf32>
    %136 = vector.extract_strided_slice %104 {offsets = [6, 0], sizes = [1, 256], strides = [1, 1]} : vector<128x256xf32> to vector<1x256xf32>
    %c6 = arith.constant 6 : index
    %c0_92 = arith.constant 0 : index
    %c0_93 = arith.constant 0 : index
    %137 = vector.load %arg18[%c6, %c0_92, %c0_93] : memref<8x256x128xf32, #tpu.memory_space<vmem>>, vector<1x256x128xf32>
    %138 = vector.shape_cast %137 : vector<1x256x128xf32> to vector<256x128xf32>
    %cst_94 = arith.constant dense<0.000000e+00> : vector<1x128xf32>
    %139 = tpu.matmul %136, %138, %cst_94 {dimension_numbers = #tpu.dot_dimension_numbers<[1], [0], [0], [1], [0, 0, 1, 1], [], []>} : vector<1x256xf32>, vector<256x128xf32>, vector<1x128xf32> -> vector<1x128xf32>
    %140 = arith.addf %135, %139 : vector<1x128xf32>
    %141 = vector.extract_strided_slice %104 {offsets = [7, 0], sizes = [1, 256], strides = [1, 1]} : vector<128x256xf32> to vector<1x256xf32>
    %c7 = arith.constant 7 : index
    %c0_95 = arith.constant 0 : index
    %c0_96 = arith.constant 0 : index
    %142 = vector.load %arg18[%c7, %c0_95, %c0_96] : memref<8x256x128xf32, #tpu.memory_space<vmem>>, vector<1x256x128xf32>
    %143 = vector.shape_cast %142 : vector<1x256x128xf32> to vector<256x128xf32>
    %cst_97 = arith.constant dense<0.000000e+00> : vector<1x128xf32>
    %144 = tpu.matmul %141, %143, %cst_97 {dimension_numbers = #tpu.dot_dimension_numbers<[1], [0], [0], [1], [0, 0, 1, 1], [], []>} : vector<1x256xf32>, vector<256x128xf32>, vector<1x128xf32> -> vector<1x128xf32>
    %145 = arith.addf %140, %144 : vector<1x128xf32>
    %c0_98 = arith.constant 0 : index
    %c0_99 = arith.constant 0 : index
    %c0_100 = arith.constant 0 : index
    %146 = vector.load %arg20[%c0_98, %c0_99, %c0_100] : memref<1x1x128xf32, #tpu.memory_space<vmem>>, vector<1x1x128xf32>
    %147 = vector.shape_cast %146 : vector<1x1x128xf32> to vector<1x128xf32>
    %148 = vector.shape_cast %145 : vector<1x128xf32> to vector<1x1x128xf32>
    tpu.vector_store %arg20[%c0_98, %c0_99, %c0_100], %148 {strides = array<i32>} : memref<1x1x128xf32, #tpu.memory_space<vmem>>, vector<1x1x128xf32>,
    return
  }
  func.func @transform_0(%arg0: i32) -> (i32, i32, i32) {
    %c0_i32 = arith.constant 0 : i32
    %c0_i32_0 = arith.constant 0 : i32
    %c0_i32_1 = arith.constant 0 : i32
    return %arg0, %c0_i32, %c0_i32_0 : i32, i32, i32
  }
  func.func @transform_1(%arg0: i32) -> (i32, i32, i32) {
    %c0_i32 = arith.constant 0 : i32
    %c0_i32_0 = arith.constant 0 : i32
    %c0_i32_1 = arith.constant 0 : i32
    return %arg0, %c0_i32, %c0_i32_0 : i32, i32, i32
  }
  func.func @transform_2(%arg0: i32) -> (i32, i32) {
    %c0_i32 = arith.constant 0 : i32
    %c0_i32_0 = arith.constant 0 : i32
    %c0_i32_1 = arith.constant 0 : i32
    return %c0_i32, %c0_i32_0 : i32, i32
  }
  func.func @transform_3(%arg0: i32) -> (i32, i32) {
    %c0_i32 = arith.constant 0 : i32
    %c0_i32_0 = arith.constant 0 : i32
    %c0_i32_1 = arith.constant 0 : i32
    return %c0_i32, %c0_i32_0 : i32, i32
  }
  func.func @transform_4(%arg0: i32) -> (i32, i32) {
    %c0_i32 = arith.constant 0 : i32
    %c0_i32_0 = arith.constant 0 : i32
    %c0_i32_1 = arith.constant 0 : i32
    return %c0_i32, %c0_i32_0 : i32, i32
  }
  func.func @transform_5(%arg0: i32) -> (i32, i32) {
    %c0_i32 = arith.constant 0 : i32
    %c0_i32_0 = arith.constant 0 : i32
    %c0_i32_1 = arith.constant 0 : i32
    return %c0_i32, %c0_i32_0 : i32, i32
  }
  func.func @transform_6(%arg0: i32) -> (i32, i32) {
    %c0_i32 = arith.constant 0 : i32
    %c0_i32_0 = arith.constant 0 : i32
    %c0_i32_1 = arith.constant 0 : i32
    return %c0_i32, %c0_i32_0 : i32, i32
  }
  func.func @transform_7(%arg0: i32) -> (i32, i32) {
    %c0_i32 = arith.constant 0 : i32
    %c0_i32_0 = arith.constant 0 : i32
    %c0_i32_1 = arith.constant 0 : i32
    return %c0_i32, %c0_i32_0 : i32, i32
  }
  func.func @transform_8(%arg0: i32) -> (i32, i32) {
    %c0_i32 = arith.constant 0 : i32
    %c0_i32_0 = arith.constant 0 : i32
    %c0_i32_1 = arith.constant 0 : i32
    return %c0_i32, %c0_i32_0 : i32, i32
  }
  func.func @transform_9(%arg0: i32) -> (i32, i32) {
    %c0_i32 = arith.constant 0 : i32
    %c0_i32_0 = arith.constant 0 : i32
    %c0_i32_1 = arith.constant 0 : i32
    return %c0_i32, %c0_i32_0 : i32, i32
  }
  func.func @transform_10(%arg0: i32) -> (i32, i32) {
    %c0_i32 = arith.constant 0 : i32
    %c0_i32_0 = arith.constant 0 : i32
    %c0_i32_1 = arith.constant 0 : i32
    return %c0_i32, %c0_i32_0 : i32, i32
  }
  func.func @transform_11(%arg0: i32) -> (i32, i32) {
    %c0_i32 = arith.constant 0 : i32
    %c0_i32_0 = arith.constant 0 : i32
    %c0_i32_1 = arith.constant 0 : i32
    return %c0_i32, %c0_i32_0 : i32, i32
  }
  func.func @transform_12(%arg0: i32) -> (i32, i32) {
    %c0_i32 = arith.constant 0 : i32
    %c0_i32_0 = arith.constant 0 : i32
    %c0_i32_1 = arith.constant 0 : i32
    return %c0_i32, %c0_i32_0 : i32, i32
  }
  func.func @transform_13(%arg0: i32) -> (i32, i32) {
    %c0_i32 = arith.constant 0 : i32
    %c0_i32_0 = arith.constant 0 : i32
    %c0_i32_1 = arith.constant 0 : i32
    return %c0_i32, %c0_i32_0 : i32, i32
  }
  func.func @transform_14(%arg0: i32) -> (i32, i32) {
    %c0_i32 = arith.constant 0 : i32
    %c0_i32_0 = arith.constant 0 : i32
    %c0_i32_1 = arith.constant 0 : i32
    return %c0_i32, %c0_i32_0 : i32, i32
  }
  func.func @transform_15(%arg0: i32) -> (i32, i32) {
    %c0_i32 = arith.constant 0 : i32
    %c0_i32_0 = arith.constant 0 : i32
    %c0_i32_1 = arith.constant 0 : i32
    return %c0_i32, %c0_i32_0 : i32, i32
  }
  func.func @transform_16(%arg0: i32) -> (i32, i32) {
    %c0_i32 = arith.constant 0 : i32
    %c0_i32_0 = arith.constant 0 : i32
    %c0_i32_1 = arith.constant 0 : i32
    return %c0_i32, %c0_i32_0 : i32, i32
  }
  func.func @transform_17(%arg0: i32) -> (i32, i32, i32) {
    %c0_i32 = arith.constant 0 : i32
    %c0_i32_0 = arith.constant 0 : i32
    %c0_i32_1 = arith.constant 0 : i32
    %c0_i32_2 = arith.constant 0 : i32
    return %c0_i32, %c0_i32_0, %c0_i32_1 : i32, i32, i32
  }
  func.func @transform_18(%arg0: i32) -> (i32, i32) {
    %c0_i32 = arith.constant 0 : i32
    %c0_i32_0 = arith.constant 0 : i32
    %c0_i32_1 = arith.constant 0 : i32
    return %c0_i32, %c0_i32_0 : i32, i32
  }
  func.func @transform_19(%arg0: i32) -> (i32, i32, i32) {
    %c0_i32 = arith.constant 0 : i32
    %c0_i32_0 = arith.constant 0 : i32
    %c0_i32_1 = arith.constant 0 : i32
    return %arg0, %c0_i32, %c0_i32_0 : i32, i32, i32
  }
}

</mosaic_0001>

<llo_original>
// kernel: chebnet_forward.1
$region0: #{chebnet_forward.1}
  #allocation0 [shape = 'u32[]', space=smem, size = 0x4, offset = 0x4, fixed_abs, tag = 'smem constant byte address 0x4 - core index']
  #allocation1 [shape = 'u32[144,128]{1,0:T(1,128)}', space=vmem, size = 0x12000, scoped, tag = 'internal scratch']
  %s0 = inlined_call_operand.vmem [shape: f32[2,256,256], index: 0, kind: input, shape index: {}]
  %s1 = inlined_call_operand.vmem [shape: bf16[2,256,256], index: 1, kind: input, shape index: {}]
  %s2 = inlined_call_operand.vmem [shape: bf16[512,128], index: 2, kind: input, shape index: {}]
  %s3 = inlined_call_operand.vmem [shape: bf16[256,128], index: 3, kind: input, shape index: {}]
  %s4 = inlined_call_operand.vmem [shape: bf16[256,128], index: 4, kind: input, shape index: {}]
  %s5 = inlined_call_operand.vmem [shape: bf16[256,128], index: 5, kind: input, shape index: {}]
  %s6 = inlined_call_operand.vmem [shape: bf16[256,128], index: 6, kind: input, shape index: {}]
  %s7 = inlined_call_operand.vmem [shape: bf16[256,128], index: 7, kind: input, shape index: {}]
  %s8 = inlined_call_operand.vmem [shape: f32[1,128], index: 8, kind: input, shape index: {}]
  %s9 = inlined_call_operand.vmem [shape: f32[1,128], index: 9, kind: input, shape index: {}]
  %s10 = inlined_call_operand.vmem [shape: f32[1,128], index: 10, kind: input, shape index: {}]
  %s11 = inlined_call_operand.vmem [shape: f32[1,128], index: 11, kind: input, shape index: {}]
  %s12 = inlined_call_operand.vmem [shape: f32[1,128], index: 12, kind: input, shape index: {}]
  %s13 = inlined_call_operand.vmem [shape: f32[1,128], index: 13, kind: input, shape index: {}]
  %s14 = inlined_call_operand.vmem [shape: f32[1,128], index: 14, kind: input, shape index: {}]
  %s15 = inlined_call_operand.vmem [shape: f32[1,128], index: 15, kind: input, shape index: {}]
  %s16 = inlined_call_operand.vmem [shape: f32[1,128], index: 16, kind: input, shape index: {}]
  %s17 = inlined_call_operand.vmem [shape: f32[8,256,128], index: 17, kind: input, shape index: {}]
  %s18 = inlined_call_operand.vmem [shape: f32[1,128], index: 18, kind: input, shape index: {}]
  %s19 = inlined_call_operand.hbm [shape: f32[2,1,128], index: 19, kind: output, shape index: {}]
  %s20 = sld [smem:[#allocation0]]
  $region109: #{chebnet_forward.1} parent=0
    _
  %s22 = ssub.s32 1, %s20
  %s23 = scalar_select 0, %s22, %s20
  $region1: #{chebnet_forward.1} parent=0
    #allocation2 [shape = 'u8[1024]{0}', space=vmem, size = 0x400, scoped, tag = 'output window, operand 0']
    #allocation3 [shape = 's32[2]{0}', space=sflag, size = 0x8, scoped, tag = 'scoped memory for chebnet_forward.1']
    %24 = vsyncpa [#allocation3], 0
    %s25 = scalar_lea.sflag [#allocation3], 1
    %26 = vsyncpa %s25, 0
    loop: start=0, step=1, limit=4
    $region2: #{chebnet_forward.1} parent=1 // loop_pre_header
      _
    $region3: #{chebnet_forward.1} parent=1 // loop_header
      %s28 = sphi 0, %s32
      %p29 = scmp.ge.s32.totalorder %s28, 4
      %s38 = sphi 0, %s40
      %s41 = sphi 0, %s38
      %s42 = sphi 0, %s41
      %s58 = sphi 0, %s42
      %s64 = sphi 0, %s66
      %s67 = sphi 0, %s64
      %s68 = sphi 0, %s67
      %s84 = sphi 0, %s68
      %s88 = sphi 0, %s88
      %s90 = sphi 0, %s88
      %s91 = sphi 0, %s90
      %s105 = sphi 0, %s91
      %s109 = sphi 0, %s109
      %s111 = sphi 0, %s109
      %s112 = sphi 0, %s111
      %s126 = sphi 0, %s112
      %s130 = sphi 0, %s130
      %s132 = sphi 0, %s130
      %s133 = sphi 0, %s132
      %s147 = sphi 0, %s133
      %s151 = sphi 0, %s151
      %s153 = sphi 0, %s151
      %s154 = sphi 0, %s153
      %s168 = sphi 0, %s154
      %s172 = sphi 0, %s172
      %s174 = sphi 0, %s172
      %s175 = sphi 0, %s174
      %s189 = sphi 0, %s175
      %s193 = sphi 0, %s193
      %s195 = sphi 0, %s193
      %s196 = sphi 0, %s195
      %s210 = sphi 0, %s196
      %s214 = sphi 0, %s214
      %s216 = sphi 0, %s214
      %s217 = sphi 0, %s216
      %s231 = sphi 0, %s217
      %s235 = sphi 0, %s235
      %s237 = sphi 0, %s235
      %s238 = sphi 0, %s237
      %s252 = sphi 0, %s238
      %s256 = sphi 0, %s256
      %s258 = sphi 0, %s256
      %s259 = sphi 0, %s258
      %s273 = sphi 0, %s259
      %s277 = sphi 0, %s277
      %s279 = sphi 0, %s277
      %s280 = sphi 0, %s279
      %s294 = sphi 0, %s280
      %s298 = sphi 0, %s298
      %s300 = sphi 0, %s298
      %s301 = sphi 0, %s300
      %s315 = sphi 0, %s301
      %s319 = sphi 0, %s319
      %s321 = sphi 0, %s319
      %s322 = sphi 0, %s321
      %s336 = sphi 0, %s322
      %s340 = sphi 0, %s340
      %s342 = sphi 0, %s340
      %s343 = sphi 0, %s342
      %s357 = sphi 0, %s343
      %s361 = sphi 0, %s361
      %s363 = sphi 0, %s361
      %s364 = sphi 0, %s363
      %s378 = sphi 0, %s364
      %s382 = sphi 0, %s382
      %s384 = sphi 0, %s382
      %s385 = sphi 0, %s384
      %s399 = sphi 0, %s385
      %s403 = sphi 0, %s403
      %s405 = sphi 0, %s403
      %s406 = sphi 0, %s405
      %s420 = sphi 0, %s406
      %s424 = sphi 0, %s424
      %s426 = sphi 0, %s424
      %s427 = sphi 0, %s426
      %s441 = sphi 0, %s427
      %s447 = sphi 0, %s449
      %s450 = sphi 0, %s447
      %s451 = sphi 0, %s450
      %s467 = sphi 0, %s451
    $region4: #{chebnet_forward.1} parent=1 // loop_header_branch
      %31 = sbr.rel (%p29) target = $region8
    $region5: #{chebnet_forward.1} parent=1 // loop_body
      %s33 = ssub.s32 %s28, 1
      %s34 = ssub.s32 %s28, 2
      %s35 = sadd.s32 %s28, 1
      %s36 = ssub.s32 %s28, %s35
      %p37 = scmp.eq.s32.totalorder %s36, 0
      %s39 = sadd.s32 %s38, 1
      %s40 = scalar_select %p37, %s38, %s39
      %p43 = pneg %p37
      %p44 = scmp.eq.s32.totalorder %s28, 1
      %p45 = por %p43, %p44
      %p46 = scmp.ne.s32.totalorder %s38, %s41
      %p47 = scmp.eq.s32.totalorder %s28, 0
      %p48 = por %p46, %p47
      %p49 = scmp.ne.s32.totalorder %s38, %s41
      %p50 = scmp.eq.s32.totalorder %s33, 1
      %p51 = por %p49, %p50
      %p52 = scmp.ne.s32.totalorder %s41, %s42
      %p53 = scmp.eq.s32.totalorder %s33, 0
      %p54 = por %p52, %p53
      %p55 = scmp.ne.s32.totalorder %s41, %s42
      %p56 = scmp.eq.s32.totalorder %s34, 1
      %p57 = por %p55, %p56
      %p59 = scmp.ne.s32.totalorder %s42, %s58
      %p60 = scmp.eq.s32.totalorder %s34, 0
      %p61 = por %p59, %p60
      %s62 = ssub.s32 %s28, %s35
      %p63 = scmp.eq.s32.totalorder %s62, 0
      %s65 = sadd.s32 %s64, 1
      %s66 = scalar_select %p63, %s64, %s65
      %p69 = pneg %p63
      %p70 = scmp.eq.s32.totalorder %s28, 1
      %p71 = por %p69, %p70
      %p72 = scmp.ne.s32.totalorder %s64, %s67
      %p73 = scmp.eq.s32.totalorder %s28, 0
      %p74 = por %p72, %p73
      %p75 = scmp.ne.s32.totalorder %s64, %s67
      %p76 = scmp.eq.s32.totalorder %s33, 1
      %p77 = por %p75, %p76
      %p78 = scmp.ne.s32.totalorder %s67, %s68
      %p79 = scmp.eq.s32.totalorder %s33, 0
      %p80 = por %p78, %p79
      %p81 = scmp.ne.s32.totalorder %s67, %s68
      %p82 = scmp.eq.s32.totalorder %s34, 1
      %p83 = por %p81, %p82
      %p85 = scmp.ne.s32.totalorder %s68, %s84
      %p86 = scmp.eq.s32.totalorder %s34, 0
      %p87 = por %p85, %p86
      %s89 = sadd.s32 %s88, 1
      %p92 = scmp.eq.s32.totalorder %s28, 1
      %p93 = scmp.ne.s32.totalorder %s88, %s90
      %p94 = scmp.eq.s32.totalorder %s28, 0
      %p95 = por %p93, %p94
      %p96 = scmp.ne.s32.totalorder %s88, %s90
      %p97 = scmp.eq.s32.totalorder %s33, 1
      %p98 = por %p96, %p97
      %p99 = scmp.ne.s32.totalorder %s90, %s91
      %p100 = scmp.eq.s32.totalorder %s33, 0
      %p101 = por %p99, %p100
      %p102 = scmp.ne.s32.totalorder %s90, %s91
      %p103 = scmp.eq.s32.totalorder %s34, 1
      %p104 = por %p102, %p103
      %p106 = scmp.ne.s32.totalorder %s91, %s105
      %p107 = scmp.eq.s32.totalorder %s34, 0
      %p108 = por %p106, %p107
      %s110 = sadd.s32 %s109, 1
      %p113 = scmp.eq.s32.totalorder %s28, 1
      %p114 = scmp.ne.s32.totalorder %s109, %s111
      %p115 = scmp.eq.s32.totalorder %s28, 0
      %p116 = por %p114, %p115
      %p117 = scmp.ne.s32.totalorder %s109, %s111
      %p118 = scmp.eq.s32.totalorder %s33, 1
      %p119 = por %p117, %p118
      %p120 = scmp.ne.s32.totalorder %s111, %s112
      %p121 = scmp.eq.s32.totalorder %s33, 0
      %p122 = por %p120, %p121
      %p123 = scmp.ne.s32.totalorder %s111, %s112
      %p124 = scmp.eq.s32.totalorder %s34, 1
      %p125 = por %p123, %p124
      %p127 = scmp.ne.s32.totalorder %s112, %s126
      %p128 = scmp.eq.s32.totalorder %s34, 0
      %p129 = por %p127, %p128
      %s131 = sadd.s32 %s130, 1
      %p134 = scmp.eq.s32.totalorder %s28, 1
      %p135 = scmp.ne.s32.totalorder %s130, %s132
      %p136 = scmp.eq.s32.totalorder %s28, 0
      %p137 = por %p135, %p136
      %p138 = scmp.ne.s32.totalorder %s130, %s132
      %p139 = scmp.eq.s32.totalorder %s33, 1
      %p140 = por %p138, %p139
      %p141 = scmp.ne.s32.totalorder %s132, %s133
      %p142 = scmp.eq.s32.totalorder %s33, 0
      %p143 = por %p141, %p142
      %p144 = scmp.ne.s32.totalorder %s132, %s133
      %p145 = scmp.eq.s32.totalorder %s34, 1
      %p146 = por %p144, %p145
      %p148 = scmp.ne.s32.totalorder %s133, %s147
      %p149 = scmp.eq.s32.totalorder %s34, 0
      %p150 = por %p148, %p149
      %s152 = sadd.s32 %s151, 1
      %p155 = scmp.eq.s32.totalorder %s28, 1
      %p156 = scmp.ne.s32.totalorder %s151, %s153
      %p157 = scmp.eq.s32.totalorder %s28, 0
      %p158 = por %p156, %p157
      %p159 = scmp.ne.s32.totalorder %s151, %s153
      %p160 = scmp.eq.s32.totalorder %s33, 1
      %p161 = por %p159, %p160
      %p162 = scmp.ne.s32.totalorder %s153, %s154
      %p163 = scmp.eq.s32.totalorder %s33, 0
      %p164 = por %p162, %p163
      %p165 = scmp.ne.s32.totalorder %s153, %s154
      %p166 = scmp.eq.s32.totalorder %s34, 1
      %p167 = por %p165, %p166
      %p169 = scmp.ne.s32.totalorder %s154, %s168
      %p170 = scmp.eq.s32.totalorder %s34, 0
      %p171 = por %p169, %p170
      %s173 = sadd.s32 %s172, 1
      %p176 = scmp.eq.s32.totalorder %s28, 1
      %p177 = scmp.ne.s32.totalorder %s172, %s174
      %p178 = scmp.eq.s32.totalorder %s28, 0
      %p179 = por %p177, %p178
      %p180 = scmp.ne.s32.totalorder %s172, %s174
      %p181 = scmp.eq.s32.totalorder %s33, 1
      %p182 = por %p180, %p181
      %p183 = scmp.ne.s32.totalorder %s174, %s175
      %p184 = scmp.eq.s32.totalorder %s33, 0
      %p185 = por %p183, %p184
      %p186 = scmp.ne.s32.totalorder %s174, %s175
      %p187 = scmp.eq.s32.totalorder %s34, 1
      %p188 = por %p186, %p187
      %p190 = scmp.ne.s32.totalorder %s175, %s189
      %p191 = scmp.eq.s32.totalorder %s34, 0
      %p192 = por %p190, %p191
      %s194 = sadd.s32 %s193, 1
      %p197 = scmp.eq.s32.totalorder %s28, 1
      %p198 = scmp.ne.s32.totalorder %s193, %s195
      %p199 = scmp.eq.s32.totalorder %s28, 0
      %p200 = por %p198, %p199
      %p201 = scmp.ne.s32.totalorder %s193, %s195
      %p202 = scmp.eq.s32.totalorder %s33, 1
      %p203 = por %p201, %p202
      %p204 = scmp.ne.s32.totalorder %s195, %s196
      %p205 = scmp.eq.s32.totalorder %s33, 0
      %p206 = por %p204, %p205
      %p207 = scmp.ne.s32.totalorder %s195, %s196
      %p208 = scmp.eq.s32.totalorder %s34, 1
      %p209 = por %p207, %p208
      %p211 = scmp.ne.s32.totalorder %s196, %s210
      %p212 = scmp.eq.s32.totalorder %s34, 0
      %p213 = por %p211, %p212
      %s215 = sadd.s32 %s214, 1
      %p218 = scmp.eq.s32.totalorder %s28, 1
      %p219 = scmp.ne.s32.totalorder %s214, %s216
      %p220 = scmp.eq.s32.totalorder %s28, 0
      %p221 = por %p219, %p220
      %p222 = scmp.ne.s32.totalorder %s214, %s216
      %p223 = scmp.eq.s32.totalorder %s33, 1
      %p224 = por %p222, %p223
      %p225 = scmp.ne.s32.totalorder %s216, %s217
      %p226 = scmp.eq.s32.totalorder %s33, 0
      %p227 = por %p225, %p226
      %p228 = scmp.ne.s32.totalorder %s216, %s217
      %p229 = scmp.eq.s32.totalorder %s34, 1
      %p230 = por %p228, %p229
      %p232 = scmp.ne.s32.totalorder %s217, %s231
      %p233 = scmp.eq.s32.totalorder %s34, 0
      %p234 = por %p232, %p233
      %s236 = sadd.s32 %s235, 1
      %p239 = scmp.eq.s32.totalorder %s28, 1
      %p240 = scmp.ne.s32.totalorder %s235, %s237
      %p241 = scmp.eq.s32.totalorder %s28, 0
      %p242 = por %p240, %p241
      %p243 = scmp.ne.s32.totalorder %s235, %s237
      %p244 = scmp.eq.s32.totalorder %s33, 1
      %p245 = por %p243, %p244
      %p246 = scmp.ne.s32.totalorder %s237, %s238
      %p247 = scmp.eq.s32.totalorder %s33, 0
      %p248 = por %p246, %p247
      %p249 = scmp.ne.s32.totalorder %s237, %s238
      %p250 = scmp.eq.s32.totalorder %s34, 1
      %p251 = por %p249, %p250
      %p253 = scmp.ne.s32.totalorder %s238, %s252
      %p254 = scmp.eq.s32.totalorder %s34, 0
      %p255 = por %p253, %p254
      %s257 = sadd.s32 %s256, 1
      %p260 = scmp.eq.s32.totalorder %s28, 1
      %p261 = scmp.ne.s32.totalorder %s256, %s258
      %p262 = scmp.eq.s32.totalorder %s28, 0
      %p263 = por %p261, %p262
      %p264 = scmp.ne.s32.totalorder %s256, %s258
      %p265 = scmp.eq.s32.totalorder %s33, 1
      %p266 = por %p264, %p265
      %p267 = scmp.ne.s32.totalorder %s258, %s259
      %p268 = scmp.eq.s32.totalorder %s33, 0
      %p269 = por %p267, %p268
      %p270 = scmp.ne.s32.totalorder %s258, %s259
      %p271 = scmp.eq.s32.totalorder %s34, 1
      %p272 = por %p270, %p271
      %p274 = scmp.ne.s32.totalorder %s259, %s273
      %p275 = scmp.eq.s32.totalorder %s34, 0
      %p276 = por %p274, %p275
      %s278 = sadd.s32 %s277, 1
      %p281 = scmp.eq.s32.totalorder %s28, 1
      %p282 = scmp.ne.s32.totalorder %s277, %s279
      %p283 = scmp.eq.s32.totalorder %s28, 0
      %p284 = por %p282, %p283
      %p285 = scmp.ne.s32.totalorder %s277, %s279
      %p286 = scmp.eq.s32.totalorder %s33, 1
      %p287 = por %p285, %p286
      %p288 = scmp.ne.s32.totalorder %s279, %s280
      %p289 = scmp.eq.s32.totalorder %s33, 0
      %p290 = por %p288, %p289
      %p291 = scmp.ne.s32.totalorder %s279, %s280
      %p292 = scmp.eq.s32.totalorder %s34, 1
      %p293 = por %p291, %p292
      %p295 = scmp.ne.s32.totalorder %s280, %s294
      %p296 = scmp.eq.s32.totalorder %s34, 0
      %p297 = por %p295, %p296
      %s299 = sadd.s32 %s298, 1
      %p302 = scmp.eq.s32.totalorder %s28, 1
      %p303 = scmp.ne.s32.totalorder %s298, %s300
      %p304 = scmp.eq.s32.totalorder %s28, 0
      %p305 = por %p303, %p304
      %p306 = scmp.ne.s32.totalorder %s298, %s300
      %p307 = scmp.eq.s32.totalorder %s33, 1
      %p308 = por %p306, %p307
      %p309 = scmp.ne.s32.totalorder %s300, %s301
      %p310 = scmp.eq.s32.totalorder %s33, 0
      %p311 = por %p309, %p310
      %p312 = scmp.ne.s32.totalorder %s300, %s301
      %p313 = scmp.eq.s32.totalorder %s34, 1
      %p314 = por %p312, %p313
      %p316 = scmp.ne.s32.totalorder %s301, %s315
      %p317 = scmp.eq.s32.totalorder %s34, 0
      %p318 = por %p316, %p317
      %s320 = sadd.s32 %s319, 1
      %p323 = scmp.eq.s32.totalorder %s28, 1
      %p324 = scmp.ne.s32.totalorder %s319, %s321
      %p325 = scmp.eq.s32.totalorder %s28, 0
      %p326 = por %p324, %p325
      %p327 = scmp.ne.s32.totalorder %s319, %s321
      %p328 = scmp.eq.s32.totalorder %s33, 1
      %p329 = por %p327, %p328
      %p330 = scmp.ne.s32.totalorder %s321, %s322
      %p331 = scmp.eq.s32.totalorder %s33, 0
      %p332 = por %p330, %p331
      %p333 = scmp.ne.s32.totalorder %s321, %s322
      %p334 = scmp.eq.s32.totalorder %s34, 1
      %p335 = por %p333, %p334
      %p337 = scmp.ne.s32.totalorder %s322, %s336
      %p338 = scmp.eq.s32.totalorder %s34, 0
      %p339 = por %p337, %p338
      %s341 = sadd.s32 %s340, 1
      %p344 = scmp.eq.s32.totalorder %s28, 1
      %p345 = scmp.ne.s32.totalorder %s340, %s342
      %p346 = scmp.eq.s32.totalorder %s28, 0
      %p347 = por %p345, %p346
      %p348 = scmp.ne.s32.totalorder %s340, %s342
      %p349 = scmp.eq.s32.totalorder %s33, 1
      %p350 = por %p348, %p349
      %p351 = scmp.ne.s32.totalorder %s342, %s343
      %p352 = scmp.eq.s32.totalorder %s33, 0
      %p353 = por %p351, %p352
      %p354 = scmp.ne.s32.totalorder %s342, %s343
      %p355 = scmp.eq.s32.totalorder %s34, 1
      %p356 = por %p354, %p355
      %p358 = scmp.ne.s32.totalorder %s343, %s357
      %p359 = scmp.eq.s32.totalorder %s34, 0
      %p360 = por %p358, %p359
      %s362 = sadd.s32 %s361, 1
      %p365 = scmp.eq.s32.totalorder %s28, 1
      %p366 = scmp.ne.s32.totalorder %s361, %s363
      %p367 = scmp.eq.s32.totalorder %s28, 0
      %p368 = por %p366, %p367
      %p369 = scmp.ne.s32.totalorder %s361, %s363
      %p370 = scmp.eq.s32.totalorder %s33, 1
      %p371 = por %p369, %p370
      %p372 = scmp.ne.s32.totalorder %s363, %s364
      %p373 = scmp.eq.s32.totalorder %s33, 0
      %p374 = por %p372, %p373
      %p375 = scmp.ne.s32.totalorder %s363, %s364
      %p376 = scmp.eq.s32.totalorder %s34, 1
      %p377 = por %p375, %p376
      %p379 = scmp.ne.s32.totalorder %s364, %s378
      %p380 = scmp.eq.s32.totalorder %s34, 0
      %p381 = por %p379, %p380
      %s383 = sadd.s32 %s382, 1
      %p386 = scmp.eq.s32.totalorder %s28, 1
      %p387 = scmp.ne.s32.totalorder %s382, %s384
      %p388 = scmp.eq.s32.totalorder %s28, 0
      %p389 = por %p387, %p388
      %p390 = scmp.ne.s32.totalorder %s382, %s384
      %p391 = scmp.eq.s32.totalorder %s33, 1
      %p392 = por %p390, %p391
      %p393 = scmp.ne.s32.totalorder %s384, %s385
      %p394 = scmp.eq.s32.totalorder %s33, 0
      %p395 = por %p393, %p394
      %p396 = scmp.ne.s32.totalorder %s384, %s385
      %p397 = scmp.eq.s32.totalorder %s34, 1
      %p398 = por %p396, %p397
      %p400 = scmp.ne.s32.totalorder %s385, %s399
      %p401 = scmp.eq.s32.totalorder %s34, 0
      %p402 = por %p400, %p401
      %s404 = sadd.s32 %s403, 1
      %p407 = scmp.eq.s32.totalorder %s28, 1
      %p408 = scmp.ne.s32.totalorder %s403, %s405
      %p409 = scmp.eq.s32.totalorder %s28, 0
      %p410 = por %p408, %p409
      %p411 = scmp.ne.s32.totalorder %s403, %s405
      %p412 = scmp.eq.s32.totalorder %s33, 1
      %p413 = por %p411, %p412
      %p414 = scmp.ne.s32.totalorder %s405, %s406
      %p415 = scmp.eq.s32.totalorder %s33, 0
      %p416 = por %p414, %p415
      %p417 = scmp.ne.s32.totalorder %s405, %s406
      %p418 = scmp.eq.s32.totalorder %s34, 1
      %p419 = por %p417, %p418
      %p421 = scmp.ne.s32.totalorder %s406, %s420
      %p422 = scmp.eq.s32.totalorder %s34, 0
      %p423 = por %p421, %p422
      %s425 = sadd.s32 %s424, 1
      %p428 = scmp.eq.s32.totalorder %s28, 1
      %p429 = scmp.ne.s32.totalorder %s424, %s426
      %p430 = scmp.eq.s32.totalorder %s28, 0
      %p431 = por %p429, %p430
      %p432 = scmp.ne.s32.totalorder %s424, %s426
      %p433 = scmp.eq.s32.totalorder %s33, 1
      %p434 = por %p432, %p433
      %p435 = scmp.ne.s32.totalorder %s426, %s427
      %p436 = scmp.eq.s32.totalorder %s33, 0
      %p437 = por %p435, %p436
      %p438 = scmp.ne.s32.totalorder %s426, %s427
      %p439 = scmp.eq.s32.totalorder %s34, 1
      %p440 = por %p438, %p439
      %p442 = scmp.ne.s32.totalorder %s427, %s441
      %p443 = scmp.eq.s32.totalorder %s34, 0
      %p444 = por %p442, %p443
      %s445 = ssub.s32 %s28, %s35
      %p446 = scmp.eq.s32.totalorder %s445, 0
      %s448 = sadd.s32 %s447, 1
      %s449 = scalar_select %p446, %s447, %s448
      %p452 = pneg %p446
      %p453 = scmp.eq.s32.totalorder %s28, 1
      %p454 = por %p452, %p453
      %p455 = scmp.ne.s32.totalorder %s447, %s450
      %p456 = scmp.eq.s32.totalorder %s28, 0
      %p457 = por %p455, %p456
      %p458 = scmp.ne.s32.totalorder %s447, %s450
      %p459 = scmp.eq.s32.totalorder %s33, 1
      %p460 = por %p458, %p459
      %p461 = scmp.ne.s32.totalorder %s450, %s451
      %p462 = scmp.eq.s32.totalorder %s33, 0
      %p463 = por %p461, %p462
      %p464 = scmp.ne.s32.totalorder %s450, %s451
      %p465 = scmp.eq.s32.totalorder %s34, 1
      %p466 = por %p464, %p465
      %p468 = scmp.ne.s32.totalorder %s451, %s467
      %p469 = scmp.eq.s32.totalorder %s34, 0
      %p470 = por %p468, %p469
      %p471 = scmp.le.s32.totalorder 1, %s28
      %p472 = scmp.lt.s32.totalorder %s28, 3
      %p473 = pnand %p471, %p472
      %p474 = pneg %p473
      // Predicated region
      $region9: #{chebnet_forward.1} parent=5 // pred_check
        _
      $region10: #{chebnet_forward.1} parent=5 // pred_check_branch
        %476 = sbr.rel (%p473) target = $region12
      $region11: #{chebnet_forward.1} parent=5 // pred_region
        %s477 = ssub.s32 %s28, 1
        // Predicated region
        $region13: #{chebnet_forward.1} parent=11 // pred_check
          %p478 = pneg %p101
        $region14: #{chebnet_forward.1} parent=11 // pred_check_branch
          %480 = sbr.rel (%p478) target = $region16
        $region15: #{chebnet_forward.1} parent=11 // pred_region
          _
        $region16: #{chebnet_forward.1} parent=11 // pred_fallthru
          _
        // Predicated region
        $region17: #{chebnet_forward.1} parent=11 // pred_check
          %p481 = pneg %p122
        $region18: #{chebnet_forward.1} parent=11 // pred_check_branch
          %483 = sbr.rel (%p481) target = $region20
        $region19: #{chebnet_forward.1} parent=11 // pred_region
          _
        $region20: #{chebnet_forward.1} parent=11 // pred_fallthru
          _
        // Predicated region
        $region21: #{chebnet_forward.1} parent=11 // pred_check
          %p484 = pneg %p143
        $region22: #{chebnet_forward.1} parent=11 // pred_check_branch
          %486 = sbr.rel (%p484) target = $region24
        $region23: #{chebnet_forward.1} parent=11 // pred_region
          _
        $region24: #{chebnet_forward.1} parent=11 // pred_fallthru
          _
        // Predicated region
        $region25: #{chebnet_forward.1} parent=11 // pred_check
          %p487 = pneg %p164
        $region26: #{chebnet_forward.1} parent=11 // pred_check_branch
          %489 = sbr.rel (%p487) target = $region28
        $region27: #{chebnet_forward.1} parent=11 // pred_region
          _
        $region28: #{chebnet_forward.1} parent=11 // pred_fallthru
          _
        // Predicated region
        $region29: #{chebnet_forward.1} parent=11 // pred_check
          %p490 = pneg %p185
        $region30: #{chebnet_forward.1} parent=11 // pred_check_branch
          %492 = sbr.rel (%p490) target = $region32
        $region31: #{chebnet_forward.1} parent=11 // pred_region
          _
        $region32: #{chebnet_forward.1} parent=11 // pred_fallthru
          _
        // Predicated region
        $region33: #{chebnet_forward.1} parent=11 // pred_check
          %p493 = pneg %p206
        $region34: #{chebnet_forward.1} parent=11 // pred_check_branch
          %495 = sbr.rel (%p493) target = $region36
        $region35: #{chebnet_forward.1} parent=11 // pred_region
          _
        $region36: #{chebnet_forward.1} parent=11 // pred_fallthru
          _
        // Predicated region
        $region37: #{chebnet_forward.1} parent=11 // pred_check
          %p496 = pneg %p227
        $region38: #{chebnet_forward.1} parent=11 // pred_check_branch
          %498 = sbr.rel (%p496) target = $region40
        $region39: #{chebnet_forward.1} parent=11 // pred_region
          _
        $region40: #{chebnet_forward.1} parent=11 // pred_fallthru
          _
        // Predicated region
        $region41: #{chebnet_forward.1} parent=11 // pred_check
          %p499 = pneg %p248
        $region42: #{chebnet_forward.1} parent=11 // pred_check_branch
          %501 = sbr.rel (%p499) target = $region44
        $region43: #{chebnet_forward.1} parent=11 // pred_region
          _
        $region44: #{chebnet_forward.1} parent=11 // pred_fallthru
          _
        // Predicated region
        $region45: #{chebnet_forward.1} parent=11 // pred_check
          %p502 = pneg %p269
        $region46: #{chebnet_forward.1} parent=11 // pred_check_branch
          %504 = sbr.rel (%p502) target = $region48
        $region47: #{chebnet_forward.1} parent=11 // pred_region
          _
        $region48: #{chebnet_forward.1} parent=11 // pred_fallthru
          _
        // Predicated region
        $region49: #{chebnet_forward.1} parent=11 // pred_check
          %p505 = pneg %p290
        $region50: #{chebnet_forward.1} parent=11 // pred_check_branch
          %507 = sbr.rel (%p505) target = $region52
        $region51: #{chebnet_forward.1} parent=11 // pred_region
          _
        $region52: #{chebnet_forward.1} parent=11 // pred_fallthru
          _
        // Predicated region
        $region53: #{chebnet_forward.1} parent=11 // pred_check
          %p508 = pneg %p311
        $region54: #{chebnet_forward.1} parent=11 // pred_check_branch
          %510 = sbr.rel (%p508) target = $region56
        $region55: #{chebnet_forward.1} parent=11 // pred_region
          _
        $region56: #{chebnet_forward.1} parent=11 // pred_fallthru
          _
        // Predicated region
        $region57: #{chebnet_forward.1} parent=11 // pred_check
          %p511 = pneg %p332
        $region58: #{chebnet_forward.1} parent=11 // pred_check_branch
          %513 = sbr.rel (%p511) target = $region60
        $region59: #{chebnet_forward.1} parent=11 // pred_region
          _
        $region60: #{chebnet_forward.1} parent=11 // pred_fallthru
          _
        // Predicated region
        $region61: #{chebnet_forward.1} parent=11 // pred_check
          %p514 = pneg %p353
        $region62: #{chebnet_forward.1} parent=11 // pred_check_branch
          %516 = sbr.rel (%p514) target = $region64
        $region63: #{chebnet_forward.1} parent=11 // pred_region
          _
        $region64: #{chebnet_forward.1} parent=11 // pred_fallthru
          _
        // Predicated region
        $region65: #{chebnet_forward.1} parent=11 // pred_check
          %p517 = pneg %p374
        $region66: #{chebnet_forward.1} parent=11 // pred_check_branch
          %519 = sbr.rel (%p517) target = $region68
        $region67: #{chebnet_forward.1} parent=11 // pred_region
          _
        $region68: #{chebnet_forward.1} parent=11 // pred_fallthru
          _
        // Predicated region
        $region69: #{chebnet_forward.1} parent=11 // pred_check
          %p520 = pneg %p395
        $region70: #{chebnet_forward.1} parent=11 // pred_check_branch
          %522 = sbr.rel (%p520) target = $region72
        $region71: #{chebnet_forward.1} parent=11 // pred_region
          _
        $region72: #{chebnet_forward.1} parent=11 // pred_fallthru
          _
        // Predicated region
        $region73: #{chebnet_forward.1} parent=11 // pred_check
          %p523 = pneg %p416
        $region74: #{chebnet_forward.1} parent=11 // pred_check_branch
          %525 = sbr.rel (%p523) target = $region76
        $region75: #{chebnet_forward.1} parent=11 // pred_region
          _
        $region76: #{chebnet_forward.1} parent=11 // pred_fallthru
          _
        // Predicated region
        $region77: #{chebnet_forward.1} parent=11 // pred_check
          %p526 = pneg %p437
        $region78: #{chebnet_forward.1} parent=11 // pred_check_branch
          %528 = sbr.rel (%p526) target = $region80
        $region79: #{chebnet_forward.1} parent=11 // pred_region
          _
        $region80: #{chebnet_forward.1} parent=11 // pred_fallthru
          _
      $region12: #{chebnet_forward.1} parent=5 // pred_fallthru
        _
      %p529 = scmp.lt.s32.totalorder %s28, 2
      // Predicated region
      $region81: #{chebnet_forward.1} parent=5 // pred_check
        %p530 = pneg %p529
      $region82: #{chebnet_forward.1} parent=5 // pred_check_branch
        %532 = sbr.rel (%p530) target = $region84
      $region83: #{chebnet_forward.1} parent=5 // pred_region
        // Predicated region
        $region85: #{chebnet_forward.1} parent=83 // pred_check
          %p533 = pneg %p48
        $region86: #{chebnet_forward.1} parent=83 // pred_check_branch
          %535 = sbr.rel (%p533) target = $region88
        $region87: #{chebnet_forward.1} parent=83 // pred_region
          %p536 = scmp.lt.s32.totalorder %s28, 1
          %s537 = scalar_select %p536, %s28, 1
          %s538 = smul.addr %s537, 64
          %s539 = smul.addr %s538, 8
          %s540 = scalar_lea.vmem %s0, %s539
        $region88: #{chebnet_forward.1} parent=83 // pred_fallthru
          _
        // Predicated region
        $region89: #{chebnet_forward.1} parent=83 // pred_check
          %p541 = pneg %p74
        $region90: #{chebnet_forward.1} parent=83 // pred_check_branch
          %543 = sbr.rel (%p541) target = $region92
        $region91: #{chebnet_forward.1} parent=83 // pred_region
          %p544 = scmp.lt.s32.totalorder %s28, 1
          %s545 = scalar_select %p544, %s28, 1
          %s546 = smul.addr %s545, 64
          %s547 = smul.addr %s546, 4
          %s548 = scalar_lea.vmem %s1, %s547
        $region92: #{chebnet_forward.1} parent=83 // pred_fallthru
          _
      $region84: #{chebnet_forward.1} parent=5 // pred_fallthru
        _
      %p549 = scmp.le.s32.totalorder 1, %s28
      %p550 = scmp.lt.s32.totalorder %s28, 3
      %p551 = pnand %p549, %p550
      %p552 = pneg %p551
      // Predicated region
      $region93: #{chebnet_forward.1} parent=5 // pred_check
        _
      $region94: #{chebnet_forward.1} parent=5 // pred_check_branch
        %554 = sbr.rel (%p551) target = $region96
      $region95: #{chebnet_forward.1} parent=5 // pred_region
        %s555 = ssub.s32 %s28, 1
        %p556 = scmp.lt.s32.totalorder %s33, 1
        %s557 = scalar_select %p556, %s33, 1
        %s558 = smul.addr %s557, 64
        %s559 = smul.addr %s558, 8
        %s560 = scalar_lea.vmem %s0, %s559
        %p561 = pneg %p54
        %p562 = pneg %p51
        %p563 = scmp.lt.s32.totalorder %s33, 1
        %s564 = scalar_select %p563, %s33, 1
        %s565 = smul.addr %s564, 64
        %s566 = smul.addr %s565, 4
        %s567 = scalar_lea.vmem %s1, %s566
        %p568 = pneg %p80
        %p569 = pneg %p77
        %p570 = pneg %p101
        %p571 = pneg %p98
        %p572 = pneg %p122
        %p573 = pneg %p119
        %p574 = pneg %p143
        %p575 = pneg %p140
        %p576 = pneg %p164
        %p577 = pneg %p161
        %p578 = pneg %p185
        %p579 = pneg %p182
        %p580 = pneg %p206
        %p581 = pneg %p203
        %p582 = pneg %p227
        %p583 = pneg %p224
        %p584 = pneg %p248
        %p585 = pneg %p245
        %p586 = pneg %p269
        %p587 = pneg %p266
        %p588 = pneg %p290
        %p589 = pneg %p287
        %p590 = pneg %p311
        %p591 = pneg %p308
        %p592 = pneg %p332
        %p593 = pneg %p329
        %p594 = pneg %p353
        %p595 = pneg %p350
        %p596 = pneg %p374
        %p597 = pneg %p371
        %p598 = pneg %p395
        %p599 = pneg %p392
        %p600 = pneg %p416
        %p601 = pneg %p413
        %p602 = pneg %p437
        %p603 = pneg %p434
        %p604 = pneg %p463
        %p605 = pneg %p460
        %s606 = sand.u32 %s450, 1
        %s607 = scalar_lea.sflag [#allocation3], %s606
        %s608 = sand.u32 %s450, 1
        %s609 = scalar_lea.vmem [#allocation2], %s608
        %p610 = scmp.lt.s32.totalorder %s33, 1
        %s611 = scalar_select %p610, %s33, 1
        %s612 = smul.addr %s611, 64
        %s613 = smul.addr %s612, 8
        %s614 = scalar_lea.vmem %s0, %s613
        %p615 = scmp.lt.s32.totalorder %s33, 1
        %s616 = scalar_select %p615, %s33, 1
        %s617 = smul.addr %s616, 64
        %s618 = smul.addr %s617, 4
        %s619 = scalar_lea.vmem %s1, %s618
        %v621 = vld [vmem:[%s614] sm:$0xff]
        %v622 = vld [vmem:[%s614 + $0x8] sm:$0xff]
        %v623 = vld [vmem:[%s614 + $0x10] sm:$0xff]
        %v624 = vld [vmem:[%s614 + $0x18] sm:$0xff]
        %v625 = vld [vmem:[%s614 + $0x20] sm:$0xff]
        %v626 = vld [vmem:[%s614 + $0x28] sm:$0xff]
        %v627 = vld [vmem:[%s614 + $0x30] sm:$0xff]
        %v628 = vld [vmem:[%s614 + $0x38] sm:$0xff]
        %v629 = vld [vmem:[%s614 + $0x40] sm:$0xff]
        %v630 = vld [vmem:[%s614 + $0x48] sm:$0xff]
        %v631 = vld [vmem:[%s614 + $0x50] sm:$0xff]
        %v632 = vld [vmem:[%s614 + $0x58] sm:$0xff]
        %v633 = vld [vmem:[%s614 + $0x60] sm:$0xff]
        %v634 = vld [vmem:[%s614 + $0x68] sm:$0xff]
        %v635 = vld [vmem:[%s614 + $0x70] sm:$0xff]
        %v636 = vld [vmem:[%s614 + $0x78] sm:$0xff]
        %v637 = vld [vmem:[%s614 + $0x80] sm:$0xff]
        %v638 = vld [vmem:[%s614 + $0x88] sm:$0xff]
        %v639 = vld [vmem:[%s614 + $0x90] sm:$0xff]
        %v640 = vld [vmem:[%s614 + $0x98] sm:$0xff]
        %v641 = vld [vmem:[%s614 + $0xa0] sm:$0xff]
        %v642 = vld [vmem:[%s614 + $0xa8] sm:$0xff]
        %v643 = vld [vmem:[%s614 + $0xb0] sm:$0xff]
        %v644 = vld [vmem:[%s614 + $0xb8] sm:$0xff]
        %v645 = vld [vmem:[%s614 + $0xc0] sm:$0xff]
        %v646 = vld [vmem:[%s614 + $0xc8] sm:$0xff]
        %v647 = vld [vmem:[%s614 + $0xd0] sm:$0xff]
        %v648 = vld [vmem:[%s614 + $0xd8] sm:$0xff]
        %v649 = vld [vmem:[%s614 + $0xe0] sm:$0xff]
        %v650 = vld [vmem:[%s614 + $0xe8] sm:$0xff]
        %v651 = vld [vmem:[%s614 + $0xf0] sm:$0xff]
        %v652 = vld [vmem:[%s614 + $0xf8] sm:$0xff]
        %v653 = vld [vmem:[%s614 + $0x100] sm:$0xff]
        %v654 = vld [vmem:[%s614 + $0x108] sm:$0xff]
        %v655 = vld [vmem:[%s614 + $0x110] sm:$0xff]
        %v656 = vld [vmem:[%s614 + $0x118] sm:$0xff]
        %v657 = vld [vmem:[%s614 + $0x120] sm:$0xff]
        %v658 = vld [vmem:[%s614 + $0x128] sm:$0xff]
        %v659 = vld [vmem:[%s614 + $0x130] sm:$0xff]
        %v660 = vld [vmem:[%s614 + $0x138] sm:$0xff]
        %v661 = vld [vmem:[%s614 + $0x140] sm:$0xff]
        %v662 = vld [vmem:[%s614 + $0x148] sm:$0xff]
        %v663 = vld [vmem:[%s614 + $0x150] sm:$0xff]
        %v664 = vld [vmem:[%s614 + $0x158] sm:$0xff]
        %v665 = vld [vmem:[%s614 + $0x160] sm:$0xff]
        %v666 = vld [vmem:[%s614 + $0x168] sm:$0xff]
        %v667 = vld [vmem:[%s614 + $0x170] sm:$0xff]
        %v668 = vld [vmem:[%s614 + $0x178] sm:$0xff]
        %v669 = vld [vmem:[%s614 + $0x180] sm:$0xff]
        %v670 = vld [vmem:[%s614 + $0x188] sm:$0xff]
        %v671 = vld [vmem:[%s614 + $0x190] sm:$0xff]
        %v672 = vld [vmem:[%s614 + $0x198] sm:$0xff]
        %v673 = vld [vmem:[%s614 + $0x1a0] sm:$0xff]
        %v674 = vld [vmem:[%s614 + $0x1a8] sm:$0xff]
        %v675 = vld [vmem:[%s614 + $0x1b0] sm:$0xff]
        %v676 = vld [vmem:[%s614 + $0x1b8] sm:$0xff]
        %v677 = vld [vmem:[%s614 + $0x1c0] sm:$0xff]
        %v678 = vld [vmem:[%s614 + $0x1c8] sm:$0xff]
        %v679 = vld [vmem:[%s614 + $0x1d0] sm:$0xff]
        %v680 = vld [vmem:[%s614 + $0x1d8] sm:$0xff]
        %v681 = vld [vmem:[%s614 + $0x1e0] sm:$0xff]
        %v682 = vld [vmem:[%s614 + $0x1e8] sm:$0xff]
        %v683 = vld [vmem:[%s614 + $0x1f0] sm:$0xff]
        %v684 = vld [vmem:[%s614 + $0x1f8] sm:$0xff]
        %v685 = vld [vmem:[%s619] sm:$0xff]
        %v686 = vld [vmem:[%s619 + $0x8] sm:$0xff]
        %v687 = vld [vmem:[%s619 + $0x10] sm:$0xff]
        %v688 = vld [vmem:[%s619 + $0x18] sm:$0xff]
        %v689 = vld [vmem:[%s619 + $0x20] sm:$0xff]
        %v690 = vld [vmem:[%s619 + $0x28] sm:$0xff]
        %v691 = vld [vmem:[%s619 + $0x30] sm:$0xff]
        %v692 = vld [vmem:[%s619 + $0x38] sm:$0xff]
        %v693 = vld [vmem:[%s619 + $0x40] sm:$0xff]
        %v694 = vld [vmem:[%s619 + $0x48] sm:$0xff]
        %v695 = vld [vmem:[%s619 + $0x50] sm:$0xff]
        %v696 = vld [vmem:[%s619 + $0x58] sm:$0xff]
        %v697 = vld [vmem:[%s619 + $0x60] sm:$0xff]
        %v698 = vld [vmem:[%s619 + $0x68] sm:$0xff]
        %v699 = vld [vmem:[%s619 + $0x70] sm:$0xff]
        %v700 = vld [vmem:[%s619 + $0x78] sm:$0xff]
        %v701 = vld [vmem:[%s619 + $0x80] sm:$0xff]
        %v702 = vld [vmem:[%s619 + $0x88] sm:$0xff]
        %v703 = vld [vmem:[%s619 + $0x90] sm:$0xff]
        %v704 = vld [vmem:[%s619 + $0x98] sm:$0xff]
        %v705 = vld [vmem:[%s619 + $0xa0] sm:$0xff]
        %v706 = vld [vmem:[%s619 + $0xa8] sm:$0xff]
        %v707 = vld [vmem:[%s619 + $0xb0] sm:$0xff]
        %v708 = vld [vmem:[%s619 + $0xb8] sm:$0xff]
        %v709 = vld [vmem:[%s619 + $0xc0] sm:$0xff]
        %v710 = vld [vmem:[%s619 + $0xc8] sm:$0xff]
        %v711 = vld [vmem:[%s619 + $0xd0] sm:$0xff]
        %v712 = vld [vmem:[%s619 + $0xd8] sm:$0xff]
        %v713 = vld [vmem:[%s619 + $0xe0] sm:$0xff]
        %v714 = vld [vmem:[%s619 + $0xe8] sm:$0xff]
        %v715 = vld [vmem:[%s619 + $0xf0] sm:$0xff]
        %v716 = vld [vmem:[%s619 + $0xf8] sm:$0xff]
        %v717 = vld [vmem:[%s14] sm:$0x1]
        %v718 = vld [vmem:[%s2 + $0x80] sm:$0xf]
        %v719 = vld [vmem:[%s2 + $0x84] sm:$0xf]
        %v720 = vld [vmem:[%s2 + $0x88] sm:$0xf]
        %v721 = vld [vmem:[%s2 + $0x8c] sm:$0xf]
        %v722 = vld [vmem:[%s2 + $0x90] sm:$0xf]
        %v723 = vld [vmem:[%s2 + $0x94] sm:$0xf]
        %v724 = vld [vmem:[%s2 + $0x98] sm:$0xf]
        %v725 = vld [vmem:[%s2 + $0x9c] sm:$0xf]
        %v726 = vld [vmem:[%s2 + $0xa0] sm:$0xf]
        %v727 = vld [vmem:[%s2 + $0xa4] sm:$0xf]
        %v728 = vld [vmem:[%s2 + $0xa8] sm:$0xf]
        %v729 = vld [vmem:[%s2 + $0xac] sm:$0xf]
        %v730 = vld [vmem:[%s2 + $0xb0] sm:$0xf]
        %v731 = vld [vmem:[%s2 + $0xb4] sm:$0xf]
        %v732 = vld [vmem:[%s2 + $0xb8] sm:$0xf]
        %v733 = vld [vmem:[%s2 + $0xbc] sm:$0xf]
        %v734 = vld [vmem:[%s2 + $0xc0] sm:$0xf]
        %v735 = vld [vmem:[%s2 + $0xc4] sm:$0xf]
        %v736 = vld [vmem:[%s2 + $0xc8] sm:$0xf]
        %v737 = vld [vmem:[%s2 + $0xcc] sm:$0xf]
        %v738 = vld [vmem:[%s2 + $0xd0] sm:$0xf]
        %v739 = vld [vmem:[%s2 + $0xd4] sm:$0xf]
        %v740 = vld [vmem:[%s2 + $0xd8] sm:$0xf]
        %v741 = vld [vmem:[%s2 + $0xdc] sm:$0xf]
        %v742 = vld [vmem:[%s2 + $0xe0] sm:$0xf]
        %v743 = vld [vmem:[%s2 + $0xe4] sm:$0xf]
        %v744 = vld [vmem:[%s2 + $0xe8] sm:$0xf]
        %v745 = vld [vmem:[%s2 + $0xec] sm:$0xf]
        %v746 = vld [vmem:[%s2 + $0xf0] sm:$0xf]
        %v747 = vld [vmem:[%s2 + $0xf4] sm:$0xf]
        %v748 = vld [vmem:[%s2 + $0xf8] sm:$0xf]
        %v749 = vld [vmem:[%s2 + $0xfc] sm:$0xf]
        %v782 = vunpack.c.l.b16 %v685
        %v783 = vunpack.c.h.b16 %v685
        %v784 = vunpack.c.l.b16 %v686
        %v785 = vunpack.c.h.b16 %v686
        %v786 = vunpack.c.l.b16 %v687
        %v787 = vunpack.c.h.b16 %v687
        %v788 = vunpack.c.l.b16 %v688
        %v789 = vunpack.c.h.b16 %v688
        %v790 = vunpack.c.l.b16 %v689
        %v791 = vunpack.c.h.b16 %v689
        %v792 = vunpack.c.l.b16 %v690
        %v793 = vunpack.c.h.b16 %v690
        %v794 = vunpack.c.l.b16 %v691
        %v795 = vunpack.c.h.b16 %v691
        %v796 = vunpack.c.l.b16 %v692
        %v797 = vunpack.c.h.b16 %v692
        %v798 = vunpack.c.l.b16 %v693
        %v799 = vunpack.c.h.b16 %v693
        %v800 = vunpack.c.l.b16 %v694
        %v801 = vunpack.c.h.b16 %v694
        %v802 = vunpack.c.l.b16 %v695
        %v803 = vunpack.c.h.b16 %v695
        %v804 = vunpack.c.l.b16 %v696
        %v805 = vunpack.c.h.b16 %v696
        %v806 = vunpack.c.l.b16 %v697
        %v807 = vunpack.c.h.b16 %v697
        %v808 = vunpack.c.l.b16 %v698
        %v809 = vunpack.c.h.b16 %v698
        %v810 = vunpack.c.l.b16 %v699
        %v811 = vunpack.c.h.b16 %v699
        %v812 = vunpack.c.l.b16 %v700
        %v813 = vunpack.c.h.b16 %v700
        %v814 = vunpack.c.l.b16 %v701
        %v815 = vunpack.c.h.b16 %v701
        %v816 = vunpack.c.l.b16 %v702
        %v817 = vunpack.c.h.b16 %v702
        %v818 = vunpack.c.l.b16 %v703
        %v819 = vunpack.c.h.b16 %v703
        %v820 = vunpack.c.l.b16 %v704
        %v821 = vunpack.c.h.b16 %v704
        %v822 = vunpack.c.l.b16 %v705
        %v823 = vunpack.c.h.b16 %v705
        %v824 = vunpack.c.l.b16 %v706
        %v825 = vunpack.c.h.b16 %v706
        %v826 = vunpack.c.l.b16 %v707
        %v827 = vunpack.c.h.b16 %v707
        %v828 = vunpack.c.l.b16 %v708
        %v829 = vunpack.c.h.b16 %v708
        %v830 = vunpack.c.l.b16 %v709
        %v831 = vunpack.c.h.b16 %v709
        %v832 = vunpack.c.l.b16 %v710
        %v833 = vunpack.c.h.b16 %v710
        %v834 = vunpack.c.l.b16 %v711
        %v835 = vunpack.c.h.b16 %v711
        %v836 = vunpack.c.l.b16 %v712
        %v837 = vunpack.c.h.b16 %v712
        %v838 = vunpack.c.l.b16 %v713
        %v839 = vunpack.c.h.b16 %v713
        %v840 = vunpack.c.l.b16 %v714
        %v841 = vunpack.c.h.b16 %v714
        %v842 = vunpack.c.l.b16 %v715
        %v843 = vunpack.c.h.b16 %v715
        %v844 = vunpack.c.l.b16 %v716
        %v845 = vunpack.c.h.b16 %v716
        %v846 = vpack.c.b16 %v784, %v782
        %v847 = vpack.c.b16 %v785, %v783
        %v848 = vpack.c.b16 %v788, %v786
        %v849 = vpack.c.b16 %v789, %v787
        %v850 = vpack.c.b16 %v792, %v790
        %v851 = vpack.c.b16 %v793, %v791
        %v852 = vpack.c.b16 %v796, %v794
        %v853 = vpack.c.b16 %v797, %v795
        %v854 = vpack.c.b16 %v800, %v798
        %v855 = vpack.c.b16 %v801, %v799
        %v856 = vpack.c.b16 %v804, %v802
        %v857 = vpack.c.b16 %v805, %v803
        %v858 = vpack.c.b16 %v808, %v806
        %v859 = vpack.c.b16 %v809, %v807
        %v860 = vpack.c.b16 %v812, %v810
        %v861 = vpack.c.b16 %v813, %v811
        %v862 = vpack.c.b16 %v816, %v814
        %v863 = vpack.c.b16 %v817, %v815
        %v864 = vpack.c.b16 %v820, %v818
        %v865 = vpack.c.b16 %v821, %v819
        %v866 = vpack.c.b16 %v824, %v822
        %v867 = vpack.c.b16 %v825, %v823
        %v868 = vpack.c.b16 %v828, %v826
        %v869 = vpack.c.b16 %v829, %v827
        %v870 = vpack.c.b16 %v832, %v830
        %v871 = vpack.c.b16 %v833, %v831
        %v872 = vpack.c.b16 %v836, %v834
        %v873 = vpack.c.b16 %v837, %v835
        %v874 = vpack.c.b16 %v840, %v838
        %v875 = vpack.c.b16 %v841, %v839
        %v876 = vpack.c.b16 %v844, %v842
        %v877 = vpack.c.b16 %v845, %v843
        %v942 = vunpack.c.l.b16 %v718
        %v943 = vunpack.c.l.b16 %v719
        %v944 = vunpack.c.l.b16 %v720
        %v945 = vunpack.c.l.b16 %v721
        %v946 = vunpack.c.l.b16 %v722
        %v947 = vunpack.c.l.b16 %v723
        %v948 = vunpack.c.l.b16 %v724
        %v949 = vunpack.c.l.b16 %v725
        %v950 = vunpack.c.l.b16 %v726
        %v951 = vunpack.c.l.b16 %v727
        %v952 = vunpack.c.l.b16 %v728
        %v953 = vunpack.c.l.b16 %v729
        %v954 = vunpack.c.l.b16 %v730
        %v955 = vunpack.c.l.b16 %v731
        %v956 = vunpack.c.l.b16 %v732
        %v957 = vunpack.c.l.b16 %v733
        %v958 = vunpack.c.l.b16 %v734
        %v959 = vunpack.c.l.b16 %v735
        %v960 = vunpack.c.l.b16 %v736
        %v961 = vunpack.c.l.b16 %v737
        %v962 = vunpack.c.l.b16 %v738
        %v963 = vunpack.c.l.b16 %v739
        %v964 = vunpack.c.l.b16 %v740
        %v965 = vunpack.c.l.b16 %v741
        %v966 = vunpack.c.l.b16 %v742
        %v967 = vunpack.c.l.b16 %v743
        %v968 = vunpack.c.l.b16 %v744
        %v969 = vunpack.c.l.b16 %v745
        %v970 = vunpack.c.l.b16 %v746
        %v971 = vunpack.c.l.b16 %v747
        %v972 = vunpack.c.l.b16 %v748
        %v973 = vunpack.c.l.b16 %v749
        %v974 = vpack.c.b16 %v943, %v942
        %v975 = vpack.c.b16 %v945, %v944
        %v976 = vpack.c.b16 %v947, %v946
        %v977 = vpack.c.b16 %v949, %v948
        %v978 = vpack.c.b16 %v951, %v950
        %v979 = vpack.c.b16 %v953, %v952
        %v980 = vpack.c.b16 %v955, %v954
        %v981 = vpack.c.b16 %v957, %v956
        %v982 = vpack.c.b16 %v959, %v958
        %v983 = vpack.c.b16 %v961, %v960
        %v984 = vpack.c.b16 %v963, %v962
        %v985 = vpack.c.b16 %v965, %v964
        %v986 = vpack.c.b16 %v967, %v966
        %v987 = vpack.c.b16 %v969, %v968
        %v988 = vpack.c.b16 %v971, %v970
        %v989 = vpack.c.b16 %v973, %v972
        %1006 = vmatprep.subr.bf16.mxu0 0
        %1007 = vmatpush1.bf16.msra.mxu0 %v974
        %1008 = vmatprep.subr.bf16.mxu0 0
        %1009 = vmatpush1.bf16.msra.mxu0 %v975
        %1010 = vmatprep.subr.bf16.mxu0 0
        %1011 = vmatpush1.bf16.msra.mxu0 %v976
        %1012 = vmatprep.subr.bf16.mxu0 0
        %1013 = vmatpush1.bf16.msra.mxu0 %v977
        %1014 = vmatprep.subr.bf16.mxu0 0
        %1015 = vmatpush1.bf16.msra.mxu0 %v978
        %1016 = vmatprep.subr.bf16.mxu0 0
        %1017 = vmatpush1.bf16.msra.mxu0 %v979
        %1018 = vmatprep.subr.bf16.mxu0 0
        %1019 = vmatpush1.bf16.msra.mxu0 %v980
        %1020 = vmatprep.subr.bf16.mxu0 0
        %1021 = vmatpush1.bf16.msra.mxu0 %v981
        %1022 = vmatprep.subr.bf16.mxu0 0
        %1023 = vmatpush1.bf16.msra.mxu0 %v982
        %1024 = vmatprep.subr.bf16.mxu0 0
        %1025 = vmatpush1.bf16.msra.mxu0 %v983
        %1026 = vmatprep.subr.bf16.mxu0 0
        %1027 = vmatpush1.bf16.msra.mxu0 %v984
        %1028 = vmatprep.subr.bf16.mxu0 0
        %1029 = vmatpush1.bf16.msra.mxu0 %v985
        %1030 = vmatprep.subr.bf16.mxu0 0
        %1031 = vmatpush1.bf16.msra.mxu0 %v986
        %1032 = vmatprep.subr.bf16.mxu0 0
        %1033 = vmatpush1.bf16.msra.mxu0 %v987
        %1034 = vmatprep.subr.bf16.mxu0 0
        %1035 = vmatpush1.bf16.msra.mxu0 %v988
        %1036 = vmatprep.subr.bf16.mxu0 0
        %1037 = vmatpush1.bf16.msra.mxu0 %v989
        %1038 = vmatprep.mubr.bf16.mxu0 %v847
        %1039 = vmatmul.mubr.bf16.gmra.mrb[0].mxu0 %v846
        %v1040 = vpop.f32.mrb[0].mxu0
        %v1041 = vadd.f32 0.0, %v1040
        %v1042 = vpop.f32.mrb[0].mxu0
        %v1043 = vpop.f32.mrb[0].mxu0
        %v1044 = vadd.f32 0.0, %v1043
        %v1045 = vpop.f32.mrb[0].mxu0
        %1046 = vmatprep.mubr.bf16.mxu0 %v849
        %1047 = vmatmul.mubr.bf16.gmra.mrb[0].mxu0 %v848
        %v1048 = vpop.f32.mrb[0].mxu0
        %v1049 = vadd.f32 0.0, %v1048
        %v1050 = vpop.f32.mrb[0].mxu0
        %v1051 = vpop.f32.mrb[0].mxu0
        %v1052 = vadd.f32 0.0, %v1051
        %v1053 = vpop.f32.mrb[0].mxu0
        %1054 = vmatprep.mubr.bf16.mxu0 %v851
        %1055 = vmatmul.mubr.bf16.gmra.mrb[0].mxu0 %v850
        %v1056 = vpop.f32.mrb[0].mxu0
        %v1057 = vadd.f32 0.0, %v1056
        %v1058 = vpop.f32.mrb[0].mxu0
        %v1059 = vpop.f32.mrb[0].mxu0
        %v1060 = vadd.f32 0.0, %v1059
        %v1061 = vpop.f32.mrb[0].mxu0
        %1062 = vmatprep.mubr.bf16.mxu0 %v853
        %1063 = vmatmul.mubr.bf16.gmra.mrb[0].mxu0 %v852
        %v1064 = vpop.f32.mrb[0].mxu0
        %v1065 = vadd.f32 0.0, %v1064
        %v1066 = vpop.f32.mrb[0].mxu0
        %v1067 = vpop.f32.mrb[0].mxu0
        %v1068 = vadd.f32 0.0, %v1067
        %v1069 = vpop.f32.mrb[0].mxu0
        %1070 = vmatprep.mubr.bf16.mxu0 %v855
        %1071 = vmatmul.mubr.bf16.gmra.mrb[0].mxu0 %v854
        %v1072 = vpop.f32.mrb[0].mxu0
        %v1073 = vadd.f32 0.0, %v1072
        %v1074 = vpop.f32.mrb[0].mxu0
        %v1075 = vpop.f32.mrb[0].mxu0
        %v1076 = vadd.f32 0.0, %v1075
        %v1077 = vpop.f32.mrb[0].mxu0
        %1078 = vmatprep.mubr.bf16.mxu0 %v857
        %1079 = vmatmul.mubr.bf16.gmra.mrb[0].mxu0 %v856
        %v1080 = vpop.f32.mrb[0].mxu0
        %v1081 = vadd.f32 0.0, %v1080
        %v1082 = vpop.f32.mrb[0].mxu0
        %v1083 = vpop.f32.mrb[0].mxu0
        %v1084 = vadd.f32 0.0, %v1083
        %v1085 = vpop.f32.mrb[0].mxu0
        %1086 = vmatprep.mubr.bf16.mxu0 %v859
        %1087 = vmatmul.mubr.bf16.gmra.mrb[0].mxu0 %v858
        %v1088 = vpop.f32.mrb[0].mxu0
        %v1089 = vadd.f32 0.0, %v1088
        %v1090 = vpop.f32.mrb[0].mxu0
        %v1091 = vpop.f32.mrb[0].mxu0
        %v1092 = vadd.f32 0.0, %v1091
        %v1093 = vpop.f32.mrb[0].mxu0
        %1094 = vmatprep.mubr.bf16.mxu0 %v861
        %1095 = vmatmul.mubr.bf16.gmra.mrb[0].mxu0 %v860
        %v1096 = vpop.f32.mrb[0].mxu0
        %v1097 = vadd.f32 0.0, %v1096
        %v1098 = vpop.f32.mrb[0].mxu0
        %v1099 = vpop.f32.mrb[0].mxu0
        %v1100 = vadd.f32 0.0, %v1099
        %v1101 = vpop.f32.mrb[0].mxu0
        %1102 = vmatprep.mubr.bf16.mxu0 %v863
        %1103 = vmatmul.mubr.bf16.gmra.mrb[0].mxu0 %v862
        %v1104 = vpop.f32.mrb[0].mxu0
        %v1105 = vadd.f32 0.0, %v1104
        %v1106 = vpop.f32.mrb[0].mxu0
        %v1107 = vpop.f32.mrb[0].mxu0
        %v1108 = vadd.f32 0.0, %v1107
        %v1109 = vpop.f32.mrb[0].mxu0
        %1110 = vmatprep.mubr.bf16.mxu0 %v865
        %1111 = vmatmul.mubr.bf16.gmra.mrb[0].mxu0 %v864
        %v1112 = vpop.f32.mrb[0].mxu0
        %v1113 = vadd.f32 0.0, %v1112
        %v1114 = vpop.f32.mrb[0].mxu0
        %v1115 = vpop.f32.mrb[0].mxu0
        %v1116 = vadd.f32 0.0, %v1115
        %v1117 = vpop.f32.mrb[0].mxu0
        %1118 = vmatprep.mubr.bf16.mxu0 %v867
        %1119 = vmatmul.mubr.bf16.gmra.mrb[0].mxu0 %v866
        %v1120 = vpop.f32.mrb[0].mxu0
        %v1121 = vadd.f32 0.0, %v1120
        %v1122 = vpop.f32.mrb[0].mxu0
        %v1123 = vpop.f32.mrb[0].mxu0
        %v1124 = vadd.f32 0.0, %v1123
        %v1125 = vpop.f32.mrb[0].mxu0
        %1126 = vmatprep.mubr.bf16.mxu0 %v869
        %1127 = vmatmul.mubr.bf16.gmra.mrb[0].mxu0 %v868
        %v1128 = vpop.f32.mrb[0].mxu0
        %v1129 = vadd.f32 0.0, %v1128
        %v1130 = vpop.f32.mrb[0].mxu0
        %v1131 = vpop.f32.mrb[0].mxu0
        %v1132 = vadd.f32 0.0, %v1131
        %v1133 = vpop.f32.mrb[0].mxu0
        %1134 = vmatprep.mubr.bf16.mxu0 %v871
        %1135 = vmatmul.mubr.bf16.gmra.mrb[0].mxu0 %v870
        %v1136 = vpop.f32.mrb[0].mxu0
        %v1137 = vadd.f32 0.0, %v1136
        %v1138 = vpop.f32.mrb[0].mxu0
        %v1139 = vpop.f32.mrb[0].mxu0
        %v1140 = vadd.f32 0.0, %v1139
        %v1141 = vpop.f32.mrb[0].mxu0
        %1142 = vmatprep.mubr.bf16.mxu0 %v873
        %1143 = vmatmul.mubr.bf16.gmra.mrb[0].mxu0 %v872
        %v1144 = vpop.f32.mrb[0].mxu0
        %v1145 = vadd.f32 0.0, %v1144
        %v1146 = vpop.f32.mrb[0].mxu0
        %v1147 = vpop.f32.mrb[0].mxu0
        %v1148 = vadd.f32 0.0, %v1147
        %v1149 = vpop.f32.mrb[0].mxu0
        %1150 = vmatprep.mubr.bf16.mxu0 %v875
        %1151 = vmatmul.mubr.bf16.gmra.mrb[0].mxu0 %v874
        %v1152 = vpop.f32.mrb[0].mxu0
        %v1153 = vadd.f32 0.0, %v1152
        %v1154 = vpop.f32.mrb[0].mxu0
        %v1155 = vpop.f32.mrb[0].mxu0
        %v1156 = vadd.f32 0.0, %v1155
        %v1157 = vpop.f32.mrb[0].mxu0
        %1158 = vmatprep.mubr.bf16.mxu0 %v877
        %1159 = vmatmul.mubr.bf16.gmra.mrb[0].mxu0 %v876
        %v1160 = vpop.f32.mrb[0].mxu0
        %v1161 = vadd.f32 0.0, %v1160
        %v1162 = vpop.f32.mrb[0].mxu0
        %v1163 = vpop.f32.mrb[0].mxu0
        %v1164 = vadd.f32 0.0, %v1163
        %v1165 = vpop.f32.mrb[0].mxu0
        %1166 = vdwg.mxu0
        %v1167 = vld [vmem:[%s2] sm:$0xf]
        %v1168 = vld [vmem:[%s2 + $0x4] sm:$0xf]
        %v1169 = vld [vmem:[%s2 + $0x8] sm:$0xf]
        %v1170 = vld [vmem:[%s2 + $0xc] sm:$0xf]
        %v1171 = vld [vmem:[%s2 + $0x10] sm:$0xf]
        %v1172 = vld [vmem:[%s2 + $0x14] sm:$0xf]
        %v1173 = vld [vmem:[%s2 + $0x18] sm:$0xf]
        %v1174 = vld [vmem:[%s2 + $0x1c] sm:$0xf]
        %v1175 = vld [vmem:[%s2 + $0x20] sm:$0xf]
        %v1176 = vld [vmem:[%s2 + $0x24] sm:$0xf]
        %v1177 = vld [vmem:[%s2 + $0x28] sm:$0xf]
        %v1178 = vld [vmem:[%s2 + $0x2c] sm:$0xf]
        %v1179 = vld [vmem:[%s2 + $0x30] sm:$0xf]
        %v1180 = vld [vmem:[%s2 + $0x34] sm:$0xf]
        %v1181 = vld [vmem:[%s2 + $0x38] sm:$0xf]
        %v1182 = vld [vmem:[%s2 + $0x3c] sm:$0xf]
        %v1183 = vld [vmem:[%s2 + $0x40] sm:$0xf]
        %v1184 = vld [vmem:[%s2 + $0x44] sm:$0xf]
        %v1185 = vld [vmem:[%s2 + $0x48] sm:$0xf]
        %v1186 = vld [vmem:[%s2 + $0x4c] sm:$0xf]
        %v1187 = vld [vmem:[%s2 + $0x50] sm:$0xf]
        %v1188 = vld [vmem:[%s2 + $0x54] sm:$0xf]
        %v1189 = vld [vmem:[%s2 + $0x58] sm:$0xf]
        %v1190 = vld [vmem:[%s2 + $0x5c] sm:$0xf]
        %v1191 = vld [vmem:[%s2 + $0x60] sm:$0xf]
        %v1192 = vld [vmem:[%s2 + $0x64] sm:$0xf]
        %v1193 = vld [vmem:[%s2 + $0x68] sm:$0xf]
        %v1194 = vld [vmem:[%s2 + $0x6c] sm:$0xf]
        %v1195 = vld [vmem:[%s2 + $0x70] sm:$0xf]
        %v1196 = vld [vmem:[%s2 + $0x74] sm:$0xf]
        %v1197 = vld [vmem:[%s2 + $0x78] sm:$0xf]
        %v1198 = vld [vmem:[%s2 + $0x7c] sm:$0xf]
        %1199 = vmatprep.subr.mxu0 0.0
        %1200 = vmatpush1.msra.mxu0 %v1041
        %1201 = vmatprep.subr.mxu0 0.0
        %1202 = vmatpush1.msra.mxu0 %v1044
        %1203 = vmatprep.subr.mxu0 0.0
        %1204 = vmatpush1.msra.mxu0 %v1049
        %1205 = vmatprep.subr.mxu0 0.0
        %1206 = vmatpush1.msra.mxu0 %v1052
        %1207 = vmatprep.subr.mxu0 0.0
        %1208 = vmatpush1.msra.mxu0 %v1057
        %1209 = vmatprep.subr.mxu0 0.0
        %1210 = vmatpush1.msra.mxu0 %v1060
        %1211 = vmatprep.subr.mxu0 0.0
        %1212 = vmatpush1.msra.mxu0 %v1065
        %1213 = vmatprep.subr.mxu0 0.0
        %1214 = vmatpush1.msra.mxu0 %v1068
        %1215 = vmatprep.subr.mxu0 0.0
        %1216 = vmatpush1.msra.mxu0 %v1073
        %1217 = vmatprep.subr.mxu0 0.0
        %1218 = vmatpush1.msra.mxu0 %v1076
        %1219 = vmatprep.subr.mxu0 0.0
        %1220 = vmatpush1.msra.mxu0 %v1081
        %1221 = vmatprep.subr.mxu0 0.0
        %1222 = vmatpush1.msra.mxu0 %v1084
        %1223 = vmatprep.subr.mxu0 0.0
        %1224 = vmatpush1.msra.mxu0 %v1089
        %1225 = vmatprep.subr.mxu0 0.0
        %1226 = vmatpush1.msra.mxu0 %v1092
        %1227 = vmatprep.subr.mxu0 0.0
        %1228 = vmatpush1.msra.mxu0 %v1097
        %1229 = vmatprep.subr.mxu0 0.0
        %1230 = vmatpush1.msra.mxu0 %v1100
        %1231 = vmatprep.subr.mxu0 0.0
        %1232 = vmatpush1.msra.mxu0 %v1105
        %1233 = vmatprep.subr.mxu0 0.0
        %1234 = vmatpush1.msra.mxu0 %v1108
        %1235 = vmatprep.subr.mxu0 0.0
        %1236 = vmatpush1.msra.mxu0 %v1113
        %1237 = vmatprep.subr.mxu0 0.0
        %1238 = vmatpush1.msra.mxu0 %v1116
        %1239 = vmatprep.subr.mxu0 0.0
        %1240 = vmatpush1.msra.mxu0 %v1121
        %1241 = vmatprep.subr.mxu0 0.0
        %1242 = vmatpush1.msra.mxu0 %v1124
        %1243 = vmatprep.subr.mxu0 0.0
        %1244 = vmatpush1.msra.mxu0 %v1129
        %1245 = vmatprep.subr.mxu0 0.0
        %1246 = vmatpush1.msra.mxu0 %v1132
        %1247 = vmatprep.subr.mxu0 0.0
        %1248 = vmatpush1.msra.mxu0 %v1137
        %1249 = vmatprep.subr.mxu0 0.0
        %1250 = vmatpush1.msra.mxu0 %v1140
        %1251 = vmatprep.subr.mxu0 0.0
        %1252 = vmatpush1.msra.mxu0 %v1145
        %1253 = vmatprep.subr.mxu0 0.0
        %1254 = vmatpush1.msra.mxu0 %v1148
        %1255 = vmatprep.subr.mxu0 0.0
        %1256 = vmatpush1.msra.mxu0 %v1153
        %1257 = vmatprep.subr.mxu0 0.0
        %1258 = vmatpush1.msra.mxu0 %v1156
        %1259 = vmatprep.subr.mxu0 0.0
        %1260 = vmatpush1.msra.mxu0 %v1161
        %1261 = vmatprep.subr.mxu0 0.0
        %1262 = vmatpush1.msra.mxu0 %v1164
        %1263 = vmatprep.mubr.f32.mxu0 %v622
        %1264 = vmatmul.mubr.f32.gmra.mrb[0].mxu0 %v621
        %v1265 = vpop.f32.mrb[0].mxu0
        %v1266 = vadd.f32 0.0, %v1265
        %v1267 = vpop.f32.mrb[0].mxu0
        %1268 = vmatprep.mubr.f32.mxu0 %v624
        %1269 = vmatmul.mubr.f32.gmra.mrb[0].mxu0 %v623
        %v1270 = vpop.f32.mrb[0].mxu0
        %v1271 = vadd.f32 0.0, %v1270
        %v1272 = vpop.f32.mrb[0].mxu0
        %1273 = vmatprep.mubr.f32.mxu0 %v626
        %1274 = vmatmul.mubr.f32.gmra.mrb[0].mxu0 %v625
        %v1275 = vpop.f32.mrb[0].mxu0
        %v1276 = vadd.f32 0.0, %v1275
        %v1277 = vpop.f32.mrb[0].mxu0
        %1278 = vmatprep.mubr.f32.mxu0 %v628
        %1279 = vmatmul.mubr.f32.gmra.mrb[0].mxu0 %v627
        %v1280 = vpop.f32.mrb[0].mxu0
        %v1281 = vadd.f32 0.0, %v1280
        %v1282 = vpop.f32.mrb[0].mxu0
        %1283 = vmatprep.mubr.f32.mxu0 %v630
        %1284 = vmatmul.mubr.f32.gmra.mrb[0].mxu0 %v629
        %v1285 = vpop.f32.mrb[0].mxu0
        %v1286 = vadd.f32 0.0, %v1285
        %v1287 = vpop.f32.mrb[0].mxu0
        %1288 = vmatprep.mubr.f32.mxu0 %v632
        %1289 = vmatmul.mubr.f32.gmra.mrb[0].mxu0 %v631
        %v1290 = vpop.f32.mrb[0].mxu0
        %v1291 = vadd.f32 0.0, %v1290
        %v1292 = vpop.f32.mrb[0].mxu0
        %1293 = vmatprep.mubr.f32.mxu0 %v634
        %1294 = vmatmul.mubr.f32.gmra.mrb[0].mxu0 %v633
        %v1295 = vpop.f32.mrb[0].mxu0
        %v1296 = vadd.f32 0.0, %v1295
        %v1297 = vpop.f32.mrb[0].mxu0
        %1298 = vmatprep.mubr.f32.mxu0 %v636
        %1299 = vmatmul.mubr.f32.gmra.mrb[0].mxu0 %v635
        %v1300 = vpop.f32.mrb[0].mxu0
        %v1301 = vadd.f32 0.0, %v1300
        %v1302 = vpop.f32.mrb[0].mxu0
        %1303 = vmatprep.mubr.f32.mxu0 %v638
        %1304 = vmatmul.mubr.f32.gmra.mrb[0].mxu0 %v637
        %v1305 = vpop.f32.mrb[0].mxu0
        %v1306 = vadd.f32 0.0, %v1305
        %v1307 = vpop.f32.mrb[0].mxu0
        %1308 = vmatprep.mubr.f32.mxu0 %v640
        %1309 = vmatmul.mubr.f32.gmra.mrb[0].mxu0 %v639
        %v1310 = vpop.f32.mrb[0].mxu0
        %v1311 = vadd.f32 0.0, %v1310
        %v1312 = vpop.f32.mrb[0].mxu0
        %1313 = vmatprep.mubr.f32.mxu0 %v642
        %1314 = vmatmul.mubr.f32.gmra.mrb[0].mxu0 %v641
        %v1315 = vpop.f32.mrb[0].mxu0
        %v1316 = vadd.f32 0.0, %v1315
        %v1317 = vpop.f32.mrb[0].mxu0
        %1318 = vmatprep.mubr.f32.mxu0 %v644
        %1319 = vmatmul.mubr.f32.gmra.mrb[0].mxu0 %v643
        %v1320 = vpop.f32.mrb[0].mxu0
        %v1321 = vadd.f32 0.0, %v1320
        %v1322 = vpop.f32.mrb[0].mxu0
        %1323 = vmatprep.mubr.f32.mxu0 %v646
        %1324 = vmatmul.mubr.f32.gmra.mrb[0].mxu0 %v645
        %v1325 = vpop.f32.mrb[0].mxu0
        %v1326 = vadd.f32 0.0, %v1325
        %v1327 = vpop.f32.mrb[0].mxu0
        %1328 = vmatprep.mubr.f32.mxu0 %v648
        %1329 = vmatmul.mubr.f32.gmra.mrb[0].mxu0 %v647
        %v1330 = vpop.f32.mrb[0].mxu0
        %v1331 = vadd.f32 0.0, %v1330
        %v1332 = vpop.f32.mrb[0].mxu0
        %1333 = vmatprep.mubr.f32.mxu0 %v650
        %1334 = vmatmul.mubr.f32.gmra.mrb[0].mxu0 %v649
        %v1335 = vpop.f32.mrb[0].mxu0
        %v1336 = vadd.f32 0.0, %v1335
        %v1337 = vpop.f32.mrb[0].mxu0
        %1338 = vmatprep.mubr.f32.mxu0 %v652
        %1339 = vmatmul.mubr.f32.gmra.mrb[0].mxu0 %v651
        %v1340 = vpop.f32.mrb[0].mxu0
        %v1341 = vadd.f32 0.0, %v1340
        %v1342 = vpop.f32.mrb[0].mxu0
        %1343 = vmatprep.mubr.f32.mxu0 %v654
        %1344 = vmatmul.mubr.f32.gmra.mrb[0].mxu0 %v653
        %v1345 = vpop.f32.mrb[0].mxu0
        %v1346 = vadd.f32 0.0, %v1345
        %v1347 = vpop.f32.mrb[0].mxu0
        %1348 = vmatprep.mubr.f32.mxu0 %v656
        %1349 = vmatmul.mubr.f32.gmra.mrb[0].mxu0 %v655
        %v1350 = vpop.f32.mrb[0].mxu0
        %v1351 = vadd.f32 0.0, %v1350
        %v1352 = vpop.f32.mrb[0].mxu0
        %1353 = vmatprep.mubr.f32.mxu0 %v658
        %1354 = vmatmul.mubr.f32.gmra.mrb[0].mxu0 %v657
        %v1355 = vpop.f32.mrb[0].mxu0
        %v1356 = vadd.f32 0.0, %v1355
        %v1357 = vpop.f32.mrb[0].mxu0
        %1358 = vmatprep.mubr.f32.mxu0 %v660
        %1359 = vmatmul.mubr.f32.gmra.mrb[0].mxu0 %v659
        %v1360 = vpop.f32.mrb[0].mxu0
        %v1361 = vadd.f32 0.0, %v1360
        %v1362 = vpop.f32.mrb[0].mxu0
        %1363 = vmatprep.mubr.f32.mxu0 %v662
        %1364 = vmatmul.mubr.f32.gmra.mrb[0].mxu0 %v661
        %v1365 = vpop.f32.mrb[0].mxu0
        %v1366 = vadd.f32 0.0, %v1365
        %v1367 = vpop.f32.mrb[0].mxu0
        %1368 = vmatprep.mubr.f32.mxu0 %v664
        %1369 = vmatmul.mubr.f32.gmra.mrb[0].mxu0 %v663
        %v1370 = vpop.f32.mrb[0].mxu0
        %v1371 = vadd.f32 0.0, %v1370
        %v1372 = vpop.f32.mrb[0].mxu0
        %1373 = vmatprep.mubr.f32.mxu0 %v666
        %1374 = vmatmul.mubr.f32.gmra.mrb[0].mxu0 %v665
        %v1375 = vpop.f32.mrb[0].mxu0
        %v1376 = vadd.f32 0.0, %v1375
        %v1377 = vpop.f32.mrb[0].mxu0
        %1378 = vmatprep.mubr.f32.mxu0 %v668
        %1379 = vmatmul.mubr.f32.gmra.mrb[0].mxu0 %v667
        %v1380 = vpop.f32.mrb[0].mxu0
        %v1381 = vadd.f32 0.0, %v1380
        %v1382 = vpop.f32.mrb[0].mxu0
        %1383 = vmatprep.mubr.f32.mxu0 %v670
        %1384 = vmatmul.mubr.f32.gmra.mrb[0].mxu0 %v669
        %v1385 = vpop.f32.mrb[0].mxu0
        %v1386 = vadd.f32 0.0, %v1385
        %v1387 = vpop.f32.mrb[0].mxu0
        %1388 = vmatprep.mubr.f32.mxu0 %v672
        %1389 = vmatmul.mubr.f32.gmra.mrb[0].mxu0 %v671
        %v1390 = vpop.f32.mrb[0].mxu0
        %v1391 = vadd.f32 0.0, %v1390
        %v1392 = vpop.f32.mrb[0].mxu0
        %1393 = vmatprep.mubr.f32.mxu0 %v674
        %1394 = vmatmul.mubr.f32.gmra.mrb[0].mxu0 %v673
        %v1395 = vpop.f32.mrb[0].mxu0
        %v1396 = vadd.f32 0.0, %v1395
        %v1397 = vpop.f32.mrb[0].mxu0
        %1398 = vmatprep.mubr.f32.mxu0 %v676
        %1399 = vmatmul.mubr.f32.gmra.mrb[0].mxu0 %v675
        %v1400 = vpop.f32.mrb[0].mxu0
        %v1401 = vadd.f32 0.0, %v1400
        %v1402 = vpop.f32.mrb[0].mxu0
        %1403 = vmatprep.mubr.f32.mxu0 %v678
        %1404 = vmatmul.mubr.f32.gmra.mrb[0].mxu0 %v677
        %v1405 = vpop.f32.mrb[0].mxu0
        %v1406 = vadd.f32 0.0, %v1405
        %v1407 = vpop.f32.mrb[0].mxu0
        %1408 = vmatprep.mubr.f32.mxu0 %v680
        %1409 = vmatmul.mubr.f32.gmra.mrb[0].mxu0 %v679
        %v1410 = vpop.f32.mrb[0].mxu0
        %v1411 = vadd.f32 0.0, %v1410
        %v1412 = vpop.f32.mrb[0].mxu0
        %1413 = vmatprep.mubr.f32.mxu0 %v682
        %1414 = vmatmul.mubr.f32.gmra.mrb[0].mxu0 %v681
        %v1415 = vpop.f32.mrb[0].mxu0
        %v1416 = vadd.f32 0.0, %v1415
        %v1417 = vpop.f32.mrb[0].mxu0
        %1418 = vmatprep.mubr.f32.mxu0 %v684
        %1419 = vmatmul.mubr.f32.gmra.mrb[0].mxu0 %v683
        %v1420 = vpop.f32.mrb[0].mxu0
        %v1421 = vadd.f32 0.0, %v1420
        %v1422 = vpop.f32.mrb[0].mxu0
        %1423 = vdwg.mxu0
        %v1456 = vunpack.c.l.b16 %v1167
        %v1457 = vunpack.c.l.b16 %v1168
        %v1458 = vunpack.c.l.b16 %v1169
        %v1459 = vunpack.c.l.b16 %v1170
        %v1460 = vunpack.c.l.b16 %v1171
        %v1461 = vunpack.c.l.b16 %v1172
        %v1462 = vunpack.c.l.b16 %v1173
        %v1463 = vunpack.c.l.b16 %v1174
        %v1464 = vunpack.c.l.b16 %v1175
        %v1465 = vunpack.c.l.b16 %v1176
        %v1466 = vunpack.c.l.b16 %v1177
        %v1467 = vunpack.c.l.b16 %v1178
        %v1468 = vunpack.c.l.b16 %v1179
        %v1469 = vunpack.c.l.b16 %v1180
        %v1470 = vunpack.c.l.b16 %v1181
        %v1471 = vunpack.c.l.b16 %v1182
        %v1472 = vunpack.c.l.b16 %v1183
        %v1473 = vunpack.c.l.b16 %v1184
        %v1474 = vunpack.c.l.b16 %v1185
        %v1475 = vunpack.c.l.b16 %v1186
        %v1476 = vunpack.c.l.b16 %v1187
        %v1477 = vunpack.c.l.b16 %v1188
        %v1478 = vunpack.c.l.b16 %v1189
        %v1479 = vunpack.c.l.b16 %v1190
        %v1480 = vunpack.c.l.b16 %v1191
        %v1481 = vunpack.c.l.b16 %v1192
        %v1482 = vunpack.c.l.b16 %v1193
        %v1483 = vunpack.c.l.b16 %v1194
        %v1484 = vunpack.c.l.b16 %v1195
        %v1485 = vunpack.c.l.b16 %v1196
        %v1486 = vunpack.c.l.b16 %v1197
        %v1487 = vunpack.c.l.b16 %v1198
        %v1488 = vpack.c.b16 %v1457, %v1456
        %v1489 = vpack.c.b16 %v1459, %v1458
        %v1490 = vpack.c.b16 %v1461, %v1460
        %v1491 = vpack.c.b16 %v1463, %v1462
        %v1492 = vpack.c.b16 %v1465, %v1464
        %v1493 = vpack.c.b16 %v1467, %v1466
        %v1494 = vpack.c.b16 %v1469, %v1468
        %v1495 = vpack.c.b16 %v1471, %v1470
        %v1496 = vpack.c.b16 %v1473, %v1472
        %v1497 = vpack.c.b16 %v1475, %v1474
        %v1498 = vpack.c.b16 %v1477, %v1476
        %v1499 = vpack.c.b16 %v1479, %v1478
        %v1500 = vpack.c.b16 %v1481, %v1480
        %v1501 = vpack.c.b16 %v1483, %v1482
        %v1502 = vpack.c.b16 %v1485, %v1484
        %v1503 = vpack.c.b16 %v1487, %v1486
        %1520 = vmatprep.subr.bf16.mxu0 0
        %1521 = vmatpush1.bf16.msra.mxu0 %v1488
        %1522 = vmatprep.subr.bf16.mxu0 0
        %1523 = vmatpush1.bf16.msra.mxu0 %v1489
        %1524 = vmatprep.subr.bf16.mxu0 0
        %1525 = vmatpush1.bf16.msra.mxu0 %v1490
        %1526 = vmatprep.subr.bf16.mxu0 0
        %1527 = vmatpush1.bf16.msra.mxu0 %v1491
        %1528 = vmatprep.subr.bf16.mxu0 0
        %1529 = vmatpush1.bf16.msra.mxu0 %v1492
        %1530 = vmatprep.subr.bf16.mxu0 0
        %1531 = vmatpush1.bf16.msra.mxu0 %v1493
        %1532 = vmatprep.subr.bf16.mxu0 0
        %1533 = vmatpush1.bf16.msra.mxu0 %v1494
        %1534 = vmatprep.subr.bf16.mxu0 0
        %1535 = vmatpush1.bf16.msra.mxu0 %v1495
        %1536 = vmatprep.subr.bf16.mxu0 0
        %1537 = vmatpush1.bf16.msra.mxu0 %v1496
        %1538 = vmatprep.subr.bf16.mxu0 0
        %1539 = vmatpush1.bf16.msra.mxu0 %v1497
        %1540 = vmatprep.subr.bf16.mxu0 0
        %1541 = vmatpush1.bf16.msra.mxu0 %v1498
        %1542 = vmatprep.subr.bf16.mxu0 0
        %1543 = vmatpush1.bf16.msra.mxu0 %v1499
        %1544 = vmatprep.subr.bf16.mxu0 0
        %1545 = vmatpush1.bf16.msra.mxu0 %v1500
        %1546 = vmatprep.subr.bf16.mxu0 0
        %1547 = vmatpush1.bf16.msra.mxu0 %v1501
        %1548 = vmatprep.subr.bf16.mxu0 0
        %1549 = vmatpush1.bf16.msra.mxu0 %v1502
        %1550 = vmatprep.subr.bf16.mxu0 0
        %1551 = vmatpush1.bf16.msra.mxu0 %v1503
        %1552 = vmatprep.mubr.bf16.mxu0 %v847
        %1553 = vmatmul.mubr.bf16.gmra.mrb[0].mxu0 %v846
        %v1554 = vpop.f32.mrb[0].mxu0
        %v1555 = vadd.f32 %v1266, %v1554
        %v1556 = vpop.f32.mrb[0].mxu0
        %v1557 = vpop.f32.mrb[0].mxu0
        %v1558 = vadd.f32 %v1271, %v1557
        %v1559 = vpop.f32.mrb[0].mxu0
        %1560 = vmatprep.mubr.bf16.mxu0 %v849
        %1561 = vmatmul.mubr.bf16.gmra.mrb[0].mxu0 %v848
        %v1562 = vpop.f32.mrb[0].mxu0
        %v1563 = vadd.f32 %v1276, %v1562
        %v1564 = vpop.f32.mrb[0].mxu0
        %v1565 = vpop.f32.mrb[0].mxu0
        %v1566 = vadd.f32 %v1281, %v1565
        %v1567 = vpop.f32.mrb[0].mxu0
        %1568 = vmatprep.mubr.bf16.mxu0 %v851
        %1569 = vmatmul.mubr.bf16.gmra.mrb[0].mxu0 %v850
        %v1570 = vpop.f32.mrb[0].mxu0
        %v1571 = vadd.f32 %v1286, %v1570
        %v1572 = vpop.f32.mrb[0].mxu0
        %v1573 = vpop.f32.mrb[0].mxu0
        %v1574 = vadd.f32 %v1291, %v1573
        %v1575 = vpop.f32.mrb[0].mxu0
        %1576 = vmatprep.mubr.bf16.mxu0 %v853
        %1577 = vmatmul.mubr.bf16.gmra.mrb[0].mxu0 %v852
        %v1578 = vpop.f32.mrb[0].mxu0
        %v1579 = vadd.f32 %v1296, %v1578
        %v1580 = vpop.f32.mrb[0].mxu0
        %v1581 = vpop.f32.mrb[0].mxu0
        %v1582 = vadd.f32 %v1301, %v1581
        %v1583 = vpop.f32.mrb[0].mxu0
        %1584 = vmatprep.mubr.bf16.mxu0 %v855
        %1585 = vmatmul.mubr.bf16.gmra.mrb[0].mxu0 %v854
        %v1586 = vpop.f32.mrb[0].mxu0
        %v1587 = vadd.f32 %v1306, %v1586
        %v1588 = vpop.f32.mrb[0].mxu0
        %v1589 = vpop.f32.mrb[0].mxu0
        %v1590 = vadd.f32 %v1311, %v1589
        %v1591 = vpop.f32.mrb[0].mxu0
        %1592 = vmatprep.mubr.bf16.mxu0 %v857
        %1593 = vmatmul.mubr.bf16.gmra.mrb[0].mxu0 %v856
        %v1594 = vpop.f32.mrb[0].mxu0
        %v1595 = vadd.f32 %v1316, %v1594
        %v1596 = vpop.f32.mrb[0].mxu0
        %v1597 = vpop.f32.mrb[0].mxu0
        %v1598 = vadd.f32 %v1321, %v1597
        %v1599 = vpop.f32.mrb[0].mxu0
        %1600 = vmatprep.mubr.bf16.mxu0 %v859
        %1601 = vmatmul.mubr.bf16.gmra.mrb[0].mxu0 %v858
        %v1602 = vpop.f32.mrb[0].mxu0
        %v1603 = vadd.f32 %v1326, %v1602
        %v1604 = vpop.f32.mrb[0].mxu0
        %v1605 = vpop.f32.mrb[0].mxu0
        %v1606 = vadd.f32 %v1331, %v1605
        %v1607 = vpop.f32.mrb[0].mxu0
        %1608 = vmatprep.mubr.bf16.mxu0 %v861
        %1609 = vmatmul.mubr.bf16.gmra.mrb[0].mxu0 %v860
        %v1610 = vpop.f32.mrb[0].mxu0
        %v1611 = vadd.f32 %v1336, %v1610
        %v1612 = vpop.f32.mrb[0].mxu0
        %v1613 = vpop.f32.mrb[0].mxu0
        %v1614 = vadd.f32 %v1341, %v1613
        %v1615 = vpop.f32.mrb[0].mxu0
        %1616 = vmatprep.mubr.bf16.mxu0 %v863
        %1617 = vmatmul.mubr.bf16.gmra.mrb[0].mxu0 %v862
        %v1618 = vpop.f32.mrb[0].mxu0
        %v1619 = vadd.f32 %v1346, %v1618
        %v1620 = vpop.f32.mrb[0].mxu0
        %v1621 = vpop.f32.mrb[0].mxu0
        %v1622 = vadd.f32 %v1351, %v1621
        %v1623 = vpop.f32.mrb[0].mxu0
        %1624 = vmatprep.mubr.bf16.mxu0 %v865
        %1625 = vmatmul.mubr.bf16.gmra.mrb[0].mxu0 %v864
        %v1626 = vpop.f32.mrb[0].mxu0
        %v1627 = vadd.f32 %v1356, %v1626
        %v1628 = vpop.f32.mrb[0].mxu0
        %v1629 = vpop.f32.mrb[0].mxu0
        %v1630 = vadd.f32 %v1361, %v1629
        %v1631 = vpop.f32.mrb[0].mxu0
        %1632 = vmatprep.mubr.bf16.mxu0 %v867
        %1633 = vmatmul.mubr.bf16.gmra.mrb[0].mxu0 %v866
        %v1634 = vpop.f32.mrb[0].mxu0
        %v1635 = vadd.f32 %v1366, %v1634
        %v1636 = vpop.f32.mrb[0].mxu0
        %v1637 = vpop.f32.mrb[0].mxu0
        %v1638 = vadd.f32 %v1371, %v1637
        %v1639 = vpop.f32.mrb[0].mxu0
        %1640 = vmatprep.mubr.bf16.mxu0 %v869
        %1641 = vmatmul.mubr.bf16.gmra.mrb[0].mxu0 %v868
        %v1642 = vpop.f32.mrb[0].mxu0
        %v1643 = vadd.f32 %v1376, %v1642
        %v1644 = vpop.f32.mrb[0].mxu0
        %v1645 = vpop.f32.mrb[0].mxu0
        %v1646 = vadd.f32 %v1381, %v1645
        %v1647 = vpop.f32.mrb[0].mxu0
        %1648 = vmatprep.mubr.bf16.mxu0 %v871
        %1649 = vmatmul.mubr.bf16.gmra.mrb[0].mxu0 %v870
        %v1650 = vpop.f32.mrb[0].mxu0
        %v1651 = vadd.f32 %v1386, %v1650
        %v1652 = vpop.f32.mrb[0].mxu0
        %v1653 = vpop.f32.mrb[0].mxu0
        %v1654 = vadd.f32 %v1391, %v1653
        %v1655 = vpop.f32.mrb[0].mxu0
        %1656 = vmatprep.mubr.bf16.mxu0 %v873
        %1657 = vmatmul.mubr.bf16.gmra.mrb[0].mxu0 %v872
        %v1658 = vpop.f32.mrb[0].mxu0
        %v1659 = vadd.f32 %v1396, %v1658
        %v1660 = vpop.f32.mrb[0].mxu0
        %v1661 = vpop.f32.mrb[0].mxu0
        %v1662 = vadd.f32 %v1401, %v1661
        %v1663 = vpop.f32.mrb[0].mxu0
        %1664 = vmatprep.mubr.bf16.mxu0 %v875
        %1665 = vmatmul.mubr.bf16.gmra.mrb[0].mxu0 %v874
        %v1666 = vpop.f32.mrb[0].mxu0
        %v1667 = vadd.f32 %v1406, %v1666
        %v1668 = vpop.f32.mrb[0].mxu0
        %v1669 = vpop.f32.mrb[0].mxu0
        %v1670 = vadd.f32 %v1411, %v1669
        %v1671 = vpop.f32.mrb[0].mxu0
        %1672 = vmatprep.mubr.bf16.mxu0 %v877
        %1673 = vmatmul.mubr.bf16.gmra.mrb[0].mxu0 %v876
        %v1674 = vpop.f32.mrb[0].mxu0
        %v1675 = vadd.f32 %v1416, %v1674
        %v1676 = vpop.f32.mrb[0].mxu0
        %v1677 = vpop.f32.mrb[0].mxu0
        %v1678 = vadd.f32 %v1421, %v1677
        %v1679 = vpop.f32.mrb[0].mxu0
        %1680 = vdwg.mxu0
        %v1681 = vld [vmem:[%s8] sm:$0x1]
        %v1683 = vlaneseq
        %v1684 = vshrl.u32 %v1683, 7
        %v1685 = vsub.s32 0, %v1684
        %v1686 = vrot.slane %v1681, %v1685
        %v1688 = vadd.f32 %v1555, %v1686
        %v1689 = vadd.f32 %v1558, %v1686
        %v1690 = vadd.f32 %v1563, %v1686
        %v1691 = vadd.f32 %v1566, %v1686
        %v1692 = vadd.f32 %v1571, %v1686
        %v1693 = vadd.f32 %v1574, %v1686
        %v1694 = vadd.f32 %v1579, %v1686
        %v1695 = vadd.f32 %v1582, %v1686
        %v1696 = vadd.f32 %v1587, %v1686
        %v1697 = vadd.f32 %v1590, %v1686
        %v1698 = vadd.f32 %v1595, %v1686
        %v1699 = vadd.f32 %v1598, %v1686
        %v1700 = vadd.f32 %v1603, %v1686
        %v1701 = vadd.f32 %v1606, %v1686
        %v1702 = vadd.f32 %v1611, %v1686
        %v1703 = vadd.f32 %v1614, %v1686
        %v1704 = vadd.f32 %v1619, %v1686
        %v1705 = vadd.f32 %v1622, %v1686
        %v1706 = vadd.f32 %v1627, %v1686
        %v1707 = vadd.f32 %v1630, %v1686
        %v1708 = vadd.f32 %v1635, %v1686
        %v1709 = vadd.f32 %v1638, %v1686
        %v1710 = vadd.f32 %v1643, %v1686
        %v1711 = vadd.f32 %v1646, %v1686
        %v1712 = vadd.f32 %v1651, %v1686
        %v1713 = vadd.f32 %v1654, %v1686
        %v1714 = vadd.f32 %v1659, %v1686
        %v1715 = vadd.f32 %v1662, %v1686
        %v1716 = vadd.f32 %v1667, %v1686
        %v1717 = vadd.f32 %v1670, %v1686
        %v1718 = vadd.f32 %v1675, %v1686
        %v1719 = vadd.f32 %v1678, %v1686
        %v1720 = vmax.f32 %v1688, 0.0
        %v1721 = vmax.f32 %v1689, 0.0
        %v1722 = vmax.f32 %v1690, 0.0
        %v1723 = vmax.f32 %v1691, 0.0
        %v1724 = vmax.f32 %v1692, 0.0
        %v1725 = vmax.f32 %v1693, 0.0
        %v1726 = vmax.f32 %v1694, 0.0
        %v1727 = vmax.f32 %v1695, 0.0
        %v1728 = vmax.f32 %v1696, 0.0
        %v1729 = vmax.f32 %v1697, 0.0
        %v1730 = vmax.f32 %v1698, 0.0
        %v1731 = vmax.f32 %v1699, 0.0
        %v1732 = vmax.f32 %v1700, 0.0
        %v1733 = vmax.f32 %v1701, 0.0
        %v1734 = vmax.f32 %v1702, 0.0
        %v1735 = vmax.f32 %v1703, 0.0
        %v1736 = vmax.f32 %v1704, 0.0
        %v1737 = vmax.f32 %v1705, 0.0
        %v1738 = vmax.f32 %v1706, 0.0
        %v1739 = vmax.f32 %v1707, 0.0
        %v1740 = vmax.f32 %v1708, 0.0
        %v1741 = vmax.f32 %v1709, 0.0
        %v1742 = vmax.f32 %v1710, 0.0
        %v1743 = vmax.f32 %v1711, 0.0
        %v1744 = vmax.f32 %v1712, 0.0
        %v1745 = vmax.f32 %v1713, 0.0
        %v1746 = vmax.f32 %v1714, 0.0
        %v1747 = vmax.f32 %v1715, 0.0
        %v1748 = vmax.f32 %v1716, 0.0
        %v1749 = vmax.f32 %v1717, 0.0
        %v1750 = vmax.f32 %v1718, 0.0
        %v1751 = vmax.f32 %v1719, 0.0
        %v1753 = vlaneseq
        %v1754 = vshrl.u32 %v1753, 7
        %v1755 = vsub.s32 0, %v1754
        %v1756 = vrot.slane %v717, %v1755
        %v1758 = vadd.f32 %v1720, %v1756
        %v1759 = vadd.f32 %v1721, %v1756
        %v1760 = vadd.f32 %v1722, %v1756
        %v1761 = vadd.f32 %v1723, %v1756
        %v1762 = vadd.f32 %v1724, %v1756
        %v1763 = vadd.f32 %v1725, %v1756
        %v1764 = vadd.f32 %v1726, %v1756
        %v1765 = vadd.f32 %v1727, %v1756
        %v1766 = vadd.f32 %v1728, %v1756
        %v1767 = vadd.f32 %v1729, %v1756
        %v1768 = vadd.f32 %v1730, %v1756
        %v1769 = vadd.f32 %v1731, %v1756
        %v1770 = vadd.f32 %v1732, %v1756
        %v1771 = vadd.f32 %v1733, %v1756
        %v1772 = vadd.f32 %v1734, %v1756
        %v1773 = vadd.f32 %v1735, %v1756
        %v1774 = vadd.f32 %v1736, %v1756
        %v1775 = vadd.f32 %v1737, %v1756
        %v1776 = vadd.f32 %v1738, %v1756
        %v1777 = vadd.f32 %v1739, %v1756
        %v1778 = vadd.f32 %v1740, %v1756
        %v1779 = vadd.f32 %v1741, %v1756
        %v1780 = vadd.f32 %v1742, %v1756
        %v1781 = vadd.f32 %v1743, %v1756
        %v1782 = vadd.f32 %v1744, %v1756
        %v1783 = vadd.f32 %v1745, %v1756
        %v1784 = vadd.f32 %v1746, %v1756
        %v1785 = vadd.f32 %v1747, %v1756
        %v1786 = vadd.f32 %v1748, %v1756
        %v1787 = vadd.f32 %v1749, %v1756
        %v1788 = vadd.f32 %v1750, %v1756
        %v1789 = vadd.f32 %v1751, %v1756
        %1790 = vmatprep.subr.mxu0 0.0
        %1791 = vmatpush1.msra.mxu0 %v1758
        %1792 = vmatprep.subr.mxu0 0.0
        %1793 = vmatpush1.msra.mxu0 %v1759
        %1794 = vmatprep.subr.mxu0 0.0
        %1795 = vmatpush1.msra.mxu0 %v1760
        %1796 = vmatprep.subr.mxu0 0.0
        %1797 = vmatpush1.msra.mxu0 %v1761
        %1798 = vmatprep.subr.mxu0 0.0
        %1799 = vmatpush1.msra.mxu0 %v1762
        %1800 = vmatprep.subr.mxu0 0.0
        %1801 = vmatpush1.msra.mxu0 %v1763
        %1802 = vmatprep.subr.mxu0 0.0
        %1803 = vmatpush1.msra.mxu0 %v1764
        %1804 = vmatprep.subr.mxu0 0.0
        %1805 = vmatpush1.msra.mxu0 %v1765
        %1806 = vmatprep.subr.mxu0 0.0
        %1807 = vmatpush1.msra.mxu0 %v1766
        %1808 = vmatprep.subr.mxu0 0.0
        %1809 = vmatpush1.msra.mxu0 %v1767
        %1810 = vmatprep.subr.mxu0 0.0
        %1811 = vmatpush1.msra.mxu0 %v1768
        %1812 = vmatprep.subr.mxu0 0.0
        %1813 = vmatpush1.msra.mxu0 %v1769
        %1814 = vmatprep.subr.mxu0 0.0
        %1815 = vmatpush1.msra.mxu0 %v1770
        %1816 = vmatprep.subr.mxu0 0.0
        %1817 = vmatpush1.msra.mxu0 %v1771
        %1818 = vmatprep.subr.mxu0 0.0
        %1819 = vmatpush1.msra.mxu0 %v1772
        %1820 = vmatprep.subr.mxu0 0.0
        %1821 = vmatpush1.msra.mxu0 %v1773
        %1822 = vmatprep.subr.mxu0 0.0
        %1823 = vmatpush1.msra.mxu0 %v1774
        %1824 = vmatprep.subr.mxu0 0.0
        %1825 = vmatpush1.msra.mxu0 %v1775
        %1826 = vmatprep.subr.mxu0 0.0
        %1827 = vmatpush1.msra.mxu0 %v1776
        %1828 = vmatprep.subr.mxu0 0.0
        %1829 = vmatpush1.msra.mxu0 %v1777
        %1830 = vmatprep.subr.mxu0 0.0
        %1831 = vmatpush1.msra.mxu0 %v1778
        %1832 = vmatprep.subr.mxu0 0.0
        %1833 = vmatpush1.msra.mxu0 %v1779
        %1834 = vmatprep.subr.mxu0 0.0
        %1835 = vmatpush1.msra.mxu0 %v1780
        %1836 = vmatprep.subr.mxu0 0.0
        %1837 = vmatpush1.msra.mxu0 %v1781
        %1838 = vmatprep.subr.mxu0 0.0
        %1839 = vmatpush1.msra.mxu0 %v1782
        %1840 = vmatprep.subr.mxu0 0.0
        %1841 = vmatpush1.msra.mxu0 %v1783
        %1842 = vmatprep.subr.mxu0 0.0
        %1843 = vmatpush1.msra.mxu0 %v1784
        %1844 = vmatprep.subr.mxu0 0.0
        %1845 = vmatpush1.msra.mxu0 %v1785
        %1846 = vmatprep.subr.mxu0 0.0
        %1847 = vmatpush1.msra.mxu0 %v1786
        %1848 = vmatprep.subr.mxu0 0.0
        %1849 = vmatpush1.msra.mxu0 %v1787
        %1850 = vmatprep.subr.mxu0 0.0
        %1851 = vmatpush1.msra.mxu0 %v1788
        %1852 = vmatprep.subr.mxu0 0.0
        %1853 = vmatpush1.msra.mxu0 %v1789
        %1854 = vmatprep.mubr.f32.mxu0 %v622
        %1855 = vmatmul.mubr.f32.gmra.mrb[0].mxu0 %v621
        %v1856 = vpop.f32.mrb[0].mxu0
        %v1857 = vadd.f32 0.0, %v1856
        %v1858 = vpop.f32.mrb[0].mxu0
        %1859 = vmatprep.mubr.f32.mxu0 %v624
        %1860 = vmatmul.mubr.f32.gmra.mrb[0].mxu0 %v623
        %v1861 = vpop.f32.mrb[0].mxu0
        %v1862 = vadd.f32 0.0, %v1861
        %v1863 = vpop.f32.mrb[0].mxu0
        %1864 = vmatprep.mubr.f32.mxu0 %v626
        %1865 = vmatmul.mubr.f32.gmra.mrb[0].mxu0 %v625
        %v1866 = vpop.f32.mrb[0].mxu0
        %v1867 = vadd.f32 0.0, %v1866
        %v1868 = vpop.f32.mrb[0].mxu0
        %1869 = vmatprep.mubr.f32.mxu0 %v628
        %1870 = vmatmul.mubr.f32.gmra.mrb[0].mxu0 %v627
        %v1871 = vpop.f32.mrb[0].mxu0
        %v1872 = vadd.f32 0.0, %v1871
        %v1873 = vpop.f32.mrb[0].mxu0
        %1874 = vmatprep.mubr.f32.mxu0 %v630
        %1875 = vmatmul.mubr.f32.gmra.mrb[0].mxu0 %v629
        %v1876 = vpop.f32.mrb[0].mxu0
        %v1877 = vadd.f32 0.0, %v1876
        %v1878 = vpop.f32.mrb[0].mxu0
        %1879 = vmatprep.mubr.f32.mxu0 %v632
        %1880 = vmatmul.mubr.f32.gmra.mrb[0].mxu0 %v631
        %v1881 = vpop.f32.mrb[0].mxu0
        %v1882 = vadd.f32 0.0, %v1881
        %v1883 = vpop.f32.mrb[0].mxu0
        %1884 = vmatprep.mubr.f32.mxu0 %v634
        %1885 = vmatmul.mubr.f32.gmra.mrb[0].mxu0 %v633
        %v1886 = vpop.f32.mrb[0].mxu0
        %v1887 = vadd.f32 0.0, %v1886
        %v1888 = vpop.f32.mrb[0].mxu0
        %1889 = vmatprep.mubr.f32.mxu0 %v636
        %1890 = vmatmul.mubr.f32.gmra.mrb[0].mxu0 %v635
        %v1891 = vpop.f32.mrb[0].mxu0
        %v1892 = vadd.f32 0.0, %v1891
        %v1893 = vpop.f32.mrb[0].mxu0
        %1894 = vmatprep.mubr.f32.mxu0 %v638
        %1895 = vmatmul.mubr.f32.gmra.mrb[0].mxu0 %v637
        %v1896 = vpop.f32.mrb[0].mxu0
        %v1897 = vadd.f32 0.0, %v1896
        %v1898 = vpop.f32.mrb[0].mxu0
        %1899 = vmatprep.mubr.f32.mxu0 %v640
        %1900 = vmatmul.mubr.f32.gmra.mrb[0].mxu0 %v639
        %v1901 = vpop.f32.mrb[0].mxu0
        %v1902 = vadd.f32 0.0, %v1901
        %v1903 = vpop.f32.mrb[0].mxu0
        %1904 = vmatprep.mubr.f32.mxu0 %v642
        %1905 = vmatmul.mubr.f32.gmra.mrb[0].mxu0 %v641
        %v1906 = vpop.f32.mrb[0].mxu0
        %v1907 = vadd.f32 0.0, %v1906
        %v1908 = vpop.f32.mrb[0].mxu0
        %1909 = vmatprep.mubr.f32.mxu0 %v644
        %1910 = vmatmul.mubr.f32.gmra.mrb[0].mxu0 %v643
        %v1911 = vpop.f32.mrb[0].mxu0
        %v1912 = vadd.f32 0.0, %v1911
        %v1913 = vpop.f32.mrb[0].mxu0
        %1914 = vmatprep.mubr.f32.mxu0 %v646
        %1915 = vmatmul.mubr.f32.gmra.mrb[0].mxu0 %v645
        %v1916 = vpop.f32.mrb[0].mxu0
        %v1917 = vadd.f32 0.0, %v1916
        %v1918 = vpop.f32.mrb[0].mxu0
        %1919 = vmatprep.mubr.f32.mxu0 %v648
        %1920 = vmatmul.mubr.f32.gmra.mrb[0].mxu0 %v647
        %v1921 = vpop.f32.mrb[0].mxu0
        %v1922 = vadd.f32 0.0, %v1921
        %v1923 = vpop.f32.mrb[0].mxu0
        %1924 = vmatprep.mubr.f32.mxu0 %v650
        %1925 = vmatmul.mubr.f32.gmra.mrb[0].mxu0 %v649
        %v1926 = vpop.f32.mrb[0].mxu0
        %v1927 = vadd.f32 0.0, %v1926
        %v1928 = vpop.f32.mrb[0].mxu0
        %1929 = vmatprep.mubr.f32.mxu0 %v652
        %1930 = vmatmul.mubr.f32.gmra.mrb[0].mxu0 %v651
        %v1931 = vpop.f32.mrb[0].mxu0
        %v1932 = vadd.f32 0.0, %v1931
        %v1933 = vpop.f32.mrb[0].mxu0
        %1934 = vmatprep.mubr.f32.mxu0 %v654
        %1935 = vmatmul.mubr.f32.gmra.mrb[0].mxu0 %v653
        %v1936 = vpop.f32.mrb[0].mxu0
        %v1937 = vadd.f32 0.0, %v1936
        %v1938 = vpop.f32.mrb[0].mxu0
        %1939 = vmatprep.mubr.f32.mxu0 %v656
        %1940 = vmatmul.mubr.f32.gmra.mrb[0].mxu0 %v655
        %v1941 = vpop.f32.mrb[0].mxu0
        %v1942 = vadd.f32 0.0, %v1941
        %v1943 = vpop.f32.mrb[0].mxu0
        %1944 = vmatprep.mubr.f32.mxu0 %v658
        %1945 = vmatmul.mubr.f32.gmra.mrb[0].mxu0 %v657
        %v1946 = vpop.f32.mrb[0].mxu0
        %v1947 = vadd.f32 0.0, %v1946
        %v1948 = vpop.f32.mrb[0].mxu0
        %1949 = vmatprep.mubr.f32.mxu0 %v660
        %1950 = vmatmul.mubr.f32.gmra.mrb[0].mxu0 %v659
        %v1951 = vpop.f32.mrb[0].mxu0
        %v1952 = vadd.f32 0.0, %v1951
        %v1953 = vpop.f32.mrb[0].mxu0
        %1954 = vmatprep.mubr.f32.mxu0 %v662
        %1955 = vmatmul.mubr.f32.gmra.mrb[0].mxu0 %v661
        %v1956 = vpop.f32.mrb[0].mxu0
        %v1957 = vadd.f32 0.0, %v1956
        %v1958 = vpop.f32.mrb[0].mxu0
        %1959 = vmatprep.mubr.f32.mxu0 %v664
        %1960 = vmatmul.mubr.f32.gmra.mrb[0].mxu0 %v663
        %v1961 = vpop.f32.mrb[0].mxu0
        %v1962 = vadd.f32 0.0, %v1961
        %v1963 = vpop.f32.mrb[0].mxu0
        %1964 = vmatprep.mubr.f32.mxu0 %v666
        %1965 = vmatmul.mubr.f32.gmra.mrb[0].mxu0 %v665
        %v1966 = vpop.f32.mrb[0].mxu0
        %v1967 = vadd.f32 0.0, %v1966
        %v1968 = vpop.f32.mrb[0].mxu0
        %1969 = vmatprep.mubr.f32.mxu0 %v668
        %1970 = vmatmul.mubr.f32.gmra.mrb[0].mxu0 %v667
        %v1971 = vpop.f32.mrb[0].mxu0
        %v1972 = vadd.f32 0.0, %v1971
        %v1973 = vpop.f32.mrb[0].mxu0
        %1974 = vmatprep.mubr.f32.mxu0 %v670
        %1975 = vmatmul.mubr.f32.gmra.mrb[0].mxu0 %v669
        %v1976 = vpop.f32.mrb[0].mxu0
        %v1977 = vadd.f32 0.0, %v1976
        %v1978 = vpop.f32.mrb[0].mxu0
        %1979 = vmatprep.mubr.f32.mxu0 %v672
        %1980 = vmatmul.mubr.f32.gmra.mrb[0].mxu0 %v671
        %v1981 = vpop.f32.mrb[0].mxu0
        %v1982 = vadd.f32 0.0, %v1981
        %v1983 = vpop.f32.mrb[0].mxu0
        %1984 = vmatprep.mubr.f32.mxu0 %v674
        %1985 = vmatmul.mubr.f32.gmra.mrb[0].mxu0 %v673
        %v1986 = vpop.f32.mrb[0].mxu0
        %v1987 = vadd.f32 0.0, %v1986
        %v1988 = vpop.f32.mrb[0].mxu0
        %1989 = vmatprep.mubr.f32.mxu0 %v676
        %1990 = vmatmul.mubr.f32.gmra.mrb[0].mxu0 %v675
        %v1991 = vpop.f32.mrb[0].mxu0
        %v1992 = vadd.f32 0.0, %v1991
        %v1993 = vpop.f32.mrb[0].mxu0
        %1994 = vmatprep.mubr.f32.mxu0 %v678
        %1995 = vmatmul.mubr.f32.gmra.mrb[0].mxu0 %v677
        %v1996 = vpop.f32.mrb[0].mxu0
        %v1997 = vadd.f32 0.0, %v1996
        %v1998 = vpop.f32.mrb[0].mxu0
        %1999 = vmatprep.mubr.f32.mxu0 %v680
        %2000 = vmatmul.mubr.f32.gmra.mrb[0].mxu0 %v679
        %v2001 = vpop.f32.mrb[0].mxu0
        %v2002 = vadd.f32 0.0, %v2001
        %v2003 = vpop.f32.mrb[0].mxu0
        %2004 = vmatprep.mubr.f32.mxu0 %v682
        %2005 = vmatmul.mubr.f32.gmra.mrb[0].mxu0 %v681
        %v2006 = vpop.f32.mrb[0].mxu0
        %v2007 = vadd.f32 0.0, %v2006
        %v2008 = vpop.f32.mrb[0].mxu0
        %2009 = vmatprep.mubr.f32.mxu0 %v684
        %2010 = vmatmul.mubr.f32.gmra.mrb[0].mxu0 %v683
        %v2011 = vpop.f32.mrb[0].mxu0
        %v2012 = vadd.f32 0.0, %v2011
        %v2013 = vpop.f32.mrb[0].mxu0
        %2014 = vdwg.mxu0
        %v2015 = vpack.c.bf16 %v1759, %v1758
        %v2016 = vpack.c.bf16 %v1761, %v1760
        %v2017 = vpack.c.bf16 %v1763, %v1762
        %v2018 = vpack.c.bf16 %v1765, %v1764
        %v2019 = vpack.c.bf16 %v1767, %v1766
        %v2020 = vpack.c.bf16 %v1769, %v1768
        %v2021 = vpack.c.bf16 %v1771, %v1770
        %v2022 = vpack.c.bf16 %v1773, %v1772
        %v2023 = vpack.c.bf16 %v1775, %v1774
        %v2024 = vpack.c.bf16 %v1777, %v1776
        %v2025 = vpack.c.bf16 %v1779, %v1778
        %v2026 = vpack.c.bf16 %v1781, %v1780
        %v2027 = vpack.c.bf16 %v1783, %v1782
        %v2028 = vpack.c.bf16 %v1785, %v1784
        %v2029 = vpack.c.bf16 %v1787, %v1786
        %v2030 = vpack.c.bf16 %v1789, %v1788
        %v2031 = vld [vmem:[%s3] sm:$0xf]
        %v2032 = vld [vmem:[%s3 + $0x4] sm:$0xf]
        %v2033 = vld [vmem:[%s3 + $0x8] sm:$0xf]
        %v2034 = vld [vmem:[%s3 + $0xc] sm:$0xf]
        %v2035 = vld [vmem:[%s3 + $0x10] sm:$0xf]
        %v2036 = vld [vmem:[%s3 + $0x14] sm:$0xf]
        %v2037 = vld [vmem:[%s3 + $0x18] sm:$0xf]
        %v2038 = vld [vmem:[%s3 + $0x1c] sm:$0xf]
        %v2039 = vld [vmem:[%s3 + $0x20] sm:$0xf]
        %v2040 = vld [vmem:[%s3 + $0x24] sm:$0xf]
        %v2041 = vld [vmem:[%s3 + $0x28] sm:$0xf]
        %v2042 = vld [vmem:[%s3 + $0x2c] sm:$0xf]
        %v2043 = vld [vmem:[%s3 + $0x30] sm:$0xf]
        %v2044 = vld [vmem:[%s3 + $0x34] sm:$0xf]
        %v2045 = vld [vmem:[%s3 + $0x38] sm:$0xf]
        %v2046 = vld [vmem:[%s3 + $0x3c] sm:$0xf]
        %v2047 = vpack.c.bf16 %v1862, %v1857
        %v2048 = vpack.c.bf16 %v1872, %v1867
        %v2049 = vpack.c.bf16 %v1882, %v1877
        %v2050 = vpack.c.bf16 %v1892, %v1887
        %v2051 = vpack.c.bf16 %v1902, %v1897
        %v2052 = vpack.c.bf16 %v1912, %v1907
        %v2053 = vpack.c.bf16 %v1922, %v1917
        %v2054 = vpack.c.bf16 %v1932, %v1927
        %v2055 = vpack.c.bf16 %v1942, %v1937
        %v2056 = vpack.c.bf16 %v1952, %v1947
        %v2057 = vpack.c.bf16 %v1962, %v1957
        %v2058 = vpack.c.bf16 %v1972, %v1967
        %v2059 = vpack.c.bf16 %v1982, %v1977
        %v2060 = vpack.c.bf16 %v1992, %v1987
        %v2061 = vpack.c.bf16 %v2002, %v1997
        %v2062 = vpack.c.bf16 %v2012, %v2007
        %v2063 = vld [vmem:[%s3 + $0x40] sm:$0xf]
        %v2064 = vld [vmem:[%s3 + $0x44] sm:$0xf]
        %v2065 = vld [vmem:[%s3 + $0x48] sm:$0xf]
        %v2066 = vld [vmem:[%s3 + $0x4c] sm:$0xf]
        %v2067 = vld [vmem:[%s3 + $0x50] sm:$0xf]
        %v2068 = vld [vmem:[%s3 + $0x54] sm:$0xf]
        %v2069 = vld [vmem:[%s3 + $0x58] sm:$0xf]
        %v2070 = vld [vmem:[%s3 + $0x5c] sm:$0xf]
        %v2071 = vld [vmem:[%s3 + $0x60] sm:$0xf]
        %v2072 = vld [vmem:[%s3 + $0x64] sm:$0xf]
        %v2073 = vld [vmem:[%s3 + $0x68] sm:$0xf]
        %v2074 = vld [vmem:[%s3 + $0x6c] sm:$0xf]
        %v2075 = vld [vmem:[%s3 + $0x70] sm:$0xf]
        %v2076 = vld [vmem:[%s3 + $0x74] sm:$0xf]
        %v2077 = vld [vmem:[%s3 + $0x78] sm:$0xf]
        %v2078 = vld [vmem:[%s3 + $0x7c] sm:$0xf]
        %v2095 = vunpack.c.l.b16 %v2063
        %v2096 = vunpack.c.l.b16 %v2064
        %v2097 = vunpack.c.l.b16 %v2065
        %v2098 = vunpack.c.l.b16 %v2066
        %v2099 = vunpack.c.l.b16 %v2067
        %v2100 = vunpack.c.l.b16 %v2068
        %v2101 = vunpack.c.l.b16 %v2069
        %v2102 = vunpack.c.l.b16 %v2070
        %v2103 = vunpack.c.l.b16 %v2071
        %v2104 = vunpack.c.l.b16 %v2072
        %v2105 = vunpack.c.l.b16 %v2073
        %v2106 = vunpack.c.l.b16 %v2074
        %v2107 = vunpack.c.l.b16 %v2075
        %v2108 = vunpack.c.l.b16 %v2076
        %v2109 = vunpack.c.l.b16 %v2077
        %v2110 = vunpack.c.l.b16 %v2078
        %v2111 = vpack.c.b16 %v2096, %v2095
        %v2112 = vpack.c.b16 %v2098, %v2097
        %v2113 = vpack.c.b16 %v2100, %v2099
        %v2114 = vpack.c.b16 %v2102, %v2101
        %v2115 = vpack.c.b16 %v2104, %v2103
        %v2116 = vpack.c.b16 %v2106, %v2105
        %v2117 = vpack.c.b16 %v2108, %v2107
        %v2118 = vpack.c.b16 %v2110, %v2109
        %2127 = vmatprep.subr.bf16.mxu0 0
        %2128 = vmatpush1.bf16.msra.mxu0 %v2111
        %2129 = vmatprep.subr.bf16.mxu0 0
        %2130 = vmatpush1.bf16.msra.mxu0 %v2112
        %2131 = vmatprep.subr.bf16.mxu0 0
        %2132 = vmatpush1.bf16.msra.mxu0 %v2113
        %2133 = vmatprep.subr.bf16.mxu0 0
        %2134 = vmatpush1.bf16.msra.mxu0 %v2114
        %2135 = vmatprep.subr.bf16.mxu0 0
        %2136 = vmatpush1.bf16.msra.mxu0 %v2115
        %2137 = vmatprep.subr.bf16.mxu0 0
        %2138 = vmatpush1.bf16.msra.mxu0 %v2116
        %2139 = vmatprep.subr.bf16.mxu0 0
        %2140 = vmatpush1.bf16.msra.mxu0 %v2117
        %2141 = vmatprep.subr.bf16.mxu0 0
        %2142 = vmatpush1.bf16.msra.mxu0 %v2118
        %2143 = vmatprep.subr.bf16.mxu0 0
        %2144 = vmatpush1.bf16.msra.mxu0 0
        %2145 = vmatprep.subr.bf16.mxu0 0
        %2146 = vmatpush1.bf16.msra.mxu0 0
        %2147 = vmatprep.subr.bf16.mxu0 0
        %2148 = vmatpush1.bf16.msra.mxu0 0
        %2149 = vmatprep.subr.bf16.mxu0 0
        %2150 = vmatpush1.bf16.msra.mxu0 0
        %2151 = vmatprep.subr.bf16.mxu0 0
        %2152 = vmatpush1.bf16.msra.mxu0 0
        %2153 = vmatprep.subr.bf16.mxu0 0
        %2154 = vmatpush1.bf16.msra.mxu0 0
        %2155 = vmatprep.subr.bf16.mxu0 0
        %2156 = vmatpush1.bf16.msra.mxu0 0
        %2157 = vmatprep.subr.bf16.mxu0 0
        %2158 = vmatpush1.bf16.msra.mxu0 0
        %2159 = vmatprep.mubr.bf16.mxu0 0
        %2160 = vmatmul.mubr.bf16.gmra.mrb[0].mxu0 %v2047
        %v2161 = vpop.f32.mrb[0].mxu0
        %v2162 = vadd.f32 0.0, %v2161
        %v2163 = vpop.f32.mrb[0].mxu0
        %v2164 = vpop.f32.mrb[0].mxu0
        %v2165 = vadd.f32 0.0, %v2164
        %v2166 = vpop.f32.mrb[0].mxu0
        %2167 = vmatprep.mubr.bf16.mxu0 0
        %2168 = vmatmul.mubr.bf16.gmra.mrb[0].mxu0 %v2048
        %v2169 = vpop.f32.mrb[0].mxu0
        %v2170 = vadd.f32 0.0, %v2169
        %v2171 = vpop.f32.mrb[0].mxu0
        %v2172 = vpop.f32.mrb[0].mxu0
        %v2173 = vadd.f32 0.0, %v2172
        %v2174 = vpop.f32.mrb[0].mxu0
        %2175 = vmatprep.mubr.bf16.mxu0 0
        %2176 = vmatmul.mubr.bf16.gmra.mrb[0].mxu0 %v2049
        %v2177 = vpop.f32.mrb[0].mxu0
        %v2178 = vadd.f32 0.0, %v2177
        %v2179 = vpop.f32.mrb[0].mxu0
        %v2180 = vpop.f32.mrb[0].mxu0
        %v2181 = vadd.f32 0.0, %v2180
        %v2182 = vpop.f32.mrb[0].mxu0
        %2183 = vmatprep.mubr.bf16.mxu0 0
        %2184 = vmatmul.mubr.bf16.gmra.mrb[0].mxu0 %v2050
        %v2185 = vpop.f32.mrb[0].mxu0
        %v2186 = vadd.f32 0.0, %v2185
        %v2187 = vpop.f32.mrb[0].mxu0
        %v2188 = vpop.f32.mrb[0].mxu0
        %v2189 = vadd.f32 0.0, %v2188
        %v2190 = vpop.f32.mrb[0].mxu0
        %2191 = vmatprep.mubr.bf16.mxu0 0
        %2192 = vmatmul.mubr.bf16.gmra.mrb[0].mxu0 %v2051
        %v2193 = vpop.f32.mrb[0].mxu0
        %v2194 = vadd.f32 0.0, %v2193
        %v2195 = vpop.f32.mrb[0].mxu0
        %v2196 = vpop.f32.mrb[0].mxu0
        %v2197 = vadd.f32 0.0, %v2196
        %v2198 = vpop.f32.mrb[0].mxu0
        %2199 = vmatprep.mubr.bf16.mxu0 0
        %2200 = vmatmul.mubr.bf16.gmra.mrb[0].mxu0 %v2052
        %v2201 = vpop.f32.mrb[0].mxu0
        %v2202 = vadd.f32 0.0, %v2201
        %v2203 = vpop.f32.mrb[0].mxu0
        %v2204 = vpop.f32.mrb[0].mxu0
        %v2205 = vadd.f32 0.0, %v2204
        %v2206 = vpop.f32.mrb[0].mxu0
        %2207 = vmatprep.mubr.bf16.mxu0 0
        %2208 = vmatmul.mubr.bf16.gmra.mrb[0].mxu0 %v2053
        %v2209 = vpop.f32.mrb[0].mxu0
        %v2210 = vadd.f32 0.0, %v2209
        %v2211 = vpop.f32.mrb[0].mxu0
        %v2212 = vpop.f32.mrb[0].mxu0
        %v2213 = vadd.f32 0.0, %v2212
        %v2214 = vpop.f32.mrb[0].mxu0
        %2215 = vmatprep.mubr.bf16.mxu0 0
        %2216 = vmatmul.mubr.bf16.gmra.mrb[0].mxu0 %v2054
        %v2217 = vpop.f32.mrb[0].mxu0
        %v2218 = vadd.f32 0.0, %v2217
        %v2219 = vpop.f32.mrb[0].mxu0
        %v2220 = vpop.f32.mrb[0].mxu0
        %v2221 = vadd.f32 0.0, %v2220
        %v2222 = vpop.f32.mrb[0].mxu0
        %2223 = vmatprep.mubr.bf16.mxu0 0
        %2224 = vmatmul.mubr.bf16.gmra.mrb[0].mxu0 %v2055
        %v2225 = vpop.f32.mrb[0].mxu0
        %v2226 = vadd.f32 0.0, %v2225
        %v2227 = vpop.f32.mrb[0].mxu0
        %v2228 = vpop.f32.mrb[0].mxu0
        %v2229 = vadd.f32 0.0, %v2228
        %v2230 = vpop.f32.mrb[0].mxu0
        %2231 = vmatprep.mubr.bf16.mxu0 0
        %2232 = vmatmul.mubr.bf16.gmra.mrb[0].mxu0 %v2056
        %v2233 = vpop.f32.mrb[0].mxu0
        %v2234 = vadd.f32 0.0, %v2233
        %v2235 = vpop.f32.mrb[0].mxu0
        %v2236 = vpop.f32.mrb[0].mxu0
        %v2237 = vadd.f32 0.0, %v2236
        %v2238 = vpop.f32.mrb[0].mxu0
        %2239 = vmatprep.mubr.bf16.mxu0 0
        %2240 = vmatmul.mubr.bf16.gmra.mrb[0].mxu0 %v2057
        %v2241 = vpop.f32.mrb[0].mxu0
        %v2242 = vadd.f32 0.0, %v2241
        %v2243 = vpop.f32.mrb[0].mxu0
        %v2244 = vpop.f32.mrb[0].mxu0
        %v2245 = vadd.f32 0.0, %v2244
        %v2246 = vpop.f32.mrb[0].mxu0
        %2247 = vmatprep.mubr.bf16.mxu0 0
        %2248 = vmatmul.mubr.bf16.gmra.mrb[0].mxu0 %v2058
        %v2249 = vpop.f32.mrb[0].mxu0
        %v2250 = vadd.f32 0.0, %v2249
        %v2251 = vpop.f32.mrb[0].mxu0
        %v2252 = vpop.f32.mrb[0].mxu0
        %v2253 = vadd.f32 0.0, %v2252
        %v2254 = vpop.f32.mrb[0].mxu0
        %2255 = vmatprep.mubr.bf16.mxu0 0
        %2256 = vmatmul.mubr.bf16.gmra.mrb[0].mxu0 %v2059
        %v2257 = vpop.f32.mrb[0].mxu0
        %v2258 = vadd.f32 0.0, %v2257
        %v2259 = vpop.f32.mrb[0].mxu0
        %v2260 = vpop.f32.mrb[0].mxu0
        %v2261 = vadd.f32 0.0, %v2260
        %v2262 = vpop.f32.mrb[0].mxu0
        %2263 = vmatprep.mubr.bf16.mxu0 0
        %2264 = vmatmul.mubr.bf16.gmra.mrb[0].mxu0 %v2060
        %v2265 = vpop.f32.mrb[0].mxu0
        %v2266 = vadd.f32 0.0, %v2265
        %v2267 = vpop.f32.mrb[0].mxu0
        %v2268 = vpop.f32.mrb[0].mxu0
        %v2269 = vadd.f32 0.0, %v2268
        %v2270 = vpop.f32.mrb[0].mxu0
        %2271 = vmatprep.mubr.bf16.mxu0 0
        %2272 = vmatmul.mubr.bf16.gmra.mrb[0].mxu0 %v2061
        %v2273 = vpop.f32.mrb[0].mxu0
        %v2274 = vadd.f32 0.0, %v2273
        %v2275 = vpop.f32.mrb[0].mxu0
        %v2276 = vpop.f32.mrb[0].mxu0
        %v2277 = vadd.f32 0.0, %v2276
        %v2278 = vpop.f32.mrb[0].mxu0
        %2279 = vmatprep.mubr.bf16.mxu0 0
        %2280 = vmatmul.mubr.bf16.gmra.mrb[0].mxu0 %v2062
        %v2281 = vpop.f32.mrb[0].mxu0
        %v2282 = vadd.f32 0.0, %v2281
        %v2283 = vpop.f32.mrb[0].mxu0
        %v2284 = vpop.f32.mrb[0].mxu0
        %v2285 = vadd.f32 0.0, %v2284
        %v2286 = vpop.f32.mrb[0].mxu0
        %2287 = vdwg.mxu0
        %v2304 = vunpack.c.l.b16 %v2031
        %v2305 = vunpack.c.l.b16 %v2032
        %v2306 = vunpack.c.l.b16 %v2033
        %v2307 = vunpack.c.l.b16 %v2034
        %v2308 = vunpack.c.l.b16 %v2035
        %v2309 = vunpack.c.l.b16 %v2036
        %v2310 = vunpack.c.l.b16 %v2037
        %v2311 = vunpack.c.l.b16 %v2038
        %v2312 = vunpack.c.l.b16 %v2039
        %v2313 = vunpack.c.l.b16 %v2040
        %v2314 = vunpack.c.l.b16 %v2041
        %v2315 = vunpack.c.l.b16 %v2042
        %v2316 = vunpack.c.l.b16 %v2043
        %v2317 = vunpack.c.l.b16 %v2044
        %v2318 = vunpack.c.l.b16 %v2045
        %v2319 = vunpack.c.l.b16 %v2046
        %v2320 = vpack.c.b16 %v2305, %v2304
        %v2321 = vpack.c.b16 %v2307, %v2306
        %v2322 = vpack.c.b16 %v2309, %v2308
        %v2323 = vpack.c.b16 %v2311, %v2310
        %v2324 = vpack.c.b16 %v2313, %v2312
        %v2325 = vpack.c.b16 %v2315, %v2314
        %v2326 = vpack.c.b16 %v2317, %v2316
        %v2327 = vpack.c.b16 %v2319, %v2318
        %2336 = vmatprep.subr.bf16.mxu0 0
        %2337 = vmatpush1.bf16.msra.mxu0 %v2320
        %2338 = vmatprep.subr.bf16.mxu0 0
        %2339 = vmatpush1.bf16.msra.mxu0 %v2321
        %2340 = vmatprep.subr.bf16.mxu0 0
        %2341 = vmatpush1.bf16.msra.mxu0 %v2322
        %2342 = vmatprep.subr.bf16.mxu0 0
        %2343 = vmatpush1.bf16.msra.mxu0 %v2323
        %2344 = vmatprep.subr.bf16.mxu0 0
        %2345 = vmatpush1.bf16.msra.mxu0 %v2324
        %2346 = vmatprep.subr.bf16.mxu0 0
        %2347 = vmatpush1.bf16.msra.mxu0 %v2325
        %2348 = vmatprep.subr.bf16.mxu0 0
        %2349 = vmatpush1.bf16.msra.mxu0 %v2326
        %2350 = vmatprep.subr.bf16.mxu0 0
        %2351 = vmatpush1.bf16.msra.mxu0 %v2327
        %2352 = vmatprep.subr.bf16.mxu0 0
        %2353 = vmatpush1.bf16.msra.mxu0 0
        %2354 = vmatprep.subr.bf16.mxu0 0
        %2355 = vmatpush1.bf16.msra.mxu0 0
        %2356 = vmatprep.subr.bf16.mxu0 0
        %2357 = vmatpush1.bf16.msra.mxu0 0
        %2358 = vmatprep.subr.bf16.mxu0 0
        %2359 = vmatpush1.bf16.msra.mxu0 0
        %2360 = vmatprep.subr.bf16.mxu0 0
        %2361 = vmatpush1.bf16.msra.mxu0 0
        %2362 = vmatprep.subr.bf16.mxu0 0
        %2363 = vmatpush1.bf16.msra.mxu0 0
        %2364 = vmatprep.subr.bf16.mxu0 0
        %2365 = vmatpush1.bf16.msra.mxu0 0
        %2366 = vmatprep.subr.bf16.mxu0 0
        %2367 = vmatpush1.bf16.msra.mxu0 0
        %2368 = vmatprep.mubr.bf16.mxu0 0
        %2369 = vmatmul.mubr.bf16.gmra.mrb[0].mxu0 %v2015
        %v2370 = vpop.f32.mrb[0].mxu0
        %v2371 = vadd.f32 %v2162, %v2370
        %v2372 = vpop.f32.mrb[0].mxu0
        %v2373 = vpop.f32.mrb[0].mxu0
        %v2374 = vadd.f32 %v2165, %v2373
        %v2375 = vpop.f32.mrb[0].mxu0
        %2376 = vmatprep.mubr.bf16.mxu0 0
        %2377 = vmatmul.mubr.bf16.gmra.mrb[0].mxu0 %v2016
        %v2378 = vpop.f32.mrb[0].mxu0
        %v2379 = vadd.f32 %v2170, %v2378
        %v2380 = vpop.f32.mrb[0].mxu0
        %v2381 = vpop.f32.mrb[0].mxu0
        %v2382 = vadd.f32 %v2173, %v2381
        %v2383 = vpop.f32.mrb[0].mxu0
        %2384 = vmatprep.mubr.bf16.mxu0 0
        %2385 = vmatmul.mubr.bf16.gmra.mrb[0].mxu0 %v2017
        %v2386 = vpop.f32.mrb[0].mxu0
        %v2387 = vadd.f32 %v2178, %v2386
        %v2388 = vpop.f32.mrb[0].mxu0
        %v2389 = vpop.f32.mrb[0].mxu0
        %v2390 = vadd.f32 %v2181, %v2389
        %v2391 = vpop.f32.mrb[0].mxu0
        %2392 = vmatprep.mubr.bf16.mxu0 0
        %2393 = vmatmul.mubr.bf16.gmra.mrb[0].mxu0 %v2018
        %v2394 = vpop.f32.mrb[0].mxu0
        %v2395 = vadd.f32 %v2186, %v2394
        %v2396 = vpop.f32.mrb[0].mxu0
        %v2397 = vpop.f32.mrb[0].mxu0
        %v2398 = vadd.f32 %v2189, %v2397
        %v2399 = vpop.f32.mrb[0].mxu0
        %2400 = vmatprep.mubr.bf16.mxu0 0
        %2401 = vmatmul.mubr.bf16.gmra.mrb[0].mxu0 %v2019
        %v2402 = vpop.f32.mrb[0].mxu0
        %v2403 = vadd.f32 %v2194, %v2402
        %v2404 = vpop.f32.mrb[0].mxu0
        %v2405 = vpop.f32.mrb[0].mxu0
        %v2406 = vadd.f32 %v2197, %v2405
        %v2407 = vpop.f32.mrb[0].mxu0
        %2408 = vmatprep.mubr.bf16.mxu0 0
        %2409 = vmatmul.mubr.bf16.gmra.mrb[0].mxu0 %v2020
        %v2410 = vpop.f32.mrb[0].mxu0
        %v2411 = vadd.f32 %v2202, %v2410
        %v2412 = vpop.f32.mrb[0].mxu0
        %v2413 = vpop.f32.mrb[0].mxu0
        %v2414 = vadd.f32 %v2205, %v2413
        %v2415 = vpop.f32.mrb[0].mxu0
        %2416 = vmatprep.mubr.bf16.mxu0 0
        %2417 = vmatmul.mubr.bf16.gmra.mrb[0].mxu0 %v2021
        %v2418 = vpop.f32.mrb[0].mxu0
        %v2419 = vadd.f32 %v2210, %v2418
        %v2420 = vpop.f32.mrb[0].mxu0
        %v2421 = vpop.f32.mrb[0].mxu0
        %v2422 = vadd.f32 %v2213, %v2421
        %v2423 = vpop.f32.mrb[0].mxu0
        %2424 = vmatprep.mubr.bf16.mxu0 0
        %2425 = vmatmul.mubr.bf16.gmra.mrb[0].mxu0 %v2022
        %v2426 = vpop.f32.mrb[0].mxu0
        %v2427 = vadd.f32 %v2218, %v2426
        %v2428 = vpop.f32.mrb[0].mxu0
        %v2429 = vpop.f32.mrb[0].mxu0
        %v2430 = vadd.f32 %v2221, %v2429
        %v2431 = vpop.f32.mrb[0].mxu0
        %2432 = vmatprep.mubr.bf16.mxu0 0
        %2433 = vmatmul.mubr.bf16.gmra.mrb[0].mxu0 %v2023
        %v2434 = vpop.f32.mrb[0].mxu0
        %v2435 = vadd.f32 %v2226, %v2434
        %v2436 = vpop.f32.mrb[0].mxu0
        %v2437 = vpop.f32.mrb[0].mxu0
        %v2438 = vadd.f32 %v2229, %v2437
        %v2439 = vpop.f32.mrb[0].mxu0
        %2440 = vmatprep.mubr.bf16.mxu0 0
        %2441 = vmatmul.mubr.bf16.gmra.mrb[0].mxu0 %v2024
        %v2442 = vpop.f32.mrb[0].mxu0
        %v2443 = vadd.f32 %v2234, %v2442
        %v2444 = vpop.f32.mrb[0].mxu0
        %v2445 = vpop.f32.mrb[0].mxu0
        %v2446 = vadd.f32 %v2237, %v2445
        %v2447 = vpop.f32.mrb[0].mxu0
        %2448 = vmatprep.mubr.bf16.mxu0 0
        %2449 = vmatmul.mubr.bf16.gmra.mrb[0].mxu0 %v2025
        %v2450 = vpop.f32.mrb[0].mxu0
        %v2451 = vadd.f32 %v2242, %v2450
        %v2452 = vpop.f32.mrb[0].mxu0
        %v2453 = vpop.f32.mrb[0].mxu0
        %v2454 = vadd.f32 %v2245, %v2453
        %v2455 = vpop.f32.mrb[0].mxu0
        %2456 = vmatprep.mubr.bf16.mxu0 0
        %2457 = vmatmul.mubr.bf16.gmra.mrb[0].mxu0 %v2026
        %v2458 = vpop.f32.mrb[0].mxu0
        %v2459 = vadd.f32 %v2250, %v2458
        %v2460 = vpop.f32.mrb[0].mxu0
        %v2461 = vpop.f32.mrb[0].mxu0
        %v2462 = vadd.f32 %v2253, %v2461
        %v2463 = vpop.f32.mrb[0].mxu0
        %2464 = vmatprep.mubr.bf16.mxu0 0
        %2465 = vmatmul.mubr.bf16.gmra.mrb[0].mxu0 %v2027
        %v2466 = vpop.f32.mrb[0].mxu0
        %v2467 = vadd.f32 %v2258, %v2466
        %v2468 = vpop.f32.mrb[0].mxu0
        %v2469 = vpop.f32.mrb[0].mxu0
        %v2470 = vadd.f32 %v2261, %v2469
        %v2471 = vpop.f32.mrb[0].mxu0
        %2472 = vmatprep.mubr.bf16.mxu0 0
        %2473 = vmatmul.mubr.bf16.gmra.mrb[0].mxu0 %v2028
        %v2474 = vpop.f32.mrb[0].mxu0
        %v2475 = vadd.f32 %v2266, %v2474
        %v2476 = vpop.f32.mrb[0].mxu0
        %v2477 = vpop.f32.mrb[0].mxu0
        %v2478 = vadd.f32 %v2269, %v2477
        %v2479 = vpop.f32.mrb[0].mxu0
        %2480 = vmatprep.mubr.bf16.mxu0 0
        %2481 = vmatmul.mubr.bf16.gmra.mrb[0].mxu0 %v2029
        %v2482 = vpop.f32.mrb[0].mxu0
        %v2483 = vadd.f32 %v2274, %v2482
        %v2484 = vpop.f32.mrb[0].mxu0
        %v2485 = vpop.f32.mrb[0].mxu0
        %v2486 = vadd.f32 %v2277, %v2485
        %v2487 = vpop.f32.mrb[0].mxu0
        %2488 = vmatprep.mubr.bf16.mxu0 0
        %2489 = vmatmul.mubr.bf16.gmra.mrb[0].mxu0 %v2030
        %v2490 = vpop.f32.mrb[0].mxu0
        %v2491 = vadd.f32 %v2282, %v2490
        %v2492 = vpop.f32.mrb[0].mxu0
        %v2493 = vpop.f32.mrb[0].mxu0
        %v2494 = vadd.f32 %v2285, %v2493
        %v2495 = vpop.f32.mrb[0].mxu0
        %2496 = vdwg.mxu0
        %v2497 = vld [vmem:[%s9] sm:$0x1]
        %v2499 = vlaneseq
        %v2500 = vshrl.u32 %v2499, 7
        %v2501 = vsub.s32 0, %v2500
        %v2502 = vrot.slane %v2497, %v2501
        %v2504 = vadd.f32 %v2371, %v2502
        %v2505 = vadd.f32 %v2374, %v2502
        %v2506 = vadd.f32 %v2379, %v2502
        %v2507 = vadd.f32 %v2382, %v2502
        %v2508 = vadd.f32 %v2387, %v2502
        %v2509 = vadd.f32 %v2390, %v2502
        %v2510 = vadd.f32 %v2395, %v2502
        %v2511 = vadd.f32 %v2398, %v2502
        %v2512 = vadd.f32 %v2403, %v2502
        %v2513 = vadd.f32 %v2406, %v2502
        %v2514 = vadd.f32 %v2411, %v2502
        %v2515 = vadd.f32 %v2414, %v2502
        %v2516 = vadd.f32 %v2419, %v2502
        %v2517 = vadd.f32 %v2422, %v2502
        %v2518 = vadd.f32 %v2427, %v2502
        %v2519 = vadd.f32 %v2430, %v2502
        %v2520 = vadd.f32 %v2435, %v2502
        %v2521 = vadd.f32 %v2438, %v2502
        %v2522 = vadd.f32 %v2443, %v2502
        %v2523 = vadd.f32 %v2446, %v2502
        %v2524 = vadd.f32 %v2451, %v2502
        %v2525 = vadd.f32 %v2454, %v2502
        %v2526 = vadd.f32 %v2459, %v2502
        %v2527 = vadd.f32 %v2462, %v2502
        %v2528 = vadd.f32 %v2467, %v2502
        %v2529 = vadd.f32 %v2470, %v2502
        %v2530 = vadd.f32 %v2475, %v2502
        %v2531 = vadd.f32 %v2478, %v2502
        %v2532 = vadd.f32 %v2483, %v2502
        %v2533 = vadd.f32 %v2486, %v2502
        %v2534 = vadd.f32 %v2491, %v2502
        %v2535 = vadd.f32 %v2494, %v2502
        %v2536 = vmax.f32 %v2504, 0.0
        %v2537 = vmax.f32 %v2505, 0.0
        %v2538 = vmax.f32 %v2506, 0.0
        %v2539 = vmax.f32 %v2507, 0.0
        %v2540 = vmax.f32 %v2508, 0.0
        %v2541 = vmax.f32 %v2509, 0.0
        %v2542 = vmax.f32 %v2510, 0.0
        %v2543 = vmax.f32 %v2511, 0.0
        %v2544 = vmax.f32 %v2512, 0.0
        %v2545 = vmax.f32 %v2513, 0.0
        %v2546 = vmax.f32 %v2514, 0.0
        %v2547 = vmax.f32 %v2515, 0.0
        %v2548 = vmax.f32 %v2516, 0.0
        %v2549 = vmax.f32 %v2517, 0.0
        %v2550 = vmax.f32 %v2518, 0.0
        %v2551 = vmax.f32 %v2519, 0.0
        %v2552 = vmax.f32 %v2520, 0.0
        %v2553 = vmax.f32 %v2521, 0.0
        %v2554 = vmax.f32 %v2522, 0.0
        %v2555 = vmax.f32 %v2523, 0.0
        %v2556 = vmax.f32 %v2524, 0.0
        %v2557 = vmax.f32 %v2525, 0.0
        %v2558 = vmax.f32 %v2526, 0.0
        %v2559 = vmax.f32 %v2527, 0.0
        %v2560 = vmax.f32 %v2528, 0.0
        %v2561 = vmax.f32 %v2529, 0.0
        %v2562 = vmax.f32 %v2530, 0.0
        %v2563 = vmax.f32 %v2531, 0.0
        %v2564 = vmax.f32 %v2532, 0.0
        %v2565 = vmax.f32 %v2533, 0.0
        %v2566 = vmax.f32 %v2534, 0.0
        %v2567 = vmax.f32 %v2535, 0.0
        %v2568 = vadd.f32 %v2536, %v1756
        %v2569 = vadd.f32 %v2537, %v1756
        %v2570 = vadd.f32 %v2538, %v1756
        %v2571 = vadd.f32 %v2539, %v1756
        %v2572 = vadd.f32 %v2540, %v1756
        %v2573 = vadd.f32 %v2541, %v1756
        %v2574 = vadd.f32 %v2542, %v1756
        %v2575 = vadd.f32 %v2543, %v1756
        %v2576 = vadd.f32 %v2544, %v1756
        %v2577 = vadd.f32 %v2545, %v1756
        %v2578 = vadd.f32 %v2546, %v1756
        %v2579 = vadd.f32 %v2547, %v1756
        %v2580 = vadd.f32 %v2548, %v1756
        %v2581 = vadd.f32 %v2549, %v1756
        %v2582 = vadd.f32 %v2550, %v1756
        %v2583 = vadd.f32 %v2551, %v1756
        %v2584 = vadd.f32 %v2552, %v1756
        %v2585 = vadd.f32 %v2553, %v1756
        %v2586 = vadd.f32 %v2554, %v1756
        %v2587 = vadd.f32 %v2555, %v1756
        %v2588 = vadd.f32 %v2556, %v1756
        %v2589 = vadd.f32 %v2557, %v1756
        %v2590 = vadd.f32 %v2558, %v1756
        %v2591 = vadd.f32 %v2559, %v1756
        %v2592 = vadd.f32 %v2560, %v1756
        %v2593 = vadd.f32 %v2561, %v1756
        %v2594 = vadd.f32 %v2562, %v1756
        %v2595 = vadd.f32 %v2563, %v1756
        %v2596 = vadd.f32 %v2564, %v1756
        %v2597 = vadd.f32 %v2565, %v1756
        %v2598 = vadd.f32 %v2566, %v1756
        %v2599 = vadd.f32 %v2567, %v1756
        %v2600 = vmul.f32 %v1758, 0.7
        %v2601 = vmul.f32 %v1759, 0.7
        %v2602 = vmul.f32 %v1760, 0.7
        %v2603 = vmul.f32 %v1761, 0.7
        %v2604 = vmul.f32 %v1762, 0.7
        %v2605 = vmul.f32 %v1763, 0.7
        %v2606 = vmul.f32 %v1764, 0.7
        %v2607 = vmul.f32 %v1765, 0.7
        %v2608 = vmul.f32 %v1766, 0.7
        %v2609 = vmul.f32 %v1767, 0.7
        %v2610 = vmul.f32 %v1768, 0.7
        %v2611 = vmul.f32 %v1769, 0.7
        %v2612 = vmul.f32 %v1770, 0.7
        %v2613 = vmul.f32 %v1771, 0.7
        %v2614 = vmul.f32 %v1772, 0.7
        %v2615 = vmul.f32 %v1773, 0.7
        %v2616 = vmul.f32 %v1774, 0.7
        %v2617 = vmul.f32 %v1775, 0.7
        %v2618 = vmul.f32 %v1776, 0.7
        %v2619 = vmul.f32 %v1777, 0.7
        %v2620 = vmul.f32 %v1778, 0.7
        %v2621 = vmul.f32 %v1779, 0.7
        %v2622 = vmul.f32 %v1780, 0.7
        %v2623 = vmul.f32 %v1781, 0.7
        %v2624 = vmul.f32 %v1782, 0.7
        %v2625 = vmul.f32 %v1783, 0.7
        %v2626 = vmul.f32 %v1784, 0.7
        %v2627 = vmul.f32 %v1785, 0.7
        %v2628 = vmul.f32 %v1786, 0.7
        %v2629 = vmul.f32 %v1787, 0.7
        %v2630 = vmul.f32 %v1788, 0.7
        %v2631 = vmul.f32 %v1789, 0.7
        %v2632 = vadd.f32 %v2568, %v2600
        %v2633 = vadd.f32 %v2569, %v2601
        %v2634 = vadd.f32 %v2570, %v2602
        %v2635 = vadd.f32 %v2571, %v2603
        %v2636 = vadd.f32 %v2572, %v2604
        %v2637 = vadd.f32 %v2573, %v2605
        %v2638 = vadd.f32 %v2574, %v2606
        %v2639 = vadd.f32 %v2575, %v2607
        %v2640 = vadd.f32 %v2576, %v2608
        %v2641 = vadd.f32 %v2577, %v2609
        %v2642 = vadd.f32 %v2578, %v2610
        %v2643 = vadd.f32 %v2579, %v2611
        %v2644 = vadd.f32 %v2580, %v2612
        %v2645 = vadd.f32 %v2581, %v2613
        %v2646 = vadd.f32 %v2582, %v2614
        %v2647 = vadd.f32 %v2583, %v2615
        %v2648 = vadd.f32 %v2584, %v2616
        %v2649 = vadd.f32 %v2585, %v2617
        %v2650 = vadd.f32 %v2586, %v2618
        %v2651 = vadd.f32 %v2587, %v2619
        %v2652 = vadd.f32 %v2588, %v2620
        %v2653 = vadd.f32 %v2589, %v2621
        %v2654 = vadd.f32 %v2590, %v2622
        %v2655 = vadd.f32 %v2591, %v2623
        %v2656 = vadd.f32 %v2592, %v2624
        %v2657 = vadd.f32 %v2593, %v2625
        %v2658 = vadd.f32 %v2594, %v2626
        %v2659 = vadd.f32 %v2595, %v2627
        %v2660 = vadd.f32 %v2596, %v2628
        %v2661 = vadd.f32 %v2597, %v2629
        %v2662 = vadd.f32 %v2598, %v2630
        %v2663 = vadd.f32 %v2599, %v2631
        %2664 = vmatprep.subr.mxu0 0.0
        %2665 = vmatpush1.msra.mxu0 %v2632
        %2666 = vmatprep.subr.mxu0 0.0
        %2667 = vmatpush1.msra.mxu0 %v2633
        %2668 = vmatprep.subr.mxu0 0.0
        %2669 = vmatpush1.msra.mxu0 %v2634
        %2670 = vmatprep.subr.mxu0 0.0
        %2671 = vmatpush1.msra.mxu0 %v2635
        %2672 = vmatprep.subr.mxu0 0.0
        %2673 = vmatpush1.msra.mxu0 %v2636
        %2674 = vmatprep.subr.mxu0 0.0
        %2675 = vmatpush1.msra.mxu0 %v2637
        %2676 = vmatprep.subr.mxu0 0.0
        %2677 = vmatpush1.msra.mxu0 %v2638
        %2678 = vmatprep.subr.mxu0 0.0
        %2679 = vmatpush1.msra.mxu0 %v2639
        %2680 = vmatprep.subr.mxu0 0.0
        %2681 = vmatpush1.msra.mxu0 %v2640
        %2682 = vmatprep.subr.mxu0 0.0
        %2683 = vmatpush1.msra.mxu0 %v2641
        %2684 = vmatprep.subr.mxu0 0.0
        %2685 = vmatpush1.msra.mxu0 %v2642
        %2686 = vmatprep.subr.mxu0 0.0
        %2687 = vmatpush1.msra.mxu0 %v2643
        %2688 = vmatprep.subr.mxu0 0.0
        %2689 = vmatpush1.msra.mxu0 %v2644
        %2690 = vmatprep.subr.mxu0 0.0
        %2691 = vmatpush1.msra.mxu0 %v2645
        %2692 = vmatprep.subr.mxu0 0.0
        %2693 = vmatpush1.msra.mxu0 %v2646
        %2694 = vmatprep.subr.mxu0 0.0
        %2695 = vmatpush1.msra.mxu0 %v2647
        %2696 = vmatprep.subr.mxu0 0.0
        %2697 = vmatpush1.msra.mxu0 %v2648
        %2698 = vmatprep.subr.mxu0 0.0
        %2699 = vmatpush1.msra.mxu0 %v2649
        %2700 = vmatprep.subr.mxu0 0.0
        %2701 = vmatpush1.msra.mxu0 %v2650
        %2702 = vmatprep.subr.mxu0 0.0
        %2703 = vmatpush1.msra.mxu0 %v2651
        %2704 = vmatprep.subr.mxu0 0.0
        %2705 = vmatpush1.msra.mxu0 %v2652
        %2706 = vmatprep.subr.mxu0 0.0
        %2707 = vmatpush1.msra.mxu0 %v2653
        %2708 = vmatprep.subr.mxu0 0.0
        %2709 = vmatpush1.msra.mxu0 %v2654
        %2710 = vmatprep.subr.mxu0 0.0
        %2711 = vmatpush1.msra.mxu0 %v2655
        %2712 = vmatprep.subr.mxu0 0.0
        %2713 = vmatpush1.msra.mxu0 %v2656
        %2714 = vmatprep.subr.mxu0 0.0
        %2715 = vmatpush1.msra.mxu0 %v2657
        %2716 = vmatprep.subr.mxu0 0.0
        %2717 = vmatpush1.msra.mxu0 %v2658
        %2718 = vmatprep.subr.mxu0 0.0
        %2719 = vmatpush1.msra.mxu0 %v2659
        %2720 = vmatprep.subr.mxu0 0.0
        %2721 = vmatpush1.msra.mxu0 %v2660
        %2722 = vmatprep.subr.mxu0 0.0
        %2723 = vmatpush1.msra.mxu0 %v2661
        %2724 = vmatprep.subr.mxu0 0.0
        %2725 = vmatpush1.msra.mxu0 %v2662
        %2726 = vmatprep.subr.mxu0 0.0
        %2727 = vmatpush1.msra.mxu0 %v2663
        %2728 = vmatprep.mubr.f32.mxu0 %v622
        %2729 = vmatmul.mubr.f32.gmra.mrb[0].mxu0 %v621
        %v2730 = vpop.f32.mrb[0].mxu0
        %v2731 = vadd.f32 0.0, %v2730
        %v2732 = vpop.f32.mrb[0].mxu0
        %2733 = vmatprep.mubr.f32.mxu0 %v624
        %2734 = vmatmul.mubr.f32.gmra.mrb[0].mxu0 %v623
        %v2735 = vpop.f32.mrb[0].mxu0
        %v2736 = vadd.f32 0.0, %v2735
        %v2737 = vpop.f32.mrb[0].mxu0
        %2738 = vmatprep.mubr.f32.mxu0 %v626
        %2739 = vmatmul.mubr.f32.gmra.mrb[0].mxu0 %v625
        %v2740 = vpop.f32.mrb[0].mxu0
        %v2741 = vadd.f32 0.0, %v2740
        %v2742 = vpop.f32.mrb[0].mxu0
        %2743 = vmatprep.mubr.f32.mxu0 %v628
        %2744 = vmatmul.mubr.f32.gmra.mrb[0].mxu0 %v627
        %v2745 = vpop.f32.mrb[0].mxu0
        %v2746 = vadd.f32 0.0, %v2745
        %v2747 = vpop.f32.mrb[0].mxu0
        %2748 = vmatprep.mubr.f32.mxu0 %v630
        %2749 = vmatmul.mubr.f32.gmra.mrb[0].mxu0 %v629
        %v2750 = vpop.f32.mrb[0].mxu0
        %v2751 = vadd.f32 0.0, %v2750
        %v2752 = vpop.f32.mrb[0].mxu0
        %2753 = vmatprep.mubr.f32.mxu0 %v632
        %2754 = vmatmul.mubr.f32.gmra.mrb[0].mxu0 %v631
        %v2755 = vpop.f32.mrb[0].mxu0
        %v2756 = vadd.f32 0.0, %v2755
        %v2757 = vpop.f32.mrb[0].mxu0
        %2758 = vmatprep.mubr.f32.mxu0 %v634
        %2759 = vmatmul.mubr.f32.gmra.mrb[0].mxu0 %v633
        %v2760 = vpop.f32.mrb[0].mxu0
        %v2761 = vadd.f32 0.0, %v2760
        %v2762 = vpop.f32.mrb[0].mxu0
        %2763 = vmatprep.mubr.f32.mxu0 %v636
        %2764 = vmatmul.mubr.f32.gmra.mrb[0].mxu0 %v635
        %v2765 = vpop.f32.mrb[0].mxu0
        %v2766 = vadd.f32 0.0, %v2765
        %v2767 = vpop.f32.mrb[0].mxu0
        %2768 = vmatprep.mubr.f32.mxu0 %v638
        %2769 = vmatmul.mubr.f32.gmra.mrb[0].mxu0 %v637
        %v2770 = vpop.f32.mrb[0].mxu0
        %v2771 = vadd.f32 0.0, %v2770
        %v2772 = vpop.f32.mrb[0].mxu0
        %2773 = vmatprep.mubr.f32.mxu0 %v640
        %2774 = vmatmul.mubr.f32.gmra.mrb[0].mxu0 %v639
        %v2775 = vpop.f32.mrb[0].mxu0
        %v2776 = vadd.f32 0.0, %v2775
        %v2777 = vpop.f32.mrb[0].mxu0
        %2778 = vmatprep.mubr.f32.mxu0 %v642
        %2779 = vmatmul.mubr.f32.gmra.mrb[0].mxu0 %v641
        %v2780 = vpop.f32.mrb[0].mxu0
        %v2781 = vadd.f32 0.0, %v2780
        %v2782 = vpop.f32.mrb[0].mxu0
        %2783 = vmatprep.mubr.f32.mxu0 %v644
        %2784 = vmatmul.mubr.f32.gmra.mrb[0].mxu0 %v643
        %v2785 = vpop.f32.mrb[0].mxu0
        %v2786 = vadd.f32 0.0, %v2785
        %v2787 = vpop.f32.mrb[0].mxu0
        %2788 = vmatprep.mubr.f32.mxu0 %v646
        %2789 = vmatmul.mubr.f32.gmra.mrb[0].mxu0 %v645
        %v2790 = vpop.f32.mrb[0].mxu0
        %v2791 = vadd.f32 0.0, %v2790
        %v2792 = vpop.f32.mrb[0].mxu0
        %2793 = vmatprep.mubr.f32.mxu0 %v648
        %2794 = vmatmul.mubr.f32.gmra.mrb[0].mxu0 %v647
        %v2795 = vpop.f32.mrb[0].mxu0
        %v2796 = vadd.f32 0.0, %v2795
        %v2797 = vpop.f32.mrb[0].mxu0
        %2798 = vmatprep.mubr.f32.mxu0 %v650
        %2799 = vmatmul.mubr.f32.gmra.mrb[0].mxu0 %v649
        %v2800 = vpop.f32.mrb[0].mxu0
        %v2801 = vadd.f32 0.0, %v2800
        %v2802 = vpop.f32.mrb[0].mxu0
        %2803 = vmatprep.mubr.f32.mxu0 %v652
        %2804 = vmatmul.mubr.f32.gmra.mrb[0].mxu0 %v651
        %v2805 = vpop.f32.mrb[0].mxu0
        %v2806 = vadd.f32 0.0, %v2805
        %v2807 = vpop.f32.mrb[0].mxu0
        %2808 = vmatprep.mubr.f32.mxu0 %v654
        %2809 = vmatmul.mubr.f32.gmra.mrb[0].mxu0 %v653
        %v2810 = vpop.f32.mrb[0].mxu0
        %v2811 = vadd.f32 0.0, %v2810
        %v2812 = vpop.f32.mrb[0].mxu0
        %2813 = vmatprep.mubr.f32.mxu0 %v656
        %2814 = vmatmul.mubr.f32.gmra.mrb[0].mxu0 %v655
        %v2815 = vpop.f32.mrb[0].mxu0
        %v2816 = vadd.f32 0.0, %v2815
        %v2817 = vpop.f32.mrb[0].mxu0
        %2818 = vmatprep.mubr.f32.mxu0 %v658
        %2819 = vmatmul.mubr.f32.gmra.mrb[0].mxu0 %v657
        %v2820 = vpop.f32.mrb[0].mxu0
        %v2821 = vadd.f32 0.0, %v2820
        %v2822 = vpop.f32.mrb[0].mxu0
        %2823 = vmatprep.mubr.f32.mxu0 %v660
        %2824 = vmatmul.mubr.f32.gmra.mrb[0].mxu0 %v659
        %v2825 = vpop.f32.mrb[0].mxu0
        %v2826 = vadd.f32 0.0, %v2825
        %v2827 = vpop.f32.mrb[0].mxu0
        %2828 = vmatprep.mubr.f32.mxu0 %v662
        %2829 = vmatmul.mubr.f32.gmra.mrb[0].mxu0 %v661
        %v2830 = vpop.f32.mrb[0].mxu0
        %v2831 = vadd.f32 0.0, %v2830
        %v2832 = vpop.f32.mrb[0].mxu0
        %2833 = vmatprep.mubr.f32.mxu0 %v664
        %2834 = vmatmul.mubr.f32.gmra.mrb[0].mxu0 %v663
        %v2835 = vpop.f32.mrb[0].mxu0
        %v2836 = vadd.f32 0.0, %v2835
        %v2837 = vpop.f32.mrb[0].mxu0
        %2838 = vmatprep.mubr.f32.mxu0 %v666
        %2839 = vmatmul.mubr.f32.gmra.mrb[0].mxu0 %v665
        %v2840 = vpop.f32.mrb[0].mxu0
        %v2841 = vadd.f32 0.0, %v2840
        %v2842 = vpop.f32.mrb[0].mxu0
        %2843 = vmatprep.mubr.f32.mxu0 %v668
        %2844 = vmatmul.mubr.f32.gmra.mrb[0].mxu0 %v667
        %v2845 = vpop.f32.mrb[0].mxu0
        %v2846 = vadd.f32 0.0, %v2845
        %v2847 = vpop.f32.mrb[0].mxu0
        %2848 = vmatprep.mubr.f32.mxu0 %v670
        %2849 = vmatmul.mubr.f32.gmra.mrb[0].mxu0 %v669
        %v2850 = vpop.f32.mrb[0].mxu0
        %v2851 = vadd.f32 0.0, %v2850
        %v2852 = vpop.f32.mrb[0].mxu0
        %2853 = vmatprep.mubr.f32.mxu0 %v672
        %2854 = vmatmul.mubr.f32.gmra.mrb[0].mxu0 %v671
        %v2855 = vpop.f32.mrb[0].mxu0
        %v2856 = vadd.f32 0.0, %v2855
        %v2857 = vpop.f32.mrb[0].mxu0
        %2858 = vmatprep.mubr.f32.mxu0 %v674
        %2859 = vmatmul.mubr.f32.gmra.mrb[0].mxu0 %v673
        %v2860 = vpop.f32.mrb[0].mxu0
        %v2861 = vadd.f32 0.0, %v2860
        %v2862 = vpop.f32.mrb[0].mxu0
        %2863 = vmatprep.mubr.f32.mxu0 %v676
        %2864 = vmatmul.mubr.f32.gmra.mrb[0].mxu0 %v675
        %v2865 = vpop.f32.mrb[0].mxu0
        %v2866 = vadd.f32 0.0, %v2865
        %v2867 = vpop.f32.mrb[0].mxu0
        %2868 = vmatprep.mubr.f32.mxu0 %v678
        %2869 = vmatmul.mubr.f32.gmra.mrb[0].mxu0 %v677
        %v2870 = vpop.f32.mrb[0].mxu0
        %v2871 = vadd.f32 0.0, %v2870
        %v2872 = vpop.f32.mrb[0].mxu0
        %2873 = vmatprep.mubr.f32.mxu0 %v680
        %2874 = vmatmul.mubr.f32.gmra.mrb[0].mxu0 %v679
        %v2875 = vpop.f32.mrb[0].mxu0
        %v2876 = vadd.f32 0.0, %v2875
        %v2877 = vpop.f32.mrb[0].mxu0
        %2878 = vmatprep.mubr.f32.mxu0 %v682
        %2879 = vmatmul.mubr.f32.gmra.mrb[0].mxu0 %v681
        %v2880 = vpop.f32.mrb[0].mxu0
        %v2881 = vadd.f32 0.0, %v2880
        %v2882 = vpop.f32.mrb[0].mxu0
        %2883 = vmatprep.mubr.f32.mxu0 %v684
        %2884 = vmatmul.mubr.f32.gmra.mrb[0].mxu0 %v683
        %v2885 = vpop.f32.mrb[0].mxu0
        %v2886 = vadd.f32 0.0, %v2885
        %v2887 = vpop.f32.mrb[0].mxu0
        %2888 = vdwg.mxu0
        %v2889 = vpack.c.bf16 %v2633, %v2632
        %v2890 = vpack.c.bf16 %v2635, %v2634
        %v2891 = vpack.c.bf16 %v2637, %v2636
        %v2892 = vpack.c.bf16 %v2639, %v2638
        %v2893 = vpack.c.bf16 %v2641, %v2640
        %v2894 = vpack.c.bf16 %v2643, %v2642
        %v2895 = vpack.c.bf16 %v2645, %v2644
        %v2896 = vpack.c.bf16 %v2647, %v2646
        %v2897 = vpack.c.bf16 %v2649, %v2648
        %v2898 = vpack.c.bf16 %v2651, %v2650
        %v2899 = vpack.c.bf16 %v2653, %v2652
        %v2900 = vpack.c.bf16 %v2655, %v2654
        %v2901 = vpack.c.bf16 %v2657, %v2656
        %v2902 = vpack.c.bf16 %v2659, %v2658
        %v2903 = vpack.c.bf16 %v2661, %v2660
        %v2904 = vpack.c.bf16 %v2663, %v2662
        %v2905 = vld [vmem:[%s4] sm:$0xf]
        %v2906 = vld [vmem:[%s4 + $0x4] sm:$0xf]
        %v2907 = vld [vmem:[%s4 + $0x8] sm:$0xf]
        %v2908 = vld [vmem:[%s4 + $0xc] sm:$0xf]
        %v2909 = vld [vmem:[%s4 + $0x10] sm:$0xf]
        %v2910 = vld [vmem:[%s4 + $0x14] sm:$0xf]
        %v2911 = vld [vmem:[%s4 + $0x18] sm:$0xf]
        %v2912 = vld [vmem:[%s4 + $0x1c] sm:$0xf]
        %v2913 = vld [vmem:[%s4 + $0x20] sm:$0xf]
        %v2914 = vld [vmem:[%s4 + $0x24] sm:$0xf]
        %v2915 = vld [vmem:[%s4 + $0x28] sm:$0xf]
        %v2916 = vld [vmem:[%s4 + $0x2c] sm:$0xf]
        %v2917 = vld [vmem:[%s4 + $0x30] sm:$0xf]
        %v2918 = vld [vmem:[%s4 + $0x34] sm:$0xf]
        %v2919 = vld [vmem:[%s4 + $0x38] sm:$0xf]
        %v2920 = vld [vmem:[%s4 + $0x3c] sm:$0xf]
        %v2921 = vpack.c.bf16 %v2736, %v2731
        %v2922 = vpack.c.bf16 %v2746, %v2741
        %v2923 = vpack.c.bf16 %v2756, %v2751
        %v2924 = vpack.c.bf16 %v2766, %v2761
        %v2925 = vpack.c.bf16 %v2776, %v2771
        %v2926 = vpack.c.bf16 %v2786, %v2781
        %v2927 = vpack.c.bf16 %v2796, %v2791
        %v2928 = vpack.c.bf16 %v2806, %v2801
        %v2929 = vpack.c.bf16 %v2816, %v2811
        %v2930 = vpack.c.bf16 %v2826, %v2821
        %v2931 = vpack.c.bf16 %v2836, %v2831
        %v2932 = vpack.c.bf16 %v2846, %v2841
        %v2933 = vpack.c.bf16 %v2856, %v2851
        %v2934 = vpack.c.bf16 %v2866, %v2861
        %v2935 = vpack.c.bf16 %v2876, %v2871
        %v2936 = vpack.c.bf16 %v2886, %v2881
        %v2937 = vld [vmem:[%s4 + $0x40] sm:$0xf]
        %v2938 = vld [vmem:[%s4 + $0x44] sm:$0xf]
        %v2939 = vld [vmem:[%s4 + $0x48] sm:$0xf]
        %v2940 = vld [vmem:[%s4 + $0x4c] sm:$0xf]
        %v2941 = vld [vmem:[%s4 + $0x50] sm:$0xf]
        %v2942 = vld [vmem:[%s4 + $0x54] sm:$0xf]
        %v2943 = vld [vmem:[%s4 + $0x58] sm:$0xf]
        %v2944 = vld [vmem:[%s4 + $0x5c] sm:$0xf]
        %v2945 = vld [vmem:[%s4 + $0x60] sm:$0xf]
        %v2946 = vld [vmem:[%s4 + $0x64] sm:$0xf]
        %v2947 = vld [vmem:[%s4 + $0x68] sm:$0xf]
        %v2948 = vld [vmem:[%s4 + $0x6c] sm:$0xf]
        %v2949 = vld [vmem:[%s4 + $0x70] sm:$0xf]
        %v2950 = vld [vmem:[%s4 + $0x74] sm:$0xf]
        %v2951 = vld [vmem:[%s4 + $0x78] sm:$0xf]
        %v2952 = vld [vmem:[%s4 + $0x7c] sm:$0xf]
        %v2969 = vunpack.c.l.b16 %v2937
        %v2970 = vunpack.c.l.b16 %v2938
        %v2971 = vunpack.c.l.b16 %v2939
        %v2972 = vunpack.c.l.b16 %v2940
        %v2973 = vunpack.c.l.b16 %v2941
        %v2974 = vunpack.c.l.b16 %v2942
        %v2975 = vunpack.c.l.b16 %v2943
        %v2976 = vunpack.c.l.b16 %v2944
        %v2977 = vunpack.c.l.b16 %v2945
        %v2978 = vunpack.c.l.b16 %v2946
        %v2979 = vunpack.c.l.b16 %v2947
        %v2980 = vunpack.c.l.b16 %v2948
        %v2981 = vunpack.c.l.b16 %v2949
        %v2982 = vunpack.c.l.b16 %v2950
        %v2983 = vunpack.c.l.b16 %v2951
        %v2984 = vunpack.c.l.b16 %v2952
        %v2985 = vpack.c.b16 %v2970, %v2969
        %v2986 = vpack.c.b16 %v2972, %v2971
        %v2987 = vpack.c.b16 %v2974, %v2973
        %v2988 = vpack.c.b16 %v2976, %v2975
        %v2989 = vpack.c.b16 %v2978, %v2977
        %v2990 = vpack.c.b16 %v2980, %v2979
        %v2991 = vpack.c.b16 %v2982, %v2981
        %v2992 = vpack.c.b16 %v2984, %v2983
        %3001 = vmatprep.subr.bf16.mxu0 0
        %3002 = vmatpush1.bf16.msra.mxu0 %v2985
        %3003 = vmatprep.subr.bf16.mxu0 0
        %3004 = vmatpush1.bf16.msra.mxu0 %v2986
        %3005 = vmatprep.subr.bf16.mxu0 0
        %3006 = vmatpush1.bf16.msra.mxu0 %v2987
        %3007 = vmatprep.subr.bf16.mxu0 0
        %3008 = vmatpush1.bf16.msra.mxu0 %v2988
        %3009 = vmatprep.subr.bf16.mxu0 0
        %3010 = vmatpush1.bf16.msra.mxu0 %v2989
        %3011 = vmatprep.subr.bf16.mxu0 0
        %3012 = vmatpush1.bf16.msra.mxu0 %v2990
        %3013 = vmatprep.subr.bf16.mxu0 0
        %3014 = vmatpush1.bf16.msra.mxu0 %v2991
        %3015 = vmatprep.subr.bf16.mxu0 0
        %3016 = vmatpush1.bf16.msra.mxu0 %v2992
        %3017 = vmatprep.subr.bf16.mxu0 0
        %3018 = vmatpush1.bf16.msra.mxu0 0
        %3019 = vmatprep.subr.bf16.mxu0 0
        %3020 = vmatpush1.bf16.msra.mxu0 0
        %3021 = vmatprep.subr.bf16.mxu0 0
        %3022 = vmatpush1.bf16.msra.mxu0 0
        %3023 = vmatprep.subr.bf16.mxu0 0
        %3024 = vmatpush1.bf16.msra.mxu0 0
        %3025 = vmatprep.subr.bf16.mxu0 0
        %3026 = vmatpush1.bf16.msra.mxu0 0
        %3027 = vmatprep.subr.bf16.mxu0 0
        %3028 = vmatpush1.bf16.msra.mxu0 0
        %3029 = vmatprep.subr.bf16.mxu0 0
        %3030 = vmatpush1.bf16.msra.mxu0 0
        %3031 = vmatprep.subr.bf16.mxu0 0
        %3032 = vmatpush1.bf16.msra.mxu0 0
        %3033 = vmatprep.mubr.bf16.mxu0 0
        %3034 = vmatmul.mubr.bf16.gmra.mrb[0].mxu0 %v2921
        %v3035 = vpop.f32.mrb[0].mxu0
        %v3036 = vadd.f32 0.0, %v3035
        %v3037 = vpop.f32.mrb[0].mxu0
        %v3038 = vpop.f32.mrb[0].mxu0
        %v3039 = vadd.f32 0.0, %v3038
        %v3040 = vpop.f32.mrb[0].mxu0
        %3041 = vmatprep.mubr.bf16.mxu0 0
        %3042 = vmatmul.mubr.bf16.gmra.mrb[0].mxu0 %v2922
        %v3043 = vpop.f32.mrb[0].mxu0
        %v3044 = vadd.f32 0.0, %v3043
        %v3045 = vpop.f32.mrb[0].mxu0
        %v3046 = vpop.f32.mrb[0].mxu0
        %v3047 = vadd.f32 0.0, %v3046
        %v3048 = vpop.f32.mrb[0].mxu0
        %3049 = vmatprep.mubr.bf16.mxu0 0
        %3050 = vmatmul.mubr.bf16.gmra.mrb[0].mxu0 %v2923
        %v3051 = vpop.f32.mrb[0].mxu0
        %v3052 = vadd.f32 0.0, %v3051
        %v3053 = vpop.f32.mrb[0].mxu0
        %v3054 = vpop.f32.mrb[0].mxu0
        %v3055 = vadd.f32 0.0, %v3054
        %v3056 = vpop.f32.mrb[0].mxu0
        %3057 = vmatprep.mubr.bf16.mxu0 0
        %3058 = vmatmul.mubr.bf16.gmra.mrb[0].mxu0 %v2924
        %v3059 = vpop.f32.mrb[0].mxu0
        %v3060 = vadd.f32 0.0, %v3059
        %v3061 = vpop.f32.mrb[0].mxu0
        %v3062 = vpop.f32.mrb[0].mxu0
        %v3063 = vadd.f32 0.0, %v3062
        %v3064 = vpop.f32.mrb[0].mxu0
        %3065 = vmatprep.mubr.bf16.mxu0 0
        %3066 = vmatmul.mubr.bf16.gmra.mrb[0].mxu0 %v2925
        %v3067 = vpop.f32.mrb[0].mxu0
        %v3068 = vadd.f32 0.0, %v3067
        %v3069 = vpop.f32.mrb[0].mxu0
        %v3070 = vpop.f32.mrb[0].mxu0
        %v3071 = vadd.f32 0.0, %v3070
        %v3072 = vpop.f32.mrb[0].mxu0
        %3073 = vmatprep.mubr.bf16.mxu0 0
        %3074 = vmatmul.mubr.bf16.gmra.mrb[0].mxu0 %v2926
        %v3075 = vpop.f32.mrb[0].mxu0
        %v3076 = vadd.f32 0.0, %v3075
        %v3077 = vpop.f32.mrb[0].mxu0
        %v3078 = vpop.f32.mrb[0].mxu0
        %v3079 = vadd.f32 0.0, %v3078
        %v3080 = vpop.f32.mrb[0].mxu0
        %3081 = vmatprep.mubr.bf16.mxu0 0
        %3082 = vmatmul.mubr.bf16.gmra.mrb[0].mxu0 %v2927
        %v3083 = vpop.f32.mrb[0].mxu0
        %v3084 = vadd.f32 0.0, %v3083
        %v3085 = vpop.f32.mrb[0].mxu0
        %v3086 = vpop.f32.mrb[0].mxu0
        %v3087 = vadd.f32 0.0, %v3086
        %v3088 = vpop.f32.mrb[0].mxu0
        %3089 = vmatprep.mubr.bf16.mxu0 0
        %3090 = vmatmul.mubr.bf16.gmra.mrb[0].mxu0 %v2928
        %v3091 = vpop.f32.mrb[0].mxu0
        %v3092 = vadd.f32 0.0, %v3091
        %v3093 = vpop.f32.mrb[0].mxu0
        %v3094 = vpop.f32.mrb[0].mxu0
        %v3095 = vadd.f32 0.0, %v3094
        %v3096 = vpop.f32.mrb[0].mxu0
        %3097 = vmatprep.mubr.bf16.mxu0 0
        %3098 = vmatmul.mubr.bf16.gmra.mrb[0].mxu0 %v2929
        %v3099 = vpop.f32.mrb[0].mxu0
        %v3100 = vadd.f32 0.0, %v3099
        %v3101 = vpop.f32.mrb[0].mxu0
        %v3102 = vpop.f32.mrb[0].mxu0
        %v3103 = vadd.f32 0.0, %v3102
        %v3104 = vpop.f32.mrb[0].mxu0
        %3105 = vmatprep.mubr.bf16.mxu0 0
        %3106 = vmatmul.mubr.bf16.gmra.mrb[0].mxu0 %v2930
        %v3107 = vpop.f32.mrb[0].mxu0
        %v3108 = vadd.f32 0.0, %v3107
        %v3109 = vpop.f32.mrb[0].mxu0
        %v3110 = vpop.f32.mrb[0].mxu0
        %v3111 = vadd.f32 0.0, %v3110
        %v3112 = vpop.f32.mrb[0].mxu0
        %3113 = vmatprep.mubr.bf16.mxu0 0
        %3114 = vmatmul.mubr.bf16.gmra.mrb[0].mxu0 %v2931
        %v3115 = vpop.f32.mrb[0].mxu0
        %v3116 = vadd.f32 0.0, %v3115
        %v3117 = vpop.f32.mrb[0].mxu0
        %v3118 = vpop.f32.mrb[0].mxu0
        %v3119 = vadd.f32 0.0, %v3118
        %v3120 = vpop.f32.mrb[0].mxu0
        %3121 = vmatprep.mubr.bf16.mxu0 0
        %3122 = vmatmul.mubr.bf16.gmra.mrb[0].mxu0 %v2932
        %v3123 = vpop.f32.mrb[0].mxu0
        %v3124 = vadd.f32 0.0, %v3123
        %v3125 = vpop.f32.mrb[0].mxu0
        %v3126 = vpop.f32.mrb[0].mxu0
        %v3127 = vadd.f32 0.0, %v3126
        %v3128 = vpop.f32.mrb[0].mxu0
        %3129 = vmatprep.mubr.bf16.mxu0 0
        %3130 = vmatmul.mubr.bf16.gmra.mrb[0].mxu0 %v2933
        %v3131 = vpop.f32.mrb[0].mxu0
        %v3132 = vadd.f32 0.0, %v3131
        %v3133 = vpop.f32.mrb[0].mxu0
        %v3134 = vpop.f32.mrb[0].mxu0
        %v3135 = vadd.f32 0.0, %v3134
        %v3136 = vpop.f32.mrb[0].mxu0
        %3137 = vmatprep.mubr.bf16.mxu0 0
        %3138 = vmatmul.mubr.bf16.gmra.mrb[0].mxu0 %v2934
        %v3139 = vpop.f32.mrb[0].mxu0
        %v3140 = vadd.f32 0.0, %v3139
        %v3141 = vpop.f32.mrb[0].mxu0
        %v3142 = vpop.f32.mrb[0].mxu0
        %v3143 = vadd.f32 0.0, %v3142
        %v3144 = vpop.f32.mrb[0].mxu0
        %3145 = vmatprep.mubr.bf16.mxu0 0
        %3146 = vmatmul.mubr.bf16.gmra.mrb[0].mxu0 %v2935
        %v3147 = vpop.f32.mrb[0].mxu0
        %v3148 = vadd.f32 0.0, %v3147
        %v3149 = vpop.f32.mrb[0].mxu0
        %v3150 = vpop.f32.mrb[0].mxu0
        %v3151 = vadd.f32 0.0, %v3150
        %v3152 = vpop.f32.mrb[0].mxu0
        %3153 = vmatprep.mubr.bf16.mxu0 0
        %3154 = vmatmul.mubr.bf16.gmra.mrb[0].mxu0 %v2936
        %v3155 = vpop.f32.mrb[0].mxu0
        %v3156 = vadd.f32 0.0, %v3155
        %v3157 = vpop.f32.mrb[0].mxu0
        %v3158 = vpop.f32.mrb[0].mxu0
        %v3159 = vadd.f32 0.0, %v3158
        %v3160 = vpop.f32.mrb[0].mxu0
        %3161 = vdwg.mxu0
        %v3178 = vunpack.c.l.b16 %v2905
        %v3179 = vunpack.c.l.b16 %v2906
        %v3180 = vunpack.c.l.b16 %v2907
        %v3181 = vunpack.c.l.b16 %v2908
        %v3182 = vunpack.c.l.b16 %v2909
        %v3183 = vunpack.c.l.b16 %v2910
        %v3184 = vunpack.c.l.b16 %v2911
        %v3185 = vunpack.c.l.b16 %v2912
        %v3186 = vunpack.c.l.b16 %v2913
        %v3187 = vunpack.c.l.b16 %v2914
        %v3188 = vunpack.c.l.b16 %v2915
        %v3189 = vunpack.c.l.b16 %v2916
        %v3190 = vunpack.c.l.b16 %v2917
        %v3191 = vunpack.c.l.b16 %v2918
        %v3192 = vunpack.c.l.b16 %v2919
        %v3193 = vunpack.c.l.b16 %v2920
        %v3194 = vpack.c.b16 %v3179, %v3178
        %v3195 = vpack.c.b16 %v3181, %v3180
        %v3196 = vpack.c.b16 %v3183, %v3182
        %v3197 = vpack.c.b16 %v3185, %v3184
        %v3198 = vpack.c.b16 %v3187, %v3186
        %v3199 = vpack.c.b16 %v3189, %v3188
        %v3200 = vpack.c.b16 %v3191, %v3190
        %v3201 = vpack.c.b16 %v3193, %v3192
        %3210 = vmatprep.subr.bf16.mxu0 0
        %3211 = vmatpush1.bf16.msra.mxu0 %v3194
        %3212 = vmatprep.subr.bf16.mxu0 0
        %3213 = vmatpush1.bf16.msra.mxu0 %v3195
        %3214 = vmatprep.subr.bf16.mxu0 0
        %3215 = vmatpush1.bf16.msra.mxu0 %v3196
        %3216 = vmatprep.subr.bf16.mxu0 0
        %3217 = vmatpush1.bf16.msra.mxu0 %v3197
        %3218 = vmatprep.subr.bf16.mxu0 0
        %3219 = vmatpush1.bf16.msra.mxu0 %v3198
        %3220 = vmatprep.subr.bf16.mxu0 0
        %3221 = vmatpush1.bf16.msra.mxu0 %v3199
        %3222 = vmatprep.subr.bf16.mxu0 0
        %3223 = vmatpush1.bf16.msra.mxu0 %v3200
        %3224 = vmatprep.subr.bf16.mxu0 0
        %3225 = vmatpush1.bf16.msra.mxu0 %v3201
        %3226 = vmatprep.subr.bf16.mxu0 0
        %3227 = vmatpush1.bf16.msra.mxu0 0
        %3228 = vmatprep.subr.bf16.mxu0 0
        %3229 = vmatpush1.bf16.msra.mxu0 0
        %3230 = vmatprep.subr.bf16.mxu0 0
        %3231 = vmatpush1.bf16.msra.mxu0 0
        %3232 = vmatprep.subr.bf16.mxu0 0
        %3233 = vmatpush1.bf16.msra.mxu0 0
        %3234 = vmatprep.subr.bf16.mxu0 0
        %3235 = vmatpush1.bf16.msra.mxu0 0
        %3236 = vmatprep.subr.bf16.mxu0 0
        %3237 = vmatpush1.bf16.msra.mxu0 0
        %3238 = vmatprep.subr.bf16.mxu0 0
        %3239 = vmatpush1.bf16.msra.mxu0 0
        %3240 = vmatprep.subr.bf16.mxu0 0
        %3241 = vmatpush1.bf16.msra.mxu0 0
        %3242 = vmatprep.mubr.bf16.mxu0 0
        %3243 = vmatmul.mubr.bf16.gmra.mrb[0].mxu0 %v2889
        %v3244 = vpop.f32.mrb[0].mxu0
        %v3245 = vadd.f32 %v3036, %v3244
        %v3246 = vpop.f32.mrb[0].mxu0
        %v3247 = vpop.f32.mrb[0].mxu0
        %v3248 = vadd.f32 %v3039, %v3247
        %v3249 = vpop.f32.mrb[0].mxu0
        %3250 = vmatprep.mubr.bf16.mxu0 0
        %3251 = vmatmul.mubr.bf16.gmra.mrb[0].mxu0 %v2890
        %v3252 = vpop.f32.mrb[0].mxu0
        %v3253 = vadd.f32 %v3044, %v3252
        %v3254 = vpop.f32.mrb[0].mxu0
        %v3255 = vpop.f32.mrb[0].mxu0
        %v3256 = vadd.f32 %v3047, %v3255
        %v3257 = vpop.f32.mrb[0].mxu0
        %3258 = vmatprep.mubr.bf16.mxu0 0
        %3259 = vmatmul.mubr.bf16.gmra.mrb[0].mxu0 %v2891
        %v3260 = vpop.f32.mrb[0].mxu0
        %v3261 = vadd.f32 %v3052, %v3260
        %v3262 = vpop.f32.mrb[0].mxu0
        %v3263 = vpop.f32.mrb[0].mxu0
        %v3264 = vadd.f32 %v3055, %v3263
        %v3265 = vpop.f32.mrb[0].mxu0
        %3266 = vmatprep.mubr.bf16.mxu0 0
        %3267 = vmatmul.mubr.bf16.gmra.mrb[0].mxu0 %v2892
        %v3268 = vpop.f32.mrb[0].mxu0
        %v3269 = vadd.f32 %v3060, %v3268
        %v3270 = vpop.f32.mrb[0].mxu0
        %v3271 = vpop.f32.mrb[0].mxu0
        %v3272 = vadd.f32 %v3063, %v3271
        %v3273 = vpop.f32.mrb[0].mxu0
        %3274 = vmatprep.mubr.bf16.mxu0 0
        %3275 = vmatmul.mubr.bf16.gmra.mrb[0].mxu0 %v2893
        %v3276 = vpop.f32.mrb[0].mxu0
        %v3277 = vadd.f32 %v3068, %v3276
        %v3278 = vpop.f32.mrb[0].mxu0
        %v3279 = vpop.f32.mrb[0].mxu0
        %v3280 = vadd.f32 %v3071, %v3279
        %v3281 = vpop.f32.mrb[0].mxu0
        %3282 = vmatprep.mubr.bf16.mxu0 0
        %3283 = vmatmul.mubr.bf16.gmra.mrb[0].mxu0 %v2894
        %v3284 = vpop.f32.mrb[0].mxu0
        %v3285 = vadd.f32 %v3076, %v3284
        %v3286 = vpop.f32.mrb[0].mxu0
        %v3287 = vpop.f32.mrb[0].mxu0
        %v3288 = vadd.f32 %v3079, %v3287
        %v3289 = vpop.f32.mrb[0].mxu0
        %3290 = vmatprep.mubr.bf16.mxu0 0
        %3291 = vmatmul.mubr.bf16.gmra.mrb[0].mxu0 %v2895
        %v3292 = vpop.f32.mrb[0].mxu0
        %v3293 = vadd.f32 %v3084, %v3292
        %v3294 = vpop.f32.mrb[0].mxu0
        %v3295 = vpop.f32.mrb[0].mxu0
        %v3296 = vadd.f32 %v3087, %v3295
        %v3297 = vpop.f32.mrb[0].mxu0
        %3298 = vmatprep.mubr.bf16.mxu0 0
        %3299 = vmatmul.mubr.bf16.gmra.mrb[0].mxu0 %v2896
        %v3300 = vpop.f32.mrb[0].mxu0
        %v3301 = vadd.f32 %v3092, %v3300
        %v3302 = vpop.f32.mrb[0].mxu0
        %v3303 = vpop.f32.mrb[0].mxu0
        %v3304 = vadd.f32 %v3095, %v3303
        %v3305 = vpop.f32.mrb[0].mxu0
        %3306 = vmatprep.mubr.bf16.mxu0 0
        %3307 = vmatmul.mubr.bf16.gmra.mrb[0].mxu0 %v2897
        %v3308 = vpop.f32.mrb[0].mxu0
        %v3309 = vadd.f32 %v3100, %v3308
        %v3310 = vpop.f32.mrb[0].mxu0
        %v3311 = vpop.f32.mrb[0].mxu0
        %v3312 = vadd.f32 %v3103, %v3311
        %v3313 = vpop.f32.mrb[0].mxu0
        %3314 = vmatprep.mubr.bf16.mxu0 0
        %3315 = vmatmul.mubr.bf16.gmra.mrb[0].mxu0 %v2898
        %v3316 = vpop.f32.mrb[0].mxu0
        %v3317 = vadd.f32 %v3108, %v3316
        %v3318 = vpop.f32.mrb[0].mxu0
        %v3319 = vpop.f32.mrb[0].mxu0
        %v3320 = vadd.f32 %v3111, %v3319
        %v3321 = vpop.f32.mrb[0].mxu0
        %3322 = vmatprep.mubr.bf16.mxu0 0
        %3323 = vmatmul.mubr.bf16.gmra.mrb[0].mxu0 %v2899
        %v3324 = vpop.f32.mrb[0].mxu0
        %v3325 = vadd.f32 %v3116, %v3324
        %v3326 = vpop.f32.mrb[0].mxu0
        %v3327 = vpop.f32.mrb[0].mxu0
        %v3328 = vadd.f32 %v3119, %v3327
        %v3329 = vpop.f32.mrb[0].mxu0
        %3330 = vmatprep.mubr.bf16.mxu0 0
        %3331 = vmatmul.mubr.bf16.gmra.mrb[0].mxu0 %v2900
        %v3332 = vpop.f32.mrb[0].mxu0
        %v3333 = vadd.f32 %v3124, %v3332
        %v3334 = vpop.f32.mrb[0].mxu0
        %v3335 = vpop.f32.mrb[0].mxu0
        %v3336 = vadd.f32 %v3127, %v3335
        %v3337 = vpop.f32.mrb[0].mxu0
        %3338 = vmatprep.mubr.bf16.mxu0 0
        %3339 = vmatmul.mubr.bf16.gmra.mrb[0].mxu0 %v2901
        %v3340 = vpop.f32.mrb[0].mxu0
        %v3341 = vadd.f32 %v3132, %v3340
        %v3342 = vpop.f32.mrb[0].mxu0
        %v3343 = vpop.f32.mrb[0].mxu0
        %v3344 = vadd.f32 %v3135, %v3343
        %v3345 = vpop.f32.mrb[0].mxu0
        %3346 = vmatprep.mubr.bf16.mxu0 0
        %3347 = vmatmul.mubr.bf16.gmra.mrb[0].mxu0 %v2902
        %v3348 = vpop.f32.mrb[0].mxu0
        %v3349 = vadd.f32 %v3140, %v3348
        %v3350 = vpop.f32.mrb[0].mxu0
        %v3351 = vpop.f32.mrb[0].mxu0
        %v3352 = vadd.f32 %v3143, %v3351
        %v3353 = vpop.f32.mrb[0].mxu0
        %3354 = vmatprep.mubr.bf16.mxu0 0
        %3355 = vmatmul.mubr.bf16.gmra.mrb[0].mxu0 %v2903
        %v3356 = vpop.f32.mrb[0].mxu0
        %v3357 = vadd.f32 %v3148, %v3356
        %v3358 = vpop.f32.mrb[0].mxu0
        %v3359 = vpop.f32.mrb[0].mxu0
        %v3360 = vadd.f32 %v3151, %v3359
        %v3361 = vpop.f32.mrb[0].mxu0
        %3362 = vmatprep.mubr.bf16.mxu0 0
        %3363 = vmatmul.mubr.bf16.gmra.mrb[0].mxu0 %v2904
        %v3364 = vpop.f32.mrb[0].mxu0
        %v3365 = vadd.f32 %v3156, %v3364
        %v3366 = vpop.f32.mrb[0].mxu0
        %v3367 = vpop.f32.mrb[0].mxu0
        %v3368 = vadd.f32 %v3159, %v3367
        %v3369 = vpop.f32.mrb[0].mxu0
        %3370 = vdwg.mxu0
        %v3371 = vld [vmem:[%s10] sm:$0x1]
        %v3373 = vlaneseq
        %v3374 = vshrl.u32 %v3373, 7
        %v3375 = vsub.s32 0, %v3374
        %v3376 = vrot.slane %v3371, %v3375
        %v3378 = vadd.f32 %v3245, %v3376
        %v3379 = vadd.f32 %v3248, %v3376
        %v3380 = vadd.f32 %v3253, %v3376
        %v3381 = vadd.f32 %v3256, %v3376
        %v3382 = vadd.f32 %v3261, %v3376
        %v3383 = vadd.f32 %v3264, %v3376
        %v3384 = vadd.f32 %v3269, %v3376
        %v3385 = vadd.f32 %v3272, %v3376
        %v3386 = vadd.f32 %v3277, %v3376
        %v3387 = vadd.f32 %v3280, %v3376
        %v3388 = vadd.f32 %v3285, %v3376
        %v3389 = vadd.f32 %v3288, %v3376
        %v3390 = vadd.f32 %v3293, %v3376
        %v3391 = vadd.f32 %v3296, %v3376
        %v3392 = vadd.f32 %v3301, %v3376
        %v3393 = vadd.f32 %v3304, %v3376
        %v3394 = vadd.f32 %v3309, %v3376
        %v3395 = vadd.f32 %v3312, %v3376
        %v3396 = vadd.f32 %v3317, %v3376
        %v3397 = vadd.f32 %v3320, %v3376
        %v3398 = vadd.f32 %v3325, %v3376
        %v3399 = vadd.f32 %v3328, %v3376
        %v3400 = vadd.f32 %v3333, %v3376
        %v3401 = vadd.f32 %v3336, %v3376
        %v3402 = vadd.f32 %v3341, %v3376
        %v3403 = vadd.f32 %v3344, %v3376
        %v3404 = vadd.f32 %v3349, %v3376
        %v3405 = vadd.f32 %v3352, %v3376
        %v3406 = vadd.f32 %v3357, %v3376
        %v3407 = vadd.f32 %v3360, %v3376
        %v3408 = vadd.f32 %v3365, %v3376
        %v3409 = vadd.f32 %v3368, %v3376
        %v3410 = vmax.f32 %v3378, 0.0
        %v3411 = vmax.f32 %v3379, 0.0
        %v3412 = vmax.f32 %v3380, 0.0
        %v3413 = vmax.f32 %v3381, 0.0
        %v3414 = vmax.f32 %v3382, 0.0
        %v3415 = vmax.f32 %v3383, 0.0
        %v3416 = vmax.f32 %v3384, 0.0
        %v3417 = vmax.f32 %v3385, 0.0
        %v3418 = vmax.f32 %v3386, 0.0
        %v3419 = vmax.f32 %v3387, 0.0
        %v3420 = vmax.f32 %v3388, 0.0
        %v3421 = vmax.f32 %v3389, 0.0
        %v3422 = vmax.f32 %v3390, 0.0
        %v3423 = vmax.f32 %v3391, 0.0
        %v3424 = vmax.f32 %v3392, 0.0
        %v3425 = vmax.f32 %v3393, 0.0
        %v3426 = vmax.f32 %v3394, 0.0
        %v3427 = vmax.f32 %v3395, 0.0
        %v3428 = vmax.f32 %v3396, 0.0
        %v3429 = vmax.f32 %v3397, 0.0
        %v3430 = vmax.f32 %v3398, 0.0
        %v3431 = vmax.f32 %v3399, 0.0
        %v3432 = vmax.f32 %v3400, 0.0
        %v3433 = vmax.f32 %v3401, 0.0
        %v3434 = vmax.f32 %v3402, 0.0
        %v3435 = vmax.f32 %v3403, 0.0
        %v3436 = vmax.f32 %v3404, 0.0
        %v3437 = vmax.f32 %v3405, 0.0
        %v3438 = vmax.f32 %v3406, 0.0
        %v3439 = vmax.f32 %v3407, 0.0
        %v3440 = vmax.f32 %v3408, 0.0
        %v3441 = vmax.f32 %v3409, 0.0
        %v3442 = vadd.f32 %v3410, %v1756
        %v3443 = vadd.f32 %v3411, %v1756
        %v3444 = vadd.f32 %v3412, %v1756
        %v3445 = vadd.f32 %v3413, %v1756
        %v3446 = vadd.f32 %v3414, %v1756
        %v3447 = vadd.f32 %v3415, %v1756
        %v3448 = vadd.f32 %v3416, %v1756
        %v3449 = vadd.f32 %v3417, %v1756
        %v3450 = vadd.f32 %v3418, %v1756
        %v3451 = vadd.f32 %v3419, %v1756
        %v3452 = vadd.f32 %v3420, %v1756
        %v3453 = vadd.f32 %v3421, %v1756
        %v3454 = vadd.f32 %v3422, %v1756
        %v3455 = vadd.f32 %v3423, %v1756
        %v3456 = vadd.f32 %v3424, %v1756
        %v3457 = vadd.f32 %v3425, %v1756
        %v3458 = vadd.f32 %v3426, %v1756
        %v3459 = vadd.f32 %v3427, %v1756
        %v3460 = vadd.f32 %v3428, %v1756
        %v3461 = vadd.f32 %v3429, %v1756
        %v3462 = vadd.f32 %v3430, %v1756
        %v3463 = vadd.f32 %v3431, %v1756
        %v3464 = vadd.f32 %v3432, %v1756
        %v3465 = vadd.f32 %v3433, %v1756
        %v3466 = vadd.f32 %v3434, %v1756
        %v3467 = vadd.f32 %v3435, %v1756
        %v3468 = vadd.f32 %v3436, %v1756
        %v3469 = vadd.f32 %v3437, %v1756
        %v3470 = vadd.f32 %v3438, %v1756
        %v3471 = vadd.f32 %v3439, %v1756
        %v3472 = vadd.f32 %v3440, %v1756
        %v3473 = vadd.f32 %v3441, %v1756
        %v3474 = vmul.f32 %v2632, 0.7
        %v3475 = vmul.f32 %v2633, 0.7
        %v3476 = vmul.f32 %v2634, 0.7
        %v3477 = vmul.f32 %v2635, 0.7
        %v3478 = vmul.f32 %v2636, 0.7
        %v3479 = vmul.f32 %v2637, 0.7
        %v3480 = vmul.f32 %v2638, 0.7
        %v3481 = vmul.f32 %v2639, 0.7
        %v3482 = vmul.f32 %v2640, 0.7
        %v3483 = vmul.f32 %v2641, 0.7
        %v3484 = vmul.f32 %v2642, 0.7
        %v3485 = vmul.f32 %v2643, 0.7
        %v3486 = vmul.f32 %v2644, 0.7
        %v3487 = vmul.f32 %v2645, 0.7
        %v3488 = vmul.f32 %v2646, 0.7
        %v3489 = vmul.f32 %v2647, 0.7
        %v3490 = vmul.f32 %v2648, 0.7
        %v3491 = vmul.f32 %v2649, 0.7
        %v3492 = vmul.f32 %v2650, 0.7
        %v3493 = vmul.f32 %v2651, 0.7
        %v3494 = vmul.f32 %v2652, 0.7
        %v3495 = vmul.f32 %v2653, 0.7
        %v3496 = vmul.f32 %v2654, 0.7
        %v3497 = vmul.f32 %v2655, 0.7
        %v3498 = vmul.f32 %v2656, 0.7
        %v3499 = vmul.f32 %v2657, 0.7
        %v3500 = vmul.f32 %v2658, 0.7
        %v3501 = vmul.f32 %v2659, 0.7
        %v3502 = vmul.f32 %v2660, 0.7
        %v3503 = vmul.f32 %v2661, 0.7
        %v3504 = vmul.f32 %v2662, 0.7
        %v3505 = vmul.f32 %v2663, 0.7
        %v3506 = vadd.f32 %v3442, %v3474
        %v3507 = vadd.f32 %v3443, %v3475
        %v3508 = vadd.f32 %v3444, %v3476
        %v3509 = vadd.f32 %v3445, %v3477
        %v3510 = vadd.f32 %v3446, %v3478
        %v3511 = vadd.f32 %v3447, %v3479
        %v3512 = vadd.f32 %v3448, %v3480
        %v3513 = vadd.f32 %v3449, %v3481
        %v3514 = vadd.f32 %v3450, %v3482
        %v3515 = vadd.f32 %v3451, %v3483
        %v3516 = vadd.f32 %v3452, %v3484
        %v3517 = vadd.f32 %v3453, %v3485
        %v3518 = vadd.f32 %v3454, %v3486
        %v3519 = vadd.f32 %v3455, %v3487
        %v3520 = vadd.f32 %v3456, %v3488
        %v3521 = vadd.f32 %v3457, %v3489
        %v3522 = vadd.f32 %v3458, %v3490
        %v3523 = vadd.f32 %v3459, %v3491
        %v3524 = vadd.f32 %v3460, %v3492
        %v3525 = vadd.f32 %v3461, %v3493
        %v3526 = vadd.f32 %v3462, %v3494
        %v3527 = vadd.f32 %v3463, %v3495
        %v3528 = vadd.f32 %v3464, %v3496
        %v3529 = vadd.f32 %v3465, %v3497
        %v3530 = vadd.f32 %v3466, %v3498
        %v3531 = vadd.f32 %v3467, %v3499
        %v3532 = vadd.f32 %v3468, %v3500
        %v3533 = vadd.f32 %v3469, %v3501
        %v3534 = vadd.f32 %v3470, %v3502
        %v3535 = vadd.f32 %v3471, %v3503
        %v3536 = vadd.f32 %v3472, %v3504
        %v3537 = vadd.f32 %v3473, %v3505
        %3538 = vmatprep.subr.mxu0 0.0
        %3539 = vmatpush1.msra.mxu0 %v3506
        %3540 = vmatprep.subr.mxu0 0.0
        %3541 = vmatpush1.msra.mxu0 %v3507
        %3542 = vmatprep.subr.mxu0 0.0
        %3543 = vmatpush1.msra.mxu0 %v3508
        %3544 = vmatprep.subr.mxu0 0.0
        %3545 = vmatpush1.msra.mxu0 %v3509
        %3546 = vmatprep.subr.mxu0 0.0
        %3547 = vmatpush1.msra.mxu0 %v3510
        %3548 = vmatprep.subr.mxu0 0.0
        %3549 = vmatpush1.msra.mxu0 %v3511
        %3550 = vmatprep.subr.mxu0 0.0
        %3551 = vmatpush1.msra.mxu0 %v3512
        %3552 = vmatprep.subr.mxu0 0.0
        %3553 = vmatpush1.msra.mxu0 %v3513
        %3554 = vmatprep.subr.mxu0 0.0
        %3555 = vmatpush1.msra.mxu0 %v3514
        %3556 = vmatprep.subr.mxu0 0.0
        %3557 = vmatpush1.msra.mxu0 %v3515
        %3558 = vmatprep.subr.mxu0 0.0
        %3559 = vmatpush1.msra.mxu0 %v3516
        %3560 = vmatprep.subr.mxu0 0.0
        %3561 = vmatpush1.msra.mxu0 %v3517
        %3562 = vmatprep.subr.mxu0 0.0
        %3563 = vmatpush1.msra.mxu0 %v3518
        %3564 = vmatprep.subr.mxu0 0.0
        %3565 = vmatpush1.msra.mxu0 %v3519
        %3566 = vmatprep.subr.mxu0 0.0
        %3567 = vmatpush1.msra.mxu0 %v3520
        %3568 = vmatprep.subr.mxu0 0.0
        %3569 = vmatpush1.msra.mxu0 %v3521
        %3570 = vmatprep.subr.mxu0 0.0
        %3571 = vmatpush1.msra.mxu0 %v3522
        %3572 = vmatprep.subr.mxu0 0.0
        %3573 = vmatpush1.msra.mxu0 %v3523
        %3574 = vmatprep.subr.mxu0 0.0
        %3575 = vmatpush1.msra.mxu0 %v3524
        %3576 = vmatprep.subr.mxu0 0.0
        %3577 = vmatpush1.msra.mxu0 %v3525
        %3578 = vmatprep.subr.mxu0 0.0
        %3579 = vmatpush1.msra.mxu0 %v3526
        %3580 = vmatprep.subr.mxu0 0.0
        %3581 = vmatpush1.msra.mxu0 %v3527
        %3582 = vmatprep.subr.mxu0 0.0
        %3583 = vmatpush1.msra.mxu0 %v3528
        %3584 = vmatprep.subr.mxu0 0.0
        %3585 = vmatpush1.msra.mxu0 %v3529
        %3586 = vmatprep.subr.mxu0 0.0
        %3587 = vmatpush1.msra.mxu0 %v3530
        %3588 = vmatprep.subr.mxu0 0.0
        %3589 = vmatpush1.msra.mxu0 %v3531
        %3590 = vmatprep.subr.mxu0 0.0
        %3591 = vmatpush1.msra.mxu0 %v3532
        %3592 = vmatprep.subr.mxu0 0.0
        %3593 = vmatpush1.msra.mxu0 %v3533
        %3594 = vmatprep.subr.mxu0 0.0
        %3595 = vmatpush1.msra.mxu0 %v3534
        %3596 = vmatprep.subr.mxu0 0.0
        %3597 = vmatpush1.msra.mxu0 %v3535
        %3598 = vmatprep.subr.mxu0 0.0
        %3599 = vmatpush1.msra.mxu0 %v3536
        %3600 = vmatprep.subr.mxu0 0.0
        %3601 = vmatpush1.msra.mxu0 %v3537
        %3602 = vmatprep.mubr.f32.mxu0 %v622
        %3603 = vmatmul.mubr.f32.gmra.mrb[0].mxu0 %v621
        %v3604 = vpop.f32.mrb[0].mxu0
        %v3605 = vadd.f32 0.0, %v3604
        %v3606 = vpop.f32.mrb[0].mxu0
        %3607 = vmatprep.mubr.f32.mxu0 %v624
        %3608 = vmatmul.mubr.f32.gmra.mrb[0].mxu0 %v623
        %v3609 = vpop.f32.mrb[0].mxu0
        %v3610 = vadd.f32 0.0, %v3609
        %v3611 = vpop.f32.mrb[0].mxu0
        %3612 = vmatprep.mubr.f32.mxu0 %v626
        %3613 = vmatmul.mubr.f32.gmra.mrb[0].mxu0 %v625
        %v3614 = vpop.f32.mrb[0].mxu0
        %v3615 = vadd.f32 0.0, %v3614
        %v3616 = vpop.f32.mrb[0].mxu0
        %3617 = vmatprep.mubr.f32.mxu0 %v628
        %3618 = vmatmul.mubr.f32.gmra.mrb[0].mxu0 %v627
        %v3619 = vpop.f32.mrb[0].mxu0
        %v3620 = vadd.f32 0.0, %v3619
        %v3621 = vpop.f32.mrb[0].mxu0
        %3622 = vmatprep.mubr.f32.mxu0 %v630
        %3623 = vmatmul.mubr.f32.gmra.mrb[0].mxu0 %v629
        %v3624 = vpop.f32.mrb[0].mxu0
        %v3625 = vadd.f32 0.0, %v3624
        %v3626 = vpop.f32.mrb[0].mxu0
        %3627 = vmatprep.mubr.f32.mxu0 %v632
        %3628 = vmatmul.mubr.f32.gmra.mrb[0].mxu0 %v631
        %v3629 = vpop.f32.mrb[0].mxu0
        %v3630 = vadd.f32 0.0, %v3629
        %v3631 = vpop.f32.mrb[0].mxu0
        %3632 = vmatprep.mubr.f32.mxu0 %v634
        %3633 = vmatmul.mubr.f32.gmra.mrb[0].mxu0 %v633
        %v3634 = vpop.f32.mrb[0].mxu0
        %v3635 = vadd.f32 0.0, %v3634
        %v3636 = vpop.f32.mrb[0].mxu0
        %3637 = vmatprep.mubr.f32.mxu0 %v636
        %3638 = vmatmul.mubr.f32.gmra.mrb[0].mxu0 %v635
        %v3639 = vpop.f32.mrb[0].mxu0
        %v3640 = vadd.f32 0.0, %v3639
        %v3641 = vpop.f32.mrb[0].mxu0
        %3642 = vmatprep.mubr.f32.mxu0 %v638
        %3643 = vmatmul.mubr.f32.gmra.mrb[0].mxu0 %v637
        %v3644 = vpop.f32.mrb[0].mxu0
        %v3645 = vadd.f32 0.0, %v3644
        %v3646 = vpop.f32.mrb[0].mxu0
        %3647 = vmatprep.mubr.f32.mxu0 %v640
        %3648 = vmatmul.mubr.f32.gmra.mrb[0].mxu0 %v639
        %v3649 = vpop.f32.mrb[0].mxu0
        %v3650 = vadd.f32 0.0, %v3649
        %v3651 = vpop.f32.mrb[0].mxu0
        %3652 = vmatprep.mubr.f32.mxu0 %v642
        %3653 = vmatmul.mubr.f32.gmra.mrb[0].mxu0 %v641
        %v3654 = vpop.f32.mrb[0].mxu0
        %v3655 = vadd.f32 0.0, %v3654
        %v3656 = vpop.f32.mrb[0].mxu0
        %3657 = vmatprep.mubr.f32.mxu0 %v644
        %3658 = vmatmul.mubr.f32.gmra.mrb[0].mxu0 %v643
        %v3659 = vpop.f32.mrb[0].mxu0
        %v3660 = vadd.f32 0.0, %v3659
        %v3661 = vpop.f32.mrb[0].mxu0
        %3662 = vmatprep.mubr.f32.mxu0 %v646
        %3663 = vmatmul.mubr.f32.gmra.mrb[0].mxu0 %v645
        %v3664 = vpop.f32.mrb[0].mxu0
        %v3665 = vadd.f32 0.0, %v3664
        %v3666 = vpop.f32.mrb[0].mxu0
        %3667 = vmatprep.mubr.f32.mxu0 %v648
        %3668 = vmatmul.mubr.f32.gmra.mrb[0].mxu0 %v647
        %v3669 = vpop.f32.mrb[0].mxu0
        %v3670 = vadd.f32 0.0, %v3669
        %v3671 = vpop.f32.mrb[0].mxu0
        %3672 = vmatprep.mubr.f32.mxu0 %v650
        %3673 = vmatmul.mubr.f32.gmra.mrb[0].mxu0 %v649
        %v3674 = vpop.f32.mrb[0].mxu0
        %v3675 = vadd.f32 0.0, %v3674
        %v3676 = vpop.f32.mrb[0].mxu0
        %3677 = vmatprep.mubr.f32.mxu0 %v652
        %3678 = vmatmul.mubr.f32.gmra.mrb[0].mxu0 %v651
        %v3679 = vpop.f32.mrb[0].mxu0
        %v3680 = vadd.f32 0.0, %v3679
        %v3681 = vpop.f32.mrb[0].mxu0
        %3682 = vmatprep.mubr.f32.mxu0 %v654
        %3683 = vmatmul.mubr.f32.gmra.mrb[0].mxu0 %v653
        %v3684 = vpop.f32.mrb[0].mxu0
        %v3685 = vadd.f32 0.0, %v3684
        %v3686 = vpop.f32.mrb[0].mxu0
        %3687 = vmatprep.mubr.f32.mxu0 %v656
        %3688 = vmatmul.mubr.f32.gmra.mrb[0].mxu0 %v655
        %v3689 = vpop.f32.mrb[0].mxu0
        %v3690 = vadd.f32 0.0, %v3689
        %v3691 = vpop.f32.mrb[0].mxu0
        %3692 = vmatprep.mubr.f32.mxu0 %v658
        %3693 = vmatmul.mubr.f32.gmra.mrb[0].mxu0 %v657
        %v3694 = vpop.f32.mrb[0].mxu0
        %v3695 = vadd.f32 0.0, %v3694
        %v3696 = vpop.f32.mrb[0].mxu0
        %3697 = vmatprep.mubr.f32.mxu0 %v660
        %3698 = vmatmul.mubr.f32.gmra.mrb[0].mxu0 %v659
        %v3699 = vpop.f32.mrb[0].mxu0
        %v3700 = vadd.f32 0.0, %v3699
        %v3701 = vpop.f32.mrb[0].mxu0
        %3702 = vmatprep.mubr.f32.mxu0 %v662
        %3703 = vmatmul.mubr.f32.gmra.mrb[0].mxu0 %v661
        %v3704 = vpop.f32.mrb[0].mxu0
        %v3705 = vadd.f32 0.0, %v3704
        %v3706 = vpop.f32.mrb[0].mxu0
        %3707 = vmatprep.mubr.f32.mxu0 %v664
        %3708 = vmatmul.mubr.f32.gmra.mrb[0].mxu0 %v663
        %v3709 = vpop.f32.mrb[0].mxu0
        %v3710 = vadd.f32 0.0, %v3709
        %v3711 = vpop.f32.mrb[0].mxu0
        %3712 = vmatprep.mubr.f32.mxu0 %v666
        %3713 = vmatmul.mubr.f32.gmra.mrb[0].mxu0 %v665
        %v3714 = vpop.f32.mrb[0].mxu0
        %v3715 = vadd.f32 0.0, %v3714
        %v3716 = vpop.f32.mrb[0].mxu0
        %3717 = vmatprep.mubr.f32.mxu0 %v668
        %3718 = vmatmul.mubr.f32.gmra.mrb[0].mxu0 %v667
        %v3719 = vpop.f32.mrb[0].mxu0
        %v3720 = vadd.f32 0.0, %v3719
        %v3721 = vpop.f32.mrb[0].mxu0
        %3722 = vmatprep.mubr.f32.mxu0 %v670
        %3723 = vmatmul.mubr.f32.gmra.mrb[0].mxu0 %v669
        %v3724 = vpop.f32.mrb[0].mxu0
        %v3725 = vadd.f32 0.0, %v3724
        %v3726 = vpop.f32.mrb[0].mxu0
        %3727 = vmatprep.mubr.f32.mxu0 %v672
        %3728 = vmatmul.mubr.f32.gmra.mrb[0].mxu0 %v671
        %v3729 = vpop.f32.mrb[0].mxu0
        %v3730 = vadd.f32 0.0, %v3729
        %v3731 = vpop.f32.mrb[0].mxu0
        %3732 = vmatprep.mubr.f32.mxu0 %v674
        %3733 = vmatmul.mubr.f32.gmra.mrb[0].mxu0 %v673
        %v3734 = vpop.f32.mrb[0].mxu0
        %v3735 = vadd.f32 0.0, %v3734
        %v3736 = vpop.f32.mrb[0].mxu0
        %3737 = vmatprep.mubr.f32.mxu0 %v676
        %3738 = vmatmul.mubr.f32.gmra.mrb[0].mxu0 %v675
        %v3739 = vpop.f32.mrb[0].mxu0
        %v3740 = vadd.f32 0.0, %v3739
        %v3741 = vpop.f32.mrb[0].mxu0
        %3742 = vmatprep.mubr.f32.mxu0 %v678
        %3743 = vmatmul.mubr.f32.gmra.mrb[0].mxu0 %v677
        %v3744 = vpop.f32.mrb[0].mxu0
        %v3745 = vadd.f32 0.0, %v3744
        %v3746 = vpop.f32.mrb[0].mxu0
        %3747 = vmatprep.mubr.f32.mxu0 %v680
        %3748 = vmatmul.mubr.f32.gmra.mrb[0].mxu0 %v679
        %v3749 = vpop.f32.mrb[0].mxu0
        %v3750 = vadd.f32 0.0, %v3749
        %v3751 = vpop.f32.mrb[0].mxu0
        %3752 = vmatprep.mubr.f32.mxu0 %v682
        %3753 = vmatmul.mubr.f32.gmra.mrb[0].mxu0 %v681
        %v3754 = vpop.f32.mrb[0].mxu0
        %v3755 = vadd.f32 0.0, %v3754
        %v3756 = vpop.f32.mrb[0].mxu0
        %3757 = vmatprep.mubr.f32.mxu0 %v684
        %3758 = vmatmul.mubr.f32.gmra.mrb[0].mxu0 %v683
        %v3759 = vpop.f32.mrb[0].mxu0
        %v3760 = vadd.f32 0.0, %v3759
        %v3761 = vpop.f32.mrb[0].mxu0
        %3762 = vdwg.mxu0
        %v3763 = vpack.c.bf16 %v3507, %v3506
        %v3764 = vpack.c.bf16 %v3509, %v3508
        %v3765 = vpack.c.bf16 %v3511, %v3510
        %v3766 = vpack.c.bf16 %v3513, %v3512
        %v3767 = vpack.c.bf16 %v3515, %v3514
        %v3768 = vpack.c.bf16 %v3517, %v3516
        %v3769 = vpack.c.bf16 %v3519, %v3518
        %v3770 = vpack.c.bf16 %v3521, %v3520
        %v3771 = vpack.c.bf16 %v3523, %v3522
        %v3772 = vpack.c.bf16 %v3525, %v3524
        %v3773 = vpack.c.bf16 %v3527, %v3526
        %v3774 = vpack.c.bf16 %v3529, %v3528
        %v3775 = vpack.c.bf16 %v3531, %v3530
        %v3776 = vpack.c.bf16 %v3533, %v3532
        %v3777 = vpack.c.bf16 %v3535, %v3534
        %v3778 = vpack.c.bf16 %v3537, %v3536
        %v3779 = vld [vmem:[%s5] sm:$0xf]
        %v3780 = vld [vmem:[%s5 + $0x4] sm:$0xf]
        %v3781 = vld [vmem:[%s5 + $0x8] sm:$0xf]
        %v3782 = vld [vmem:[%s5 + $0xc] sm:$0xf]
        %v3783 = vld [vmem:[%s5 + $0x10] sm:$0xf]
        %v3784 = vld [vmem:[%s5 + $0x14] sm:$0xf]
        %v3785 = vld [vmem:[%s5 + $0x18] sm:$0xf]
        %v3786 = vld [vmem:[%s5 + $0x1c] sm:$0xf]
        %v3787 = vld [vmem:[%s5 + $0x20] sm:$0xf]
        %v3788 = vld [vmem:[%s5 + $0x24] sm:$0xf]
        %v3789 = vld [vmem:[%s5 + $0x28] sm:$0xf]
        %v3790 = vld [vmem:[%s5 + $0x2c] sm:$0xf]
        %v3791 = vld [vmem:[%s5 + $0x30] sm:$0xf]
        %v3792 = vld [vmem:[%s5 + $0x34] sm:$0xf]
        %v3793 = vld [vmem:[%s5 + $0x38] sm:$0xf]
        %v3794 = vld [vmem:[%s5 + $0x3c] sm:$0xf]
        %v3795 = vpack.c.bf16 %v3610, %v3605
        %v3796 = vpack.c.bf16 %v3620, %v3615
        %v3797 = vpack.c.bf16 %v3630, %v3625
        %v3798 = vpack.c.bf16 %v3640, %v3635
        %v3799 = vpack.c.bf16 %v3650, %v3645
        %v3800 = vpack.c.bf16 %v3660, %v3655
        %v3801 = vpack.c.bf16 %v3670, %v3665
        %v3802 = vpack.c.bf16 %v3680, %v3675
        %v3803 = vpack.c.bf16 %v3690, %v3685
        %v3804 = vpack.c.bf16 %v3700, %v3695
        %v3805 = vpack.c.bf16 %v3710, %v3705
        %v3806 = vpack.c.bf16 %v3720, %v3715
        %v3807 = vpack.c.bf16 %v3730, %v3725
        %v3808 = vpack.c.bf16 %v3740, %v3735
        %v3809 = vpack.c.bf16 %v3750, %v3745
        %v3810 = vpack.c.bf16 %v3760, %v3755
        %v3811 = vld [vmem:[%s5 + $0x40] sm:$0xf]
        %v3812 = vld [vmem:[%s5 + $0x44] sm:$0xf]
        %v3813 = vld [vmem:[%s5 + $0x48] sm:$0xf]
        %v3814 = vld [vmem:[%s5 + $0x4c] sm:$0xf]
        %v3815 = vld [vmem:[%s5 + $0x50] sm:$0xf]
        %v3816 = vld [vmem:[%s5 + $0x54] sm:$0xf]
        %v3817 = vld [vmem:[%s5 + $0x58] sm:$0xf]
        %v3818 = vld [vmem:[%s5 + $0x5c] sm:$0xf]
        %v3819 = vld [vmem:[%s5 + $0x60] sm:$0xf]
        %v3820 = vld [vmem:[%s5 + $0x64] sm:$0xf]
        %v3821 = vld [vmem:[%s5 + $0x68] sm:$0xf]
        %v3822 = vld [vmem:[%s5 + $0x6c] sm:$0xf]
        %v3823 = vld [vmem:[%s5 + $0x70] sm:$0xf]
        %v3824 = vld [vmem:[%s5 + $0x74] sm:$0xf]
        %v3825 = vld [vmem:[%s5 + $0x78] sm:$0xf]
        %v3826 = vld [vmem:[%s5 + $0x7c] sm:$0xf]
        %v3843 = vunpack.c.l.b16 %v3811
        %v3844 = vunpack.c.l.b16 %v3812
        %v3845 = vunpack.c.l.b16 %v3813
        %v3846 = vunpack.c.l.b16 %v3814
        %v3847 = vunpack.c.l.b16 %v3815
        %v3848 = vunpack.c.l.b16 %v3816
        %v3849 = vunpack.c.l.b16 %v3817
        %v3850 = vunpack.c.l.b16 %v3818
        %v3851 = vunpack.c.l.b16 %v3819
        %v3852 = vunpack.c.l.b16 %v3820
        %v3853 = vunpack.c.l.b16 %v3821
        %v3854 = vunpack.c.l.b16 %v3822
        %v3855 = vunpack.c.l.b16 %v3823
        %v3856 = vunpack.c.l.b16 %v3824
        %v3857 = vunpack.c.l.b16 %v3825
        %v3858 = vunpack.c.l.b16 %v3826
        %v3859 = vpack.c.b16 %v3844, %v3843
        %v3860 = vpack.c.b16 %v3846, %v3845
        %v3861 = vpack.c.b16 %v3848, %v3847
        %v3862 = vpack.c.b16 %v3850, %v3849
        %v3863 = vpack.c.b16 %v3852, %v3851
        %v3864 = vpack.c.b16 %v3854, %v3853
        %v3865 = vpack.c.b16 %v3856, %v3855
        %v3866 = vpack.c.b16 %v3858, %v3857
        %3875 = vmatprep.subr.bf16.mxu0 0
        %3876 = vmatpush1.bf16.msra.mxu0 %v3859
        %3877 = vmatprep.subr.bf16.mxu0 0
        %3878 = vmatpush1.bf16.msra.mxu0 %v3860
        %3879 = vmatprep.subr.bf16.mxu0 0
        %3880 = vmatpush1.bf16.msra.mxu0 %v3861
        %3881 = vmatprep.subr.bf16.mxu0 0
        %3882 = vmatpush1.bf16.msra.mxu0 %v3862
        %3883 = vmatprep.subr.bf16.mxu0 0
        %3884 = vmatpush1.bf16.msra.mxu0 %v3863
        %3885 = vmatprep.subr.bf16.mxu0 0
        %3886 = vmatpush1.bf16.msra.mxu0 %v3864
        %3887 = vmatprep.subr.bf16.mxu0 0
        %3888 = vmatpush1.bf16.msra.mxu0 %v3865
        %3889 = vmatprep.subr.bf16.mxu0 0
        %3890 = vmatpush1.bf16.msra.mxu0 %v3866
        %3891 = vmatprep.subr.bf16.mxu0 0
        %3892 = vmatpush1.bf16.msra.mxu0 0
        %3893 = vmatprep.subr.bf16.mxu0 0
        %3894 = vmatpush1.bf16.msra.mxu0 0
        %3895 = vmatprep.subr.bf16.mxu0 0
        %3896 = vmatpush1.bf16.msra.mxu0 0
        %3897 = vmatprep.subr.bf16.mxu0 0
        %3898 = vmatpush1.bf16.msra.mxu0 0
        %3899 = vmatprep.subr.bf16.mxu0 0
        %3900 = vmatpush1.bf16.msra.mxu0 0
        %3901 = vmatprep.subr.bf16.mxu0 0
        %3902 = vmatpush1.bf16.msra.mxu0 0
        %3903 = vmatprep.subr.bf16.mxu0 0
        %3904 = vmatpush1.bf16.msra.mxu0 0
        %3905 = vmatprep.subr.bf16.mxu0 0
        %3906 = vmatpush1.bf16.msra.mxu0 0
        %3907 = vmatprep.mubr.bf16.mxu0 0
        %3908 = vmatmul.mubr.bf16.gmra.mrb[0].mxu0 %v3795
        %v3909 = vpop.f32.mrb[0].mxu0
        %v3910 = vadd.f32 0.0, %v3909
        %v3911 = vpop.f32.mrb[0].mxu0
        %v3912 = vpop.f32.mrb[0].mxu0
        %v3913 = vadd.f32 0.0, %v3912
        %v3914 = vpop.f32.mrb[0].mxu0
        %3915 = vmatprep.mubr.bf16.mxu0 0
        %3916 = vmatmul.mubr.bf16.gmra.mrb[0].mxu0 %v3796
        %v3917 = vpop.f32.mrb[0].mxu0
        %v3918 = vadd.f32 0.0, %v3917
        %v3919 = vpop.f32.mrb[0].mxu0
        %v3920 = vpop.f32.mrb[0].mxu0
        %v3921 = vadd.f32 0.0, %v3920
        %v3922 = vpop.f32.mrb[0].mxu0
        %3923 = vmatprep.mubr.bf16.mxu0 0
        %3924 = vmatmul.mubr.bf16.gmra.mrb[0].mxu0 %v3797
        %v3925 = vpop.f32.mrb[0].mxu0
        %v3926 = vadd.f32 0.0, %v3925
        %v3927 = vpop.f32.mrb[0].mxu0
        %v3928 = vpop.f32.mrb[0].mxu0
        %v3929 = vadd.f32 0.0, %v3928
        %v3930 = vpop.f32.mrb[0].mxu0
        %3931 = vmatprep.mubr.bf16.mxu0 0
        %3932 = vmatmul.mubr.bf16.gmra.mrb[0].mxu0 %v3798
        %v3933 = vpop.f32.mrb[0].mxu0
        %v3934 = vadd.f32 0.0, %v3933
        %v3935 = vpop.f32.mrb[0].mxu0
        %v3936 = vpop.f32.mrb[0].mxu0
        %v3937 = vadd.f32 0.0, %v3936
        %v3938 = vpop.f32.mrb[0].mxu0
        %3939 = vmatprep.mubr.bf16.mxu0 0
        %3940 = vmatmul.mubr.bf16.gmra.mrb[0].mxu0 %v3799
        %v3941 = vpop.f32.mrb[0].mxu0
        %v3942 = vadd.f32 0.0, %v3941
        %v3943 = vpop.f32.mrb[0].mxu0
        %v3944 = vpop.f32.mrb[0].mxu0
        %v3945 = vadd.f32 0.0, %v3944
        %v3946 = vpop.f32.mrb[0].mxu0
        %3947 = vmatprep.mubr.bf16.mxu0 0
        %3948 = vmatmul.mubr.bf16.gmra.mrb[0].mxu0 %v3800
        %v3949 = vpop.f32.mrb[0].mxu0
        %v3950 = vadd.f32 0.0, %v3949
        %v3951 = vpop.f32.mrb[0].mxu0
        %v3952 = vpop.f32.mrb[0].mxu0
        %v3953 = vadd.f32 0.0, %v3952
        %v3954 = vpop.f32.mrb[0].mxu0
        %3955 = vmatprep.mubr.bf16.mxu0 0
        %3956 = vmatmul.mubr.bf16.gmra.mrb[0].mxu0 %v3801
        %v3957 = vpop.f32.mrb[0].mxu0
        %v3958 = vadd.f32 0.0, %v3957
        %v3959 = vpop.f32.mrb[0].mxu0
        %v3960 = vpop.f32.mrb[0].mxu0
        %v3961 = vadd.f32 0.0, %v3960
        %v3962 = vpop.f32.mrb[0].mxu0
        %3963 = vmatprep.mubr.bf16.mxu0 0
        %3964 = vmatmul.mubr.bf16.gmra.mrb[0].mxu0 %v3802
        %v3965 = vpop.f32.mrb[0].mxu0
        %v3966 = vadd.f32 0.0, %v3965
        %v3967 = vpop.f32.mrb[0].mxu0
        %v3968 = vpop.f32.mrb[0].mxu0
        %v3969 = vadd.f32 0.0, %v3968
        %v3970 = vpop.f32.mrb[0].mxu0
        %3971 = vmatprep.mubr.bf16.mxu0 0
        %3972 = vmatmul.mubr.bf16.gmra.mrb[0].mxu0 %v3803
        %v3973 = vpop.f32.mrb[0].mxu0
        %v3974 = vadd.f32 0.0, %v3973
        %v3975 = vpop.f32.mrb[0].mxu0
        %v3976 = vpop.f32.mrb[0].mxu0
        %v3977 = vadd.f32 0.0, %v3976
        %v3978 = vpop.f32.mrb[0].mxu0
        %3979 = vmatprep.mubr.bf16.mxu0 0
        %3980 = vmatmul.mubr.bf16.gmra.mrb[0].mxu0 %v3804
        %v3981 = vpop.f32.mrb[0].mxu0
        %v3982 = vadd.f32 0.0, %v3981
        %v3983 = vpop.f32.mrb[0].mxu0
        %v3984 = vpop.f32.mrb[0].mxu0
        %v3985 = vadd.f32 0.0, %v3984
        %v3986 = vpop.f32.mrb[0].mxu0
        %3987 = vmatprep.mubr.bf16.mxu0 0
        %3988 = vmatmul.mubr.bf16.gmra.mrb[0].mxu0 %v3805
        %v3989 = vpop.f32.mrb[0].mxu0
        %v3990 = vadd.f32 0.0, %v3989
        %v3991 = vpop.f32.mrb[0].mxu0
        %v3992 = vpop.f32.mrb[0].mxu0
        %v3993 = vadd.f32 0.0, %v3992
        %v3994 = vpop.f32.mrb[0].mxu0
        %3995 = vmatprep.mubr.bf16.mxu0 0
        %3996 = vmatmul.mubr.bf16.gmra.mrb[0].mxu0 %v3806
        %v3997 = vpop.f32.mrb[0].mxu0
        %v3998 = vadd.f32 0.0, %v3997
        %v3999 = vpop.f32.mrb[0].mxu0
        %v4000 = vpop.f32.mrb[0].mxu0
        %v4001 = vadd.f32 0.0, %v4000
        %v4002 = vpop.f32.mrb[0].mxu0
        %4003 = vmatprep.mubr.bf16.mxu0 0
        %4004 = vmatmul.mubr.bf16.gmra.mrb[0].mxu0 %v3807
        %v4005 = vpop.f32.mrb[0].mxu0
        %v4006 = vadd.f32 0.0, %v4005
        %v4007 = vpop.f32.mrb[0].mxu0
        %v4008 = vpop.f32.mrb[0].mxu0
        %v4009 = vadd.f32 0.0, %v4008
        %v4010 = vpop.f32.mrb[0].mxu0
        %4011 = vmatprep.mubr.bf16.mxu0 0
        %4012 = vmatmul.mubr.bf16.gmra.mrb[0].mxu0 %v3808
        %v4013 = vpop.f32.mrb[0].mxu0
        %v4014 = vadd.f32 0.0, %v4013
        %v4015 = vpop.f32.mrb[0].mxu0
        %v4016 = vpop.f32.mrb[0].mxu0
        %v4017 = vadd.f32 0.0, %v4016
        %v4018 = vpop.f32.mrb[0].mxu0
        %4019 = vmatprep.mubr.bf16.mxu0 0
        %4020 = vmatmul.mubr.bf16.gmra.mrb[0].mxu0 %v3809
        %v4021 = vpop.f32.mrb[0].mxu0
        %v4022 = vadd.f32 0.0, %v4021
        %v4023 = vpop.f32.mrb[0].mxu0
        %v4024 = vpop.f32.mrb[0].mxu0
        %v4025 = vadd.f32 0.0, %v4024
        %v4026 = vpop.f32.mrb[0].mxu0
        %4027 = vmatprep.mubr.bf16.mxu0 0
        %4028 = vmatmul.mubr.bf16.gmra.mrb[0].mxu0 %v3810
        %v4029 = vpop.f32.mrb[0].mxu0
        %v4030 = vadd.f32 0.0, %v4029
        %v4031 = vpop.f32.mrb[0].mxu0
        %v4032 = vpop.f32.mrb[0].mxu0
        %v4033 = vadd.f32 0.0, %v4032
        %v4034 = vpop.f32.mrb[0].mxu0
        %4035 = vdwg.mxu0
        %v4052 = vunpack.c.l.b16 %v3779
        %v4053 = vunpack.c.l.b16 %v3780
        %v4054 = vunpack.c.l.b16 %v3781
        %v4055 = vunpack.c.l.b16 %v3782
        %v4056 = vunpack.c.l.b16 %v3783
        %v4057 = vunpack.c.l.b16 %v3784
        %v4058 = vunpack.c.l.b16 %v3785
        %v4059 = vunpack.c.l.b16 %v3786
        %v4060 = vunpack.c.l.b16 %v3787
        %v4061 = vunpack.c.l.b16 %v3788
        %v4062 = vunpack.c.l.b16 %v3789
        %v4063 = vunpack.c.l.b16 %v3790
        %v4064 = vunpack.c.l.b16 %v3791
        %v4065 = vunpack.c.l.b16 %v3792
        %v4066 = vunpack.c.l.b16 %v3793
        %v4067 = vunpack.c.l.b16 %v3794
        %v4068 = vpack.c.b16 %v4053, %v4052
        %v4069 = vpack.c.b16 %v4055, %v4054
        %v4070 = vpack.c.b16 %v4057, %v4056
        %v4071 = vpack.c.b16 %v4059, %v4058
        %v4072 = vpack.c.b16 %v4061, %v4060
        %v4073 = vpack.c.b16 %v4063, %v4062
        %v4074 = vpack.c.b16 %v4065, %v4064
        %v4075 = vpack.c.b16 %v4067, %v4066
        %4084 = vmatprep.subr.bf16.mxu0 0
        %4085 = vmatpush1.bf16.msra.mxu0 %v4068
        %4086 = vmatprep.subr.bf16.mxu0 0
        %4087 = vmatpush1.bf16.msra.mxu0 %v4069
        %4088 = vmatprep.subr.bf16.mxu0 0
        %4089 = vmatpush1.bf16.msra.mxu0 %v4070
        %4090 = vmatprep.subr.bf16.mxu0 0
        %4091 = vmatpush1.bf16.msra.mxu0 %v4071
        %4092 = vmatprep.subr.bf16.mxu0 0
        %4093 = vmatpush1.bf16.msra.mxu0 %v4072
        %4094 = vmatprep.subr.bf16.mxu0 0
        %4095 = vmatpush1.bf16.msra.mxu0 %v4073
        %4096 = vmatprep.subr.bf16.mxu0 0
        %4097 = vmatpush1.bf16.msra.mxu0 %v4074
        %4098 = vmatprep.subr.bf16.mxu0 0
        %4099 = vmatpush1.bf16.msra.mxu0 %v4075
        %4100 = vmatprep.subr.bf16.mxu0 0
        %4101 = vmatpush1.bf16.msra.mxu0 0
        %4102 = vmatprep.subr.bf16.mxu0 0
        %4103 = vmatpush1.bf16.msra.mxu0 0
        %4104 = vmatprep.subr.bf16.mxu0 0
        %4105 = vmatpush1.bf16.msra.mxu0 0
        %4106 = vmatprep.subr.bf16.mxu0 0
        %4107 = vmatpush1.bf16.msra.mxu0 0
        %4108 = vmatprep.subr.bf16.mxu0 0
        %4109 = vmatpush1.bf16.msra.mxu0 0
        %4110 = vmatprep.subr.bf16.mxu0 0
        %4111 = vmatpush1.bf16.msra.mxu0 0
        %4112 = vmatprep.subr.bf16.mxu0 0
        %4113 = vmatpush1.bf16.msra.mxu0 0
        %4114 = vmatprep.subr.bf16.mxu0 0
        %4115 = vmatpush1.bf16.msra.mxu0 0
        %4116 = vmatprep.mubr.bf16.mxu0 0
        %4117 = vmatmul.mubr.bf16.gmra.mrb[0].mxu0 %v3763
        %v4118 = vpop.f32.mrb[0].mxu0
        %v4119 = vadd.f32 %v3910, %v4118
        %v4120 = vpop.f32.mrb[0].mxu0
        %v4121 = vpop.f32.mrb[0].mxu0
        %v4122 = vadd.f32 %v3913, %v4121
        %v4123 = vpop.f32.mrb[0].mxu0
        %4124 = vmatprep.mubr.bf16.mxu0 0
        %4125 = vmatmul.mubr.bf16.gmra.mrb[0].mxu0 %v3764
        %v4126 = vpop.f32.mrb[0].mxu0
        %v4127 = vadd.f32 %v3918, %v4126
        %v4128 = vpop.f32.mrb[0].mxu0
        %v4129 = vpop.f32.mrb[0].mxu0
        %v4130 = vadd.f32 %v3921, %v4129
        %v4131 = vpop.f32.mrb[0].mxu0
        %4132 = vmatprep.mubr.bf16.mxu0 0
        %4133 = vmatmul.mubr.bf16.gmra.mrb[0].mxu0 %v3765
        %v4134 = vpop.f32.mrb[0].mxu0
        %v4135 = vadd.f32 %v3926, %v4134
        %v4136 = vpop.f32.mrb[0].mxu0
        %v4137 = vpop.f32.mrb[0].mxu0
        %v4138 = vadd.f32 %v3929, %v4137
        %v4139 = vpop.f32.mrb[0].mxu0
        %4140 = vmatprep.mubr.bf16.mxu0 0
        %4141 = vmatmul.mubr.bf16.gmra.mrb[0].mxu0 %v3766
        %v4142 = vpop.f32.mrb[0].mxu0
        %v4143 = vadd.f32 %v3934, %v4142
        %v4144 = vpop.f32.mrb[0].mxu0
        %v4145 = vpop.f32.mrb[0].mxu0
        %v4146 = vadd.f32 %v3937, %v4145
        %v4147 = vpop.f32.mrb[0].mxu0
        %4148 = vmatprep.mubr.bf16.mxu0 0
        %4149 = vmatmul.mubr.bf16.gmra.mrb[0].mxu0 %v3767
        %v4150 = vpop.f32.mrb[0].mxu0
        %v4151 = vadd.f32 %v3942, %v4150
        %v4152 = vpop.f32.mrb[0].mxu0
        %v4153 = vpop.f32.mrb[0].mxu0
        %v4154 = vadd.f32 %v3945, %v4153
        %v4155 = vpop.f32.mrb[0].mxu0
        %4156 = vmatprep.mubr.bf16.mxu0 0
        %4157 = vmatmul.mubr.bf16.gmra.mrb[0].mxu0 %v3768
        %v4158 = vpop.f32.mrb[0].mxu0
        %v4159 = vadd.f32 %v3950, %v4158
        %v4160 = vpop.f32.mrb[0].mxu0
        %v4161 = vpop.f32.mrb[0].mxu0
        %v4162 = vadd.f32 %v3953, %v4161
        %v4163 = vpop.f32.mrb[0].mxu0
        %4164 = vmatprep.mubr.bf16.mxu0 0
        %4165 = vmatmul.mubr.bf16.gmra.mrb[0].mxu0 %v3769
        %v4166 = vpop.f32.mrb[0].mxu0
        %v4167 = vadd.f32 %v3958, %v4166
        %v4168 = vpop.f32.mrb[0].mxu0
        %v4169 = vpop.f32.mrb[0].mxu0
        %v4170 = vadd.f32 %v3961, %v4169
        %v4171 = vpop.f32.mrb[0].mxu0
        %4172 = vmatprep.mubr.bf16.mxu0 0
        %4173 = vmatmul.mubr.bf16.gmra.mrb[0].mxu0 %v3770
        %v4174 = vpop.f32.mrb[0].mxu0
        %v4175 = vadd.f32 %v3966, %v4174
        %v4176 = vpop.f32.mrb[0].mxu0
        %v4177 = vpop.f32.mrb[0].mxu0
        %v4178 = vadd.f32 %v3969, %v4177
        %v4179 = vpop.f32.mrb[0].mxu0
        %4180 = vmatprep.mubr.bf16.mxu0 0
        %4181 = vmatmul.mubr.bf16.gmra.mrb[0].mxu0 %v3771
        %v4182 = vpop.f32.mrb[0].mxu0
        %v4183 = vadd.f32 %v3974, %v4182
        %v4184 = vpop.f32.mrb[0].mxu0
        %v4185 = vpop.f32.mrb[0].mxu0
        %v4186 = vadd.f32 %v3977, %v4185
        %v4187 = vpop.f32.mrb[0].mxu0
        %4188 = vmatprep.mubr.bf16.mxu0 0
        %4189 = vmatmul.mubr.bf16.gmra.mrb[0].mxu0 %v3772
        %v4190 = vpop.f32.mrb[0].mxu0
        %v4191 = vadd.f32 %v3982, %v4190
        %v4192 = vpop.f32.mrb[0].mxu0
        %v4193 = vpop.f32.mrb[0].mxu0
        %v4194 = vadd.f32 %v3985, %v4193
        %v4195 = vpop.f32.mrb[0].mxu0
        %4196 = vmatprep.mubr.bf16.mxu0 0
        %4197 = vmatmul.mubr.bf16.gmra.mrb[0].mxu0 %v3773
        %v4198 = vpop.f32.mrb[0].mxu0
        %v4199 = vadd.f32 %v3990, %v4198
        %v4200 = vpop.f32.mrb[0].mxu0
        %v4201 = vpop.f32.mrb[0].mxu0
        %v4202 = vadd.f32 %v3993, %v4201
        %v4203 = vpop.f32.mrb[0].mxu0
        %4204 = vmatprep.mubr.bf16.mxu0 0
        %4205 = vmatmul.mubr.bf16.gmra.mrb[0].mxu0 %v3774
        %v4206 = vpop.f32.mrb[0].mxu0
        %v4207 = vadd.f32 %v3998, %v4206
        %v4208 = vpop.f32.mrb[0].mxu0
        %v4209 = vpop.f32.mrb[0].mxu0
        %v4210 = vadd.f32 %v4001, %v4209
        %v4211 = vpop.f32.mrb[0].mxu0
        %4212 = vmatprep.mubr.bf16.mxu0 0
        %4213 = vmatmul.mubr.bf16.gmra.mrb[0].mxu0 %v3775
        %v4214 = vpop.f32.mrb[0].mxu0
        %v4215 = vadd.f32 %v4006, %v4214
        %v4216 = vpop.f32.mrb[0].mxu0
        %v4217 = vpop.f32.mrb[0].mxu0
        %v4218 = vadd.f32 %v4009, %v4217
        %v4219 = vpop.f32.mrb[0].mxu0
        %4220 = vmatprep.mubr.bf16.mxu0 0
        %4221 = vmatmul.mubr.bf16.gmra.mrb[0].mxu0 %v3776
        %v4222 = vpop.f32.mrb[0].mxu0
        %v4223 = vadd.f32 %v4014, %v4222
        %v4224 = vpop.f32.mrb[0].mxu0
        %v4225 = vpop.f32.mrb[0].mxu0
        %v4226 = vadd.f32 %v4017, %v4225
        %v4227 = vpop.f32.mrb[0].mxu0
        %4228 = vmatprep.mubr.bf16.mxu0 0
        %4229 = vmatmul.mubr.bf16.gmra.mrb[0].mxu0 %v3777
        %v4230 = vpop.f32.mrb[0].mxu0
        %v4231 = vadd.f32 %v4022, %v4230
        %v4232 = vpop.f32.mrb[0].mxu0
        %v4233 = vpop.f32.mrb[0].mxu0
        %v4234 = vadd.f32 %v4025, %v4233
        %v4235 = vpop.f32.mrb[0].mxu0
        %4236 = vmatprep.mubr.bf16.mxu0 0
        %4237 = vmatmul.mubr.bf16.gmra.mrb[0].mxu0 %v3778
        %v4238 = vpop.f32.mrb[0].mxu0
        %v4239 = vadd.f32 %v4030, %v4238
        %v4240 = vpop.f32.mrb[0].mxu0
        %v4241 = vpop.f32.mrb[0].mxu0
        %v4242 = vadd.f32 %v4033, %v4241
        %v4243 = vpop.f32.mrb[0].mxu0
        %4244 = vdwg.mxu0
        %v4245 = vld [vmem:[%s11] sm:$0x1]
        %v4247 = vlaneseq
        %v4248 = vshrl.u32 %v4247, 7
        %v4249 = vsub.s32 0, %v4248
        %v4250 = vrot.slane %v4245, %v4249
        %v4252 = vadd.f32 %v4119, %v4250
        %v4253 = vadd.f32 %v4122, %v4250
        %v4254 = vadd.f32 %v4127, %v4250
        %v4255 = vadd.f32 %v4130, %v4250
        %v4256 = vadd.f32 %v4135, %v4250
        %v4257 = vadd.f32 %v4138, %v4250
        %v4258 = vadd.f32 %v4143, %v4250
        %v4259 = vadd.f32 %v4146, %v4250
        %v4260 = vadd.f32 %v4151, %v4250
        %v4261 = vadd.f32 %v4154, %v4250
        %v4262 = vadd.f32 %v4159, %v4250
        %v4263 = vadd.f32 %v4162, %v4250
        %v4264 = vadd.f32 %v4167, %v4250
        %v4265 = vadd.f32 %v4170, %v4250
        %v4266 = vadd.f32 %v4175, %v4250
        %v4267 = vadd.f32 %v4178, %v4250
        %v4268 = vadd.f32 %v4183, %v4250
        %v4269 = vadd.f32 %v4186, %v4250
        %v4270 = vadd.f32 %v4191, %v4250
        %v4271 = vadd.f32 %v4194, %v4250
        %v4272 = vadd.f32 %v4199, %v4250
        %v4273 = vadd.f32 %v4202, %v4250
        %v4274 = vadd.f32 %v4207, %v4250
        %v4275 = vadd.f32 %v4210, %v4250
        %v4276 = vadd.f32 %v4215, %v4250
        %v4277 = vadd.f32 %v4218, %v4250
        %v4278 = vadd.f32 %v4223, %v4250
        %v4279 = vadd.f32 %v4226, %v4250
        %v4280 = vadd.f32 %v4231, %v4250
        %v4281 = vadd.f32 %v4234, %v4250
        %v4282 = vadd.f32 %v4239, %v4250
        %v4283 = vadd.f32 %v4242, %v4250
        %v4284 = vmax.f32 %v4252, 0.0
        %v4285 = vmax.f32 %v4253, 0.0
        %v4286 = vmax.f32 %v4254, 0.0
        %v4287 = vmax.f32 %v4255, 0.0
        %v4288 = vmax.f32 %v4256, 0.0
        %v4289 = vmax.f32 %v4257, 0.0
        %v4290 = vmax.f32 %v4258, 0.0
        %v4291 = vmax.f32 %v4259, 0.0
        %v4292 = vmax.f32 %v4260, 0.0
        %v4293 = vmax.f32 %v4261, 0.0
        %v4294 = vmax.f32 %v4262, 0.0
        %v4295 = vmax.f32 %v4263, 0.0
        %v4296 = vmax.f32 %v4264, 0.0
        %v4297 = vmax.f32 %v4265, 0.0
        %v4298 = vmax.f32 %v4266, 0.0
        %v4299 = vmax.f32 %v4267, 0.0
        %v4300 = vmax.f32 %v4268, 0.0
        %v4301 = vmax.f32 %v4269, 0.0
        %v4302 = vmax.f32 %v4270, 0.0
        %v4303 = vmax.f32 %v4271, 0.0
        %v4304 = vmax.f32 %v4272, 0.0
        %v4305 = vmax.f32 %v4273, 0.0
        %v4306 = vmax.f32 %v4274, 0.0
        %v4307 = vmax.f32 %v4275, 0.0
        %v4308 = vmax.f32 %v4276, 0.0
        %v4309 = vmax.f32 %v4277, 0.0
        %v4310 = vmax.f32 %v4278, 0.0
        %v4311 = vmax.f32 %v4279, 0.0
        %v4312 = vmax.f32 %v4280, 0.0
        %v4313 = vmax.f32 %v4281, 0.0
        %v4314 = vmax.f32 %v4282, 0.0
        %v4315 = vmax.f32 %v4283, 0.0
        %v4316 = vadd.f32 %v4284, %v1756
        %v4317 = vadd.f32 %v4285, %v1756
        %v4318 = vadd.f32 %v4286, %v1756
        %v4319 = vadd.f32 %v4287, %v1756
        %v4320 = vadd.f32 %v4288, %v1756
        %v4321 = vadd.f32 %v4289, %v1756
        %v4322 = vadd.f32 %v4290, %v1756
        %v4323 = vadd.f32 %v4291, %v1756
        %v4324 = vadd.f32 %v4292, %v1756
        %v4325 = vadd.f32 %v4293, %v1756
        %v4326 = vadd.f32 %v4294, %v1756
        %v4327 = vadd.f32 %v4295, %v1756
        %v4328 = vadd.f32 %v4296, %v1756
        %v4329 = vadd.f32 %v4297, %v1756
        %v4330 = vadd.f32 %v4298, %v1756
        %v4331 = vadd.f32 %v4299, %v1756
        %v4332 = vadd.f32 %v4300, %v1756
        %v4333 = vadd.f32 %v4301, %v1756
        %v4334 = vadd.f32 %v4302, %v1756
        %v4335 = vadd.f32 %v4303, %v1756
        %v4336 = vadd.f32 %v4304, %v1756
        %v4337 = vadd.f32 %v4305, %v1756
        %v4338 = vadd.f32 %v4306, %v1756
        %v4339 = vadd.f32 %v4307, %v1756
        %v4340 = vadd.f32 %v4308, %v1756
        %v4341 = vadd.f32 %v4309, %v1756
        %v4342 = vadd.f32 %v4310, %v1756
        %v4343 = vadd.f32 %v4311, %v1756
        %v4344 = vadd.f32 %v4312, %v1756
        %v4345 = vadd.f32 %v4313, %v1756
        %v4346 = vadd.f32 %v4314, %v1756
        %v4347 = vadd.f32 %v4315, %v1756
        %v4348 = vmul.f32 %v3506, 0.7
        %v4349 = vmul.f32 %v3507, 0.7
        %v4350 = vmul.f32 %v3508, 0.7
        %v4351 = vmul.f32 %v3509, 0.7
        %v4352 = vmul.f32 %v3510, 0.7
        %v4353 = vmul.f32 %v3511, 0.7
        %v4354 = vmul.f32 %v3512, 0.7
        %v4355 = vmul.f32 %v3513, 0.7
        %v4356 = vmul.f32 %v3514, 0.7
        %v4357 = vmul.f32 %v3515, 0.7
        %v4358 = vmul.f32 %v3516, 0.7
        %v4359 = vmul.f32 %v3517, 0.7
        %v4360 = vmul.f32 %v3518, 0.7
        %v4361 = vmul.f32 %v3519, 0.7
        %v4362 = vmul.f32 %v3520, 0.7
        %v4363 = vmul.f32 %v3521, 0.7
        %v4364 = vmul.f32 %v3522, 0.7
        %v4365 = vmul.f32 %v3523, 0.7
        %v4366 = vmul.f32 %v3524, 0.7
        %v4367 = vmul.f32 %v3525, 0.7
        %v4368 = vmul.f32 %v3526, 0.7
        %v4369 = vmul.f32 %v3527, 0.7
        %v4370 = vmul.f32 %v3528, 0.7
        %v4371 = vmul.f32 %v3529, 0.7
        %v4372 = vmul.f32 %v3530, 0.7
        %v4373 = vmul.f32 %v3531, 0.7
        %v4374 = vmul.f32 %v3532, 0.7
        %v4375 = vmul.f32 %v3533, 0.7
        %v4376 = vmul.f32 %v3534, 0.7
        %v4377 = vmul.f32 %v3535, 0.7
        %v4378 = vmul.f32 %v3536, 0.7
        %v4379 = vmul.f32 %v3537, 0.7
        %v4380 = vadd.f32 %v4316, %v4348
        %v4381 = vadd.f32 %v4317, %v4349
        %v4382 = vadd.f32 %v4318, %v4350
        %v4383 = vadd.f32 %v4319, %v4351
        %v4384 = vadd.f32 %v4320, %v4352
        %v4385 = vadd.f32 %v4321, %v4353
        %v4386 = vadd.f32 %v4322, %v4354
        %v4387 = vadd.f32 %v4323, %v4355
        %v4388 = vadd.f32 %v4324, %v4356
        %v4389 = vadd.f32 %v4325, %v4357
        %v4390 = vadd.f32 %v4326, %v4358
        %v4391 = vadd.f32 %v4327, %v4359
        %v4392 = vadd.f32 %v4328, %v4360
        %v4393 = vadd.f32 %v4329, %v4361
        %v4394 = vadd.f32 %v4330, %v4362
        %v4395 = vadd.f32 %v4331, %v4363
        %v4396 = vadd.f32 %v4332, %v4364
        %v4397 = vadd.f32 %v4333, %v4365
        %v4398 = vadd.f32 %v4334, %v4366
        %v4399 = vadd.f32 %v4335, %v4367
        %v4400 = vadd.f32 %v4336, %v4368
        %v4401 = vadd.f32 %v4337, %v4369
        %v4402 = vadd.f32 %v4338, %v4370
        %v4403 = vadd.f32 %v4339, %v4371
        %v4404 = vadd.f32 %v4340, %v4372
        %v4405 = vadd.f32 %v4341, %v4373
        %v4406 = vadd.f32 %v4342, %v4374
        %v4407 = vadd.f32 %v4343, %v4375
        %v4408 = vadd.f32 %v4344, %v4376
        %v4409 = vadd.f32 %v4345, %v4377
        %v4410 = vadd.f32 %v4346, %v4378
        %v4411 = vadd.f32 %v4347, %v4379
        %v4412 = vld [vmem:[%s15] sm:$0x1]
        %4413 = vmatprep.subr.mxu0 0.0
        %4414 = vmatpush1.msra.mxu0 %v4380
        %4415 = vmatprep.subr.mxu0 0.0
        %4416 = vmatpush1.msra.mxu0 %v4381
        %4417 = vmatprep.subr.mxu0 0.0
        %4418 = vmatpush1.msra.mxu0 %v4382
        %4419 = vmatprep.subr.mxu0 0.0
        %4420 = vmatpush1.msra.mxu0 %v4383
        %4421 = vmatprep.subr.mxu0 0.0
        %4422 = vmatpush1.msra.mxu0 %v4384
        %4423 = vmatprep.subr.mxu0 0.0
        %4424 = vmatpush1.msra.mxu0 %v4385
        %4425 = vmatprep.subr.mxu0 0.0
        %4426 = vmatpush1.msra.mxu0 %v4386
        %4427 = vmatprep.subr.mxu0 0.0
        %4428 = vmatpush1.msra.mxu0 %v4387
        %4429 = vmatprep.subr.mxu0 0.0
        %4430 = vmatpush1.msra.mxu0 %v4388
        %4431 = vmatprep.subr.mxu0 0.0
        %4432 = vmatpush1.msra.mxu0 %v4389
        %4433 = vmatprep.subr.mxu0 0.0
        %4434 = vmatpush1.msra.mxu0 %v4390
        %4435 = vmatprep.subr.mxu0 0.0
        %4436 = vmatpush1.msra.mxu0 %v4391
        %4437 = vmatprep.subr.mxu0 0.0
        %4438 = vmatpush1.msra.mxu0 %v4392
        %4439 = vmatprep.subr.mxu0 0.0
        %4440 = vmatpush1.msra.mxu0 %v4393
        %4441 = vmatprep.subr.mxu0 0.0
        %4442 = vmatpush1.msra.mxu0 %v4394
        %4443 = vmatprep.subr.mxu0 0.0
        %4444 = vmatpush1.msra.mxu0 %v4395
        %4445 = vmatprep.subr.mxu0 0.0
        %4446 = vmatpush1.msra.mxu0 %v4396
        %4447 = vmatprep.subr.mxu0 0.0
        %4448 = vmatpush1.msra.mxu0 %v4397
        %4449 = vmatprep.subr.mxu0 0.0
        %4450 = vmatpush1.msra.mxu0 %v4398
        %4451 = vmatprep.subr.mxu0 0.0
        %4452 = vmatpush1.msra.mxu0 %v4399
        %4453 = vmatprep.subr.mxu0 0.0
        %4454 = vmatpush1.msra.mxu0 %v4400
        %4455 = vmatprep.subr.mxu0 0.0
        %4456 = vmatpush1.msra.mxu0 %v4401
        %4457 = vmatprep.subr.mxu0 0.0
        %4458 = vmatpush1.msra.mxu0 %v4402
        %4459 = vmatprep.subr.mxu0 0.0
        %4460 = vmatpush1.msra.mxu0 %v4403
        %4461 = vmatprep.subr.mxu0 0.0
        %4462 = vmatpush1.msra.mxu0 %v4404
        %4463 = vmatprep.subr.mxu0 0.0
        %4464 = vmatpush1.msra.mxu0 %v4405
        %4465 = vmatprep.subr.mxu0 0.0
        %4466 = vmatpush1.msra.mxu0 %v4406
        %4467 = vmatprep.subr.mxu0 0.0
        %4468 = vmatpush1.msra.mxu0 %v4407
        %4469 = vmatprep.subr.mxu0 0.0
        %4470 = vmatpush1.msra.mxu0 %v4408
        %4471 = vmatprep.subr.mxu0 0.0
        %4472 = vmatpush1.msra.mxu0 %v4409
        %4473 = vmatprep.subr.mxu0 0.0
        %4474 = vmatpush1.msra.mxu0 %v4410
        %4475 = vmatprep.subr.mxu0 0.0
        %4476 = vmatpush1.msra.mxu0 %v4411
        %4477 = vmatprep.mubr.f32.mxu0 %v622
        %4478 = vmatmul.mubr.f32.gmra.mrb[0].mxu0 %v621
        %v4479 = vpop.f32.mrb[0].mxu0
        %v4480 = vadd.f32 0.0, %v4479
        %v4481 = vpop.f32.mrb[0].mxu0
        %4482 = vmatprep.mubr.f32.mxu0 %v624
        %4483 = vmatmul.mubr.f32.gmra.mrb[0].mxu0 %v623
        %v4484 = vpop.f32.mrb[0].mxu0
        %v4485 = vadd.f32 0.0, %v4484
        %v4486 = vpop.f32.mrb[0].mxu0
        %4487 = vmatprep.mubr.f32.mxu0 %v626
        %4488 = vmatmul.mubr.f32.gmra.mrb[0].mxu0 %v625
        %v4489 = vpop.f32.mrb[0].mxu0
        %v4490 = vadd.f32 0.0, %v4489
        %v4491 = vpop.f32.mrb[0].mxu0
        %4492 = vmatprep.mubr.f32.mxu0 %v628
        %4493 = vmatmul.mubr.f32.gmra.mrb[0].mxu0 %v627
        %v4494 = vpop.f32.mrb[0].mxu0
        %v4495 = vadd.f32 0.0, %v4494
        %v4496 = vpop.f32.mrb[0].mxu0
        %4497 = vmatprep.mubr.f32.mxu0 %v630
        %4498 = vmatmul.mubr.f32.gmra.mrb[0].mxu0 %v629
        %v4499 = vpop.f32.mrb[0].mxu0
        %v4500 = vadd.f32 0.0, %v4499
        %v4501 = vpop.f32.mrb[0].mxu0
        %4502 = vmatprep.mubr.f32.mxu0 %v632
        %4503 = vmatmul.mubr.f32.gmra.mrb[0].mxu0 %v631
        %v4504 = vpop.f32.mrb[0].mxu0
        %v4505 = vadd.f32 0.0, %v4504
        %v4506 = vpop.f32.mrb[0].mxu0
        %4507 = vmatprep.mubr.f32.mxu0 %v634
        %4508 = vmatmul.mubr.f32.gmra.mrb[0].mxu0 %v633
        %v4509 = vpop.f32.mrb[0].mxu0
        %v4510 = vadd.f32 0.0, %v4509
        %v4511 = vpop.f32.mrb[0].mxu0
        %4512 = vmatprep.mubr.f32.mxu0 %v636
        %4513 = vmatmul.mubr.f32.gmra.mrb[0].mxu0 %v635
        %v4514 = vpop.f32.mrb[0].mxu0
        %v4515 = vadd.f32 0.0, %v4514
        %v4516 = vpop.f32.mrb[0].mxu0
        %4517 = vmatprep.mubr.f32.mxu0 %v638
        %4518 = vmatmul.mubr.f32.gmra.mrb[0].mxu0 %v637
        %v4519 = vpop.f32.mrb[0].mxu0
        %v4520 = vadd.f32 0.0, %v4519
        %v4521 = vpop.f32.mrb[0].mxu0
        %4522 = vmatprep.mubr.f32.mxu0 %v640
        %4523 = vmatmul.mubr.f32.gmra.mrb[0].mxu0 %v639
        %v4524 = vpop.f32.mrb[0].mxu0
        %v4525 = vadd.f32 0.0, %v4524
        %v4526 = vpop.f32.mrb[0].mxu0
        %4527 = vmatprep.mubr.f32.mxu0 %v642
        %4528 = vmatmul.mubr.f32.gmra.mrb[0].mxu0 %v641
        %v4529 = vpop.f32.mrb[0].mxu0
        %v4530 = vadd.f32 0.0, %v4529
        %v4531 = vpop.f32.mrb[0].mxu0
        %4532 = vmatprep.mubr.f32.mxu0 %v644
        %4533 = vmatmul.mubr.f32.gmra.mrb[0].mxu0 %v643
        %v4534 = vpop.f32.mrb[0].mxu0
        %v4535 = vadd.f32 0.0, %v4534
        %v4536 = vpop.f32.mrb[0].mxu0
        %4537 = vmatprep.mubr.f32.mxu0 %v646
        %4538 = vmatmul.mubr.f32.gmra.mrb[0].mxu0 %v645
        %v4539 = vpop.f32.mrb[0].mxu0
        %v4540 = vadd.f32 0.0, %v4539
        %v4541 = vpop.f32.mrb[0].mxu0
        %4542 = vmatprep.mubr.f32.mxu0 %v648
        %4543 = vmatmul.mubr.f32.gmra.mrb[0].mxu0 %v647
        %v4544 = vpop.f32.mrb[0].mxu0
        %v4545 = vadd.f32 0.0, %v4544
        %v4546 = vpop.f32.mrb[0].mxu0
        %4547 = vmatprep.mubr.f32.mxu0 %v650
        %4548 = vmatmul.mubr.f32.gmra.mrb[0].mxu0 %v649
        %v4549 = vpop.f32.mrb[0].mxu0
        %v4550 = vadd.f32 0.0, %v4549
        %v4551 = vpop.f32.mrb[0].mxu0
        %4552 = vmatprep.mubr.f32.mxu0 %v652
        %4553 = vmatmul.mubr.f32.gmra.mrb[0].mxu0 %v651
        %v4554 = vpop.f32.mrb[0].mxu0
        %v4555 = vadd.f32 0.0, %v4554
        %v4556 = vpop.f32.mrb[0].mxu0
        %4557 = vmatprep.mubr.f32.mxu0 %v654
        %4558 = vmatmul.mubr.f32.gmra.mrb[0].mxu0 %v653
        %v4559 = vpop.f32.mrb[0].mxu0
        %v4560 = vadd.f32 0.0, %v4559
        %v4561 = vpop.f32.mrb[0].mxu0
        %4562 = vmatprep.mubr.f32.mxu0 %v656
        %4563 = vmatmul.mubr.f32.gmra.mrb[0].mxu0 %v655
        %v4564 = vpop.f32.mrb[0].mxu0
        %v4565 = vadd.f32 0.0, %v4564
        %v4566 = vpop.f32.mrb[0].mxu0
        %4567 = vmatprep.mubr.f32.mxu0 %v658
        %4568 = vmatmul.mubr.f32.gmra.mrb[0].mxu0 %v657
        %v4569 = vpop.f32.mrb[0].mxu0
        %v4570 = vadd.f32 0.0, %v4569
        %v4571 = vpop.f32.mrb[0].mxu0
        %4572 = vmatprep.mubr.f32.mxu0 %v660
        %4573 = vmatmul.mubr.f32.gmra.mrb[0].mxu0 %v659
        %v4574 = vpop.f32.mrb[0].mxu0
        %v4575 = vadd.f32 0.0, %v4574
        %v4576 = vpop.f32.mrb[0].mxu0
        %4577 = vmatprep.mubr.f32.mxu0 %v662
        %4578 = vmatmul.mubr.f32.gmra.mrb[0].mxu0 %v661
        %v4579 = vpop.f32.mrb[0].mxu0
        %v4580 = vadd.f32 0.0, %v4579
        %v4581 = vpop.f32.mrb[0].mxu0
        %4582 = vmatprep.mubr.f32.mxu0 %v664
        %4583 = vmatmul.mubr.f32.gmra.mrb[0].mxu0 %v663
        %v4584 = vpop.f32.mrb[0].mxu0
        %v4585 = vadd.f32 0.0, %v4584
        %v4586 = vpop.f32.mrb[0].mxu0
        %4587 = vmatprep.mubr.f32.mxu0 %v666
        %4588 = vmatmul.mubr.f32.gmra.mrb[0].mxu0 %v665
        %v4589 = vpop.f32.mrb[0].mxu0
        %v4590 = vadd.f32 0.0, %v4589
        %v4591 = vpop.f32.mrb[0].mxu0
        %4592 = vmatprep.mubr.f32.mxu0 %v668
        %4593 = vmatmul.mubr.f32.gmra.mrb[0].mxu0 %v667
        %v4594 = vpop.f32.mrb[0].mxu0
        %v4595 = vadd.f32 0.0, %v4594
        %v4596 = vpop.f32.mrb[0].mxu0
        %4597 = vmatprep.mubr.f32.mxu0 %v670
        %4598 = vmatmul.mubr.f32.gmra.mrb[0].mxu0 %v669
        %v4599 = vpop.f32.mrb[0].mxu0
        %v4600 = vadd.f32 0.0, %v4599
        %v4601 = vpop.f32.mrb[0].mxu0
        %4602 = vmatprep.mubr.f32.mxu0 %v672
        %4603 = vmatmul.mubr.f32.gmra.mrb[0].mxu0 %v671
        %v4604 = vpop.f32.mrb[0].mxu0
        %v4605 = vadd.f32 0.0, %v4604
        %v4606 = vpop.f32.mrb[0].mxu0
        %4607 = vmatprep.mubr.f32.mxu0 %v674
        %4608 = vmatmul.mubr.f32.gmra.mrb[0].mxu0 %v673
        %v4609 = vpop.f32.mrb[0].mxu0
        %v4610 = vadd.f32 0.0, %v4609
        %v4611 = vpop.f32.mrb[0].mxu0
        %4612 = vmatprep.mubr.f32.mxu0 %v676
        %4613 = vmatmul.mubr.f32.gmra.mrb[0].mxu0 %v675
        %v4614 = vpop.f32.mrb[0].mxu0
        %v4615 = vadd.f32 0.0, %v4614
        %v4616 = vpop.f32.mrb[0].mxu0
        %4617 = vmatprep.mubr.f32.mxu0 %v678
        %4618 = vmatmul.mubr.f32.gmra.mrb[0].mxu0 %v677
        %v4619 = vpop.f32.mrb[0].mxu0
        %v4620 = vadd.f32 0.0, %v4619
        %v4621 = vpop.f32.mrb[0].mxu0
        %4622 = vmatprep.mubr.f32.mxu0 %v680
        %4623 = vmatmul.mubr.f32.gmra.mrb[0].mxu0 %v679
        %v4624 = vpop.f32.mrb[0].mxu0
        %v4625 = vadd.f32 0.0, %v4624
        %v4626 = vpop.f32.mrb[0].mxu0
        %4627 = vmatprep.mubr.f32.mxu0 %v682
        %4628 = vmatmul.mubr.f32.gmra.mrb[0].mxu0 %v681
        %v4629 = vpop.f32.mrb[0].mxu0
        %v4630 = vadd.f32 0.0, %v4629
        %v4631 = vpop.f32.mrb[0].mxu0
        %4632 = vmatprep.mubr.f32.mxu0 %v684
        %4633 = vmatmul.mubr.f32.gmra.mrb[0].mxu0 %v683
        %v4634 = vpop.f32.mrb[0].mxu0
        %v4635 = vadd.f32 0.0, %v4634
        %v4636 = vpop.f32.mrb[0].mxu0
        %4637 = vdwg.mxu0
        %v4638 = vpack.c.bf16 %v4381, %v4380
        %v4639 = vpack.c.bf16 %v4383, %v4382
        %v4640 = vpack.c.bf16 %v4385, %v4384
        %v4641 = vpack.c.bf16 %v4387, %v4386
        %v4642 = vpack.c.bf16 %v4389, %v4388
        %v4643 = vpack.c.bf16 %v4391, %v4390
        %v4644 = vpack.c.bf16 %v4393, %v4392
        %v4645 = vpack.c.bf16 %v4395, %v4394
        %v4646 = vpack.c.bf16 %v4397, %v4396
        %v4647 = vpack.c.bf16 %v4399, %v4398
        %v4648 = vpack.c.bf16 %v4401, %v4400
        %v4649 = vpack.c.bf16 %v4403, %v4402
        %v4650 = vpack.c.bf16 %v4405, %v4404
        %v4651 = vpack.c.bf16 %v4407, %v4406
        %v4652 = vpack.c.bf16 %v4409, %v4408
        %v4653 = vpack.c.bf16 %v4411, %v4410
        %v4654 = vld [vmem:[%s6] sm:$0xf]
        %v4655 = vld [vmem:[%s6 + $0x4] sm:$0xf]
        %v4656 = vld [vmem:[%s6 + $0x8] sm:$0xf]
        %v4657 = vld [vmem:[%s6 + $0xc] sm:$0xf]
        %v4658 = vld [vmem:[%s6 + $0x10] sm:$0xf]
        %v4659 = vld [vmem:[%s6 + $0x14] sm:$0xf]
        %v4660 = vld [vmem:[%s6 + $0x18] sm:$0xf]
        %v4661 = vld [vmem:[%s6 + $0x1c] sm:$0xf]
        %v4662 = vld [vmem:[%s6 + $0x20] sm:$0xf]
        %v4663 = vld [vmem:[%s6 + $0x24] sm:$0xf]
        %v4664 = vld [vmem:[%s6 + $0x28] sm:$0xf]
        %v4665 = vld [vmem:[%s6 + $0x2c] sm:$0xf]
        %v4666 = vld [vmem:[%s6 + $0x30] sm:$0xf]
        %v4667 = vld [vmem:[%s6 + $0x34] sm:$0xf]
        %v4668 = vld [vmem:[%s6 + $0x38] sm:$0xf]
        %v4669 = vld [vmem:[%s6 + $0x3c] sm:$0xf]
        %v4670 = vpack.c.bf16 %v4485, %v4480
        %v4671 = vpack.c.bf16 %v4495, %v4490
        %v4672 = vpack.c.bf16 %v4505, %v4500
        %v4673 = vpack.c.bf16 %v4515, %v4510
        %v4674 = vpack.c.bf16 %v4525, %v4520
        %v4675 = vpack.c.bf16 %v4535, %v4530
        %v4676 = vpack.c.bf16 %v4545, %v4540
        %v4677 = vpack.c.bf16 %v4555, %v4550
        %v4678 = vpack.c.bf16 %v4565, %v4560
        %v4679 = vpack.c.bf16 %v4575, %v4570
        %v4680 = vpack.c.bf16 %v4585, %v4580
        %v4681 = vpack.c.bf16 %v4595, %v4590
        %v4682 = vpack.c.bf16 %v4605, %v4600
        %v4683 = vpack.c.bf16 %v4615, %v4610
        %v4684 = vpack.c.bf16 %v4625, %v4620
        %v4685 = vpack.c.bf16 %v4635, %v4630
        %v4686 = vld [vmem:[%s6 + $0x40] sm:$0xf]
        %v4687 = vld [vmem:[%s6 + $0x44] sm:$0xf]
        %v4688 = vld [vmem:[%s6 + $0x48] sm:$0xf]
        %v4689 = vld [vmem:[%s6 + $0x4c] sm:$0xf]
        %v4690 = vld [vmem:[%s6 + $0x50] sm:$0xf]
        %v4691 = vld [vmem:[%s6 + $0x54] sm:$0xf]
        %v4692 = vld [vmem:[%s6 + $0x58] sm:$0xf]
        %v4693 = vld [vmem:[%s6 + $0x5c] sm:$0xf]
        %v4694 = vld [vmem:[%s6 + $0x60] sm:$0xf]
        %v4695 = vld [vmem:[%s6 + $0x64] sm:$0xf]
        %v4696 = vld [vmem:[%s6 + $0x68] sm:$0xf]
        %v4697 = vld [vmem:[%s6 + $0x6c] sm:$0xf]
        %v4698 = vld [vmem:[%s6 + $0x70] sm:$0xf]
        %v4699 = vld [vmem:[%s6 + $0x74] sm:$0xf]
        %v4700 = vld [vmem:[%s6 + $0x78] sm:$0xf]
        %v4701 = vld [vmem:[%s6 + $0x7c] sm:$0xf]
        %v4718 = vunpack.c.l.b16 %v4686
        %v4719 = vunpack.c.l.b16 %v4687
        %v4720 = vunpack.c.l.b16 %v4688
        %v4721 = vunpack.c.l.b16 %v4689
        %v4722 = vunpack.c.l.b16 %v4690
        %v4723 = vunpack.c.l.b16 %v4691
        %v4724 = vunpack.c.l.b16 %v4692
        %v4725 = vunpack.c.l.b16 %v4693
        %v4726 = vunpack.c.l.b16 %v4694
        %v4727 = vunpack.c.l.b16 %v4695
        %v4728 = vunpack.c.l.b16 %v4696
        %v4729 = vunpack.c.l.b16 %v4697
        %v4730 = vunpack.c.l.b16 %v4698
        %v4731 = vunpack.c.l.b16 %v4699
        %v4732 = vunpack.c.l.b16 %v4700
        %v4733 = vunpack.c.l.b16 %v4701
        %v4734 = vpack.c.b16 %v4719, %v4718
        %v4735 = vpack.c.b16 %v4721, %v4720
        %v4736 = vpack.c.b16 %v4723, %v4722
        %v4737 = vpack.c.b16 %v4725, %v4724
        %v4738 = vpack.c.b16 %v4727, %v4726
        %v4739 = vpack.c.b16 %v4729, %v4728
        %v4740 = vpack.c.b16 %v4731, %v4730
        %v4741 = vpack.c.b16 %v4733, %v4732
        %4750 = vmatprep.subr.bf16.mxu0 0
        %4751 = vmatpush1.bf16.msra.mxu0 %v4734
        %4752 = vmatprep.subr.bf16.mxu0 0
        %4753 = vmatpush1.bf16.msra.mxu0 %v4735
        %4754 = vmatprep.subr.bf16.mxu0 0
        %4755 = vmatpush1.bf16.msra.mxu0 %v4736
        %4756 = vmatprep.subr.bf16.mxu0 0
        %4757 = vmatpush1.bf16.msra.mxu0 %v4737
        %4758 = vmatprep.subr.bf16.mxu0 0
        %4759 = vmatpush1.bf16.msra.mxu0 %v4738
        %4760 = vmatprep.subr.bf16.mxu0 0
        %4761 = vmatpush1.bf16.msra.mxu0 %v4739
        %4762 = vmatprep.subr.bf16.mxu0 0
        %4763 = vmatpush1.bf16.msra.mxu0 %v4740
        %4764 = vmatprep.subr.bf16.mxu0 0
        %4765 = vmatpush1.bf16.msra.mxu0 %v4741
        %4766 = vmatprep.subr.bf16.mxu0 0
        %4767 = vmatpush1.bf16.msra.mxu0 0
        %4768 = vmatprep.subr.bf16.mxu0 0
        %4769 = vmatpush1.bf16.msra.mxu0 0
        %4770 = vmatprep.subr.bf16.mxu0 0
        %4771 = vmatpush1.bf16.msra.mxu0 0
        %4772 = vmatprep.subr.bf16.mxu0 0
        %4773 = vmatpush1.bf16.msra.mxu0 0
        %4774 = vmatprep.subr.bf16.mxu0 0
        %4775 = vmatpush1.bf16.msra.mxu0 0
        %4776 = vmatprep.subr.bf16.mxu0 0
        %4777 = vmatpush1.bf16.msra.mxu0 0
        %4778 = vmatprep.subr.bf16.mxu0 0
        %4779 = vmatpush1.bf16.msra.mxu0 0
        %4780 = vmatprep.subr.bf16.mxu0 0
        %4781 = vmatpush1.bf16.msra.mxu0 0
        %4782 = vmatprep.mubr.bf16.mxu0 0
        %4783 = vmatmul.mubr.bf16.gmra.mrb[0].mxu0 %v4670
        %v4784 = vpop.f32.mrb[0].mxu0
        %v4785 = vadd.f32 0.0, %v4784
        %v4786 = vpop.f32.mrb[0].mxu0
        %v4787 = vpop.f32.mrb[0].mxu0
        %v4788 = vadd.f32 0.0, %v4787
        %v4789 = vpop.f32.mrb[0].mxu0
        %4790 = vmatprep.mubr.bf16.mxu0 0
        %4791 = vmatmul.mubr.bf16.gmra.mrb[0].mxu0 %v4671
        %v4792 = vpop.f32.mrb[0].mxu0
        %v4793 = vadd.f32 0.0, %v4792
        %v4794 = vpop.f32.mrb[0].mxu0
        %v4795 = vpop.f32.mrb[0].mxu0
        %v4796 = vadd.f32 0.0, %v4795
        %v4797 = vpop.f32.mrb[0].mxu0
        %4798 = vmatprep.mubr.bf16.mxu0 0
        %4799 = vmatmul.mubr.bf16.gmra.mrb[0].mxu0 %v4672
        %v4800 = vpop.f32.mrb[0].mxu0
        %v4801 = vadd.f32 0.0, %v4800
        %v4802 = vpop.f32.mrb[0].mxu0
        %v4803 = vpop.f32.mrb[0].mxu0
        %v4804 = vadd.f32 0.0, %v4803
        %v4805 = vpop.f32.mrb[0].mxu0
        %4806 = vmatprep.mubr.bf16.mxu0 0
        %4807 = vmatmul.mubr.bf16.gmra.mrb[0].mxu0 %v4673
        %v4808 = vpop.f32.mrb[0].mxu0
        %v4809 = vadd.f32 0.0, %v4808
        %v4810 = vpop.f32.mrb[0].mxu0
        %v4811 = vpop.f32.mrb[0].mxu0
        %v4812 = vadd.f32 0.0, %v4811
        %v4813 = vpop.f32.mrb[0].mxu0
        %4814 = vmatprep.mubr.bf16.mxu0 0
        %4815 = vmatmul.mubr.bf16.gmra.mrb[0].mxu0 %v4674
        %v4816 = vpop.f32.mrb[0].mxu0
        %v4817 = vadd.f32 0.0, %v4816
        %v4818 = vpop.f32.mrb[0].mxu0
        %v4819 = vpop.f32.mrb[0].mxu0
        %v4820 = vadd.f32 0.0, %v4819
        %v4821 = vpop.f32.mrb[0].mxu0
        %4822 = vmatprep.mubr.bf16.mxu0 0
        %4823 = vmatmul.mubr.bf16.gmra.mrb[0].mxu0 %v4675
        %v4824 = vpop.f32.mrb[0].mxu0
        %v4825 = vadd.f32 0.0, %v4824
        %v4826 = vpop.f32.mrb[0].mxu0
        %v4827 = vpop.f32.mrb[0].mxu0
        %v4828 = vadd.f32 0.0, %v4827
        %v4829 = vpop.f32.mrb[0].mxu0
        %4830 = vmatprep.mubr.bf16.mxu0 0
        %4831 = vmatmul.mubr.bf16.gmra.mrb[0].mxu0 %v4676
        %v4832 = vpop.f32.mrb[0].mxu0
        %v4833 = vadd.f32 0.0, %v4832
        %v4834 = vpop.f32.mrb[0].mxu0
        %v4835 = vpop.f32.mrb[0].mxu0
        %v4836 = vadd.f32 0.0, %v4835
        %v4837 = vpop.f32.mrb[0].mxu0
        %4838 = vmatprep.mubr.bf16.mxu0 0
        %4839 = vmatmul.mubr.bf16.gmra.mrb[0].mxu0 %v4677
        %v4840 = vpop.f32.mrb[0].mxu0
        %v4841 = vadd.f32 0.0, %v4840
        %v4842 = vpop.f32.mrb[0].mxu0
        %v4843 = vpop.f32.mrb[0].mxu0
        %v4844 = vadd.f32 0.0, %v4843
        %v4845 = vpop.f32.mrb[0].mxu0
        %4846 = vmatprep.mubr.bf16.mxu0 0
        %4847 = vmatmul.mubr.bf16.gmra.mrb[0].mxu0 %v4678
        %v4848 = vpop.f32.mrb[0].mxu0
        %v4849 = vadd.f32 0.0, %v4848
        %v4850 = vpop.f32.mrb[0].mxu0
        %v4851 = vpop.f32.mrb[0].mxu0
        %v4852 = vadd.f32 0.0, %v4851
        %v4853 = vpop.f32.mrb[0].mxu0
        %4854 = vmatprep.mubr.bf16.mxu0 0
        %4855 = vmatmul.mubr.bf16.gmra.mrb[0].mxu0 %v4679
        %v4856 = vpop.f32.mrb[0].mxu0
        %v4857 = vadd.f32 0.0, %v4856
        %v4858 = vpop.f32.mrb[0].mxu0
        %v4859 = vpop.f32.mrb[0].mxu0
        %v4860 = vadd.f32 0.0, %v4859
        %v4861 = vpop.f32.mrb[0].mxu0
        %4862 = vmatprep.mubr.bf16.mxu0 0
        %4863 = vmatmul.mubr.bf16.gmra.mrb[0].mxu0 %v4680
        %v4864 = vpop.f32.mrb[0].mxu0
        %v4865 = vadd.f32 0.0, %v4864
        %v4866 = vpop.f32.mrb[0].mxu0
        %v4867 = vpop.f32.mrb[0].mxu0
        %v4868 = vadd.f32 0.0, %v4867
        %v4869 = vpop.f32.mrb[0].mxu0
        %4870 = vmatprep.mubr.bf16.mxu0 0
        %4871 = vmatmul.mubr.bf16.gmra.mrb[0].mxu0 %v4681
        %v4872 = vpop.f32.mrb[0].mxu0
        %v4873 = vadd.f32 0.0, %v4872
        %v4874 = vpop.f32.mrb[0].mxu0
        %v4875 = vpop.f32.mrb[0].mxu0
        %v4876 = vadd.f32 0.0, %v4875
        %v4877 = vpop.f32.mrb[0].mxu0
        %4878 = vmatprep.mubr.bf16.mxu0 0
        %4879 = vmatmul.mubr.bf16.gmra.mrb[0].mxu0 %v4682
        %v4880 = vpop.f32.mrb[0].mxu0
        %v4881 = vadd.f32 0.0, %v4880
        %v4882 = vpop.f32.mrb[0].mxu0
        %v4883 = vpop.f32.mrb[0].mxu0
        %v4884 = vadd.f32 0.0, %v4883
        %v4885 = vpop.f32.mrb[0].mxu0
        %4886 = vmatprep.mubr.bf16.mxu0 0
        %4887 = vmatmul.mubr.bf16.gmra.mrb[0].mxu0 %v4683
        %v4888 = vpop.f32.mrb[0].mxu0
        %v4889 = vadd.f32 0.0, %v4888
        %v4890 = vpop.f32.mrb[0].mxu0
        %v4891 = vpop.f32.mrb[0].mxu0
        %v4892 = vadd.f32 0.0, %v4891
        %v4893 = vpop.f32.mrb[0].mxu0
        %4894 = vmatprep.mubr.bf16.mxu0 0
        %4895 = vmatmul.mubr.bf16.gmra.mrb[0].mxu0 %v4684
        %v4896 = vpop.f32.mrb[0].mxu0
        %v4897 = vadd.f32 0.0, %v4896
        %v4898 = vpop.f32.mrb[0].mxu0
        %v4899 = vpop.f32.mrb[0].mxu0
        %v4900 = vadd.f32 0.0, %v4899
        %v4901 = vpop.f32.mrb[0].mxu0
        %4902 = vmatprep.mubr.bf16.mxu0 0
        %4903 = vmatmul.mubr.bf16.gmra.mrb[0].mxu0 %v4685
        %v4904 = vpop.f32.mrb[0].mxu0
        %v4905 = vadd.f32 0.0, %v4904
        %v4906 = vpop.f32.mrb[0].mxu0
        %v4907 = vpop.f32.mrb[0].mxu0
        %v4908 = vadd.f32 0.0, %v4907
        %v4909 = vpop.f32.mrb[0].mxu0
        %4910 = vdwg.mxu0
        %v4927 = vunpack.c.l.b16 %v4654
        %v4928 = vunpack.c.l.b16 %v4655
        %v4929 = vunpack.c.l.b16 %v4656
        %v4930 = vunpack.c.l.b16 %v4657
        %v4931 = vunpack.c.l.b16 %v4658
        %v4932 = vunpack.c.l.b16 %v4659
        %v4933 = vunpack.c.l.b16 %v4660
        %v4934 = vunpack.c.l.b16 %v4661
        %v4935 = vunpack.c.l.b16 %v4662
        %v4936 = vunpack.c.l.b16 %v4663
        %v4937 = vunpack.c.l.b16 %v4664
        %v4938 = vunpack.c.l.b16 %v4665
        %v4939 = vunpack.c.l.b16 %v4666
        %v4940 = vunpack.c.l.b16 %v4667
        %v4941 = vunpack.c.l.b16 %v4668
        %v4942 = vunpack.c.l.b16 %v4669
        %v4943 = vpack.c.b16 %v4928, %v4927
        %v4944 = vpack.c.b16 %v4930, %v4929
        %v4945 = vpack.c.b16 %v4932, %v4931
        %v4946 = vpack.c.b16 %v4934, %v4933
        %v4947 = vpack.c.b16 %v4936, %v4935
        %v4948 = vpack.c.b16 %v4938, %v4937
        %v4949 = vpack.c.b16 %v4940, %v4939
        %v4950 = vpack.c.b16 %v4942, %v4941
        %4959 = vmatprep.subr.bf16.mxu0 0
        %4960 = vmatpush1.bf16.msra.mxu0 %v4943
        %4961 = vmatprep.subr.bf16.mxu0 0
        %4962 = vmatpush1.bf16.msra.mxu0 %v4944
        %4963 = vmatprep.subr.bf16.mxu0 0
        %4964 = vmatpush1.bf16.msra.mxu0 %v4945
        %4965 = vmatprep.subr.bf16.mxu0 0
        %4966 = vmatpush1.bf16.msra.mxu0 %v4946
        %4967 = vmatprep.subr.bf16.mxu0 0
        %4968 = vmatpush1.bf16.msra.mxu0 %v4947
        %4969 = vmatprep.subr.bf16.mxu0 0
        %4970 = vmatpush1.bf16.msra.mxu0 %v4948
        %4971 = vmatprep.subr.bf16.mxu0 0
        %4972 = vmatpush1.bf16.msra.mxu0 %v4949
        %4973 = vmatprep.subr.bf16.mxu0 0
        %4974 = vmatpush1.bf16.msra.mxu0 %v4950
        %4975 = vmatprep.subr.bf16.mxu0 0
        %4976 = vmatpush1.bf16.msra.mxu0 0
        %4977 = vmatprep.subr.bf16.mxu0 0
        %4978 = vmatpush1.bf16.msra.mxu0 0
        %4979 = vmatprep.subr.bf16.mxu0 0
        %4980 = vmatpush1.bf16.msra.mxu0 0
        %4981 = vmatprep.subr.bf16.mxu0 0
        %4982 = vmatpush1.bf16.msra.mxu0 0
        %4983 = vmatprep.subr.bf16.mxu0 0
        %4984 = vmatpush1.bf16.msra.mxu0 0
        %4985 = vmatprep.subr.bf16.mxu0 0
        %4986 = vmatpush1.bf16.msra.mxu0 0
        %4987 = vmatprep.subr.bf16.mxu0 0
        %4988 = vmatpush1.bf16.msra.mxu0 0
        %4989 = vmatprep.subr.bf16.mxu0 0
        %4990 = vmatpush1.bf16.msra.mxu0 0
        %4991 = vmatprep.mubr.bf16.mxu0 0
        %4992 = vmatmul.mubr.bf16.gmra.mrb[0].mxu0 %v4638
        %v4993 = vpop.f32.mrb[0].mxu0
        %v4994 = vadd.f32 %v4785, %v4993
        %v4995 = vpop.f32.mrb[0].mxu0
        %v4996 = vpop.f32.mrb[0].mxu0
        %v4997 = vadd.f32 %v4788, %v4996
        %v4998 = vpop.f32.mrb[0].mxu0
        %4999 = vmatprep.mubr.bf16.mxu0 0
        %5000 = vmatmul.mubr.bf16.gmra.mrb[0].mxu0 %v4639
        %v5001 = vpop.f32.mrb[0].mxu0
        %v5002 = vadd.f32 %v4793, %v5001
        %v5003 = vpop.f32.mrb[0].mxu0
        %v5004 = vpop.f32.mrb[0].mxu0
        %v5005 = vadd.f32 %v4796, %v5004
        %v5006 = vpop.f32.mrb[0].mxu0
        %5007 = vmatprep.mubr.bf16.mxu0 0
        %5008 = vmatmul.mubr.bf16.gmra.mrb[0].mxu0 %v4640
        %v5009 = vpop.f32.mrb[0].mxu0
        %v5010 = vadd.f32 %v4801, %v5009
        %v5011 = vpop.f32.mrb[0].mxu0
        %v5012 = vpop.f32.mrb[0].mxu0
        %v5013 = vadd.f32 %v4804, %v5012
        %v5014 = vpop.f32.mrb[0].mxu0
        %5015 = vmatprep.mubr.bf16.mxu0 0
        %5016 = vmatmul.mubr.bf16.gmra.mrb[0].mxu0 %v4641
        %v5017 = vpop.f32.mrb[0].mxu0
        %v5018 = vadd.f32 %v4809, %v5017
        %v5019 = vpop.f32.mrb[0].mxu0
        %v5020 = vpop.f32.mrb[0].mxu0
        %v5021 = vadd.f32 %v4812, %v5020
        %v5022 = vpop.f32.mrb[0].mxu0
        %5023 = vmatprep.mubr.bf16.mxu0 0
        %5024 = vmatmul.mubr.bf16.gmra.mrb[0].mxu0 %v4642
        %v5025 = vpop.f32.mrb[0].mxu0
        %v5026 = vadd.f32 %v4817, %v5025
        %v5027 = vpop.f32.mrb[0].mxu0
        %v5028 = vpop.f32.mrb[0].mxu0
        %v5029 = vadd.f32 %v4820, %v5028
        %v5030 = vpop.f32.mrb[0].mxu0
        %5031 = vmatprep.mubr.bf16.mxu0 0
        %5032 = vmatmul.mubr.bf16.gmra.mrb[0].mxu0 %v4643
        %v5033 = vpop.f32.mrb[0].mxu0
        %v5034 = vadd.f32 %v4825, %v5033
        %v5035 = vpop.f32.mrb[0].mxu0
        %v5036 = vpop.f32.mrb[0].mxu0
        %v5037 = vadd.f32 %v4828, %v5036
        %v5038 = vpop.f32.mrb[0].mxu0
        %5039 = vmatprep.mubr.bf16.mxu0 0
        %5040 = vmatmul.mubr.bf16.gmra.mrb[0].mxu0 %v4644
        %v5041 = vpop.f32.mrb[0].mxu0
        %v5042 = vadd.f32 %v4833, %v5041
        %v5043 = vpop.f32.mrb[0].mxu0
        %v5044 = vpop.f32.mrb[0].mxu0
        %v5045 = vadd.f32 %v4836, %v5044
        %v5046 = vpop.f32.mrb[0].mxu0
        %5047 = vmatprep.mubr.bf16.mxu0 0
        %5048 = vmatmul.mubr.bf16.gmra.mrb[0].mxu0 %v4645
        %v5049 = vpop.f32.mrb[0].mxu0
        %v5050 = vadd.f32 %v4841, %v5049
        %v5051 = vpop.f32.mrb[0].mxu0
        %v5052 = vpop.f32.mrb[0].mxu0
        %v5053 = vadd.f32 %v4844, %v5052
        %v5054 = vpop.f32.mrb[0].mxu0
        %5055 = vmatprep.mubr.bf16.mxu0 0
        %5056 = vmatmul.mubr.bf16.gmra.mrb[0].mxu0 %v4646
        %v5057 = vpop.f32.mrb[0].mxu0
        %v5058 = vadd.f32 %v4849, %v5057
        %v5059 = vpop.f32.mrb[0].mxu0
        %v5060 = vpop.f32.mrb[0].mxu0
        %v5061 = vadd.f32 %v4852, %v5060
        %v5062 = vpop.f32.mrb[0].mxu0
        %5063 = vmatprep.mubr.bf16.mxu0 0
        %5064 = vmatmul.mubr.bf16.gmra.mrb[0].mxu0 %v4647
        %v5065 = vpop.f32.mrb[0].mxu0
        %v5066 = vadd.f32 %v4857, %v5065
        %v5067 = vpop.f32.mrb[0].mxu0
        %v5068 = vpop.f32.mrb[0].mxu0
        %v5069 = vadd.f32 %v4860, %v5068
        %v5070 = vpop.f32.mrb[0].mxu0
        %5071 = vmatprep.mubr.bf16.mxu0 0
        %5072 = vmatmul.mubr.bf16.gmra.mrb[0].mxu0 %v4648
        %v5073 = vpop.f32.mrb[0].mxu0
        %v5074 = vadd.f32 %v4865, %v5073
        %v5075 = vpop.f32.mrb[0].mxu0
        %v5076 = vpop.f32.mrb[0].mxu0
        %v5077 = vadd.f32 %v4868, %v5076
        %v5078 = vpop.f32.mrb[0].mxu0
        %5079 = vmatprep.mubr.bf16.mxu0 0
        %5080 = vmatmul.mubr.bf16.gmra.mrb[0].mxu0 %v4649
        %v5081 = vpop.f32.mrb[0].mxu0
        %v5082 = vadd.f32 %v4873, %v5081
        %v5083 = vpop.f32.mrb[0].mxu0
        %v5084 = vpop.f32.mrb[0].mxu0
        %v5085 = vadd.f32 %v4876, %v5084
        %v5086 = vpop.f32.mrb[0].mxu0
        %5087 = vmatprep.mubr.bf16.mxu0 0
        %5088 = vmatmul.mubr.bf16.gmra.mrb[0].mxu0 %v4650
        %v5089 = vpop.f32.mrb[0].mxu0
        %v5090 = vadd.f32 %v4881, %v5089
        %v5091 = vpop.f32.mrb[0].mxu0
        %v5092 = vpop.f32.mrb[0].mxu0
        %v5093 = vadd.f32 %v4884, %v5092
        %v5094 = vpop.f32.mrb[0].mxu0
        %5095 = vmatprep.mubr.bf16.mxu0 0
        %5096 = vmatmul.mubr.bf16.gmra.mrb[0].mxu0 %v4651
        %v5097 = vpop.f32.mrb[0].mxu0
        %v5098 = vadd.f32 %v4889, %v5097
        %v5099 = vpop.f32.mrb[0].mxu0
        %v5100 = vpop.f32.mrb[0].mxu0
        %v5101 = vadd.f32 %v4892, %v5100
        %v5102 = vpop.f32.mrb[0].mxu0
        %5103 = vmatprep.mubr.bf16.mxu0 0
        %5104 = vmatmul.mubr.bf16.gmra.mrb[0].mxu0 %v4652
        %v5105 = vpop.f32.mrb[0].mxu0
        %v5106 = vadd.f32 %v4897, %v5105
        %v5107 = vpop.f32.mrb[0].mxu0
        %v5108 = vpop.f32.mrb[0].mxu0
        %v5109 = vadd.f32 %v4900, %v5108
        %v5110 = vpop.f32.mrb[0].mxu0
        %5111 = vmatprep.mubr.bf16.mxu0 0
        %5112 = vmatmul.mubr.bf16.gmra.mrb[0].mxu0 %v4653
        %v5113 = vpop.f32.mrb[0].mxu0
        %v5114 = vadd.f32 %v4905, %v5113
        %v5115 = vpop.f32.mrb[0].mxu0
        %v5116 = vpop.f32.mrb[0].mxu0
        %v5117 = vadd.f32 %v4908, %v5116
        %v5118 = vpop.f32.mrb[0].mxu0
        %5119 = vdwg.mxu0
        %v5120 = vld [vmem:[%s12] sm:$0x1]
        %v5122 = vlaneseq
        %v5123 = vshrl.u32 %v5122, 7
        %v5124 = vsub.s32 0, %v5123
        %v5125 = vrot.slane %v5120, %v5124
        %v5127 = vadd.f32 %v4994, %v5125
        %v5128 = vadd.f32 %v4997, %v5125
        %v5129 = vadd.f32 %v5002, %v5125
        %v5130 = vadd.f32 %v5005, %v5125
        %v5131 = vadd.f32 %v5010, %v5125
        %v5132 = vadd.f32 %v5013, %v5125
        %v5133 = vadd.f32 %v5018, %v5125
        %v5134 = vadd.f32 %v5021, %v5125
        %v5135 = vadd.f32 %v5026, %v5125
        %v5136 = vadd.f32 %v5029, %v5125
        %v5137 = vadd.f32 %v5034, %v5125
        %v5138 = vadd.f32 %v5037, %v5125
        %v5139 = vadd.f32 %v5042, %v5125
        %v5140 = vadd.f32 %v5045, %v5125
        %v5141 = vadd.f32 %v5050, %v5125
        %v5142 = vadd.f32 %v5053, %v5125
        %v5143 = vadd.f32 %v5058, %v5125
        %v5144 = vadd.f32 %v5061, %v5125
        %v5145 = vadd.f32 %v5066, %v5125
        %v5146 = vadd.f32 %v5069, %v5125
        %v5147 = vadd.f32 %v5074, %v5125
        %v5148 = vadd.f32 %v5077, %v5125
        %v5149 = vadd.f32 %v5082, %v5125
        %v5150 = vadd.f32 %v5085, %v5125
        %v5151 = vadd.f32 %v5090, %v5125
        %v5152 = vadd.f32 %v5093, %v5125
        %v5153 = vadd.f32 %v5098, %v5125
        %v5154 = vadd.f32 %v5101, %v5125
        %v5155 = vadd.f32 %v5106, %v5125
        %v5156 = vadd.f32 %v5109, %v5125
        %v5157 = vadd.f32 %v5114, %v5125
        %v5158 = vadd.f32 %v5117, %v5125
        %v5159 = vmax.f32 %v5127, 0.0
        %v5160 = vmax.f32 %v5128, 0.0
        %v5161 = vmax.f32 %v5129, 0.0
        %v5162 = vmax.f32 %v5130, 0.0
        %v5163 = vmax.f32 %v5131, 0.0
        %v5164 = vmax.f32 %v5132, 0.0
        %v5165 = vmax.f32 %v5133, 0.0
        %v5166 = vmax.f32 %v5134, 0.0
        %v5167 = vmax.f32 %v5135, 0.0
        %v5168 = vmax.f32 %v5136, 0.0
        %v5169 = vmax.f32 %v5137, 0.0
        %v5170 = vmax.f32 %v5138, 0.0
        %v5171 = vmax.f32 %v5139, 0.0
        %v5172 = vmax.f32 %v5140, 0.0
        %v5173 = vmax.f32 %v5141, 0.0
        %v5174 = vmax.f32 %v5142, 0.0
        %v5175 = vmax.f32 %v5143, 0.0
        %v5176 = vmax.f32 %v5144, 0.0
        %v5177 = vmax.f32 %v5145, 0.0
        %v5178 = vmax.f32 %v5146, 0.0
        %v5179 = vmax.f32 %v5147, 0.0
        %v5180 = vmax.f32 %v5148, 0.0
        %v5181 = vmax.f32 %v5149, 0.0
        %v5182 = vmax.f32 %v5150, 0.0
        %v5183 = vmax.f32 %v5151, 0.0
        %v5184 = vmax.f32 %v5152, 0.0
        %v5185 = vmax.f32 %v5153, 0.0
        %v5186 = vmax.f32 %v5154, 0.0
        %v5187 = vmax.f32 %v5155, 0.0
        %v5188 = vmax.f32 %v5156, 0.0
        %v5189 = vmax.f32 %v5157, 0.0
        %v5190 = vmax.f32 %v5158, 0.0
        %v5192 = vlaneseq
        %v5193 = vshrl.u32 %v5192, 7
        %v5194 = vsub.s32 0, %v5193
        %v5195 = vrot.slane %v4412, %v5194
        %v5197 = vadd.f32 %v5159, %v5195
        %v5198 = vadd.f32 %v5160, %v5195
        %v5199 = vadd.f32 %v5161, %v5195
        %v5200 = vadd.f32 %v5162, %v5195
        %v5201 = vadd.f32 %v5163, %v5195
        %v5202 = vadd.f32 %v5164, %v5195
        %v5203 = vadd.f32 %v5165, %v5195
        %v5204 = vadd.f32 %v5166, %v5195
        %v5205 = vadd.f32 %v5167, %v5195
        %v5206 = vadd.f32 %v5168, %v5195
        %v5207 = vadd.f32 %v5169, %v5195
        %v5208 = vadd.f32 %v5170, %v5195
        %v5209 = vadd.f32 %v5171, %v5195
        %v5210 = vadd.f32 %v5172, %v5195
        %v5211 = vadd.f32 %v5173, %v5195
        %v5212 = vadd.f32 %v5174, %v5195
        %v5213 = vadd.f32 %v5175, %v5195
        %v5214 = vadd.f32 %v5176, %v5195
        %v5215 = vadd.f32 %v5177, %v5195
        %v5216 = vadd.f32 %v5178, %v5195
        %v5217 = vadd.f32 %v5179, %v5195
        %v5218 = vadd.f32 %v5180, %v5195
        %v5219 = vadd.f32 %v5181, %v5195
        %v5220 = vadd.f32 %v5182, %v5195
        %v5221 = vadd.f32 %v5183, %v5195
        %v5222 = vadd.f32 %v5184, %v5195
        %v5223 = vadd.f32 %v5185, %v5195
        %v5224 = vadd.f32 %v5186, %v5195
        %v5225 = vadd.f32 %v5187, %v5195
        %v5226 = vadd.f32 %v5188, %v5195
        %v5227 = vadd.f32 %v5189, %v5195
        %v5228 = vadd.f32 %v5190, %v5195
        %v5229 = vld [vmem:[%s16] sm:$0x1]
        %5230 = vmatprep.subr.mxu0 0.0
        %5231 = vmatpush1.msra.mxu0 %v5197
        %5232 = vmatprep.subr.mxu0 0.0
        %5233 = vmatpush1.msra.mxu0 %v5198
        %5234 = vmatprep.subr.mxu0 0.0
        %5235 = vmatpush1.msra.mxu0 %v5199
        %5236 = vmatprep.subr.mxu0 0.0
        %5237 = vmatpush1.msra.mxu0 %v5200
        %5238 = vmatprep.subr.mxu0 0.0
        %5239 = vmatpush1.msra.mxu0 %v5201
        %5240 = vmatprep.subr.mxu0 0.0
        %5241 = vmatpush1.msra.mxu0 %v5202
        %5242 = vmatprep.subr.mxu0 0.0
        %5243 = vmatpush1.msra.mxu0 %v5203
        %5244 = vmatprep.subr.mxu0 0.0
        %5245 = vmatpush1.msra.mxu0 %v5204
        %5246 = vmatprep.subr.mxu0 0.0
        %5247 = vmatpush1.msra.mxu0 %v5205
        %5248 = vmatprep.subr.mxu0 0.0
        %5249 = vmatpush1.msra.mxu0 %v5206
        %5250 = vmatprep.subr.mxu0 0.0
        %5251 = vmatpush1.msra.mxu0 %v5207
        %5252 = vmatprep.subr.mxu0 0.0
        %5253 = vmatpush1.msra.mxu0 %v5208
        %5254 = vmatprep.subr.mxu0 0.0
        %5255 = vmatpush1.msra.mxu0 %v5209
        %5256 = vmatprep.subr.mxu0 0.0
        %5257 = vmatpush1.msra.mxu0 %v5210
        %5258 = vmatprep.subr.mxu0 0.0
        %5259 = vmatpush1.msra.mxu0 %v5211
        %5260 = vmatprep.subr.mxu0 0.0
        %5261 = vmatpush1.msra.mxu0 %v5212
        %5262 = vmatprep.subr.mxu0 0.0
        %5263 = vmatpush1.msra.mxu0 %v5213
        %5264 = vmatprep.subr.mxu0 0.0
        %5265 = vmatpush1.msra.mxu0 %v5214
        %5266 = vmatprep.subr.mxu0 0.0
        %5267 = vmatpush1.msra.mxu0 %v5215
        %5268 = vmatprep.subr.mxu0 0.0
        %5269 = vmatpush1.msra.mxu0 %v5216
        %5270 = vmatprep.subr.mxu0 0.0
        %5271 = vmatpush1.msra.mxu0 %v5217
        %5272 = vmatprep.subr.mxu0 0.0
        %5273 = vmatpush1.msra.mxu0 %v5218
        %5274 = vmatprep.subr.mxu0 0.0
        %5275 = vmatpush1.msra.mxu0 %v5219
        %5276 = vmatprep.subr.mxu0 0.0
        %5277 = vmatpush1.msra.mxu0 %v5220
        %5278 = vmatprep.subr.mxu0 0.0
        %5279 = vmatpush1.msra.mxu0 %v5221
        %5280 = vmatprep.subr.mxu0 0.0
        %5281 = vmatpush1.msra.mxu0 %v5222
        %5282 = vmatprep.subr.mxu0 0.0
        %5283 = vmatpush1.msra.mxu0 %v5223
        %5284 = vmatprep.subr.mxu0 0.0
        %5285 = vmatpush1.msra.mxu0 %v5224
        %5286 = vmatprep.subr.mxu0 0.0
        %5287 = vmatpush1.msra.mxu0 %v5225
        %5288 = vmatprep.subr.mxu0 0.0
        %5289 = vmatpush1.msra.mxu0 %v5226
        %5290 = vmatprep.subr.mxu0 0.0
        %5291 = vmatpush1.msra.mxu0 %v5227
        %5292 = vmatprep.subr.mxu0 0.0
        %5293 = vmatpush1.msra.mxu0 %v5228
        %5294 = vmatprep.mubr.f32.mxu0 %v622
        %5295 = vmatmul.mubr.f32.gmra.mrb[0].mxu0 %v621
        %v5296 = vpop.f32.mrb[0].mxu0
        %v5297 = vadd.f32 0.0, %v5296
        %v5298 = vpop.f32.mrb[0].mxu0
        %5299 = vmatprep.mubr.f32.mxu0 %v624
        %5300 = vmatmul.mubr.f32.gmra.mrb[0].mxu0 %v623
        %v5301 = vpop.f32.mrb[0].mxu0
        %v5302 = vadd.f32 0.0, %v5301
        %v5303 = vpop.f32.mrb[0].mxu0
        %5304 = vmatprep.mubr.f32.mxu0 %v626
        %5305 = vmatmul.mubr.f32.gmra.mrb[0].mxu0 %v625
        %v5306 = vpop.f32.mrb[0].mxu0
        %v5307 = vadd.f32 0.0, %v5306
        %v5308 = vpop.f32.mrb[0].mxu0
        %5309 = vmatprep.mubr.f32.mxu0 %v628
        %5310 = vmatmul.mubr.f32.gmra.mrb[0].mxu0 %v627
        %v5311 = vpop.f32.mrb[0].mxu0
        %v5312 = vadd.f32 0.0, %v5311
        %v5313 = vpop.f32.mrb[0].mxu0
        %5314 = vmatprep.mubr.f32.mxu0 %v630
        %5315 = vmatmul.mubr.f32.gmra.mrb[0].mxu0 %v629
        %v5316 = vpop.f32.mrb[0].mxu0
        %v5317 = vadd.f32 0.0, %v5316
        %v5318 = vpop.f32.mrb[0].mxu0
        %5319 = vmatprep.mubr.f32.mxu0 %v632
        %5320 = vmatmul.mubr.f32.gmra.mrb[0].mxu0 %v631
        %v5321 = vpop.f32.mrb[0].mxu0
        %v5322 = vadd.f32 0.0, %v5321
        %v5323 = vpop.f32.mrb[0].mxu0
        %5324 = vmatprep.mubr.f32.mxu0 %v634
        %5325 = vmatmul.mubr.f32.gmra.mrb[0].mxu0 %v633
        %v5326 = vpop.f32.mrb[0].mxu0
        %v5327 = vadd.f32 0.0, %v5326
        %v5328 = vpop.f32.mrb[0].mxu0
        %5329 = vmatprep.mubr.f32.mxu0 %v636
        %5330 = vmatmul.mubr.f32.gmra.mrb[0].mxu0 %v635
        %v5331 = vpop.f32.mrb[0].mxu0
        %v5332 = vadd.f32 0.0, %v5331
        %v5333 = vpop.f32.mrb[0].mxu0
        %5334 = vmatprep.mubr.f32.mxu0 %v638
        %5335 = vmatmul.mubr.f32.gmra.mrb[0].mxu0 %v637
        %v5336 = vpop.f32.mrb[0].mxu0
        %v5337 = vadd.f32 0.0, %v5336
        %v5338 = vpop.f32.mrb[0].mxu0
        %5339 = vmatprep.mubr.f32.mxu0 %v640
        %5340 = vmatmul.mubr.f32.gmra.mrb[0].mxu0 %v639
        %v5341 = vpop.f32.mrb[0].mxu0
        %v5342 = vadd.f32 0.0, %v5341
        %v5343 = vpop.f32.mrb[0].mxu0
        %5344 = vmatprep.mubr.f32.mxu0 %v642
        %5345 = vmatmul.mubr.f32.gmra.mrb[0].mxu0 %v641
        %v5346 = vpop.f32.mrb[0].mxu0
        %v5347 = vadd.f32 0.0, %v5346
        %v5348 = vpop.f32.mrb[0].mxu0
        %5349 = vmatprep.mubr.f32.mxu0 %v644
        %5350 = vmatmul.mubr.f32.gmra.mrb[0].mxu0 %v643
        %v5351 = vpop.f32.mrb[0].mxu0
        %v5352 = vadd.f32 0.0, %v5351
        %v5353 = vpop.f32.mrb[0].mxu0
        %5354 = vmatprep.mubr.f32.mxu0 %v646
        %5355 = vmatmul.mubr.f32.gmra.mrb[0].mxu0 %v645
        %v5356 = vpop.f32.mrb[0].mxu0
        %v5357 = vadd.f32 0.0, %v5356
        %v5358 = vpop.f32.mrb[0].mxu0
        %5359 = vmatprep.mubr.f32.mxu0 %v648
        %5360 = vmatmul.mubr.f32.gmra.mrb[0].mxu0 %v647
        %v5361 = vpop.f32.mrb[0].mxu0
        %v5362 = vadd.f32 0.0, %v5361
        %v5363 = vpop.f32.mrb[0].mxu0
        %5364 = vmatprep.mubr.f32.mxu0 %v650
        %5365 = vmatmul.mubr.f32.gmra.mrb[0].mxu0 %v649
        %v5366 = vpop.f32.mrb[0].mxu0
        %v5367 = vadd.f32 0.0, %v5366
        %v5368 = vpop.f32.mrb[0].mxu0
        %5369 = vmatprep.mubr.f32.mxu0 %v652
        %5370 = vmatmul.mubr.f32.gmra.mrb[0].mxu0 %v651
        %v5371 = vpop.f32.mrb[0].mxu0
        %v5372 = vadd.f32 0.0, %v5371
        %v5373 = vpop.f32.mrb[0].mxu0
        %5374 = vmatprep.mubr.f32.mxu0 %v654
        %5375 = vmatmul.mubr.f32.gmra.mrb[0].mxu0 %v653
        %v5376 = vpop.f32.mrb[0].mxu0
        %v5377 = vadd.f32 0.0, %v5376
        %v5378 = vpop.f32.mrb[0].mxu0
        %5379 = vmatprep.mubr.f32.mxu0 %v656
        %5380 = vmatmul.mubr.f32.gmra.mrb[0].mxu0 %v655
        %v5381 = vpop.f32.mrb[0].mxu0
        %v5382 = vadd.f32 0.0, %v5381
        %v5383 = vpop.f32.mrb[0].mxu0
        %5384 = vmatprep.mubr.f32.mxu0 %v658
        %5385 = vmatmul.mubr.f32.gmra.mrb[0].mxu0 %v657
        %v5386 = vpop.f32.mrb[0].mxu0
        %v5387 = vadd.f32 0.0, %v5386
        %v5388 = vpop.f32.mrb[0].mxu0
        %5389 = vmatprep.mubr.f32.mxu0 %v660
        %5390 = vmatmul.mubr.f32.gmra.mrb[0].mxu0 %v659
        %v5391 = vpop.f32.mrb[0].mxu0
        %v5392 = vadd.f32 0.0, %v5391
        %v5393 = vpop.f32.mrb[0].mxu0
        %5394 = vmatprep.mubr.f32.mxu0 %v662
        %5395 = vmatmul.mubr.f32.gmra.mrb[0].mxu0 %v661
        %v5396 = vpop.f32.mrb[0].mxu0
        %v5397 = vadd.f32 0.0, %v5396
        %v5398 = vpop.f32.mrb[0].mxu0
        %5399 = vmatprep.mubr.f32.mxu0 %v664
        %5400 = vmatmul.mubr.f32.gmra.mrb[0].mxu0 %v663
        %v5401 = vpop.f32.mrb[0].mxu0
        %v5402 = vadd.f32 0.0, %v5401
        %v5403 = vpop.f32.mrb[0].mxu0
        %5404 = vmatprep.mubr.f32.mxu0 %v666
        %5405 = vmatmul.mubr.f32.gmra.mrb[0].mxu0 %v665
        %v5406 = vpop.f32.mrb[0].mxu0
        %v5407 = vadd.f32 0.0, %v5406
        %v5408 = vpop.f32.mrb[0].mxu0
        %5409 = vmatprep.mubr.f32.mxu0 %v668
        %5410 = vmatmul.mubr.f32.gmra.mrb[0].mxu0 %v667
        %v5411 = vpop.f32.mrb[0].mxu0
        %v5412 = vadd.f32 0.0, %v5411
        %v5413 = vpop.f32.mrb[0].mxu0
        %5414 = vmatprep.mubr.f32.mxu0 %v670
        %5415 = vmatmul.mubr.f32.gmra.mrb[0].mxu0 %v669
        %v5416 = vpop.f32.mrb[0].mxu0
        %v5417 = vadd.f32 0.0, %v5416
        %v5418 = vpop.f32.mrb[0].mxu0
        %5419 = vmatprep.mubr.f32.mxu0 %v672
        %5420 = vmatmul.mubr.f32.gmra.mrb[0].mxu0 %v671
        %v5421 = vpop.f32.mrb[0].mxu0
        %v5422 = vadd.f32 0.0, %v5421
        %v5423 = vpop.f32.mrb[0].mxu0
        %5424 = vmatprep.mubr.f32.mxu0 %v674
        %5425 = vmatmul.mubr.f32.gmra.mrb[0].mxu0 %v673
        %v5426 = vpop.f32.mrb[0].mxu0
        %v5427 = vadd.f32 0.0, %v5426
        %v5428 = vpop.f32.mrb[0].mxu0
        %5429 = vmatprep.mubr.f32.mxu0 %v676
        %5430 = vmatmul.mubr.f32.gmra.mrb[0].mxu0 %v675
        %v5431 = vpop.f32.mrb[0].mxu0
        %v5432 = vadd.f32 0.0, %v5431
        %v5433 = vpop.f32.mrb[0].mxu0
        %5434 = vmatprep.mubr.f32.mxu0 %v678
        %5435 = vmatmul.mubr.f32.gmra.mrb[0].mxu0 %v677
        %v5436 = vpop.f32.mrb[0].mxu0
        %v5437 = vadd.f32 0.0, %v5436
        %v5438 = vpop.f32.mrb[0].mxu0
        %5439 = vmatprep.mubr.f32.mxu0 %v680
        %5440 = vmatmul.mubr.f32.gmra.mrb[0].mxu0 %v679
        %v5441 = vpop.f32.mrb[0].mxu0
        %v5442 = vadd.f32 0.0, %v5441
        %v5443 = vpop.f32.mrb[0].mxu0
        %5444 = vmatprep.mubr.f32.mxu0 %v682
        %5445 = vmatmul.mubr.f32.gmra.mrb[0].mxu0 %v681
        %v5446 = vpop.f32.mrb[0].mxu0
        %v5447 = vadd.f32 0.0, %v5446
        %v5448 = vpop.f32.mrb[0].mxu0
        %5449 = vmatprep.mubr.f32.mxu0 %v684
        %5450 = vmatmul.mubr.f32.gmra.mrb[0].mxu0 %v683
        %v5451 = vpop.f32.mrb[0].mxu0
        %v5452 = vadd.f32 0.0, %v5451
        %v5453 = vpop.f32.mrb[0].mxu0
        %5454 = vdwg.mxu0
        %v5455 = vpack.c.bf16 %v5198, %v5197
        %v5456 = vpack.c.bf16 %v5200, %v5199
        %v5457 = vpack.c.bf16 %v5202, %v5201
        %v5458 = vpack.c.bf16 %v5204, %v5203
        %v5459 = vpack.c.bf16 %v5206, %v5205
        %v5460 = vpack.c.bf16 %v5208, %v5207
        %v5461 = vpack.c.bf16 %v5210, %v5209
        %v5462 = vpack.c.bf16 %v5212, %v5211
        %v5463 = vpack.c.bf16 %v5214, %v5213
        %v5464 = vpack.c.bf16 %v5216, %v5215
        %v5465 = vpack.c.bf16 %v5218, %v5217
        %v5466 = vpack.c.bf16 %v5220, %v5219
        %v5467 = vpack.c.bf16 %v5222, %v5221
        %v5468 = vpack.c.bf16 %v5224, %v5223
        %v5469 = vpack.c.bf16 %v5226, %v5225
        %v5470 = vpack.c.bf16 %v5228, %v5227
        %v5471 = vld [vmem:[%s7] sm:$0xf]
        %v5472 = vld [vmem:[%s7 + $0x4] sm:$0xf]
        %v5473 = vld [vmem:[%s7 + $0x8] sm:$0xf]
        %v5474 = vld [vmem:[%s7 + $0xc] sm:$0xf]
        %v5475 = vld [vmem:[%s7 + $0x10] sm:$0xf]
        %v5476 = vld [vmem:[%s7 + $0x14] sm:$0xf]
        %v5477 = vld [vmem:[%s7 + $0x18] sm:$0xf]
        %v5478 = vld [vmem:[%s7 + $0x1c] sm:$0xf]
        %v5479 = vld [vmem:[%s7 + $0x20] sm:$0xf]
        %v5480 = vld [vmem:[%s7 + $0x24] sm:$0xf]
        %v5481 = vld [vmem:[%s7 + $0x28] sm:$0xf]
        %v5482 = vld [vmem:[%s7 + $0x2c] sm:$0xf]
        %v5483 = vld [vmem:[%s7 + $0x30] sm:$0xf]
        %v5484 = vld [vmem:[%s7 + $0x34] sm:$0xf]
        %v5485 = vld [vmem:[%s7 + $0x38] sm:$0xf]
        %v5486 = vld [vmem:[%s7 + $0x3c] sm:$0xf]
        %v5487 = vpack.c.bf16 %v5302, %v5297
        %v5488 = vpack.c.bf16 %v5312, %v5307
        %v5489 = vpack.c.bf16 %v5322, %v5317
        %v5490 = vpack.c.bf16 %v5332, %v5327
        %v5491 = vpack.c.bf16 %v5342, %v5337
        %v5492 = vpack.c.bf16 %v5352, %v5347
        %v5493 = vpack.c.bf16 %v5362, %v5357
        %v5494 = vpack.c.bf16 %v5372, %v5367
        %v5495 = vpack.c.bf16 %v5382, %v5377
        %v5496 = vpack.c.bf16 %v5392, %v5387
        %v5497 = vpack.c.bf16 %v5402, %v5397
        %v5498 = vpack.c.bf16 %v5412, %v5407
        %v5499 = vpack.c.bf16 %v5422, %v5417
        %v5500 = vpack.c.bf16 %v5432, %v5427
        %v5501 = vpack.c.bf16 %v5442, %v5437
        %v5502 = vpack.c.bf16 %v5452, %v5447
        %v5503 = vld [vmem:[%s7 + $0x40] sm:$0xf]
        %v5504 = vld [vmem:[%s7 + $0x44] sm:$0xf]
        %v5505 = vld [vmem:[%s7 + $0x48] sm:$0xf]
        %v5506 = vld [vmem:[%s7 + $0x4c] sm:$0xf]
        %v5507 = vld [vmem:[%s7 + $0x50] sm:$0xf]
        %v5508 = vld [vmem:[%s7 + $0x54] sm:$0xf]
        %v5509 = vld [vmem:[%s7 + $0x58] sm:$0xf]
        %v5510 = vld [vmem:[%s7 + $0x5c] sm:$0xf]
        %v5511 = vld [vmem:[%s7 + $0x60] sm:$0xf]
        %v5512 = vld [vmem:[%s7 + $0x64] sm:$0xf]
        %v5513 = vld [vmem:[%s7 + $0x68] sm:$0xf]
        %v5514 = vld [vmem:[%s7 + $0x6c] sm:$0xf]
        %v5515 = vld [vmem:[%s7 + $0x70] sm:$0xf]
        %v5516 = vld [vmem:[%s7 + $0x74] sm:$0xf]
        %v5517 = vld [vmem:[%s7 + $0x78] sm:$0xf]
        %v5518 = vld [vmem:[%s7 + $0x7c] sm:$0xf]
        %v5535 = vunpack.c.l.b16 %v5503
        %v5536 = vunpack.c.l.b16 %v5504
        %v5537 = vunpack.c.l.b16 %v5505
        %v5538 = vunpack.c.l.b16 %v5506
        %v5539 = vunpack.c.l.b16 %v5507
        %v5540 = vunpack.c.l.b16 %v5508
        %v5541 = vunpack.c.l.b16 %v5509
        %v5542 = vunpack.c.l.b16 %v5510
        %v5543 = vunpack.c.l.b16 %v5511
        %v5544 = vunpack.c.l.b16 %v5512
        %v5545 = vunpack.c.l.b16 %v5513
        %v5546 = vunpack.c.l.b16 %v5514
        %v5547 = vunpack.c.l.b16 %v5515
        %v5548 = vunpack.c.l.b16 %v5516
        %v5549 = vunpack.c.l.b16 %v5517
        %v5550 = vunpack.c.l.b16 %v5518
        %v5551 = vpack.c.b16 %v5536, %v5535
        %v5552 = vpack.c.b16 %v5538, %v5537
        %v5553 = vpack.c.b16 %v5540, %v5539
        %v5554 = vpack.c.b16 %v5542, %v5541
        %v5555 = vpack.c.b16 %v5544, %v5543
        %v5556 = vpack.c.b16 %v5546, %v5545
        %v5557 = vpack.c.b16 %v5548, %v5547
        %v5558 = vpack.c.b16 %v5550, %v5549
        %5567 = vmatprep.subr.bf16.mxu0 0
        %5568 = vmatpush1.bf16.msra.mxu0 %v5551
        %5569 = vmatprep.subr.bf16.mxu0 0
        %5570 = vmatpush1.bf16.msra.mxu0 %v5552
        %5571 = vmatprep.subr.bf16.mxu0 0
        %5572 = vmatpush1.bf16.msra.mxu0 %v5553
        %5573 = vmatprep.subr.bf16.mxu0 0
        %5574 = vmatpush1.bf16.msra.mxu0 %v5554
        %5575 = vmatprep.subr.bf16.mxu0 0
        %5576 = vmatpush1.bf16.msra.mxu0 %v5555
        %5577 = vmatprep.subr.bf16.mxu0 0
        %5578 = vmatpush1.bf16.msra.mxu0 %v5556
        %5579 = vmatprep.subr.bf16.mxu0 0
        %5580 = vmatpush1.bf16.msra.mxu0 %v5557
        %5581 = vmatprep.subr.bf16.mxu0 0
        %5582 = vmatpush1.bf16.msra.mxu0 %v5558
        %5583 = vmatprep.subr.bf16.mxu0 0
        %5584 = vmatpush1.bf16.msra.mxu0 0
        %5585 = vmatprep.subr.bf16.mxu0 0
        %5586 = vmatpush1.bf16.msra.mxu0 0
        %5587 = vmatprep.subr.bf16.mxu0 0
        %5588 = vmatpush1.bf16.msra.mxu0 0
        %5589 = vmatprep.subr.bf16.mxu0 0
        %5590 = vmatpush1.bf16.msra.mxu0 0
        %5591 = vmatprep.subr.bf16.mxu0 0
        %5592 = vmatpush1.bf16.msra.mxu0 0
        %5593 = vmatprep.subr.bf16.mxu0 0
        %5594 = vmatpush1.bf16.msra.mxu0 0
        %5595 = vmatprep.subr.bf16.mxu0 0
        %5596 = vmatpush1.bf16.msra.mxu0 0
        %5597 = vmatprep.subr.bf16.mxu0 0
        %5598 = vmatpush1.bf16.msra.mxu0 0
        %5599 = vmatprep.mubr.bf16.mxu0 0
        %5600 = vmatmul.mubr.bf16.gmra.mrb[0].mxu0 %v5487
        %v5601 = vpop.f32.mrb[0].mxu0
        %v5602 = vadd.f32 0.0, %v5601
        %v5603 = vpop.f32.mrb[0].mxu0
        %v5604 = vpop.f32.mrb[0].mxu0
        %v5605 = vadd.f32 0.0, %v5604
        %v5606 = vpop.f32.mrb[0].mxu0
        %5607 = vmatprep.mubr.bf16.mxu0 0
        %5608 = vmatmul.mubr.bf16.gmra.mrb[0].mxu0 %v5488
        %v5609 = vpop.f32.mrb[0].mxu0
        %v5610 = vadd.f32 0.0, %v5609
        %v5611 = vpop.f32.mrb[0].mxu0
        %v5612 = vpop.f32.mrb[0].mxu0
        %v5613 = vadd.f32 0.0, %v5612
        %v5614 = vpop.f32.mrb[0].mxu0
        %5615 = vmatprep.mubr.bf16.mxu0 0
        %5616 = vmatmul.mubr.bf16.gmra.mrb[0].mxu0 %v5489
        %v5617 = vpop.f32.mrb[0].mxu0
        %v5618 = vadd.f32 0.0, %v5617
        %v5619 = vpop.f32.mrb[0].mxu0
        %v5620 = vpop.f32.mrb[0].mxu0
        %v5621 = vadd.f32 0.0, %v5620
        %v5622 = vpop.f32.mrb[0].mxu0
        %5623 = vmatprep.mubr.bf16.mxu0 0
        %5624 = vmatmul.mubr.bf16.gmra.mrb[0].mxu0 %v5490
        %v5625 = vpop.f32.mrb[0].mxu0
        %v5626 = vadd.f32 0.0, %v5625
        %v5627 = vpop.f32.mrb[0].mxu0
        %v5628 = vpop.f32.mrb[0].mxu0
        %v5629 = vadd.f32 0.0, %v5628
        %v5630 = vpop.f32.mrb[0].mxu0
        %5631 = vmatprep.mubr.bf16.mxu0 0
        %5632 = vmatmul.mubr.bf16.gmra.mrb[0].mxu0 %v5491
        %v5633 = vpop.f32.mrb[0].mxu0
        %v5634 = vadd.f32 0.0, %v5633
        %v5635 = vpop.f32.mrb[0].mxu0
        %v5636 = vpop.f32.mrb[0].mxu0
        %v5637 = vadd.f32 0.0, %v5636
        %v5638 = vpop.f32.mrb[0].mxu0
        %5639 = vmatprep.mubr.bf16.mxu0 0
        %5640 = vmatmul.mubr.bf16.gmra.mrb[0].mxu0 %v5492
        %v5641 = vpop.f32.mrb[0].mxu0
        %v5642 = vadd.f32 0.0, %v5641
        %v5643 = vpop.f32.mrb[0].mxu0
        %v5644 = vpop.f32.mrb[0].mxu0
        %v5645 = vadd.f32 0.0, %v5644
        %v5646 = vpop.f32.mrb[0].mxu0
        %5647 = vmatprep.mubr.bf16.mxu0 0
        %5648 = vmatmul.mubr.bf16.gmra.mrb[0].mxu0 %v5493
        %v5649 = vpop.f32.mrb[0].mxu0
        %v5650 = vadd.f32 0.0, %v5649
        %v5651 = vpop.f32.mrb[0].mxu0
        %v5652 = vpop.f32.mrb[0].mxu0
        %v5653 = vadd.f32 0.0, %v5652
        %v5654 = vpop.f32.mrb[0].mxu0
        %5655 = vmatprep.mubr.bf16.mxu0 0
        %5656 = vmatmul.mubr.bf16.gmra.mrb[0].mxu0 %v5494
        %v5657 = vpop.f32.mrb[0].mxu0
        %v5658 = vadd.f32 0.0, %v5657
        %v5659 = vpop.f32.mrb[0].mxu0
        %v5660 = vpop.f32.mrb[0].mxu0
        %v5661 = vadd.f32 0.0, %v5660
        %v5662 = vpop.f32.mrb[0].mxu0
        %5663 = vmatprep.mubr.bf16.mxu0 0
        %5664 = vmatmul.mubr.bf16.gmra.mrb[0].mxu0 %v5495
        %v5665 = vpop.f32.mrb[0].mxu0
        %v5666 = vadd.f32 0.0, %v5665
        %v5667 = vpop.f32.mrb[0].mxu0
        %v5668 = vpop.f32.mrb[0].mxu0
        %v5669 = vadd.f32 0.0, %v5668
        %v5670 = vpop.f32.mrb[0].mxu0
        %5671 = vmatprep.mubr.bf16.mxu0 0
        %5672 = vmatmul.mubr.bf16.gmra.mrb[0].mxu0 %v5496
        %v5673 = vpop.f32.mrb[0].mxu0
        %v5674 = vadd.f32 0.0, %v5673
        %v5675 = vpop.f32.mrb[0].mxu0
        %v5676 = vpop.f32.mrb[0].mxu0
        %v5677 = vadd.f32 0.0, %v5676
        %v5678 = vpop.f32.mrb[0].mxu0
        %5679 = vmatprep.mubr.bf16.mxu0 0
        %5680 = vmatmul.mubr.bf16.gmra.mrb[0].mxu0 %v5497
        %v5681 = vpop.f32.mrb[0].mxu0
        %v5682 = vadd.f32 0.0, %v5681
        %v5683 = vpop.f32.mrb[0].mxu0
        %v5684 = vpop.f32.mrb[0].mxu0
        %v5685 = vadd.f32 0.0, %v5684
        %v5686 = vpop.f32.mrb[0].mxu0
        %5687 = vmatprep.mubr.bf16.mxu0 0
        %5688 = vmatmul.mubr.bf16.gmra.mrb[0].mxu0 %v5498
        %v5689 = vpop.f32.mrb[0].mxu0
        %v5690 = vadd.f32 0.0, %v5689
        %v5691 = vpop.f32.mrb[0].mxu0
        %v5692 = vpop.f32.mrb[0].mxu0
        %v5693 = vadd.f32 0.0, %v5692
        %v5694 = vpop.f32.mrb[0].mxu0
        %5695 = vmatprep.mubr.bf16.mxu0 0
        %5696 = vmatmul.mubr.bf16.gmra.mrb[0].mxu0 %v5499
        %v5697 = vpop.f32.mrb[0].mxu0
        %v5698 = vadd.f32 0.0, %v5697
        %v5699 = vpop.f32.mrb[0].mxu0
        %v5700 = vpop.f32.mrb[0].mxu0
        %v5701 = vadd.f32 0.0, %v5700
        %v5702 = vpop.f32.mrb[0].mxu0
        %5703 = vmatprep.mubr.bf16.mxu0 0
        %5704 = vmatmul.mubr.bf16.gmra.mrb[0].mxu0 %v5500
        %v5705 = vpop.f32.mrb[0].mxu0
        %v5706 = vadd.f32 0.0, %v5705
        %v5707 = vpop.f32.mrb[0].mxu0
        %v5708 = vpop.f32.mrb[0].mxu0
        %v5709 = vadd.f32 0.0, %v5708
        %v5710 = vpop.f32.mrb[0].mxu0
        %5711 = vmatprep.mubr.bf16.mxu0 0
        %5712 = vmatmul.mubr.bf16.gmra.mrb[0].mxu0 %v5501
        %v5713 = vpop.f32.mrb[0].mxu0
        %v5714 = vadd.f32 0.0, %v5713
        %v5715 = vpop.f32.mrb[0].mxu0
        %v5716 = vpop.f32.mrb[0].mxu0
        %v5717 = vadd.f32 0.0, %v5716
        %v5718 = vpop.f32.mrb[0].mxu0
        %5719 = vmatprep.mubr.bf16.mxu0 0
        %5720 = vmatmul.mubr.bf16.gmra.mrb[0].mxu0 %v5502
        %v5721 = vpop.f32.mrb[0].mxu0
        %v5722 = vadd.f32 0.0, %v5721
        %v5723 = vpop.f32.mrb[0].mxu0
        %v5724 = vpop.f32.mrb[0].mxu0
        %v5725 = vadd.f32 0.0, %v5724
        %v5726 = vpop.f32.mrb[0].mxu0
        %5727 = vdwg.mxu0
        %v5744 = vunpack.c.l.b16 %v5471
        %v5745 = vunpack.c.l.b16 %v5472
        %v5746 = vunpack.c.l.b16 %v5473
        %v5747 = vunpack.c.l.b16 %v5474
        %v5748 = vunpack.c.l.b16 %v5475
        %v5749 = vunpack.c.l.b16 %v5476
        %v5750 = vunpack.c.l.b16 %v5477
        %v5751 = vunpack.c.l.b16 %v5478
        %v5752 = vunpack.c.l.b16 %v5479
        %v5753 = vunpack.c.l.b16 %v5480
        %v5754 = vunpack.c.l.b16 %v5481
        %v5755 = vunpack.c.l.b16 %v5482
        %v5756 = vunpack.c.l.b16 %v5483
        %v5757 = vunpack.c.l.b16 %v5484
        %v5758 = vunpack.c.l.b16 %v5485
        %v5759 = vunpack.c.l.b16 %v5486
        %v5760 = vpack.c.b16 %v5745, %v5744
        %v5761 = vpack.c.b16 %v5747, %v5746
        %v5762 = vpack.c.b16 %v5749, %v5748
        %v5763 = vpack.c.b16 %v5751, %v5750
        %v5764 = vpack.c.b16 %v5753, %v5752
        %v5765 = vpack.c.b16 %v5755, %v5754
        %v5766 = vpack.c.b16 %v5757, %v5756
        %v5767 = vpack.c.b16 %v5759, %v5758
        %5776 = vmatprep.subr.bf16.mxu0 0
        %5777 = vmatpush1.bf16.msra.mxu0 %v5760
        %5778 = vmatprep.subr.bf16.mxu0 0
        %5779 = vmatpush1.bf16.msra.mxu0 %v5761
        %5780 = vmatprep.subr.bf16.mxu0 0
        %5781 = vmatpush1.bf16.msra.mxu0 %v5762
        %5782 = vmatprep.subr.bf16.mxu0 0
        %5783 = vmatpush1.bf16.msra.mxu0 %v5763
        %5784 = vmatprep.subr.bf16.mxu0 0
        %5785 = vmatpush1.bf16.msra.mxu0 %v5764
        %5786 = vmatprep.subr.bf16.mxu0 0
        %5787 = vmatpush1.bf16.msra.mxu0 %v5765
        %5788 = vmatprep.subr.bf16.mxu0 0
        %5789 = vmatpush1.bf16.msra.mxu0 %v5766
        %5790 = vmatprep.subr.bf16.mxu0 0
        %5791 = vmatpush1.bf16.msra.mxu0 %v5767
        %5792 = vmatprep.subr.bf16.mxu0 0
        %5793 = vmatpush1.bf16.msra.mxu0 0
        %5794 = vmatprep.subr.bf16.mxu0 0
        %5795 = vmatpush1.bf16.msra.mxu0 0
        %5796 = vmatprep.subr.bf16.mxu0 0
        %5797 = vmatpush1.bf16.msra.mxu0 0
        %5798 = vmatprep.subr.bf16.mxu0 0
        %5799 = vmatpush1.bf16.msra.mxu0 0
        %5800 = vmatprep.subr.bf16.mxu0 0
        %5801 = vmatpush1.bf16.msra.mxu0 0
        %5802 = vmatprep.subr.bf16.mxu0 0
        %5803 = vmatpush1.bf16.msra.mxu0 0
        %5804 = vmatprep.subr.bf16.mxu0 0
        %5805 = vmatpush1.bf16.msra.mxu0 0
        %5806 = vmatprep.subr.bf16.mxu0 0
        %5807 = vmatpush1.bf16.msra.mxu0 0
        %5808 = vmatprep.mubr.bf16.mxu0 0
        %5809 = vmatmul.mubr.bf16.gmra.mrb[0].mxu0 %v5455
        %v5810 = vpop.f32.mrb[0].mxu0
        %v5811 = vadd.f32 %v5602, %v5810
        %v5812 = vpop.f32.mrb[0].mxu0
        %v5813 = vpop.f32.mrb[0].mxu0
        %v5814 = vadd.f32 %v5605, %v5813
        %v5815 = vpop.f32.mrb[0].mxu0
        %5816 = vmatprep.mubr.bf16.mxu0 0
        %5817 = vmatmul.mubr.bf16.gmra.mrb[0].mxu0 %v5456
        %v5818 = vpop.f32.mrb[0].mxu0
        %v5819 = vadd.f32 %v5610, %v5818
        %v5820 = vpop.f32.mrb[0].mxu0
        %v5821 = vpop.f32.mrb[0].mxu0
        %v5822 = vadd.f32 %v5613, %v5821
        %v5823 = vpop.f32.mrb[0].mxu0
        %5824 = vmatprep.mubr.bf16.mxu0 0
        %5825 = vmatmul.mubr.bf16.gmra.mrb[0].mxu0 %v5457
        %v5826 = vpop.f32.mrb[0].mxu0
        %v5827 = vadd.f32 %v5618, %v5826
        %v5828 = vpop.f32.mrb[0].mxu0
        %v5829 = vpop.f32.mrb[0].mxu0
        %v5830 = vadd.f32 %v5621, %v5829
        %v5831 = vpop.f32.mrb[0].mxu0
        %5832 = vmatprep.mubr.bf16.mxu0 0
        %5833 = vmatmul.mubr.bf16.gmra.mrb[0].mxu0 %v5458
        %v5834 = vpop.f32.mrb[0].mxu0
        %v5835 = vadd.f32 %v5626, %v5834
        %v5836 = vpop.f32.mrb[0].mxu0
        %v5837 = vpop.f32.mrb[0].mxu0
        %v5838 = vadd.f32 %v5629, %v5837
        %v5839 = vpop.f32.mrb[0].mxu0
        %5840 = vmatprep.mubr.bf16.mxu0 0
        %5841 = vmatmul.mubr.bf16.gmra.mrb[0].mxu0 %v5459
        %v5842 = vpop.f32.mrb[0].mxu0
        %v5843 = vadd.f32 %v5634, %v5842
        %v5844 = vpop.f32.mrb[0].mxu0
        %v5845 = vpop.f32.mrb[0].mxu0
        %v5846 = vadd.f32 %v5637, %v5845
        %v5847 = vpop.f32.mrb[0].mxu0
        %5848 = vmatprep.mubr.bf16.mxu0 0
        %5849 = vmatmul.mubr.bf16.gmra.mrb[0].mxu0 %v5460
        %v5850 = vpop.f32.mrb[0].mxu0
        %v5851 = vadd.f32 %v5642, %v5850
        %v5852 = vpop.f32.mrb[0].mxu0
        %v5853 = vpop.f32.mrb[0].mxu0
        %v5854 = vadd.f32 %v5645, %v5853
        %v5855 = vpop.f32.mrb[0].mxu0
        %5856 = vmatprep.mubr.bf16.mxu0 0
        %5857 = vmatmul.mubr.bf16.gmra.mrb[0].mxu0 %v5461
        %v5858 = vpop.f32.mrb[0].mxu0
        %v5859 = vadd.f32 %v5650, %v5858
        %v5860 = vpop.f32.mrb[0].mxu0
        %v5861 = vpop.f32.mrb[0].mxu0
        %v5862 = vadd.f32 %v5653, %v5861
        %v5863 = vpop.f32.mrb[0].mxu0
        %5864 = vmatprep.mubr.bf16.mxu0 0
        %5865 = vmatmul.mubr.bf16.gmra.mrb[0].mxu0 %v5462
        %v5866 = vpop.f32.mrb[0].mxu0
        %v5867 = vadd.f32 %v5658, %v5866
        %v5868 = vpop.f32.mrb[0].mxu0
        %v5869 = vpop.f32.mrb[0].mxu0
        %v5870 = vadd.f32 %v5661, %v5869
        %v5871 = vpop.f32.mrb[0].mxu0
        %5872 = vmatprep.mubr.bf16.mxu0 0
        %5873 = vmatmul.mubr.bf16.gmra.mrb[0].mxu0 %v5463
        %v5874 = vpop.f32.mrb[0].mxu0
        %v5875 = vadd.f32 %v5666, %v5874
        %v5876 = vpop.f32.mrb[0].mxu0
        %v5877 = vpop.f32.mrb[0].mxu0
        %v5878 = vadd.f32 %v5669, %v5877
        %v5879 = vpop.f32.mrb[0].mxu0
        %5880 = vmatprep.mubr.bf16.mxu0 0
        %5881 = vmatmul.mubr.bf16.gmra.mrb[0].mxu0 %v5464
        %v5882 = vpop.f32.mrb[0].mxu0
        %v5883 = vadd.f32 %v5674, %v5882
        %v5884 = vpop.f32.mrb[0].mxu0
        %v5885 = vpop.f32.mrb[0].mxu0
        %v5886 = vadd.f32 %v5677, %v5885
        %v5887 = vpop.f32.mrb[0].mxu0
        %5888 = vmatprep.mubr.bf16.mxu0 0
        %5889 = vmatmul.mubr.bf16.gmra.mrb[0].mxu0 %v5465
        %v5890 = vpop.f32.mrb[0].mxu0
        %v5891 = vadd.f32 %v5682, %v5890
        %v5892 = vpop.f32.mrb[0].mxu0
        %v5893 = vpop.f32.mrb[0].mxu0
        %v5894 = vadd.f32 %v5685, %v5893
        %v5895 = vpop.f32.mrb[0].mxu0
        %5896 = vmatprep.mubr.bf16.mxu0 0
        %5897 = vmatmul.mubr.bf16.gmra.mrb[0].mxu0 %v5466
        %v5898 = vpop.f32.mrb[0].mxu0
        %v5899 = vadd.f32 %v5690, %v5898
        %v5900 = vpop.f32.mrb[0].mxu0
        %v5901 = vpop.f32.mrb[0].mxu0
        %v5902 = vadd.f32 %v5693, %v5901
        %v5903 = vpop.f32.mrb[0].mxu0
        %5904 = vmatprep.mubr.bf16.mxu0 0
        %5905 = vmatmul.mubr.bf16.gmra.mrb[0].mxu0 %v5467
        %v5906 = vpop.f32.mrb[0].mxu0
        %v5907 = vadd.f32 %v5698, %v5906
        %v5908 = vpop.f32.mrb[0].mxu0
        %v5909 = vpop.f32.mrb[0].mxu0
        %v5910 = vadd.f32 %v5701, %v5909
        %v5911 = vpop.f32.mrb[0].mxu0
        %5912 = vmatprep.mubr.bf16.mxu0 0
        %5913 = vmatmul.mubr.bf16.gmra.mrb[0].mxu0 %v5468
        %v5914 = vpop.f32.mrb[0].mxu0
        %v5915 = vadd.f32 %v5706, %v5914
        %v5916 = vpop.f32.mrb[0].mxu0
        %v5917 = vpop.f32.mrb[0].mxu0
        %v5918 = vadd.f32 %v5709, %v5917
        %v5919 = vpop.f32.mrb[0].mxu0
        %5920 = vmatprep.mubr.bf16.mxu0 0
        %5921 = vmatmul.mubr.bf16.gmra.mrb[0].mxu0 %v5469
        %v5922 = vpop.f32.mrb[0].mxu0
        %v5923 = vadd.f32 %v5714, %v5922
        %v5924 = vpop.f32.mrb[0].mxu0
        %v5925 = vpop.f32.mrb[0].mxu0
        %v5926 = vadd.f32 %v5717, %v5925
        %v5927 = vpop.f32.mrb[0].mxu0
        %5928 = vmatprep.mubr.bf16.mxu0 0
        %5929 = vmatmul.mubr.bf16.gmra.mrb[0].mxu0 %v5470
        %v5930 = vpop.f32.mrb[0].mxu0
        %v5931 = vadd.f32 %v5722, %v5930
        %v5932 = vpop.f32.mrb[0].mxu0
        %v5933 = vpop.f32.mrb[0].mxu0
        %v5934 = vadd.f32 %v5725, %v5933
        %v5935 = vpop.f32.mrb[0].mxu0
        %5936 = vdwg.mxu0
        %v5937 = vld [vmem:[%s13] sm:$0x1]
        %v5939 = vlaneseq
        %v5940 = vshrl.u32 %v5939, 7
        %v5941 = vsub.s32 0, %v5940
        %v5942 = vrot.slane %v5937, %v5941
        %v5944 = vadd.f32 %v5811, %v5942
        %v5945 = vadd.f32 %v5814, %v5942
        %v5946 = vadd.f32 %v5819, %v5942
        %v5947 = vadd.f32 %v5822, %v5942
        %v5948 = vadd.f32 %v5827, %v5942
        %v5949 = vadd.f32 %v5830, %v5942
        %v5950 = vadd.f32 %v5835, %v5942
        %v5951 = vadd.f32 %v5838, %v5942
        %v5952 = vadd.f32 %v5843, %v5942
        %v5953 = vadd.f32 %v5846, %v5942
        %v5954 = vadd.f32 %v5851, %v5942
        %v5955 = vadd.f32 %v5854, %v5942
        %v5956 = vadd.f32 %v5859, %v5942
        %v5957 = vadd.f32 %v5862, %v5942
        %v5958 = vadd.f32 %v5867, %v5942
        %v5959 = vadd.f32 %v5870, %v5942
        %v5960 = vadd.f32 %v5875, %v5942
        %v5961 = vadd.f32 %v5878, %v5942
        %v5962 = vadd.f32 %v5883, %v5942
        %v5963 = vadd.f32 %v5886, %v5942
        %v5964 = vadd.f32 %v5891, %v5942
        %v5965 = vadd.f32 %v5894, %v5942
        %v5966 = vadd.f32 %v5899, %v5942
        %v5967 = vadd.f32 %v5902, %v5942
        %v5968 = vadd.f32 %v5907, %v5942
        %v5969 = vadd.f32 %v5910, %v5942
        %v5970 = vadd.f32 %v5915, %v5942
        %v5971 = vadd.f32 %v5918, %v5942
        %v5972 = vadd.f32 %v5923, %v5942
        %v5973 = vadd.f32 %v5926, %v5942
        %v5974 = vadd.f32 %v5931, %v5942
        %v5975 = vadd.f32 %v5934, %v5942
        %v5976 = vmax.f32 %v5944, 0.0
        %v5977 = vmax.f32 %v5945, 0.0
        %v5978 = vmax.f32 %v5946, 0.0
        %v5979 = vmax.f32 %v5947, 0.0
        %v5980 = vmax.f32 %v5948, 0.0
        %v5981 = vmax.f32 %v5949, 0.0
        %v5982 = vmax.f32 %v5950, 0.0
        %v5983 = vmax.f32 %v5951, 0.0
        %v5984 = vmax.f32 %v5952, 0.0
        %v5985 = vmax.f32 %v5953, 0.0
        %v5986 = vmax.f32 %v5954, 0.0
        %v5987 = vmax.f32 %v5955, 0.0
        %v5988 = vmax.f32 %v5956, 0.0
        %v5989 = vmax.f32 %v5957, 0.0
        %v5990 = vmax.f32 %v5958, 0.0
        %v5991 = vmax.f32 %v5959, 0.0
        %v5992 = vmax.f32 %v5960, 0.0
        %v5993 = vmax.f32 %v5961, 0.0
        %v5994 = vmax.f32 %v5962, 0.0
        %v5995 = vmax.f32 %v5963, 0.0
        %v5996 = vmax.f32 %v5964, 0.0
        %v5997 = vmax.f32 %v5965, 0.0
        %v5998 = vmax.f32 %v5966, 0.0
        %v5999 = vmax.f32 %v5967, 0.0
        %v6000 = vmax.f32 %v5968, 0.0
        %v6001 = vmax.f32 %v5969, 0.0
        %v6002 = vmax.f32 %v5970, 0.0
        %v6003 = vmax.f32 %v5971, 0.0
        %v6004 = vmax.f32 %v5972, 0.0
        %v6005 = vmax.f32 %v5973, 0.0
        %v6006 = vmax.f32 %v5974, 0.0
        %v6007 = vmax.f32 %v5975, 0.0
        %v6009 = vlaneseq
        %v6010 = vshrl.u32 %v6009, 7
        %v6011 = vsub.s32 0, %v6010
        %v6012 = vrot.slane %v5229, %v6011
        %v6014 = vadd.f32 %v5976, %v6012
        %v6015 = vadd.f32 %v5977, %v6012
        %v6016 = vadd.f32 %v5978, %v6012
        %v6017 = vadd.f32 %v5979, %v6012
        %v6018 = vadd.f32 %v5980, %v6012
        %v6019 = vadd.f32 %v5981, %v6012
        %v6020 = vadd.f32 %v5982, %v6012
        %v6021 = vadd.f32 %v5983, %v6012
        %v6022 = vadd.f32 %v5984, %v6012
        %v6023 = vadd.f32 %v5985, %v6012
        %v6024 = vadd.f32 %v5986, %v6012
        %v6025 = vadd.f32 %v5987, %v6012
        %v6026 = vadd.f32 %v5988, %v6012
        %v6027 = vadd.f32 %v5989, %v6012
        %v6028 = vadd.f32 %v5990, %v6012
        %v6029 = vadd.f32 %v5991, %v6012
        %v6030 = vadd.f32 %v5992, %v6012
        %v6031 = vadd.f32 %v5993, %v6012
        %v6032 = vadd.f32 %v5994, %v6012
        %v6033 = vadd.f32 %v5995, %v6012
        %v6034 = vadd.f32 %v5996, %v6012
        %v6035 = vadd.f32 %v5997, %v6012
        %v6036 = vadd.f32 %v5998, %v6012
        %v6037 = vadd.f32 %v5999, %v6012
        %v6038 = vadd.f32 %v6000, %v6012
        %v6039 = vadd.f32 %v6001, %v6012
        %v6040 = vadd.f32 %v6002, %v6012
        %v6041 = vadd.f32 %v6003, %v6012
        %v6042 = vadd.f32 %v6004, %v6012
        %v6043 = vadd.f32 %v6005, %v6012
        %v6044 = vadd.f32 %v6006, %v6012
        %v6045 = vadd.f32 %v6007, %v6012
        %6046 = vxpose.xlu0.b32.start [1/16] %v6014, 128
        %6047 = vxpose.xlu0.b32.cont [2/16] %v6015, 128
        %6048 = vxpose.xlu0.b32.cont [3/16] %v6016, 128
        %6049 = vxpose.xlu0.b32.cont [4/16] %v6017, 128
        %6050 = vxpose.xlu0.b32.cont [5/16] %v6018, 128
        %6051 = vxpose.xlu0.b32.cont [6/16] %v6019, 128
        %6052 = vxpose.xlu0.b32.cont [7/16] %v6020, 128
        %6053 = vxpose.xlu0.b32.cont [8/16] %v6021, 128
        %6054 = vxpose.xlu0.b32.cont [9/16] %v6022, 128
        %6055 = vxpose.xlu0.b32.cont [10/16] %v6023, 128
        %6056 = vxpose.xlu0.b32.cont [11/16] %v6024, 128
        %6057 = vxpose.xlu0.b32.cont [12/16] %v6025, 128
        %6058 = vxpose.xlu0.b32.cont [13/16] %v6026, 128
        %6059 = vxpose.xlu0.b32.cont [14/16] %v6027, 128
        %6060 = vxpose.xlu0.b32.cont [15/16] %v6028, 128
        %6061 = vxpose.xlu0.b32.end [16/16] %v6029, 128
        %v6062 = vpop.trf.xlu0
        %v6063 = vpop.trf.xlu0
        %v6064 = vpop.trf.xlu0
        %v6065 = vpop.trf.xlu0
        %v6066 = vpop.trf.xlu0
        %v6067 = vpop.trf.xlu0
        %v6068 = vpop.trf.xlu0
        %v6069 = vpop.trf.xlu0
        %v6070 = vpop.trf.xlu0
        %v6071 = vpop.trf.xlu0
        %v6072 = vpop.trf.xlu0
        %v6073 = vpop.trf.xlu0
        %v6074 = vpop.trf.xlu0
        %v6075 = vpop.trf.xlu0
        %v6076 = vpop.trf.xlu0
        %v6077 = vpop.trf.xlu0
        %6078 = vxpose.xlu0.b32.start [1/16] %v6030, 128
        %6079 = vxpose.xlu0.b32.cont [2/16] %v6031, 128
        %6080 = vxpose.xlu0.b32.cont [3/16] %v6032, 128
        %6081 = vxpose.xlu0.b32.cont [4/16] %v6033, 128
        %6082 = vxpose.xlu0.b32.cont [5/16] %v6034, 128
        %6083 = vxpose.xlu0.b32.cont [6/16] %v6035, 128
        %6084 = vxpose.xlu0.b32.cont [7/16] %v6036, 128
        %6085 = vxpose.xlu0.b32.cont [8/16] %v6037, 128
        %6086 = vxpose.xlu0.b32.cont [9/16] %v6038, 128
        %6087 = vxpose.xlu0.b32.cont [10/16] %v6039, 128
        %6088 = vxpose.xlu0.b32.cont [11/16] %v6040, 128
        %6089 = vxpose.xlu0.b32.cont [12/16] %v6041, 128
        %6090 = vxpose.xlu0.b32.cont [13/16] %v6042, 128
        %6091 = vxpose.xlu0.b32.cont [14/16] %v6043, 128
        %6092 = vxpose.xlu0.b32.cont [15/16] %v6044, 128
        %6093 = vxpose.xlu0.b32.end [16/16] %v6045, 128
        %v6094 = vpop.trf.xlu0
        %v6095 = vpop.trf.xlu0
        %v6096 = vpop.trf.xlu0
        %v6097 = vpop.trf.xlu0
        %v6098 = vpop.trf.xlu0
        %v6099 = vpop.trf.xlu0
        %v6100 = vpop.trf.xlu0
        %v6101 = vpop.trf.xlu0
        %v6102 = vpop.trf.xlu0
        %v6103 = vpop.trf.xlu0
        %v6104 = vpop.trf.xlu0
        %v6105 = vpop.trf.xlu0
        %v6106 = vpop.trf.xlu0
        %v6107 = vpop.trf.xlu0
        %v6108 = vpop.trf.xlu0
        %v6109 = vpop.trf.xlu0
        %v6110 = vld [vmem:[%s18] sm:$0x1]
        %v6111 = vld [vmem:[%s17] sm:$0xff]
        %v6112 = vld [vmem:[%s17 + $0x8] sm:$0xff]
        %v6113 = vld [vmem:[%s17 + $0x10] sm:$0xff]
        %v6114 = vld [vmem:[%s17 + $0x18] sm:$0xff]
        %v6115 = vld [vmem:[%s17 + $0x20] sm:$0xff]
        %v6116 = vld [vmem:[%s17 + $0x28] sm:$0xff]
        %v6117 = vld [vmem:[%s17 + $0x30] sm:$0xff]
        %v6118 = vld [vmem:[%s17 + $0x38] sm:$0xff]
        %v6119 = vld [vmem:[%s17 + $0x40] sm:$0xff]
        %v6120 = vld [vmem:[%s17 + $0x48] sm:$0xff]
        %v6121 = vld [vmem:[%s17 + $0x50] sm:$0xff]
        %v6122 = vld [vmem:[%s17 + $0x58] sm:$0xff]
        %v6123 = vld [vmem:[%s17 + $0x60] sm:$0xff]
        %v6124 = vld [vmem:[%s17 + $0x68] sm:$0xff]
        %v6125 = vld [vmem:[%s17 + $0x70] sm:$0xff]
        %v6126 = vld [vmem:[%s17 + $0x78] sm:$0xff]
        %v6127 = vld [vmem:[%s17 + $0x80] sm:$0xff]
        %v6128 = vld [vmem:[%s17 + $0x88] sm:$0xff]
        %v6129 = vld [vmem:[%s17 + $0x90] sm:$0xff]
        %v6130 = vld [vmem:[%s17 + $0x98] sm:$0xff]
        %v6131 = vld [vmem:[%s17 + $0xa0] sm:$0xff]
        %v6132 = vld [vmem:[%s17 + $0xa8] sm:$0xff]
        %v6133 = vld [vmem:[%s17 + $0xb0] sm:$0xff]
        %v6134 = vld [vmem:[%s17 + $0xb8] sm:$0xff]
        %v6135 = vld [vmem:[%s17 + $0xc0] sm:$0xff]
        %v6136 = vld [vmem:[%s17 + $0xc8] sm:$0xff]
        %v6137 = vld [vmem:[%s17 + $0xd0] sm:$0xff]
        %v6138 = vld [vmem:[%s17 + $0xd8] sm:$0xff]
        %v6139 = vld [vmem:[%s17 + $0xe0] sm:$0xff]
        %v6140 = vld [vmem:[%s17 + $0xe8] sm:$0xff]
        %v6141 = vld [vmem:[%s17 + $0xf0] sm:$0xff]
        %v6142 = vld [vmem:[%s17 + $0xf8] sm:$0xff]
        %6143 = vmatprep.subr.mxu0 0.0
        %6144 = vmatpush1.msra.mxu0 %v6111
        %6145 = vmatprep.subr.mxu0 0.0
        %6146 = vmatpush1.msra.mxu0 %v6112
        %6147 = vmatprep.subr.mxu0 0.0
        %6148 = vmatpush1.msra.mxu0 %v6113
        %6149 = vmatprep.subr.mxu0 0.0
        %6150 = vmatpush1.msra.mxu0 %v6114
        %6151 = vmatprep.subr.mxu0 0.0
        %6152 = vmatpush1.msra.mxu0 %v6115
        %6153 = vmatprep.subr.mxu0 0.0
        %6154 = vmatpush1.msra.mxu0 %v6116
        %6155 = vmatprep.subr.mxu0 0.0
        %6156 = vmatpush1.msra.mxu0 %v6117
        %6157 = vmatprep.subr.mxu0 0.0
        %6158 = vmatpush1.msra.mxu0 %v6118
        %6159 = vmatprep.subr.mxu0 0.0
        %6160 = vmatpush1.msra.mxu0 %v6119
        %6161 = vmatprep.subr.mxu0 0.0
        %6162 = vmatpush1.msra.mxu0 %v6120
        %6163 = vmatprep.subr.mxu0 0.0
        %6164 = vmatpush1.msra.mxu0 %v6121
        %6165 = vmatprep.subr.mxu0 0.0
        %6166 = vmatpush1.msra.mxu0 %v6122
        %6167 = vmatprep.subr.mxu0 0.0
        %6168 = vmatpush1.msra.mxu0 %v6123
        %6169 = vmatprep.subr.mxu0 0.0
        %6170 = vmatpush1.msra.mxu0 %v6124
        %6171 = vmatprep.subr.mxu0 0.0
        %6172 = vmatpush1.msra.mxu0 %v6125
        %6173 = vmatprep.subr.mxu0 0.0
        %6174 = vmatpush1.msra.mxu0 %v6126
        %6175 = vmatprep.subr.mxu0 0.0
        %6176 = vmatpush1.msra.mxu0 %v6127
        %6177 = vmatprep.subr.mxu0 0.0
        %6178 = vmatpush1.msra.mxu0 %v6128
        %6179 = vmatprep.subr.mxu0 0.0
        %6180 = vmatpush1.msra.mxu0 %v6129
        %6181 = vmatprep.subr.mxu0 0.0
        %6182 = vmatpush1.msra.mxu0 %v6130
        %6183 = vmatprep.subr.mxu0 0.0
        %6184 = vmatpush1.msra.mxu0 %v6131
        %6185 = vmatprep.subr.mxu0 0.0
        %6186 = vmatpush1.msra.mxu0 %v6132
        %6187 = vmatprep.subr.mxu0 0.0
        %6188 = vmatpush1.msra.mxu0 %v6133
        %6189 = vmatprep.subr.mxu0 0.0
        %6190 = vmatpush1.msra.mxu0 %v6134
        %6191 = vmatprep.subr.mxu0 0.0
        %6192 = vmatpush1.msra.mxu0 %v6135
        %6193 = vmatprep.subr.mxu0 0.0
        %6194 = vmatpush1.msra.mxu0 %v6136
        %6195 = vmatprep.subr.mxu0 0.0
        %6196 = vmatpush1.msra.mxu0 %v6137
        %6197 = vmatprep.subr.mxu0 0.0
        %6198 = vmatpush1.msra.mxu0 %v6138
        %6199 = vmatprep.subr.mxu0 0.0
        %6200 = vmatpush1.msra.mxu0 %v6139
        %6201 = vmatprep.subr.mxu0 0.0
        %6202 = vmatpush1.msra.mxu0 %v6140
        %6203 = vmatprep.subr.mxu0 0.0
        %6204 = vmatpush1.msra.mxu0 %v6141
        %6205 = vmatprep.subr.mxu0 0.0
        %6206 = vmatpush1.msra.mxu0 %v6142
        %6207 = vmatprep.mubr.f32.mxu0 %v6094
        %6208 = vmatmul.mubr.f32.gmra.mrb[0].mxu0 %v6062
        %v6209 = vpop.f32.mrb[0].mxu0
        %v6210 = vadd.f32 0.0, %v6209
        %v6211 = vpop.f32.mrb[0].mxu0
        %6212 = vdwg.mxu0
        %v6213 = vadd.f32 %v6110, %v6210
        %s6214 = scalar_lea.vmem %s17, 256
        %v6215 = vld [vmem:[%s6214] sm:$0xff]
        %v6216 = vld [vmem:[%s6214 + $0x8] sm:$0xff]
        %v6217 = vld [vmem:[%s6214 + $0x10] sm:$0xff]
        %v6218 = vld [vmem:[%s6214 + $0x18] sm:$0xff]
        %v6219 = vld [vmem:[%s6214 + $0x20] sm:$0xff]
        %v6220 = vld [vmem:[%s6214 + $0x28] sm:$0xff]
        %v6221 = vld [vmem:[%s6214 + $0x30] sm:$0xff]
        %v6222 = vld [vmem:[%s6214 + $0x38] sm:$0xff]
        %v6223 = vld [vmem:[%s6214 + $0x40] sm:$0xff]
        %v6224 = vld [vmem:[%s6214 + $0x48] sm:$0xff]
        %v6225 = vld [vmem:[%s6214 + $0x50] sm:$0xff]
        %v6226 = vld [vmem:[%s6214 + $0x58] sm:$0xff]
        %v6227 = vld [vmem:[%s6214 + $0x60] sm:$0xff]
        %v6228 = vld [vmem:[%s6214 + $0x68] sm:$0xff]
        %v6229 = vld [vmem:[%s6214 + $0x70] sm:$0xff]
        %v6230 = vld [vmem:[%s6214 + $0x78] sm:$0xff]
        %v6231 = vld [vmem:[%s6214 + $0x80] sm:$0xff]
        %v6232 = vld [vmem:[%s6214 + $0x88] sm:$0xff]
        %v6233 = vld [vmem:[%s6214 + $0x90] sm:$0xff]
        %v6234 = vld [vmem:[%s6214 + $0x98] sm:$0xff]
        %v6235 = vld [vmem:[%s6214 + $0xa0] sm:$0xff]
        %v6236 = vld [vmem:[%s6214 + $0xa8] sm:$0xff]
        %v6237 = vld [vmem:[%s6214 + $0xb0] sm:$0xff]
        %v6238 = vld [vmem:[%s6214 + $0xb8] sm:$0xff]
        %v6239 = vld [vmem:[%s6214 + $0xc0] sm:$0xff]
        %v6240 = vld [vmem:[%s6214 + $0xc8] sm:$0xff]
        %v6241 = vld [vmem:[%s6214 + $0xd0] sm:$0xff]
        %v6242 = vld [vmem:[%s6214 + $0xd8] sm:$0xff]
        %v6243 = vld [vmem:[%s6214 + $0xe0] sm:$0xff]
        %v6244 = vld [vmem:[%s6214 + $0xe8] sm:$0xff]
        %v6245 = vld [vmem:[%s6214 + $0xf0] sm:$0xff]
        %v6246 = vld [vmem:[%s6214 + $0xf8] sm:$0xff]
        %v6249 = vrot.slane %v6062, 1
        %v6250 = vrot.slane %v6094, 1
        %6253 = vmatprep.subr.mxu0 0.0
        %6254 = vmatpush1.msra.mxu0 %v6215
        %6255 = vmatprep.subr.mxu0 0.0
        %6256 = vmatpush1.msra.mxu0 %v6216
        %6257 = vmatprep.subr.mxu0 0.0
        %6258 = vmatpush1.msra.mxu0 %v6217
        %6259 = vmatprep.subr.mxu0 0.0
        %6260 = vmatpush1.msra.mxu0 %v6218
        %6261 = vmatprep.subr.mxu0 0.0
        %6262 = vmatpush1.msra.mxu0 %v6219
        %6263 = vmatprep.subr.mxu0 0.0
        %6264 = vmatpush1.msra.mxu0 %v6220
        %6265 = vmatprep.subr.mxu0 0.0
        %6266 = vmatpush1.msra.mxu0 %v6221
        %6267 = vmatprep.subr.mxu0 0.0
        %6268 = vmatpush1.msra.mxu0 %v6222
        %6269 = vmatprep.subr.mxu0 0.0
        %6270 = vmatpush1.msra.mxu0 %v6223
        %6271 = vmatprep.subr.mxu0 0.0
        %6272 = vmatpush1.msra.mxu0 %v6224
        %6273 = vmatprep.subr.mxu0 0.0
        %6274 = vmatpush1.msra.mxu0 %v6225
        %6275 = vmatprep.subr.mxu0 0.0
        %6276 = vmatpush1.msra.mxu0 %v6226
        %6277 = vmatprep.subr.mxu0 0.0
        %6278 = vmatpush1.msra.mxu0 %v6227
        %6279 = vmatprep.subr.mxu0 0.0
        %6280 = vmatpush1.msra.mxu0 %v6228
        %6281 = vmatprep.subr.mxu0 0.0
        %6282 = vmatpush1.msra.mxu0 %v6229
        %6283 = vmatprep.subr.mxu0 0.0
        %6284 = vmatpush1.msra.mxu0 %v6230
        %6285 = vmatprep.subr.mxu0 0.0
        %6286 = vmatpush1.msra.mxu0 %v6231
        %6287 = vmatprep.subr.mxu0 0.0
        %6288 = vmatpush1.msra.mxu0 %v6232
        %6289 = vmatprep.subr.mxu0 0.0
        %6290 = vmatpush1.msra.mxu0 %v6233
        %6291 = vmatprep.subr.mxu0 0.0
        %6292 = vmatpush1.msra.mxu0 %v6234
        %6293 = vmatprep.subr.mxu0 0.0
        %6294 = vmatpush1.msra.mxu0 %v6235
        %6295 = vmatprep.subr.mxu0 0.0
        %6296 = vmatpush1.msra.mxu0 %v6236
        %6297 = vmatprep.subr.mxu0 0.0
        %6298 = vmatpush1.msra.mxu0 %v6237
        %6299 = vmatprep.subr.mxu0 0.0
        %6300 = vmatpush1.msra.mxu0 %v6238
        %6301 = vmatprep.subr.mxu0 0.0
        %6302 = vmatpush1.msra.mxu0 %v6239
        %6303 = vmatprep.subr.mxu0 0.0
        %6304 = vmatpush1.msra.mxu0 %v6240
        %6305 = vmatprep.subr.mxu0 0.0
        %6306 = vmatpush1.msra.mxu0 %v6241
        %6307 = vmatprep.subr.mxu0 0.0
        %6308 = vmatpush1.msra.mxu0 %v6242
        %6309 = vmatprep.subr.mxu0 0.0
        %6310 = vmatpush1.msra.mxu0 %v6243
        %6311 = vmatprep.subr.mxu0 0.0
        %6312 = vmatpush1.msra.mxu0 %v6244
        %6313 = vmatprep.subr.mxu0 0.0
        %6314 = vmatpush1.msra.mxu0 %v6245
        %6315 = vmatprep.subr.mxu0 0.0
        %6316 = vmatpush1.msra.mxu0 %v6246
        %6317 = vmatprep.mubr.f32.mxu0 %v6250
        %6318 = vmatmul.mubr.f32.gmra.mrb[0].mxu0 %v6249
        %v6319 = vpop.f32.mrb[0].mxu0
        %v6320 = vadd.f32 0.0, %v6319
        %v6321 = vpop.f32.mrb[0].mxu0
        %6322 = vdwg.mxu0
        %v6323 = vadd.f32 %v6213, %v6320
        %s6324 = scalar_lea.vmem %s17, 512
        %v6325 = vld [vmem:[%s6324] sm:$0xff]
        %v6326 = vld [vmem:[%s6324 + $0x8] sm:$0xff]
        %v6327 = vld [vmem:[%s6324 + $0x10] sm:$0xff]
        %v6328 = vld [vmem:[%s6324 + $0x18] sm:$0xff]
        %v6329 = vld [vmem:[%s6324 + $0x20] sm:$0xff]
        %v6330 = vld [vmem:[%s6324 + $0x28] sm:$0xff]
        %v6331 = vld [vmem:[%s6324 + $0x30] sm:$0xff]
        %v6332 = vld [vmem:[%s6324 + $0x38] sm:$0xff]
        %v6333 = vld [vmem:[%s6324 + $0x40] sm:$0xff]
        %v6334 = vld [vmem:[%s6324 + $0x48] sm:$0xff]
        %v6335 = vld [vmem:[%s6324 + $0x50] sm:$0xff]
        %v6336 = vld [vmem:[%s6324 + $0x58] sm:$0xff]
        %v6337 = vld [vmem:[%s6324 + $0x60] sm:$0xff]
        %v6338 = vld [vmem:[%s6324 + $0x68] sm:$0xff]
        %v6339 = vld [vmem:[%s6324 + $0x70] sm:$0xff]
        %v6340 = vld [vmem:[%s6324 + $0x78] sm:$0xff]
        %v6341 = vld [vmem:[%s6324 + $0x80] sm:$0xff]
        %v6342 = vld [vmem:[%s6324 + $0x88] sm:$0xff]
        %v6343 = vld [vmem:[%s6324 + $0x90] sm:$0xff]
        %v6344 = vld [vmem:[%s6324 + $0x98] sm:$0xff]
        %v6345 = vld [vmem:[%s6324 + $0xa0] sm:$0xff]
        %v6346 = vld [vmem:[%s6324 + $0xa8] sm:$0xff]
        %v6347 = vld [vmem:[%s6324 + $0xb0] sm:$0xff]
        %v6348 = vld [vmem:[%s6324 + $0xb8] sm:$0xff]
        %v6349 = vld [vmem:[%s6324 + $0xc0] sm:$0xff]
        %v6350 = vld [vmem:[%s6324 + $0xc8] sm:$0xff]
        %v6351 = vld [vmem:[%s6324 + $0xd0] sm:$0xff]
        %v6352 = vld [vmem:[%s6324 + $0xd8] sm:$0xff]
        %v6353 = vld [vmem:[%s6324 + $0xe0] sm:$0xff]
        %v6354 = vld [vmem:[%s6324 + $0xe8] sm:$0xff]
        %v6355 = vld [vmem:[%s6324 + $0xf0] sm:$0xff]
        %v6356 = vld [vmem:[%s6324 + $0xf8] sm:$0xff]
        %v6357 = vrot.slane %v6062, 2
        %v6358 = vrot.slane %v6094, 2
        %6361 = vmatprep.subr.mxu0 0.0
        %6362 = vmatpush1.msra.mxu0 %v6325
        %6363 = vmatprep.subr.mxu0 0.0
        %6364 = vmatpush1.msra.mxu0 %v6326
        %6365 = vmatprep.subr.mxu0 0.0
        %6366 = vmatpush1.msra.mxu0 %v6327
        %6367 = vmatprep.subr.mxu0 0.0
        %6368 = vmatpush1.msra.mxu0 %v6328
        %6369 = vmatprep.subr.mxu0 0.0
        %6370 = vmatpush1.msra.mxu0 %v6329
        %6371 = vmatprep.subr.mxu0 0.0
        %6372 = vmatpush1.msra.mxu0 %v6330
        %6373 = vmatprep.subr.mxu0 0.0
        %6374 = vmatpush1.msra.mxu0 %v6331
        %6375 = vmatprep.subr.mxu0 0.0
        %6376 = vmatpush1.msra.mxu0 %v6332
        %6377 = vmatprep.subr.mxu0 0.0
        %6378 = vmatpush1.msra.mxu0 %v6333
        %6379 = vmatprep.subr.mxu0 0.0
        %6380 = vmatpush1.msra.mxu0 %v6334
        %6381 = vmatprep.subr.mxu0 0.0
        %6382 = vmatpush1.msra.mxu0 %v6335
        %6383 = vmatprep.subr.mxu0 0.0
        %6384 = vmatpush1.msra.mxu0 %v6336
        %6385 = vmatprep.subr.mxu0 0.0
        %6386 = vmatpush1.msra.mxu0 %v6337
        %6387 = vmatprep.subr.mxu0 0.0
        %6388 = vmatpush1.msra.mxu0 %v6338
        %6389 = vmatprep.subr.mxu0 0.0
        %6390 = vmatpush1.msra.mxu0 %v6339
        %6391 = vmatprep.subr.mxu0 0.0
        %6392 = vmatpush1.msra.mxu0 %v6340
        %6393 = vmatprep.subr.mxu0 0.0
        %6394 = vmatpush1.msra.mxu0 %v6341
        %6395 = vmatprep.subr.mxu0 0.0
        %6396 = vmatpush1.msra.mxu0 %v6342
        %6397 = vmatprep.subr.mxu0 0.0
        %6398 = vmatpush1.msra.mxu0 %v6343
        %6399 = vmatprep.subr.mxu0 0.0
        %6400 = vmatpush1.msra.mxu0 %v6344
        %6401 = vmatprep.subr.mxu0 0.0
        %6402 = vmatpush1.msra.mxu0 %v6345
        %6403 = vmatprep.subr.mxu0 0.0
        %6404 = vmatpush1.msra.mxu0 %v6346
        %6405 = vmatprep.subr.mxu0 0.0
        %6406 = vmatpush1.msra.mxu0 %v6347
        %6407 = vmatprep.subr.mxu0 0.0
        %6408 = vmatpush1.msra.mxu0 %v6348
        %6409 = vmatprep.subr.mxu0 0.0
        %6410 = vmatpush1.msra.mxu0 %v6349
        %6411 = vmatprep.subr.mxu0 0.0
        %6412 = vmatpush1.msra.mxu0 %v6350
        %6413 = vmatprep.subr.mxu0 0.0
        %6414 = vmatpush1.msra.mxu0 %v6351
        %6415 = vmatprep.subr.mxu0 0.0
        %6416 = vmatpush1.msra.mxu0 %v6352
        %6417 = vmatprep.subr.mxu0 0.0
        %6418 = vmatpush1.msra.mxu0 %v6353
        %6419 = vmatprep.subr.mxu0 0.0
        %6420 = vmatpush1.msra.mxu0 %v6354
        %6421 = vmatprep.subr.mxu0 0.0
        %6422 = vmatpush1.msra.mxu0 %v6355
        %6423 = vmatprep.subr.mxu0 0.0
        %6424 = vmatpush1.msra.mxu0 %v6356
        %6425 = vmatprep.mubr.f32.mxu0 %v6358
        %6426 = vmatmul.mubr.f32.gmra.mrb[0].mxu0 %v6357
        %v6427 = vpop.f32.mrb[0].mxu0
        %v6428 = vadd.f32 0.0, %v6427
        %v6429 = vpop.f32.mrb[0].mxu0
        %6430 = vdwg.mxu0
        %v6431 = vadd.f32 %v6323, %v6428
        %s6432 = scalar_lea.vmem %s17, 768
        %v6433 = vld [vmem:[%s6432] sm:$0xff]
        %v6434 = vld [vmem:[%s6432 + $0x8] sm:$0xff]
        %v6435 = vld [vmem:[%s6432 + $0x10] sm:$0xff]
        %v6436 = vld [vmem:[%s6432 + $0x18] sm:$0xff]
        %v6437 = vld [vmem:[%s6432 + $0x20] sm:$0xff]
        %v6438 = vld [vmem:[%s6432 + $0x28] sm:$0xff]
        %v6439 = vld [vmem:[%s6432 + $0x30] sm:$0xff]
        %v6440 = vld [vmem:[%s6432 + $0x38] sm:$0xff]
        %v6441 = vld [vmem:[%s6432 + $0x40] sm:$0xff]
        %v6442 = vld [vmem:[%s6432 + $0x48] sm:$0xff]
        %v6443 = vld [vmem:[%s6432 + $0x50] sm:$0xff]
        %v6444 = vld [vmem:[%s6432 + $0x58] sm:$0xff]
        %v6445 = vld [vmem:[%s6432 + $0x60] sm:$0xff]
        %v6446 = vld [vmem:[%s6432 + $0x68] sm:$0xff]
        %v6447 = vld [vmem:[%s6432 + $0x70] sm:$0xff]
        %v6448 = vld [vmem:[%s6432 + $0x78] sm:$0xff]
        %v6449 = vld [vmem:[%s6432 + $0x80] sm:$0xff]
        %v6450 = vld [vmem:[%s6432 + $0x88] sm:$0xff]
        %v6451 = vld [vmem:[%s6432 + $0x90] sm:$0xff]
        %v6452 = vld [vmem:[%s6432 + $0x98] sm:$0xff]
        %v6453 = vld [vmem:[%s6432 + $0xa0] sm:$0xff]
        %v6454 = vld [vmem:[%s6432 + $0xa8] sm:$0xff]
        %v6455 = vld [vmem:[%s6432 + $0xb0] sm:$0xff]
        %v6456 = vld [vmem:[%s6432 + $0xb8] sm:$0xff]
        %v6457 = vld [vmem:[%s6432 + $0xc0] sm:$0xff]
        %v6458 = vld [vmem:[%s6432 + $0xc8] sm:$0xff]
        %v6459 = vld [vmem:[%s6432 + $0xd0] sm:$0xff]
        %v6460 = vld [vmem:[%s6432 + $0xd8] sm:$0xff]
        %v6461 = vld [vmem:[%s6432 + $0xe0] sm:$0xff]
        %v6462 = vld [vmem:[%s6432 + $0xe8] sm:$0xff]
        %v6463 = vld [vmem:[%s6432 + $0xf0] sm:$0xff]
        %v6464 = vld [vmem:[%s6432 + $0xf8] sm:$0xff]
        %v6465 = vrot.slane %v6062, 3
        %v6466 = vrot.slane %v6094, 3
        %6469 = vmatprep.subr.mxu0 0.0
        %6470 = vmatpush1.msra.mxu0 %v6433
        %6471 = vmatprep.subr.mxu0 0.0
        %6472 = vmatpush1.msra.mxu0 %v6434
        %6473 = vmatprep.subr.mxu0 0.0
        %6474 = vmatpush1.msra.mxu0 %v6435
        %6475 = vmatprep.subr.mxu0 0.0
        %6476 = vmatpush1.msra.mxu0 %v6436
        %6477 = vmatprep.subr.mxu0 0.0
        %6478 = vmatpush1.msra.mxu0 %v6437
        %6479 = vmatprep.subr.mxu0 0.0
        %6480 = vmatpush1.msra.mxu0 %v6438
        %6481 = vmatprep.subr.mxu0 0.0
        %6482 = vmatpush1.msra.mxu0 %v6439
        %6483 = vmatprep.subr.mxu0 0.0
        %6484 = vmatpush1.msra.mxu0 %v6440
        %6485 = vmatprep.subr.mxu0 0.0
        %6486 = vmatpush1.msra.mxu0 %v6441
        %6487 = vmatprep.subr.mxu0 0.0
        %6488 = vmatpush1.msra.mxu0 %v6442
        %6489 = vmatprep.subr.mxu0 0.0
        %6490 = vmatpush1.msra.mxu0 %v6443
        %6491 = vmatprep.subr.mxu0 0.0
        %6492 = vmatpush1.msra.mxu0 %v6444
        %6493 = vmatprep.subr.mxu0 0.0
        %6494 = vmatpush1.msra.mxu0 %v6445
        %6495 = vmatprep.subr.mxu0 0.0
        %6496 = vmatpush1.msra.mxu0 %v6446
        %6497 = vmatprep.subr.mxu0 0.0
        %6498 = vmatpush1.msra.mxu0 %v6447
        %6499 = vmatprep.subr.mxu0 0.0
        %6500 = vmatpush1.msra.mxu0 %v6448
        %6501 = vmatprep.subr.mxu0 0.0
        %6502 = vmatpush1.msra.mxu0 %v6449
        %6503 = vmatprep.subr.mxu0 0.0
        %6504 = vmatpush1.msra.mxu0 %v6450
        %6505 = vmatprep.subr.mxu0 0.0
        %6506 = vmatpush1.msra.mxu0 %v6451
        %6507 = vmatprep.subr.mxu0 0.0
        %6508 = vmatpush1.msra.mxu0 %v6452
        %6509 = vmatprep.subr.mxu0 0.0
        %6510 = vmatpush1.msra.mxu0 %v6453
        %6511 = vmatprep.subr.mxu0 0.0
        %6512 = vmatpush1.msra.mxu0 %v6454
        %6513 = vmatprep.subr.mxu0 0.0
        %6514 = vmatpush1.msra.mxu0 %v6455
        %6515 = vmatprep.subr.mxu0 0.0
        %6516 = vmatpush1.msra.mxu0 %v6456
        %6517 = vmatprep.subr.mxu0 0.0
        %6518 = vmatpush1.msra.mxu0 %v6457
        %6519 = vmatprep.subr.mxu0 0.0
        %6520 = vmatpush1.msra.mxu0 %v6458
        %6521 = vmatprep.subr.mxu0 0.0
        %6522 = vmatpush1.msra.mxu0 %v6459
        %6523 = vmatprep.subr.mxu0 0.0
        %6524 = vmatpush1.msra.mxu0 %v6460
        %6525 = vmatprep.subr.mxu0 0.0
        %6526 = vmatpush1.msra.mxu0 %v6461
        %6527 = vmatprep.subr.mxu0 0.0
        %6528 = vmatpush1.msra.mxu0 %v6462
        %6529 = vmatprep.subr.mxu0 0.0
        %6530 = vmatpush1.msra.mxu0 %v6463
        %6531 = vmatprep.subr.mxu0 0.0
        %6532 = vmatpush1.msra.mxu0 %v6464
        %6533 = vmatprep.mubr.f32.mxu0 %v6466
        %6534 = vmatmul.mubr.f32.gmra.mrb[0].mxu0 %v6465
        %v6535 = vpop.f32.mrb[0].mxu0
        %v6536 = vadd.f32 0.0, %v6535
        %v6537 = vpop.f32.mrb[0].mxu0
        %6538 = vdwg.mxu0
        %v6539 = vadd.f32 %v6431, %v6536
        %s6540 = scalar_lea.vmem %s17, 1024
        %v6541 = vld [vmem:[%s6540] sm:$0xff]
        %v6542 = vld [vmem:[%s6540 + $0x8] sm:$0xff]
        %v6543 = vld [vmem:[%s6540 + $0x10] sm:$0xff]
        %v6544 = vld [vmem:[%s6540 + $0x18] sm:$0xff]
        %v6545 = vld [vmem:[%s6540 + $0x20] sm:$0xff]
        %v6546 = vld [vmem:[%s6540 + $0x28] sm:$0xff]
        %v6547 = vld [vmem:[%s6540 + $0x30] sm:$0xff]
        %v6548 = vld [vmem:[%s6540 + $0x38] sm:$0xff]
        %v6549 = vld [vmem:[%s6540 + $0x40] sm:$0xff]
        %v6550 = vld [vmem:[%s6540 + $0x48] sm:$0xff]
        %v6551 = vld [vmem:[%s6540 + $0x50] sm:$0xff]
        %v6552 = vld [vmem:[%s6540 + $0x58] sm:$0xff]
        %v6553 = vld [vmem:[%s6540 + $0x60] sm:$0xff]
        %v6554 = vld [vmem:[%s6540 + $0x68] sm:$0xff]
        %v6555 = vld [vmem:[%s6540 + $0x70] sm:$0xff]
        %v6556 = vld [vmem:[%s6540 + $0x78] sm:$0xff]
        %v6557 = vld [vmem:[%s6540 + $0x80] sm:$0xff]
        %v6558 = vld [vmem:[%s6540 + $0x88] sm:$0xff]
        %v6559 = vld [vmem:[%s6540 + $0x90] sm:$0xff]
        %v6560 = vld [vmem:[%s6540 + $0x98] sm:$0xff]
        %v6561 = vld [vmem:[%s6540 + $0xa0] sm:$0xff]
        %v6562 = vld [vmem:[%s6540 + $0xa8] sm:$0xff]
        %v6563 = vld [vmem:[%s6540 + $0xb0] sm:$0xff]
        %v6564 = vld [vmem:[%s6540 + $0xb8] sm:$0xff]
        %v6565 = vld [vmem:[%s6540 + $0xc0] sm:$0xff]
        %v6566 = vld [vmem:[%s6540 + $0xc8] sm:$0xff]
        %v6567 = vld [vmem:[%s6540 + $0xd0] sm:$0xff]
        %v6568 = vld [vmem:[%s6540 + $0xd8] sm:$0xff]
        %v6569 = vld [vmem:[%s6540 + $0xe0] sm:$0xff]
        %v6570 = vld [vmem:[%s6540 + $0xe8] sm:$0xff]
        %v6571 = vld [vmem:[%s6540 + $0xf0] sm:$0xff]
        %v6572 = vld [vmem:[%s6540 + $0xf8] sm:$0xff]
        %v6573 = vrot.slane %v6062, 4
        %v6574 = vrot.slane %v6094, 4
        %6577 = vmatprep.subr.mxu0 0.0
        %6578 = vmatpush1.msra.mxu0 %v6541
        %6579 = vmatprep.subr.mxu0 0.0
        %6580 = vmatpush1.msra.mxu0 %v6542
        %6581 = vmatprep.subr.mxu0 0.0
        %6582 = vmatpush1.msra.mxu0 %v6543
        %6583 = vmatprep.subr.mxu0 0.0
        %6584 = vmatpush1.msra.mxu0 %v6544
        %6585 = vmatprep.subr.mxu0 0.0
        %6586 = vmatpush1.msra.mxu0 %v6545
        %6587 = vmatprep.subr.mxu0 0.0
        %6588 = vmatpush1.msra.mxu0 %v6546
        %6589 = vmatprep.subr.mxu0 0.0
        %6590 = vmatpush1.msra.mxu0 %v6547
        %6591 = vmatprep.subr.mxu0 0.0
        %6592 = vmatpush1.msra.mxu0 %v6548
        %6593 = vmatprep.subr.mxu0 0.0
        %6594 = vmatpush1.msra.mxu0 %v6549
        %6595 = vmatprep.subr.mxu0 0.0
        %6596 = vmatpush1.msra.mxu0 %v6550
        %6597 = vmatprep.subr.mxu0 0.0
        %6598 = vmatpush1.msra.mxu0 %v6551
        %6599 = vmatprep.subr.mxu0 0.0
        %6600 = vmatpush1.msra.mxu0 %v6552
        %6601 = vmatprep.subr.mxu0 0.0
        %6602 = vmatpush1.msra.mxu0 %v6553
        %6603 = vmatprep.subr.mxu0 0.0
        %6604 = vmatpush1.msra.mxu0 %v6554
        %6605 = vmatprep.subr.mxu0 0.0
        %6606 = vmatpush1.msra.mxu0 %v6555
        %6607 = vmatprep.subr.mxu0 0.0
        %6608 = vmatpush1.msra.mxu0 %v6556
        %6609 = vmatprep.subr.mxu0 0.0
        %6610 = vmatpush1.msra.mxu0 %v6557
        %6611 = vmatprep.subr.mxu0 0.0
        %6612 = vmatpush1.msra.mxu0 %v6558
        %6613 = vmatprep.subr.mxu0 0.0
        %6614 = vmatpush1.msra.mxu0 %v6559
        %6615 = vmatprep.subr.mxu0 0.0
        %6616 = vmatpush1.msra.mxu0 %v6560
        %6617 = vmatprep.subr.mxu0 0.0
        %6618 = vmatpush1.msra.mxu0 %v6561
        %6619 = vmatprep.subr.mxu0 0.0
        %6620 = vmatpush1.msra.mxu0 %v6562
        %6621 = vmatprep.subr.mxu0 0.0
        %6622 = vmatpush1.msra.mxu0 %v6563
        %6623 = vmatprep.subr.mxu0 0.0
        %6624 = vmatpush1.msra.mxu0 %v6564
        %6625 = vmatprep.subr.mxu0 0.0
        %6626 = vmatpush1.msra.mxu0 %v6565
        %6627 = vmatprep.subr.mxu0 0.0
        %6628 = vmatpush1.msra.mxu0 %v6566
        %6629 = vmatprep.subr.mxu0 0.0
        %6630 = vmatpush1.msra.mxu0 %v6567
        %6631 = vmatprep.subr.mxu0 0.0
        %6632 = vmatpush1.msra.mxu0 %v6568
        %6633 = vmatprep.subr.mxu0 0.0
        %6634 = vmatpush1.msra.mxu0 %v6569
        %6635 = vmatprep.subr.mxu0 0.0
        %6636 = vmatpush1.msra.mxu0 %v6570
        %6637 = vmatprep.subr.mxu0 0.0
        %6638 = vmatpush1.msra.mxu0 %v6571
        %6639 = vmatprep.subr.mxu0 0.0
        %6640 = vmatpush1.msra.mxu0 %v6572
        %6641 = vmatprep.mubr.f32.mxu0 %v6574
        %6642 = vmatmul.mubr.f32.gmra.mrb[0].mxu0 %v6573
        %v6643 = vpop.f32.mrb[0].mxu0
        %v6644 = vadd.f32 0.0, %v6643
        %v6645 = vpop.f32.mrb[0].mxu0
        %6646 = vdwg.mxu0
        %v6647 = vadd.f32 %v6539, %v6644
        %s6648 = scalar_lea.vmem %s17, 1280
        %v6649 = vld [vmem:[%s6648] sm:$0xff]
        %v6650 = vld [vmem:[%s6648 + $0x8] sm:$0xff]
        %v6651 = vld [vmem:[%s6648 + $0x10] sm:$0xff]
        %v6652 = vld [vmem:[%s6648 + $0x18] sm:$0xff]
        %v6653 = vld [vmem:[%s6648 + $0x20] sm:$0xff]
        %v6654 = vld [vmem:[%s6648 + $0x28] sm:$0xff]
        %v6655 = vld [vmem:[%s6648 + $0x30] sm:$0xff]
        %v6656 = vld [vmem:[%s6648 + $0x38] sm:$0xff]
        %v6657 = vld [vmem:[%s6648 + $0x40] sm:$0xff]
        %v6658 = vld [vmem:[%s6648 + $0x48] sm:$0xff]
        %v6659 = vld [vmem:[%s6648 + $0x50] sm:$0xff]
        %v6660 = vld [vmem:[%s6648 + $0x58] sm:$0xff]
        %v6661 = vld [vmem:[%s6648 + $0x60] sm:$0xff]
        %v6662 = vld [vmem:[%s6648 + $0x68] sm:$0xff]
        %v6663 = vld [vmem:[%s6648 + $0x70] sm:$0xff]
        %v6664 = vld [vmem:[%s6648 + $0x78] sm:$0xff]
        %v6665 = vld [vmem:[%s6648 + $0x80] sm:$0xff]
        %v6666 = vld [vmem:[%s6648 + $0x88] sm:$0xff]
        %v6667 = vld [vmem:[%s6648 + $0x90] sm:$0xff]
        %v6668 = vld [vmem:[%s6648 + $0x98] sm:$0xff]
        %v6669 = vld [vmem:[%s6648 + $0xa0] sm:$0xff]
        %v6670 = vld [vmem:[%s6648 + $0xa8] sm:$0xff]
        %v6671 = vld [vmem:[%s6648 + $0xb0] sm:$0xff]
        %v6672 = vld [vmem:[%s6648 + $0xb8] sm:$0xff]
        %v6673 = vld [vmem:[%s6648 + $0xc0] sm:$0xff]
        %v6674 = vld [vmem:[%s6648 + $0xc8] sm:$0xff]
        %v6675 = vld [vmem:[%s6648 + $0xd0] sm:$0xff]
        %v6676 = vld [vmem:[%s6648 + $0xd8] sm:$0xff]
        %v6677 = vld [vmem:[%s6648 + $0xe0] sm:$0xff]
        %v6678 = vld [vmem:[%s6648 + $0xe8] sm:$0xff]
        %v6679 = vld [vmem:[%s6648 + $0xf0] sm:$0xff]
        %v6680 = vld [vmem:[%s6648 + $0xf8] sm:$0xff]
        %v6681 = vrot.slane %v6062, 5
        %v6682 = vrot.slane %v6094, 5
        %6685 = vmatprep.subr.mxu0 0.0
        %6686 = vmatpush1.msra.mxu0 %v6649
        %6687 = vmatprep.subr.mxu0 0.0
        %6688 = vmatpush1.msra.mxu0 %v6650
        %6689 = vmatprep.subr.mxu0 0.0
        %6690 = vmatpush1.msra.mxu0 %v6651
        %6691 = vmatprep.subr.mxu0 0.0
        %6692 = vmatpush1.msra.mxu0 %v6652
        %6693 = vmatprep.subr.mxu0 0.0
        %6694 = vmatpush1.msra.mxu0 %v6653
        %6695 = vmatprep.subr.mxu0 0.0
        %6696 = vmatpush1.msra.mxu0 %v6654
        %6697 = vmatprep.subr.mxu0 0.0
        %6698 = vmatpush1.msra.mxu0 %v6655
        %6699 = vmatprep.subr.mxu0 0.0
        %6700 = vmatpush1.msra.mxu0 %v6656
        %6701 = vmatprep.subr.mxu0 0.0
        %6702 = vmatpush1.msra.mxu0 %v6657
        %6703 = vmatprep.subr.mxu0 0.0
        %6704 = vmatpush1.msra.mxu0 %v6658
        %6705 = vmatprep.subr.mxu0 0.0
        %6706 = vmatpush1.msra.mxu0 %v6659
        %6707 = vmatprep.subr.mxu0 0.0
        %6708 = vmatpush1.msra.mxu0 %v6660
        %6709 = vmatprep.subr.mxu0 0.0
        %6710 = vmatpush1.msra.mxu0 %v6661
        %6711 = vmatprep.subr.mxu0 0.0
        %6712 = vmatpush1.msra.mxu0 %v6662
        %6713 = vmatprep.subr.mxu0 0.0
        %6714 = vmatpush1.msra.mxu0 %v6663
        %6715 = vmatprep.subr.mxu0 0.0
        %6716 = vmatpush1.msra.mxu0 %v6664
        %6717 = vmatprep.subr.mxu0 0.0
        %6718 = vmatpush1.msra.mxu0 %v6665
        %6719 = vmatprep.subr.mxu0 0.0
        %6720 = vmatpush1.msra.mxu0 %v6666
        %6721 = vmatprep.subr.mxu0 0.0
        %6722 = vmatpush1.msra.mxu0 %v6667
        %6723 = vmatprep.subr.mxu0 0.0
        %6724 = vmatpush1.msra.mxu0 %v6668
        %6725 = vmatprep.subr.mxu0 0.0
        %6726 = vmatpush1.msra.mxu0 %v6669
        %6727 = vmatprep.subr.mxu0 0.0
        %6728 = vmatpush1.msra.mxu0 %v6670
        %6729 = vmatprep.subr.mxu0 0.0
        %6730 = vmatpush1.msra.mxu0 %v6671
        %6731 = vmatprep.subr.mxu0 0.0
        %6732 = vmatpush1.msra.mxu0 %v6672
        %6733 = vmatprep.subr.mxu0 0.0
        %6734 = vmatpush1.msra.mxu0 %v6673
        %6735 = vmatprep.subr.mxu0 0.0
        %6736 = vmatpush1.msra.mxu0 %v6674
        %6737 = vmatprep.subr.mxu0 0.0
        %6738 = vmatpush1.msra.mxu0 %v6675
        %6739 = vmatprep.subr.mxu0 0.0
        %6740 = vmatpush1.msra.mxu0 %v6676
        %6741 = vmatprep.subr.mxu0 0.0
        %6742 = vmatpush1.msra.mxu0 %v6677
        %6743 = vmatprep.subr.mxu0 0.0
        %6744 = vmatpush1.msra.mxu0 %v6678
        %6745 = vmatprep.subr.mxu0 0.0
        %6746 = vmatpush1.msra.mxu0 %v6679
        %6747 = vmatprep.subr.mxu0 0.0
        %6748 = vmatpush1.msra.mxu0 %v6680
        %6749 = vmatprep.mubr.f32.mxu0 %v6682
        %6750 = vmatmul.mubr.f32.gmra.mrb[0].mxu0 %v6681
        %v6751 = vpop.f32.mrb[0].mxu0
        %v6752 = vadd.f32 0.0, %v6751
        %v6753 = vpop.f32.mrb[0].mxu0
        %6754 = vdwg.mxu0
        %v6755 = vadd.f32 %v6647, %v6752
        %s6756 = scalar_lea.vmem %s17, 1536
        %v6757 = vld [vmem:[%s6756] sm:$0xff]
        %v6758 = vld [vmem:[%s6756 + $0x8] sm:$0xff]
        %v6759 = vld [vmem:[%s6756 + $0x10] sm:$0xff]
        %v6760 = vld [vmem:[%s6756 + $0x18] sm:$0xff]
        %v6761 = vld [vmem:[%s6756 + $0x20] sm:$0xff]
        %v6762 = vld [vmem:[%s6756 + $0x28] sm:$0xff]
        %v6763 = vld [vmem:[%s6756 + $0x30] sm:$0xff]
        %v6764 = vld [vmem:[%s6756 + $0x38] sm:$0xff]
        %v6765 = vld [vmem:[%s6756 + $0x40] sm:$0xff]
        %v6766 = vld [vmem:[%s6756 + $0x48] sm:$0xff]
        %v6767 = vld [vmem:[%s6756 + $0x50] sm:$0xff]
        %v6768 = vld [vmem:[%s6756 + $0x58] sm:$0xff]
        %v6769 = vld [vmem:[%s6756 + $0x60] sm:$0xff]
        %v6770 = vld [vmem:[%s6756 + $0x68] sm:$0xff]
        %v6771 = vld [vmem:[%s6756 + $0x70] sm:$0xff]
        %v6772 = vld [vmem:[%s6756 + $0x78] sm:$0xff]
        %v6773 = vld [vmem:[%s6756 + $0x80] sm:$0xff]
        %v6774 = vld [vmem:[%s6756 + $0x88] sm:$0xff]
        %v6775 = vld [vmem:[%s6756 + $0x90] sm:$0xff]
        %v6776 = vld [vmem:[%s6756 + $0x98] sm:$0xff]
        %v6777 = vld [vmem:[%s6756 + $0xa0] sm:$0xff]
        %v6778 = vld [vmem:[%s6756 + $0xa8] sm:$0xff]
        %v6779 = vld [vmem:[%s6756 + $0xb0] sm:$0xff]
        %v6780 = vld [vmem:[%s6756 + $0xb8] sm:$0xff]
        %v6781 = vld [vmem:[%s6756 + $0xc0] sm:$0xff]
        %v6782 = vld [vmem:[%s6756 + $0xc8] sm:$0xff]
        %v6783 = vld [vmem:[%s6756 + $0xd0] sm:$0xff]
        %v6784 = vld [vmem:[%s6756 + $0xd8] sm:$0xff]
        %v6785 = vld [vmem:[%s6756 + $0xe0] sm:$0xff]
        %v6786 = vld [vmem:[%s6756 + $0xe8] sm:$0xff]
        %v6787 = vld [vmem:[%s6756 + $0xf0] sm:$0xff]
        %v6788 = vld [vmem:[%s6756 + $0xf8] sm:$0xff]
        %v6789 = vrot.slane %v6062, 6
        %v6790 = vrot.slane %v6094, 6
        %6793 = vmatprep.subr.mxu0 0.0
        %6794 = vmatpush1.msra.mxu0 %v6757
        %6795 = vmatprep.subr.mxu0 0.0
        %6796 = vmatpush1.msra.mxu0 %v6758
        %6797 = vmatprep.subr.mxu0 0.0
        %6798 = vmatpush1.msra.mxu0 %v6759
        %6799 = vmatprep.subr.mxu0 0.0
        %6800 = vmatpush1.msra.mxu0 %v6760
        %6801 = vmatprep.subr.mxu0 0.0
        %6802 = vmatpush1.msra.mxu0 %v6761
        %6803 = vmatprep.subr.mxu0 0.0
        %6804 = vmatpush1.msra.mxu0 %v6762
        %6805 = vmatprep.subr.mxu0 0.0
        %6806 = vmatpush1.msra.mxu0 %v6763
        %6807 = vmatprep.subr.mxu0 0.0
        %6808 = vmatpush1.msra.mxu0 %v6764
        %6809 = vmatprep.subr.mxu0 0.0
        %6810 = vmatpush1.msra.mxu0 %v6765
        %6811 = vmatprep.subr.mxu0 0.0
        %6812 = vmatpush1.msra.mxu0 %v6766
        %6813 = vmatprep.subr.mxu0 0.0
        %6814 = vmatpush1.msra.mxu0 %v6767
        %6815 = vmatprep.subr.mxu0 0.0
        %6816 = vmatpush1.msra.mxu0 %v6768
        %6817 = vmatprep.subr.mxu0 0.0
        %6818 = vmatpush1.msra.mxu0 %v6769
        %6819 = vmatprep.subr.mxu0 0.0
        %6820 = vmatpush1.msra.mxu0 %v6770
        %6821 = vmatprep.subr.mxu0 0.0
        %6822 = vmatpush1.msra.mxu0 %v6771
        %6823 = vmatprep.subr.mxu0 0.0
        %6824 = vmatpush1.msra.mxu0 %v6772
        %6825 = vmatprep.subr.mxu0 0.0
        %6826 = vmatpush1.msra.mxu0 %v6773
        %6827 = vmatprep.subr.mxu0 0.0
        %6828 = vmatpush1.msra.mxu0 %v6774
        %6829 = vmatprep.subr.mxu0 0.0
        %6830 = vmatpush1.msra.mxu0 %v6775
        %6831 = vmatprep.subr.mxu0 0.0
        %6832 = vmatpush1.msra.mxu0 %v6776
        %6833 = vmatprep.subr.mxu0 0.0
        %6834 = vmatpush1.msra.mxu0 %v6777
        %6835 = vmatprep.subr.mxu0 0.0
        %6836 = vmatpush1.msra.mxu0 %v6778
        %6837 = vmatprep.subr.mxu0 0.0
        %6838 = vmatpush1.msra.mxu0 %v6779
        %6839 = vmatprep.subr.mxu0 0.0
        %6840 = vmatpush1.msra.mxu0 %v6780
        %6841 = vmatprep.subr.mxu0 0.0
        %6842 = vmatpush1.msra.mxu0 %v6781
        %6843 = vmatprep.subr.mxu0 0.0
        %6844 = vmatpush1.msra.mxu0 %v6782
        %6845 = vmatprep.subr.mxu0 0.0
        %6846 = vmatpush1.msra.mxu0 %v6783
        %6847 = vmatprep.subr.mxu0 0.0
        %6848 = vmatpush1.msra.mxu0 %v6784
        %6849 = vmatprep.subr.mxu0 0.0
        %6850 = vmatpush1.msra.mxu0 %v6785
        %6851 = vmatprep.subr.mxu0 0.0
        %6852 = vmatpush1.msra.mxu0 %v6786
        %6853 = vmatprep.subr.mxu0 0.0
        %6854 = vmatpush1.msra.mxu0 %v6787
        %6855 = vmatprep.subr.mxu0 0.0
        %6856 = vmatpush1.msra.mxu0 %v6788
        %6857 = vmatprep.mubr.f32.mxu0 %v6790
        %6858 = vmatmul.mubr.f32.gmra.mrb[0].mxu0 %v6789
        %v6859 = vpop.f32.mrb[0].mxu0
        %v6860 = vadd.f32 0.0, %v6859
        %v6861 = vpop.f32.mrb[0].mxu0
        %6862 = vdwg.mxu0
        %v6863 = vadd.f32 %v6755, %v6860
        %s6864 = scalar_lea.vmem %s17, 1792
        %v6865 = vld [vmem:[%s6864] sm:$0xff]
        %v6866 = vld [vmem:[%s6864 + $0x8] sm:$0xff]
        %v6867 = vld [vmem:[%s6864 + $0x10] sm:$0xff]
        %v6868 = vld [vmem:[%s6864 + $0x18] sm:$0xff]
        %v6869 = vld [vmem:[%s6864 + $0x20] sm:$0xff]
        %v6870 = vld [vmem:[%s6864 + $0x28] sm:$0xff]
        %v6871 = vld [vmem:[%s6864 + $0x30] sm:$0xff]
        %v6872 = vld [vmem:[%s6864 + $0x38] sm:$0xff]
        %v6873 = vld [vmem:[%s6864 + $0x40] sm:$0xff]
        %v6874 = vld [vmem:[%s6864 + $0x48] sm:$0xff]
        %v6875 = vld [vmem:[%s6864 + $0x50] sm:$0xff]
        %v6876 = vld [vmem:[%s6864 + $0x58] sm:$0xff]
        %v6877 = vld [vmem:[%s6864 + $0x60] sm:$0xff]
        %v6878 = vld [vmem:[%s6864 + $0x68] sm:$0xff]
        %v6879 = vld [vmem:[%s6864 + $0x70] sm:$0xff]
        %v6880 = vld [vmem:[%s6864 + $0x78] sm:$0xff]
        %v6881 = vld [vmem:[%s6864 + $0x80] sm:$0xff]
        %v6882 = vld [vmem:[%s6864 + $0x88] sm:$0xff]
        %v6883 = vld [vmem:[%s6864 + $0x90] sm:$0xff]
        %v6884 = vld [vmem:[%s6864 + $0x98] sm:$0xff]
        %v6885 = vld [vmem:[%s6864 + $0xa0] sm:$0xff]
        %v6886 = vld [vmem:[%s6864 + $0xa8] sm:$0xff]
        %v6887 = vld [vmem:[%s6864 + $0xb0] sm:$0xff]
        %v6888 = vld [vmem:[%s6864 + $0xb8] sm:$0xff]
        %v6889 = vld [vmem:[%s6864 + $0xc0] sm:$0xff]
        %v6890 = vld [vmem:[%s6864 + $0xc8] sm:$0xff]
        %v6891 = vld [vmem:[%s6864 + $0xd0] sm:$0xff]
        %v6892 = vld [vmem:[%s6864 + $0xd8] sm:$0xff]
        %v6893 = vld [vmem:[%s6864 + $0xe0] sm:$0xff]
        %v6894 = vld [vmem:[%s6864 + $0xe8] sm:$0xff]
        %v6895 = vld [vmem:[%s6864 + $0xf0] sm:$0xff]
        %v6896 = vld [vmem:[%s6864 + $0xf8] sm:$0xff]
        %v6897 = vrot.slane %v6062, 7
        %v6898 = vrot.slane %v6094, 7
        %6901 = vmatprep.subr.mxu0 0.0
        %6902 = vmatpush1.msra.mxu0 %v6865
        %6903 = vmatprep.subr.mxu0 0.0
        %6904 = vmatpush1.msra.mxu0 %v6866
        %6905 = vmatprep.subr.mxu0 0.0
        %6906 = vmatpush1.msra.mxu0 %v6867
        %6907 = vmatprep.subr.mxu0 0.0
        %6908 = vmatpush1.msra.mxu0 %v6868
        %6909 = vmatprep.subr.mxu0 0.0
        %6910 = vmatpush1.msra.mxu0 %v6869
        %6911 = vmatprep.subr.mxu0 0.0
        %6912 = vmatpush1.msra.mxu0 %v6870
        %6913 = vmatprep.subr.mxu0 0.0
        %6914 = vmatpush1.msra.mxu0 %v6871
        %6915 = vmatprep.subr.mxu0 0.0
        %6916 = vmatpush1.msra.mxu0 %v6872
        %6917 = vmatprep.subr.mxu0 0.0
        %6918 = vmatpush1.msra.mxu0 %v6873
        %6919 = vmatprep.subr.mxu0 0.0
        %6920 = vmatpush1.msra.mxu0 %v6874
        %6921 = vmatprep.subr.mxu0 0.0
        %6922 = vmatpush1.msra.mxu0 %v6875
        %6923 = vmatprep.subr.mxu0 0.0
        %6924 = vmatpush1.msra.mxu0 %v6876
        %6925 = vmatprep.subr.mxu0 0.0
        %6926 = vmatpush1.msra.mxu0 %v6877
        %6927 = vmatprep.subr.mxu0 0.0
        %6928 = vmatpush1.msra.mxu0 %v6878
        %6929 = vmatprep.subr.mxu0 0.0
        %6930 = vmatpush1.msra.mxu0 %v6879
        %6931 = vmatprep.subr.mxu0 0.0
        %6932 = vmatpush1.msra.mxu0 %v6880
        %6933 = vmatprep.subr.mxu0 0.0
        %6934 = vmatpush1.msra.mxu0 %v6881
        %6935 = vmatprep.subr.mxu0 0.0
        %6936 = vmatpush1.msra.mxu0 %v6882
        %6937 = vmatprep.subr.mxu0 0.0
        %6938 = vmatpush1.msra.mxu0 %v6883
        %6939 = vmatprep.subr.mxu0 0.0
        %6940 = vmatpush1.msra.mxu0 %v6884
        %6941 = vmatprep.subr.mxu0 0.0
        %6942 = vmatpush1.msra.mxu0 %v6885
        %6943 = vmatprep.subr.mxu0 0.0
        %6944 = vmatpush1.msra.mxu0 %v6886
        %6945 = vmatprep.subr.mxu0 0.0
        %6946 = vmatpush1.msra.mxu0 %v6887
        %6947 = vmatprep.subr.mxu0 0.0
        %6948 = vmatpush1.msra.mxu0 %v6888
        %6949 = vmatprep.subr.mxu0 0.0
        %6950 = vmatpush1.msra.mxu0 %v6889
        %6951 = vmatprep.subr.mxu0 0.0
        %6952 = vmatpush1.msra.mxu0 %v6890
        %6953 = vmatprep.subr.mxu0 0.0
        %6954 = vmatpush1.msra.mxu0 %v6891
        %6955 = vmatprep.subr.mxu0 0.0
        %6956 = vmatpush1.msra.mxu0 %v6892
        %6957 = vmatprep.subr.mxu0 0.0
        %6958 = vmatpush1.msra.mxu0 %v6893
        %6959 = vmatprep.subr.mxu0 0.0
        %6960 = vmatpush1.msra.mxu0 %v6894
        %6961 = vmatprep.subr.mxu0 0.0
        %6962 = vmatpush1.msra.mxu0 %v6895
        %6963 = vmatprep.subr.mxu0 0.0
        %6964 = vmatpush1.msra.mxu0 %v6896
        %6965 = vmatprep.mubr.f32.mxu0 %v6898
        %6966 = vmatmul.mubr.f32.gmra.mrb[0].mxu0 %v6897
        %v6967 = vpop.f32.mrb[0].mxu0
        %v6968 = vadd.f32 0.0, %v6967
        %v6969 = vpop.f32.mrb[0].mxu0
        %6970 = vdwg.mxu0
        %v6971 = vadd.f32 %v6863, %v6968
        %6972 = vst [vmem:[%s609] sm:$0x1] %v6971
        %s6973 = sand.u32 %s450, 1
        %s6974 = scalar_lea.sflag [#allocation3], %s6973
        %s6975 = sand.u32 %s450, 1
        %s6976 = scalar_lea.vmem [#allocation2], %s6975
        // Predicated region
        $region97: #{chebnet_forward.1} parent=95 // pred_check
          %p6977 = pneg %p460
        $region98: #{chebnet_forward.1} parent=95 // pred_check_branch
          %6979 = sbr.rel (%p6977) target = $region100
        $region99: #{chebnet_forward.1} parent=95 // pred_region
          %s6981 = ssub.s32 16, 16
          %6982 = vsyncadd %s6974, %s6981
          %s6983 = smul.addr %s33, 16
          %s6984 = scalar_lea.hbm %s19, %s6983
          %s6986 = sshll.u32 %s6976, 4
          %s6987 = int_to_ptr.vmem [resolvable:$true] %s6986
          %6989 = dma.vmem_to_hbm [thread:$0]  %s6987, 16, %s6984, %s6974
        $region100: #{chebnet_forward.1} parent=95 // pred_fallthru
          _
      $region96: #{chebnet_forward.1} parent=5 // pred_fallthru
        _
      %p6990 = scmp.le.s32.totalorder 2, %s28
      // Predicated region
      $region101: #{chebnet_forward.1} parent=5 // pred_check
        %p6991 = pneg %p6990
      $region102: #{chebnet_forward.1} parent=5 // pred_check_branch
        %6993 = sbr.rel (%p6991) target = $region104
      $region103: #{chebnet_forward.1} parent=5 // pred_region
        %s6994 = ssub.s32 %s28, 2
        // Predicated region
        $region105: #{chebnet_forward.1} parent=103 // pred_check
          %p6995 = pneg %p466
        $region106: #{chebnet_forward.1} parent=103 // pred_check_branch
          %6997 = sbr.rel (%p6995) target = $region108
        $region107: #{chebnet_forward.1} parent=103 // pred_region
          %s6998 = sand.u32 %s451, 1
          %s6999 = scalar_lea.sflag [#allocation3], %s6998
          %s7000 = sand.u32 %s451, 1
          %s7001 = scalar_lea.vmem [#allocation2], %s7000
          %7002 = dma.done %s6999, 16
        $region108: #{chebnet_forward.1} parent=103 // pred_fallthru
          _
      $region104: #{chebnet_forward.1} parent=5 // pred_fallthru
        _
    $region6: #{chebnet_forward.1} parent=1 // loop_footer
      %s32 = sadd.s32 1, %s28
    $region7: #{chebnet_forward.1} parent=1 // loop_footer_branch
      %27 = sbr.rel target = $region3
    $region8: #{chebnet_forward.1} parent=1 // loop_exit
      _
    %7003 = vsyncpa [#allocation3], 1
    %s7004 = scalar_lea.sflag [#allocation3], 1
    %7005 = vsyncpa %s7004, 1

</llo_original>
